<compile_context>
chip_gen: v7x
topology: tpu7x:2x2x1
jax: 0.10.0
libtpu: 0.0.40
codegen_flags: <defaults>
</compile_context>

<pallas_src>
import functools

import jax
import jax.numpy as jnp
from jax.experimental import pallas as pl
from jax.experimental.pallas import tpu as pltpu


# -----------------------------------------------------------------------------
# Fused forward kernel: Bt images per grid step.
# -----------------------------------------------------------------------------
def _fused_forward_kernel(Bt, lhs1_ref, w1p_ref, w2r_ref, b2_ref, sel_ref,
                          wf1_ref, bf1_ref, wf2_ref, bf2_ref,
                          o_ref,
                          xp2_ref, fc1lhs_ref, h1_ref):
    f32 = jnp.float32
    N = Bt * 264          # flat (16x16-padded + tail) pool1 rows for the batch tile
    NW = N - 40           # rows fed to the K-fused conv2 GEMM

    # ---- conv1 + bias + pool1, folded into one GEMM + lane-block max --------
    # lhs1 row r = b*264 + (hp+1)*16 + (wp+1) for the 14x14 pool grid (zero rows
    # elsewhere); 17 cols = 4x4 stride-2 input patch + constant-1 bias column.
    r1 = jnp.dot(lhs1_ref[0], w1p_ref[...], preferred_element_type=f32)   # (N, 128)
    p1 = jnp.maximum(jnp.maximum(r1[:, 0:32], r1[:, 32:64]),
                     jnp.maximum(r1[:, 64:96], r1[:, 96:128]))
    p1 = jnp.maximum(p1, 0.0)                                             # (N, 32)
    # Border / tail rows of p1 are exactly 0 -> they are conv2's zero padding.

    # ---- build the K-fused conv2 LHS: xp2[r, 32*t + c] = p1[r + ki*16 + kj, c]
    for ki in range(3):
        for kj in range(3):
            t = ki * 3 + kj
            off = ki * 16 + kj
            xp2_ref[:, pl.ds(32 * t, 32)] = p1[off:off + NW, :]

    # ---- conv2: single GEMM with K = 288, + bias + ReLU ----------------------
    act2 = jnp.dot(xp2_ref[...], w2r_ref[...],
                   preferred_element_type=f32) + b2_ref[...]              # (NW, 64)
    act2 = jnp.maximum(act2, 0.0)

    # ---- pool2: pairwise maxes (w then h) + per-image 0/1 row-gather matmul --
    m1 = jnp.maximum(act2[0:NW - 1, :], act2[1:NW, :])                    # (NW-1, 64)
    m2 = jnp.maximum(m1[0:NW - 17, :], m1[16:NW - 1, :])                  # (NW-17, 64)

    sel = sel_ref[...]                                                    # (49, 207)
    for b in range(Bt):
        p2 = jnp.dot(sel, m2[b * 264:b * 264 + 207, :],
                     preferred_element_type=f32)                          # (49, 64)
        # fc1 block-diagonal LHS: row (b, w2), lanes h2*64 + c.
        for h2 in range(7):
            fc1lhs_ref[pl.ds(7 * b, 7), pl.ds(64 * h2, 64)] = p2[7 * h2:7 * h2 + 7, :]

    # ---- fc1: block-diagonal GEMM (diagonal 128-blocks are the real result) --
    rfc = jnp.dot(fc1lhs_ref[...], wf1_ref[...],
                  preferred_element_type=f32)                             # (Bt*7, 896)
    bf1 = bf1_ref[...]                                                    # (1, 128)
    for b in range(Bt):
        h1 = bf1
        for w2 in range(7):
            h1 = h1 + rfc[7 * b + w2:7 * b + w2 + 1, 128 * w2:128 * (w2 + 1)]
        # TODO(synk): nn.Dropout(0.5) treated as identity (eval semantics);
        # training-mode dropout would need pltpu PRNG masking.
        h1_ref[pl.ds(b, 1), :] = jnp.maximum(h1, 0.0)

    # ---- fc2 (zero-padded to 128 lanes -> unmasked, lane-dense output store) -
    logits = jnp.dot(h1_ref[...], wf2_ref[...],
                     preferred_element_type=f32) + bf2_ref[...]           # (Bt, 128)
    o_ref[0] = logits


# -----------------------------------------------------------------------------
# One-time parameter reflow (hoisted out of the jitted hot path).
# -----------------------------------------------------------------------------
def prepare_params(params):
    f32 = jnp.float32
    c1w = params["conv1_w"].astype(f32)      # (32, 1, 3, 3)
    c1b = params["conv1_b"].astype(f32)      # (32,)
    c2w = params["conv2_w"].astype(f32)      # (64, 32, 3, 3)
    c2b = params["conv2_b"].astype(f32)      # (64,)
    f1w = params["fc1_w"].astype(f32)        # (128, 3136)
    f1b = params["fc1_b"].astype(f32)        # (128,)
    f2w = params["fc2_w"].astype(f32)        # (10, 128)
    f2b = params["fc2_b"].astype(f32)        # (10,)

    # conv1+pool1 folded weight (17, 128):
    #   W[pi*4+pj, (dh*2+dw)*32 + c] = c1w[c, 0, pi-dh, pj-dw] (0 outside 3x3)
    #   W[16,      (dh*2+dw)*32 + c] = c1b[c]                  (bias row)
    blocks = []
    for dh in range(2):
        for dw in range(2):
            k4 = jnp.zeros((32, 4, 4), f32).at[:, dh:dh + 3, dw:dw + 3].set(c1w[:, 0])
            blocks.append(jnp.transpose(k4, (1, 2, 0)).reshape(16, 32))
    w1p = jnp.concatenate(
        [jnp.concatenate(blocks, axis=1), jnp.tile(c1b[None, :], (1, 4))], axis=0)

    # conv2 weight, K-fused: W[(ki*3+kj)*32 + ci, co] = c2w[co, ci, ki, kj]
    w2r = jnp.transpose(c2w, (2, 3, 1, 0)).reshape(288, 64)

    # pool2 row-gather matrix: picks rows t = 32*h2 + 2*w2 of the pairwise-maxed
    # conv2 activations (one (49, 207) 0/1 matmul per image instead of strides).
    s = jnp.arange(49)
    tgt = 32 * (s // 7) + 2 * (s % 7)
    sel = (jnp.arange(207)[None, :] == tgt[:, None]).astype(f32)

    # fc1 weight for the block-diagonal trick:
    #   W[h2*64 + c, w2*128 + n] = f1w[n, c*49 + h2*7 + w2]
    wf1 = jnp.transpose(f1w.reshape(128, 64, 7, 7), (2, 1, 3, 0)).reshape(448, 896)

    # fc2 zero-padded to 128 output lanes (lane-dense output block).
    wf2 = jnp.zeros((128, 128), f32).at[:, :10].set(f2w.T)
    bf2 = jnp.pad(f2b, (0, 118)).reshape(1, 128)

    return {
        "w1p": w1p, "w2r": w2r, "b2": c2b.reshape(1, 64), "sel": sel,
        "wf1": wf1, "bf1": f1b.reshape(1, 128), "wf2": wf2, "bf2": bf2,
    }


def _pick_batch_tile(batch):
    for bt in (8, 4, 2, 1):
        if batch % bt == 0:
            return bt
    return 1


def _build_conv1_lhs(x, batch_tile):
    """(B, 28, 28) -> (B//Bt, Bt*264, 17) conv1+pool1 GEMM LHS (layout plumbing)."""
    B = x.shape[0]
    xpad = jnp.pad(x, ((0, 0), (1, 1), (1, 1)))                 # (B, 30, 30)
    cols = [xpad[:, pi:pi + 28:2, pj:pj + 28:2]                 # (B, 14, 14) each
            for pi in range(4) for pj in range(4)]
    cols.append(jnp.ones((B, 14, 14), x.dtype))                 # bias column
    core = jnp.stack(cols, axis=-1)                             # (B, 14, 14, 17)
    buf = jnp.zeros((B, 16, 16, 17), x.dtype)
    buf = buf.at[:, 1:15, 1:15, :].set(core)                    # zero borders
    buf = buf.reshape(B, 256, 17)
    buf = jnp.pad(buf, ((0, 0), (0, 8), (0, 0)))                # (B, 264, 17)
    return buf.reshape(B // batch_tile, batch_tile * 264, 17)


@jax.jit
def mnist_convnet_forward(prep, x):
    """x: (B, 28, 28) float32 (the torch forward does x.unsqueeze(1))."""
    B = x.shape[0]
    Bt = _pick_batch_tile(B)
    NW = Bt * 264 - 40
    lhs1 = _build_conv1_lhs(x, Bt)                              # (B//Bt, Bt*264, 17)

    out = pl.pallas_call(
        functools.partial(_fused_forward_kernel, Bt),
        out_shape=jax.ShapeDtypeStruct((B // Bt, Bt, 128), jnp.float32),
        grid=(B // Bt,),
        in_specs=[
            pl.BlockSpec((1, Bt * 264, 17), lambda i: (i, 0, 0)),   # conv1 lhs
            pl.BlockSpec((17, 128), lambda i: (0, 0)),              # conv1+pool1 W
            pl.BlockSpec((288, 64), lambda i: (0, 0)),              # conv2 W (K-fused)
            pl.BlockSpec((1, 64), lambda i: (0, 0)),                # conv2 b
            pl.BlockSpec((49, 207), lambda i: (0, 0)),              # pool2 gather
            pl.BlockSpec((448, 896), lambda i: (0, 0)),             # fc1 W (block-diag)
            pl.BlockSpec((1, 128), lambda i: (0, 0)),               # fc1 b
            pl.BlockSpec((128, 128), lambda i: (0, 0)),             # fc2 W (padded)
            pl.BlockSpec((1, 128), lambda i: (0, 0)),               # fc2 b (padded)
        ],
        out_specs=pl.BlockSpec((1, Bt, 128), lambda i: (i, 0, 0)),
        scratch_shapes=[
            pltpu.VMEM((NW, 288), jnp.float32),       # K-fused conv2 LHS
            pltpu.VMEM((Bt * 7, 448), jnp.float32),   # fc1 block-diagonal LHS
            pltpu.VMEM((Bt, 128), jnp.float32),       # fc1 activations
        ],
        compiler_params=pltpu.CompilerParams(
            dimension_semantics=("parallel",),
            vmem_limit_bytes=32 * 1024 * 1024,
        ),
    )(lhs1, prep["w1p"], prep["w2r"], prep["b2"], prep["sel"],
      prep["wf1"], prep["bf1"], prep["wf2"], prep["bf2"])
    return out.reshape(B, 128)[:, :10]


# -----------------------------------------------------------------------------
# Parameters (PyTorch-native layouts) and pure-JAX reference.
# -----------------------------------------------------------------------------
def init_params(key):
    ks = jax.random.split(key, 8)

    def u(k, shape, fan_in):
        bound = 1.0 / jnp.sqrt(float(fan_in))
        return jax.random.uniform(k, shape, jnp.float32, -bound, bound)

    return {
        "conv1_w": u(ks[0], (32, 1, 3, 3), 1 * 9),
        "conv1_b": u(ks[1], (32,), 1 * 9),
        "conv2_w": u(ks[2], (64, 32, 3, 3), 32 * 9),
        "conv2_b": u(ks[3], (64,), 32 * 9),
        "fc1_w": u(ks[4], (128, 64 * 7 * 7), 64 * 7 * 7),
        "fc1_b": u(ks[5], (128,), 64 * 7 * 7),
        "fc2_w": u(ks[6], (10, 128), 128),
        "fc2_b": u(ks[7], (10,), 128),
    }


def reference_forward(params, x):
    """Pure-JAX reference mirroring the PyTorch module (eval-mode dropout)."""
    xn = x[:, None, :, :]  # NCHW

    def conv(z, w, b):
        y = jax.lax.conv_general_dilated(
            z, w, (1, 1), ((1, 1), (1, 1)),
            dimension_numbers=("NCHW", "OIHW", "NCHW"))
        return jax.nn.relu(y + b[None, :, None, None])

    def pool(z):
        return jax.lax.reduce_window(z, -jnp.inf, jax.lax.max,
                                     (1, 1, 2, 2), (1, 1, 2, 2), "VALID")

    y = pool(conv(xn, params["conv1_w"], params["conv1_b"]))
    y = pool(conv(y, params["conv2_w"], params["conv2_b"]))
    y = y.reshape(x.shape[0], -1)
    y = jax.nn.relu(y @ params["fc1_w"].T + params["fc1_b"])
    return y @ params["fc2_w"].T + params["fc2_b"]


if __name__ == "__main__":
    key = jax.random.PRNGKey(0)
    k_x, k_p = jax.random.split(key)
    # Spatial size fixed at 28x28 by fc1 = Linear(64*7*7, 128); batch = 2.
    x = jax.random.normal(k_x, (2, 28, 28), dtype=jnp.float32)
    params = init_params(k_p)
    prep = prepare_params(params)    # one-time weight reflow (not in hot path)

    out = jax.block_until_ready(mnist_convnet_forward(prep, x))
    assert out.shape == (2, 10) and out.dtype == jnp.float32

    ref = jax.block_until_ready(reference_forward(params, x))
    max_diff = float(jnp.max(jnp.abs(out - ref)))
    assert jnp.allclose(out, ref, rtol=1e-3, atol=1e-3), (
        f"mismatch: max abs diff {max_diff}")

    print("KERNEL_OK")
</pallas_src>

<mosaic_0001>
module attributes {stable_mosaic.version = 11 : i64} {
  func.func @_fused_forward_kernel(%arg0: i32, %arg1: memref<1x528x17xf32, #tpu.memory_space<vmem>>, %arg2: memref<17x128xf32, #tpu.memory_space<vmem>>, %arg3: memref<288x64xf32, #tpu.memory_space<vmem>>, %arg4: memref<1x64xf32, #tpu.memory_space<vmem>>, %arg5: memref<49x207xf32, #tpu.memory_space<vmem>>, %arg6: memref<448x896xf32, #tpu.memory_space<vmem>>, %arg7: memref<1x128xf32, #tpu.memory_space<vmem>>, %arg8: memref<128x128xf32, #tpu.memory_space<vmem>>, %arg9: memref<1x128xf32, #tpu.memory_space<vmem>>, %arg10: memref<1x2x128xf32, #tpu.memory_space<vmem>>, %arg11: memref<488x288xf32, #tpu.memory_space<vmem>>, %arg12: memref<14x448xf32, #tpu.memory_space<vmem>>, %arg13: memref<2x128xf32, #tpu.memory_space<vmem>>) attributes {dimension_semantics = [#tpu.dimension_semantics<parallel>], iteration_bounds = array<i64: 1>, scalar_prefetch = 0 : i64, scratch_operands = 3 : i64, tpu.core_type = #tpu.core_type<tc>, window_params = [{transform_indices = @transform_0, window_bounds = array<i64: 1, 528, 17>}, {pipeline_mode = #tpu.pipeline_mode<synchronous>, transform_indices = @transform_1, window_bounds = array<i64: 17, 128>}, {pipeline_mode = #tpu.pipeline_mode<synchronous>, transform_indices = @transform_2, window_bounds = array<i64: 288, 64>}, {pipeline_mode = #tpu.pipeline_mode<synchronous>, transform_indices = @transform_3, window_bounds = array<i64: 1, 64>}, {pipeline_mode = #tpu.pipeline_mode<synchronous>, transform_indices = @transform_4, window_bounds = array<i64: 49, 207>}, {pipeline_mode = #tpu.pipeline_mode<synchronous>, transform_indices = @transform_5, window_bounds = array<i64: 448, 896>}, {pipeline_mode = #tpu.pipeline_mode<synchronous>, transform_indices = @transform_6, window_bounds = array<i64: 1, 128>}, {pipeline_mode = #tpu.pipeline_mode<synchronous>, transform_indices = @transform_7, window_bounds = array<i64: 128, 128>}, {pipeline_mode = #tpu.pipeline_mode<synchronous>, transform_indices = @transform_8, window_bounds = array<i64: 1, 128>}, {transform_indices = @transform_9, window_bounds = array<i64: 1, 2, 128>}]} {
    %c0 = arith.constant 0 : index
    %c0_0 = arith.constant 0 : index
    %c0_1 = arith.constant 0 : index
    %0 = vector.load %arg1[%c0, %c0_0, %c0_1] : memref<1x528x17xf32, #tpu.memory_space<vmem>>, vector<1x528x17xf32>
    %1 = vector.shape_cast %0 : vector<1x528x17xf32> to vector<528x17xf32>
    %c0_2 = arith.constant 0 : index
    %c0_3 = arith.constant 0 : index
    %2 = vector.load %arg2[%c0_2, %c0_3] : memref<17x128xf32, #tpu.memory_space<vmem>>, vector<17x128xf32>
    %cst = arith.constant dense<0.000000e+00> : vector<528x128xf32>
    %3 = tpu.matmul %1, %2, %cst {dimension_numbers = #tpu.dot_dimension_numbers<[1], [0], [0], [1], [0, 0, 1, 1], [], []>} : vector<528x17xf32>, vector<17x128xf32>, vector<528x128xf32> -> vector<528x128xf32>
    %4 = vector.extract_strided_slice %3 {offsets = [0, 0], sizes = [528, 32], strides = [1, 1]} : vector<528x128xf32> to vector<528x32xf32>
    %5 = vector.extract_strided_slice %3 {offsets = [0, 32], sizes = [528, 32], strides = [1, 1]} : vector<528x128xf32> to vector<528x32xf32>
    %6 = arith.maximumf %4, %5 : vector<528x32xf32>
    %7 = vector.extract_strided_slice %3 {offsets = [0, 64], sizes = [528, 32], strides = [1, 1]} : vector<528x128xf32> to vector<528x32xf32>
    %8 = vector.extract_strided_slice %3 {offsets = [0, 96], sizes = [528, 32], strides = [1, 1]} : vector<528x128xf32> to vector<528x32xf32>
    %9 = arith.maximumf %7, %8 : vector<528x32xf32>
    %10 = arith.maximumf %6, %9 : vector<528x32xf32>
    %cst_4 = arith.constant 0.000000e+00 : f32
    %11 = vector.broadcast %cst_4 : f32 to vector<528x32xf32>
    %12 = arith.maximumf %10, %11 : vector<528x32xf32>
    %13 = vector.extract_strided_slice %12 {offsets = [0, 0], sizes = [488, 32], strides = [1, 1]} : vector<528x32xf32> to vector<488x32xf32>
    %c0_5 = arith.constant 0 : index
    %c0_6 = arith.constant 0 : index
    %14 = vector.load %arg11[%c0_5, %c0_6] : memref<488x288xf32, #tpu.memory_space<vmem>>, vector<488x32xf32>
    tpu.vector_store %arg11[%c0_5, %c0_6], %13 {strides = array<i32>} : memref<488x288xf32, #tpu.memory_space<vmem>>, vector<488x32xf32>,
    %15 = vector.extract_strided_slice %12 {offsets = [1, 0], sizes = [488, 32], strides = [1, 1]} : vector<528x32xf32> to vector<488x32xf32>
    %c0_7 = arith.constant 0 : index
    %c32 = arith.constant 32 : index
    %16 = vector.load %arg11[%c0_7, %c32] : memref<488x288xf32, #tpu.memory_space<vmem>>, vector<488x32xf32>
    tpu.vector_store %arg11[%c0_7, %c32], %15 {strides = array<i32>} : memref<488x288xf32, #tpu.memory_space<vmem>>, vector<488x32xf32>,
    %17 = vector.extract_strided_slice %12 {offsets = [2, 0], sizes = [488, 32], strides = [1, 1]} : vector<528x32xf32> to vector<488x32xf32>
    %c0_8 = arith.constant 0 : index
    %c64 = arith.constant 64 : index
    %18 = vector.load %arg11[%c0_8, %c64] : memref<488x288xf32, #tpu.memory_space<vmem>>, vector<488x32xf32>
    tpu.vector_store %arg11[%c0_8, %c64], %17 {strides = array<i32>} : memref<488x288xf32, #tpu.memory_space<vmem>>, vector<488x32xf32>,
    %19 = vector.extract_strided_slice %12 {offsets = [16, 0], sizes = [488, 32], strides = [1, 1]} : vector<528x32xf32> to vector<488x32xf32>
    %c0_9 = arith.constant 0 : index
    %c96 = arith.constant 96 : index
    %20 = vector.load %arg11[%c0_9, %c96] : memref<488x288xf32, #tpu.memory_space<vmem>>, vector<488x32xf32>
    tpu.vector_store %arg11[%c0_9, %c96], %19 {strides = array<i32>} : memref<488x288xf32, #tpu.memory_space<vmem>>, vector<488x32xf32>,
    %21 = vector.extract_strided_slice %12 {offsets = [17, 0], sizes = [488, 32], strides = [1, 1]} : vector<528x32xf32> to vector<488x32xf32>
    %c0_10 = arith.constant 0 : index
    %c128 = arith.constant 128 : index
    %22 = vector.load %arg11[%c0_10, %c128] : memref<488x288xf32, #tpu.memory_space<vmem>>, vector<488x32xf32>
    tpu.vector_store %arg11[%c0_10, %c128], %21 {strides = array<i32>} : memref<488x288xf32, #tpu.memory_space<vmem>>, vector<488x32xf32>,
    %23 = vector.extract_strided_slice %12 {offsets = [18, 0], sizes = [488, 32], strides = [1, 1]} : vector<528x32xf32> to vector<488x32xf32>
    %c0_11 = arith.constant 0 : index
    %c160 = arith.constant 160 : index
    %24 = vector.load %arg11[%c0_11, %c160] : memref<488x288xf32, #tpu.memory_space<vmem>>, vector<488x32xf32>
    tpu.vector_store %arg11[%c0_11, %c160], %23 {strides = array<i32>} : memref<488x288xf32, #tpu.memory_space<vmem>>, vector<488x32xf32>,
    %25 = vector.extract_strided_slice %12 {offsets = [32, 0], sizes = [488, 32], strides = [1, 1]} : vector<528x32xf32> to vector<488x32xf32>
    %c0_12 = arith.constant 0 : index
    %c192 = arith.constant 192 : index
    %26 = vector.load %arg11[%c0_12, %c192] : memref<488x288xf32, #tpu.memory_space<vmem>>, vector<488x32xf32>
    tpu.vector_store %arg11[%c0_12, %c192], %25 {strides = array<i32>} : memref<488x288xf32, #tpu.memory_space<vmem>>, vector<488x32xf32>,
    %27 = vector.extract_strided_slice %12 {offsets = [33, 0], sizes = [488, 32], strides = [1, 1]} : vector<528x32xf32> to vector<488x32xf32>
    %c0_13 = arith.constant 0 : index
    %c224 = arith.constant 224 : index
    %28 = vector.load %arg11[%c0_13, %c224] : memref<488x288xf32, #tpu.memory_space<vmem>>, vector<488x32xf32>
    tpu.vector_store %arg11[%c0_13, %c224], %27 {strides = array<i32>} : memref<488x288xf32, #tpu.memory_space<vmem>>, vector<488x32xf32>,
    %29 = vector.extract_strided_slice %12 {offsets = [34, 0], sizes = [488, 32], strides = [1, 1]} : vector<528x32xf32> to vector<488x32xf32>
    %c0_14 = arith.constant 0 : index
    %c256 = arith.constant 256 : index
    %30 = vector.load %arg11[%c0_14, %c256] : memref<488x288xf32, #tpu.memory_space<vmem>>, vector<488x32xf32>
    tpu.vector_store %arg11[%c0_14, %c256], %29 {strides = array<i32>} : memref<488x288xf32, #tpu.memory_space<vmem>>, vector<488x32xf32>,
    %c0_15 = arith.constant 0 : index
    %c0_16 = arith.constant 0 : index
    %31 = vector.load %arg11[%c0_15, %c0_16] : memref<488x288xf32, #tpu.memory_space<vmem>>, vector<488x288xf32>
    %c0_17 = arith.constant 0 : index
    %c0_18 = arith.constant 0 : index
    %32 = vector.load %arg3[%c0_17, %c0_18] : memref<288x64xf32, #tpu.memory_space<vmem>>, vector<288x64xf32>
    %cst_19 = arith.constant dense<0.000000e+00> : vector<488x64xf32>
    %33 = tpu.matmul %31, %32, %cst_19 {dimension_numbers = #tpu.dot_dimension_numbers<[1], [0], [0], [1], [0, 0, 1, 1], [], []>} : vector<488x288xf32>, vector<288x64xf32>, vector<488x64xf32> -> vector<488x64xf32>
    %c0_20 = arith.constant 0 : index
    %c0_21 = arith.constant 0 : index
    %34 = vector.load %arg4[%c0_20, %c0_21] : memref<1x64xf32, #tpu.memory_space<vmem>>, vector<1x64xf32>
    %35 = vector.broadcast %34 : vector<1x64xf32> to vector<488x64xf32>
    %36 = arith.addf %33, %35 : vector<488x64xf32>
    %cst_22 = arith.constant 0.000000e+00 : f32
    %37 = vector.broadcast %cst_22 : f32 to vector<488x64xf32>
    %38 = arith.maximumf %36, %37 : vector<488x64xf32>
    %39 = vector.extract_strided_slice %38 {offsets = [0, 0], sizes = [487, 64], strides = [1, 1]} : vector<488x64xf32> to vector<487x64xf32>
    %40 = vector.extract_strided_slice %38 {offsets = [1, 0], sizes = [487, 64], strides = [1, 1]} : vector<488x64xf32> to vector<487x64xf32>
    %41 = arith.maximumf %39, %40 : vector<487x64xf32>
    %42 = vector.extract_strided_slice %41 {offsets = [0, 0], sizes = [471, 64], strides = [1, 1]} : vector<487x64xf32> to vector<471x64xf32>
    %43 = vector.extract_strided_slice %41 {offsets = [16, 0], sizes = [471, 64], strides = [1, 1]} : vector<487x64xf32> to vector<471x64xf32>
    %44 = arith.maximumf %42, %43 : vector<471x64xf32>
    %c0_23 = arith.constant 0 : index
    %c0_24 = arith.constant 0 : index
    %45 = vector.load %arg5[%c0_23, %c0_24] : memref<49x207xf32, #tpu.memory_space<vmem>>, vector<49x207xf32>
    %46 = vector.extract_strided_slice %44 {offsets = [0, 0], sizes = [207, 64], strides = [1, 1]} : vector<471x64xf32> to vector<207x64xf32>
    %cst_25 = arith.constant dense<0.000000e+00> : vector<49x64xf32>
    %47 = tpu.matmul %45, %46, %cst_25 {dimension_numbers = #tpu.dot_dimension_numbers<[1], [0], [0], [1], [0, 0, 1, 1], [], []>} : vector<49x207xf32>, vector<207x64xf32>, vector<49x64xf32> -> vector<49x64xf32>
    %48 = vector.extract_strided_slice %47 {offsets = [0, 0], sizes = [7, 64], strides = [1, 1]} : vector<49x64xf32> to vector<7x64xf32>
    %c0_26 = arith.constant 0 : index
    %c0_27 = arith.constant 0 : index
    %49 = vector.load %arg12[%c0_26, %c0_27] : memref<14x448xf32, #tpu.memory_space<vmem>>, vector<7x64xf32>
    tpu.vector_store %arg12[%c0_26, %c0_27], %48 {strides = array<i32>} : memref<14x448xf32, #tpu.memory_space<vmem>>, vector<7x64xf32>,
    %50 = vector.extract_strided_slice %47 {offsets = [7, 0], sizes = [7, 64], strides = [1, 1]} : vector<49x64xf32> to vector<7x64xf32>
    %c0_28 = arith.constant 0 : index
    %c64_29 = arith.constant 64 : index
    %51 = vector.load %arg12[%c0_28, %c64_29] : memref<14x448xf32, #tpu.memory_space<vmem>>, vector<7x64xf32>
    tpu.vector_store %arg12[%c0_28, %c64_29], %50 {strides = array<i32>} : memref<14x448xf32, #tpu.memory_space<vmem>>, vector<7x64xf32>,
    %52 = vector.extract_strided_slice %47 {offsets = [14, 0], sizes = [7, 64], strides = [1, 1]} : vector<49x64xf32> to vector<7x64xf32>
    %c0_30 = arith.constant 0 : index
    %c128_31 = arith.constant 128 : index
    %53 = vector.load %arg12[%c0_30, %c128_31] : memref<14x448xf32, #tpu.memory_space<vmem>>, vector<7x64xf32>
    tpu.vector_store %arg12[%c0_30, %c128_31], %52 {strides = array<i32>} : memref<14x448xf32, #tpu.memory_space<vmem>>, vector<7x64xf32>,
    %54 = vector.extract_strided_slice %47 {offsets = [21, 0], sizes = [7, 64], strides = [1, 1]} : vector<49x64xf32> to vector<7x64xf32>
    %c0_32 = arith.constant 0 : index
    %c192_33 = arith.constant 192 : index
    %55 = vector.load %arg12[%c0_32, %c192_33] : memref<14x448xf32, #tpu.memory_space<vmem>>, vector<7x64xf32>
    tpu.vector_store %arg12[%c0_32, %c192_33], %54 {strides = array<i32>} : memref<14x448xf32, #tpu.memory_space<vmem>>, vector<7x64xf32>,
    %56 = vector.extract_strided_slice %47 {offsets = [28, 0], sizes = [7, 64], strides = [1, 1]} : vector<49x64xf32> to vector<7x64xf32>
    %c0_34 = arith.constant 0 : index
    %c256_35 = arith.constant 256 : index
    %57 = vector.load %arg12[%c0_34, %c256_35] : memref<14x448xf32, #tpu.memory_space<vmem>>, vector<7x64xf32>
    tpu.vector_store %arg12[%c0_34, %c256_35], %56 {strides = array<i32>} : memref<14x448xf32, #tpu.memory_space<vmem>>, vector<7x64xf32>,
    %58 = vector.extract_strided_slice %47 {offsets = [35, 0], sizes = [7, 64], strides = [1, 1]} : vector<49x64xf32> to vector<7x64xf32>
    %c0_36 = arith.constant 0 : index
    %c320 = arith.constant 320 : index
    %59 = vector.load %arg12[%c0_36, %c320] : memref<14x448xf32, #tpu.memory_space<vmem>>, vector<7x64xf32>
    tpu.vector_store %arg12[%c0_36, %c320], %58 {strides = array<i32>} : memref<14x448xf32, #tpu.memory_space<vmem>>, vector<7x64xf32>,
    %60 = vector.extract_strided_slice %47 {offsets = [42, 0], sizes = [7, 64], strides = [1, 1]} : vector<49x64xf32> to vector<7x64xf32>
    %c0_37 = arith.constant 0 : index
    %c384 = arith.constant 384 : index
    %61 = vector.load %arg12[%c0_37, %c384] : memref<14x448xf32, #tpu.memory_space<vmem>>, vector<7x64xf32>
    tpu.vector_store %arg12[%c0_37, %c384], %60 {strides = array<i32>} : memref<14x448xf32, #tpu.memory_space<vmem>>, vector<7x64xf32>,
    %62 = vector.extract_strided_slice %44 {offsets = [264, 0], sizes = [207, 64], strides = [1, 1]} : vector<471x64xf32> to vector<207x64xf32>
    %cst_38 = arith.constant dense<0.000000e+00> : vector<49x64xf32>
    %63 = tpu.matmul %45, %62, %cst_38 {dimension_numbers = #tpu.dot_dimension_numbers<[1], [0], [0], [1], [0, 0, 1, 1], [], []>} : vector<49x207xf32>, vector<207x64xf32>, vector<49x64xf32> -> vector<49x64xf32>
    %64 = vector.extract_strided_slice %63 {offsets = [0, 0], sizes = [7, 64], strides = [1, 1]} : vector<49x64xf32> to vector<7x64xf32>
    %c7 = arith.constant 7 : index
    %c0_39 = arith.constant 0 : index
    %65 = vector.load %arg12[%c7, %c0_39] : memref<14x448xf32, #tpu.memory_space<vmem>>, vector<7x64xf32>
    tpu.vector_store %arg12[%c7, %c0_39], %64 {strides = array<i32>} : memref<14x448xf32, #tpu.memory_space<vmem>>, vector<7x64xf32>,
    %66 = vector.extract_strided_slice %63 {offsets = [7, 0], sizes = [7, 64], strides = [1, 1]} : vector<49x64xf32> to vector<7x64xf32>
    %c7_40 = arith.constant 7 : index
    %c64_41 = arith.constant 64 : index
    %67 = vector.load %arg12[%c7_40, %c64_41] : memref<14x448xf32, #tpu.memory_space<vmem>>, vector<7x64xf32>
    tpu.vector_store %arg12[%c7_40, %c64_41], %66 {strides = array<i32>} : memref<14x448xf32, #tpu.memory_space<vmem>>, vector<7x64xf32>,
    %68 = vector.extract_strided_slice %63 {offsets = [14, 0], sizes = [7, 64], strides = [1, 1]} : vector<49x64xf32> to vector<7x64xf32>
    %c7_42 = arith.constant 7 : index
    %c128_43 = arith.constant 128 : index
    %69 = vector.load %arg12[%c7_42, %c128_43] : memref<14x448xf32, #tpu.memory_space<vmem>>, vector<7x64xf32>
    tpu.vector_store %arg12[%c7_42, %c128_43], %68 {strides = array<i32>} : memref<14x448xf32, #tpu.memory_space<vmem>>, vector<7x64xf32>,
    %70 = vector.extract_strided_slice %63 {offsets = [21, 0], sizes = [7, 64], strides = [1, 1]} : vector<49x64xf32> to vector<7x64xf32>
    %c7_44 = arith.constant 7 : index
    %c192_45 = arith.constant 192 : index
    %71 = vector.load %arg12[%c7_44, %c192_45] : memref<14x448xf32, #tpu.memory_space<vmem>>, vector<7x64xf32>
    tpu.vector_store %arg12[%c7_44, %c192_45], %70 {strides = array<i32>} : memref<14x448xf32, #tpu.memory_space<vmem>>, vector<7x64xf32>,
    %72 = vector.extract_strided_slice %63 {offsets = [28, 0], sizes = [7, 64], strides = [1, 1]} : vector<49x64xf32> to vector<7x64xf32>
    %c7_46 = arith.constant 7 : index
    %c256_47 = arith.constant 256 : index
    %73 = vector.load %arg12[%c7_46, %c256_47] : memref<14x448xf32, #tpu.memory_space<vmem>>, vector<7x64xf32>
    tpu.vector_store %arg12[%c7_46, %c256_47], %72 {strides = array<i32>} : memref<14x448xf32, #tpu.memory_space<vmem>>, vector<7x64xf32>,
    %74 = vector.extract_strided_slice %63 {offsets = [35, 0], sizes = [7, 64], strides = [1, 1]} : vector<49x64xf32> to vector<7x64xf32>
    %c7_48 = arith.constant 7 : index
    %c320_49 = arith.constant 320 : index
    %75 = vector.load %arg12[%c7_48, %c320_49] : memref<14x448xf32, #tpu.memory_space<vmem>>, vector<7x64xf32>
    tpu.vector_store %arg12[%c7_48, %c320_49], %74 {strides = array<i32>} : memref<14x448xf32, #tpu.memory_space<vmem>>, vector<7x64xf32>,
    %76 = vector.extract_strided_slice %63 {offsets = [42, 0], sizes = [7, 64], strides = [1, 1]} : vector<49x64xf32> to vector<7x64xf32>
    %c7_50 = arith.constant 7 : index
    %c384_51 = arith.constant 384 : index
    %77 = vector.load %arg12[%c7_50, %c384_51] : memref<14x448xf32, #tpu.memory_space<vmem>>, vector<7x64xf32>
    tpu.vector_store %arg12[%c7_50, %c384_51], %76 {strides = array<i32>} : memref<14x448xf32, #tpu.memory_space<vmem>>, vector<7x64xf32>,
    %c0_52 = arith.constant 0 : index
    %c0_53 = arith.constant 0 : index
    %78 = vector.load %arg12[%c0_52, %c0_53] : memref<14x448xf32, #tpu.memory_space<vmem>>, vector<14x448xf32>
    %c0_54 = arith.constant 0 : index
    %c0_55 = arith.constant 0 : index
    %79 = vector.load %arg6[%c0_54, %c0_55] : memref<448x896xf32, #tpu.memory_space<vmem>>, vector<448x896xf32>
    %cst_56 = arith.constant dense<0.000000e+00> : vector<14x896xf32>
    %80 = tpu.matmul %78, %79, %cst_56 {dimension_numbers = #tpu.dot_dimension_numbers<[1], [0], [0], [1], [0, 0, 1, 1], [], []>} : vector<14x448xf32>, vector<448x896xf32>, vector<14x896xf32> -> vector<14x896xf32>
    %c0_57 = arith.constant 0 : index
    %c0_58 = arith.constant 0 : index
    %81 = vector.load %arg7[%c0_57, %c0_58] : memref<1x128xf32, #tpu.memory_space<vmem>>, vector<1x128xf32>
    %82 = vector.extract_strided_slice %80 {offsets = [0, 0], sizes = [1, 128], strides = [1, 1]} : vector<14x896xf32> to vector<1x128xf32>
    %83 = arith.addf %81, %82 : vector<1x128xf32>
    %84 = vector.extract_strided_slice %80 {offsets = [1, 128], sizes = [1, 128], strides = [1, 1]} : vector<14x896xf32> to vector<1x128xf32>
    %85 = arith.addf %83, %84 : vector<1x128xf32>
    %86 = vector.extract_strided_slice %80 {offsets = [2, 256], sizes = [1, 128], strides = [1, 1]} : vector<14x896xf32> to vector<1x128xf32>
    %87 = arith.addf %85, %86 : vector<1x128xf32>
    %88 = vector.extract_strided_slice %80 {offsets = [3, 384], sizes = [1, 128], strides = [1, 1]} : vector<14x896xf32> to vector<1x128xf32>
    %89 = arith.addf %87, %88 : vector<1x128xf32>
    %90 = vector.extract_strided_slice %80 {offsets = [4, 512], sizes = [1, 128], strides = [1, 1]} : vector<14x896xf32> to vector<1x128xf32>
    %91 = arith.addf %89, %90 : vector<1x128xf32>
    %92 = vector.extract_strided_slice %80 {offsets = [5, 640], sizes = [1, 128], strides = [1, 1]} : vector<14x896xf32> to vector<1x128xf32>
    %93 = arith.addf %91, %92 : vector<1x128xf32>
    %94 = vector.extract_strided_slice %80 {offsets = [6, 768], sizes = [1, 128], strides = [1, 1]} : vector<14x896xf32> to vector<1x128xf32>
    %95 = arith.addf %93, %94 : vector<1x128xf32>
    %cst_59 = arith.constant 0.000000e+00 : f32
    %96 = vector.broadcast %cst_59 : f32 to vector<1x128xf32>
    %97 = arith.maximumf %95, %96 : vector<1x128xf32>
    %c0_60 = arith.constant 0 : index
    %c0_61 = arith.constant 0 : index
    %98 = vector.load %arg13[%c0_60, %c0_61] : memref<2x128xf32, #tpu.memory_space<vmem>>, vector<1x128xf32>
    tpu.vector_store %arg13[%c0_60, %c0_61], %97 {strides = array<i32>} : memref<2x128xf32, #tpu.memory_space<vmem>>, vector<1x128xf32>,
    %99 = vector.extract_strided_slice %80 {offsets = [7, 0], sizes = [1, 128], strides = [1, 1]} : vector<14x896xf32> to vector<1x128xf32>
    %100 = arith.addf %81, %99 : vector<1x128xf32>
    %101 = vector.extract_strided_slice %80 {offsets = [8, 128], sizes = [1, 128], strides = [1, 1]} : vector<14x896xf32> to vector<1x128xf32>
    %102 = arith.addf %100, %101 : vector<1x128xf32>
    %103 = vector.extract_strided_slice %80 {offsets = [9, 256], sizes = [1, 128], strides = [1, 1]} : vector<14x896xf32> to vector<1x128xf32>
    %104 = arith.addf %102, %103 : vector<1x128xf32>
    %105 = vector.extract_strided_slice %80 {offsets = [10, 384], sizes = [1, 128], strides = [1, 1]} : vector<14x896xf32> to vector<1x128xf32>
    %106 = arith.addf %104, %105 : vector<1x128xf32>
    %107 = vector.extract_strided_slice %80 {offsets = [11, 512], sizes = [1, 128], strides = [1, 1]} : vector<14x896xf32> to vector<1x128xf32>
    %108 = arith.addf %106, %107 : vector<1x128xf32>
    %109 = vector.extract_strided_slice %80 {offsets = [12, 640], sizes = [1, 128], strides = [1, 1]} : vector<14x896xf32> to vector<1x128xf32>
    %110 = arith.addf %108, %109 : vector<1x128xf32>
    %111 = vector.extract_strided_slice %80 {offsets = [13, 768], sizes = [1, 128], strides = [1, 1]} : vector<14x896xf32> to vector<1x128xf32>
    %112 = arith.addf %110, %111 : vector<1x128xf32>
    %cst_62 = arith.constant 0.000000e+00 : f32
    %113 = vector.broadcast %cst_62 : f32 to vector<1x128xf32>
    %114 = arith.maximumf %112, %113 : vector<1x128xf32>
    %c1 = arith.constant 1 : index
    %c0_63 = arith.constant 0 : index
    %115 = vector.load %arg13[%c1, %c0_63] : memref<2x128xf32, #tpu.memory_space<vmem>>, vector<1x128xf32>
    tpu.vector_store %arg13[%c1, %c0_63], %114 {strides = array<i32>} : memref<2x128xf32, #tpu.memory_space<vmem>>, vector<1x128xf32>,
    %c0_64 = arith.constant 0 : index
    %c0_65 = arith.constant 0 : index
    %116 = vector.load %arg13[%c0_64, %c0_65] : memref<2x128xf32, #tpu.memory_space<vmem>>, vector<2x128xf32>
    %c0_66 = arith.constant 0 : index
    %c0_67 = arith.constant 0 : index
    %117 = vector.load %arg8[%c0_66, %c0_67] : memref<128x128xf32, #tpu.memory_space<vmem>>, vector<128x128xf32>
    %cst_68 = arith.constant dense<0.000000e+00> : vector<2x128xf32>
    %118 = tpu.matmul %116, %117, %cst_68 {dimension_numbers = #tpu.dot_dimension_numbers<[1], [0], [0], [1], [0, 0, 1, 1], [], []>} : vector<2x128xf32>, vector<128x128xf32>, vector<2x128xf32> -> vector<2x128xf32>
    %c0_69 = arith.constant 0 : index
    %c0_70 = arith.constant 0 : index
    %119 = vector.load %arg9[%c0_69, %c0_70] : memref<1x128xf32, #tpu.memory_space<vmem>>, vector<1x128xf32>
    %120 = vector.broadcast %119 : vector<1x128xf32> to vector<2x128xf32>
    %121 = arith.addf %118, %120 : vector<2x128xf32>
    %c0_71 = arith.constant 0 : index
    %c0_72 = arith.constant 0 : index
    %c0_73 = arith.constant 0 : index
    %122 = vector.load %arg10[%c0_71, %c0_72, %c0_73] : memref<1x2x128xf32, #tpu.memory_space<vmem>>, vector<1x2x128xf32>
    %123 = vector.shape_cast %122 : vector<1x2x128xf32> to vector<2x128xf32>
    %124 = vector.shape_cast %121 : vector<2x128xf32> to vector<1x2x128xf32>
    tpu.vector_store %arg10[%c0_71, %c0_72, %c0_73], %124 {strides = array<i32>} : memref<1x2x128xf32, #tpu.memory_space<vmem>>, vector<1x2x128xf32>,
    return
  }
  func.func @transform_0(%arg0: i32) -> (i32, i32, i32) {
    %c0_i32 = arith.constant 0 : i32
    %c0_i32_0 = arith.constant 0 : i32
    %c0_i32_1 = arith.constant 0 : i32
    return %arg0, %c0_i32, %c0_i32_0 : i32, i32, i32
  }
  func.func @transform_1(%arg0: i32) -> (i32, i32) {
    %c0_i32 = arith.constant 0 : i32
    %c0_i32_0 = arith.constant 0 : i32
    %c0_i32_1 = arith.constant 0 : i32
    return %c0_i32, %c0_i32_0 : i32, i32
  }
  func.func @transform_2(%arg0: i32) -> (i32, i32) {
    %c0_i32 = arith.constant 0 : i32
    %c0_i32_0 = arith.constant 0 : i32
    %c0_i32_1 = arith.constant 0 : i32
    return %c0_i32, %c0_i32_0 : i32, i32
  }
  func.func @transform_3(%arg0: i32) -> (i32, i32) {
    %c0_i32 = arith.constant 0 : i32
    %c0_i32_0 = arith.constant 0 : i32
    %c0_i32_1 = arith.constant 0 : i32
    return %c0_i32, %c0_i32_0 : i32, i32
  }
  func.func @transform_4(%arg0: i32) -> (i32, i32) {
    %c0_i32 = arith.constant 0 : i32
    %c0_i32_0 = arith.constant 0 : i32
    %c0_i32_1 = arith.constant 0 : i32
    return %c0_i32, %c0_i32_0 : i32, i32
  }
  func.func @transform_5(%arg0: i32) -> (i32, i32) {
    %c0_i32 = arith.constant 0 : i32
    %c0_i32_0 = arith.constant 0 : i32
    %c0_i32_1 = arith.constant 0 : i32
    return %c0_i32, %c0_i32_0 : i32, i32
  }
  func.func @transform_6(%arg0: i32) -> (i32, i32) {
    %c0_i32 = arith.constant 0 : i32
    %c0_i32_0 = arith.constant 0 : i32
    %c0_i32_1 = arith.constant 0 : i32
    return %c0_i32, %c0_i32_0 : i32, i32
  }
  func.func @transform_7(%arg0: i32) -> (i32, i32) {
    %c0_i32 = arith.constant 0 : i32
    %c0_i32_0 = arith.constant 0 : i32
    %c0_i32_1 = arith.constant 0 : i32
    return %c0_i32, %c0_i32_0 : i32, i32
  }
  func.func @transform_8(%arg0: i32) -> (i32, i32) {
    %c0_i32 = arith.constant 0 : i32
    %c0_i32_0 = arith.constant 0 : i32
    %c0_i32_1 = arith.constant 0 : i32
    return %c0_i32, %c0_i32_0 : i32, i32
  }
  func.func @transform_9(%arg0: i32) -> (i32, i32, i32) {
    %c0_i32 = arith.constant 0 : i32
    %c0_i32_0 = arith.constant 0 : i32
    %c0_i32_1 = arith.constant 0 : i32
    return %arg0, %c0_i32, %c0_i32_0 : i32, i32, i32
  }
}

</mosaic_0001>

<llo_original>
// kernel: mnist_convnet_forward.1
$region0: #{mnist_convnet_forward.1}
  #allocation0 [shape = 'u32[]', space=smem, size = 0x4, offset = 0x4, fixed_abs, tag = 'smem constant byte address 0x4 - core index']
  #allocation1 [shape = 'u32[144,128]{1,0:T(1,128)}', space=vmem, size = 0x12000, scoped, tag = 'internal scratch']
  #allocation2 [shape = 'f32[488,288]{1,0:T(8,128)}', space=vmem, size = 0xb7000, scoped, tag = 'scratch operand']
  #allocation3 [shape = 'f32[14,448]{1,0:T(8,128)}', space=vmem, size = 0x8000, scoped, tag = 'scratch operand']
  #allocation4 [shape = 'f32[2,128]{1,0:T(2,128)}', space=vmem, size = 0x400, scoped, tag = 'scratch operand']
  %s0 = inlined_call_operand.vmem [shape: f32[1,528,17], index: 0, kind: input, shape index: {}]
  %s1 = inlined_call_operand.vmem [shape: f32[17,128], index: 1, kind: input, shape index: {}]
  %s2 = inlined_call_operand.vmem [shape: f32[288,64], index: 2, kind: input, shape index: {}]
  %s3 = inlined_call_operand.vmem [shape: f32[1,64], index: 3, kind: input, shape index: {}]
  %s4 = inlined_call_operand.vmem [shape: f32[49,207], index: 4, kind: input, shape index: {}]
  %s5 = inlined_call_operand.vmem [shape: f32[448,896], index: 5, kind: input, shape index: {}]
  %s6 = inlined_call_operand.vmem [shape: f32[1,128], index: 6, kind: input, shape index: {}]
  %s7 = inlined_call_operand.vmem [shape: f32[128,128], index: 7, kind: input, shape index: {}]
  %s8 = inlined_call_operand.vmem [shape: f32[1,128], index: 8, kind: input, shape index: {}]
  %s9 = inlined_call_operand.hbm [shape: f32[1,2,128], index: 9, kind: output, shape index: {}]
  %s10 = sld [smem:[#allocation0]]
  $region46: #{mnist_convnet_forward.1} parent=0
    _
  %s12 = ssub.s32 1, %s10
  %s13 = scalar_select 0, %s12, %s10
  $region1: #{mnist_convnet_forward.1} parent=0
    #allocation5 [shape = 'u8[1024]{0}', space=vmem, size = 0x400, scoped, tag = 'output window, operand 0, single buffered']
    #allocation6 [shape = 's32[1]{0}', space=sflag, size = 0x4, scoped, tag = 'scoped memory for mnist_convnet_forward.1']
    %14 = vsyncpa [#allocation6], 0
    // Predicated region
    $region2: #{mnist_convnet_forward.1} parent=1 // pred_check
      _
    $region3: #{mnist_convnet_forward.1} parent=1 // pred_check_branch
      %16 = sbr.rel (0) target = $region5
    $region4: #{mnist_convnet_forward.1} parent=1 // pred_region
      _
    $region5: #{mnist_convnet_forward.1} parent=1 // pred_fallthru
      _
    // Predicated region
    $region6: #{mnist_convnet_forward.1} parent=1 // pred_check
      _
    $region7: #{mnist_convnet_forward.1} parent=1 // pred_check_branch
      %18 = sbr.rel (0) target = $region9
    $region8: #{mnist_convnet_forward.1} parent=1 // pred_region
      _
    $region9: #{mnist_convnet_forward.1} parent=1 // pred_fallthru
      _
    // Predicated region
    $region10: #{mnist_convnet_forward.1} parent=1 // pred_check
      _
    $region11: #{mnist_convnet_forward.1} parent=1 // pred_check_branch
      %20 = sbr.rel (0) target = $region13
    $region12: #{mnist_convnet_forward.1} parent=1 // pred_region
      _
    $region13: #{mnist_convnet_forward.1} parent=1 // pred_fallthru
      _
    // Predicated region
    $region14: #{mnist_convnet_forward.1} parent=1 // pred_check
      _
    $region15: #{mnist_convnet_forward.1} parent=1 // pred_check_branch
      %22 = sbr.rel (0) target = $region17
    $region16: #{mnist_convnet_forward.1} parent=1 // pred_region
      _
    $region17: #{mnist_convnet_forward.1} parent=1 // pred_fallthru
      _
    // Predicated region
    $region18: #{mnist_convnet_forward.1} parent=1 // pred_check
      _
    $region19: #{mnist_convnet_forward.1} parent=1 // pred_check_branch
      %24 = sbr.rel (0) target = $region21
    $region20: #{mnist_convnet_forward.1} parent=1 // pred_region
      _
    $region21: #{mnist_convnet_forward.1} parent=1 // pred_fallthru
      _
    // Predicated region
    $region22: #{mnist_convnet_forward.1} parent=1 // pred_check
      _
    $region23: #{mnist_convnet_forward.1} parent=1 // pred_check_branch
      %26 = sbr.rel (0) target = $region25
    $region24: #{mnist_convnet_forward.1} parent=1 // pred_region
      _
    $region25: #{mnist_convnet_forward.1} parent=1 // pred_fallthru
      _
    // Predicated region
    $region26: #{mnist_convnet_forward.1} parent=1 // pred_check
      _
    $region27: #{mnist_convnet_forward.1} parent=1 // pred_check_branch
      %28 = sbr.rel (0) target = $region29
    $region28: #{mnist_convnet_forward.1} parent=1 // pred_region
      _
    $region29: #{mnist_convnet_forward.1} parent=1 // pred_fallthru
      _
    // Predicated region
    $region30: #{mnist_convnet_forward.1} parent=1 // pred_check
      _
    $region31: #{mnist_convnet_forward.1} parent=1 // pred_check_branch
      %30 = sbr.rel (0) target = $region33
    $region32: #{mnist_convnet_forward.1} parent=1 // pred_region
      _
    $region33: #{mnist_convnet_forward.1} parent=1 // pred_fallthru
      _
    // Predicated region
    $region34: #{mnist_convnet_forward.1} parent=1 // pred_check
      _
    $region35: #{mnist_convnet_forward.1} parent=1 // pred_check_branch
      %32 = sbr.rel (0) target = $region37
    $region36: #{mnist_convnet_forward.1} parent=1 // pred_region
      _
    $region37: #{mnist_convnet_forward.1} parent=1 // pred_fallthru
      _
    %v33 = vld [vmem:[%s0] sm:$0xff]
    %v34 = vld [vmem:[%s0 + $0x8] sm:$0xff]
    %v35 = vld [vmem:[%s0 + $0x10] sm:$0xff]
    %v36 = vld [vmem:[%s0 + $0x18] sm:$0xff]
    %v37 = vld [vmem:[%s0 + $0x20] sm:$0xff]
    %v38 = vld [vmem:[%s0 + $0x28] sm:$0xff]
    %v39 = vld [vmem:[%s0 + $0x30] sm:$0xff]
    %v40 = vld [vmem:[%s0 + $0x38] sm:$0xff]
    %v41 = vld [vmem:[%s0 + $0x40] sm:$0xff]
    %v42 = vld [vmem:[%s0 + $0x48] sm:$0xff]
    %v43 = vld [vmem:[%s0 + $0x50] sm:$0xff]
    %v44 = vld [vmem:[%s0 + $0x58] sm:$0xff]
    %v45 = vld [vmem:[%s0 + $0x60] sm:$0xff]
    %v46 = vld [vmem:[%s0 + $0x68] sm:$0xff]
    %v47 = vld [vmem:[%s0 + $0x70] sm:$0xff]
    %v48 = vld [vmem:[%s0 + $0x78] sm:$0xff]
    %v49 = vld [vmem:[%s0 + $0x80] sm:$0xff]
    %v50 = vld [vmem:[%s0 + $0x88] sm:$0xff]
    %v51 = vld [vmem:[%s0 + $0x90] sm:$0xff]
    %v52 = vld [vmem:[%s0 + $0x98] sm:$0xff]
    %v53 = vld [vmem:[%s0 + $0xa0] sm:$0xff]
    %v54 = vld [vmem:[%s0 + $0xa8] sm:$0xff]
    %v55 = vld [vmem:[%s0 + $0xb0] sm:$0xff]
    %v56 = vld [vmem:[%s0 + $0xb8] sm:$0xff]
    %v57 = vld [vmem:[%s0 + $0xc0] sm:$0xff]
    %v58 = vld [vmem:[%s0 + $0xc8] sm:$0xff]
    %v59 = vld [vmem:[%s0 + $0xd0] sm:$0xff]
    %v60 = vld [vmem:[%s0 + $0xd8] sm:$0xff]
    %v61 = vld [vmem:[%s0 + $0xe0] sm:$0xff]
    %v62 = vld [vmem:[%s0 + $0xe8] sm:$0xff]
    %v63 = vld [vmem:[%s0 + $0xf0] sm:$0xff]
    %v64 = vld [vmem:[%s0 + $0xf8] sm:$0xff]
    %v65 = vld [vmem:[%s0 + $0x100] sm:$0xff]
    %v66 = vld [vmem:[%s0 + $0x108] sm:$0xff]
    %v67 = vld [vmem:[%s0 + $0x110] sm:$0xff]
    %v68 = vld [vmem:[%s0 + $0x118] sm:$0xff]
    %v69 = vld [vmem:[%s0 + $0x120] sm:$0xff]
    %v70 = vld [vmem:[%s0 + $0x128] sm:$0xff]
    %v71 = vld [vmem:[%s0 + $0x130] sm:$0xff]
    %v72 = vld [vmem:[%s0 + $0x138] sm:$0xff]
    %v73 = vld [vmem:[%s0 + $0x140] sm:$0xff]
    %v74 = vld [vmem:[%s0 + $0x148] sm:$0xff]
    %v75 = vld [vmem:[%s0 + $0x150] sm:$0xff]
    %v76 = vld [vmem:[%s0 + $0x158] sm:$0xff]
    %v77 = vld [vmem:[%s0 + $0x160] sm:$0xff]
    %v78 = vld [vmem:[%s0 + $0x168] sm:$0xff]
    %v79 = vld [vmem:[%s0 + $0x170] sm:$0xff]
    %v80 = vld [vmem:[%s0 + $0x178] sm:$0xff]
    %v81 = vld [vmem:[%s0 + $0x180] sm:$0xff]
    %v82 = vld [vmem:[%s0 + $0x188] sm:$0xff]
    %v83 = vld [vmem:[%s0 + $0x190] sm:$0xff]
    %v84 = vld [vmem:[%s0 + $0x198] sm:$0xff]
    %v85 = vld [vmem:[%s0 + $0x1a0] sm:$0xff]
    %v86 = vld [vmem:[%s0 + $0x1a8] sm:$0xff]
    %v87 = vld [vmem:[%s0 + $0x1b0] sm:$0xff]
    %v88 = vld [vmem:[%s0 + $0x1b8] sm:$0xff]
    %v89 = vld [vmem:[%s0 + $0x1c0] sm:$0xff]
    %v90 = vld [vmem:[%s0 + $0x1c8] sm:$0xff]
    %v91 = vld [vmem:[%s0 + $0x1d0] sm:$0xff]
    %v92 = vld [vmem:[%s0 + $0x1d8] sm:$0xff]
    %v93 = vld [vmem:[%s0 + $0x1e0] sm:$0xff]
    %v94 = vld [vmem:[%s0 + $0x1e8] sm:$0xff]
    %v95 = vld [vmem:[%s0 + $0x1f0] sm:$0xff]
    %v96 = vld [vmem:[%s0 + $0x1f8] sm:$0xff]
    %v97 = vld [vmem:[%s0 + $0x200] sm:$0xff]
    %v98 = vld [vmem:[%s0 + $0x208] sm:$0xff]
    %v99 = vld [vmem:[%s1] sm:$0xff]
    %v100 = vld [vmem:[%s1 + $0x8] sm:$0xff]
    %v101 = vld [vmem:[%s1 + $0x10] sm:$0x1]
    %vm102 = vcmask 138240
    %v104 = vsel %vm102, %v33, 0
    %v107 = vsel %vm102, %v34, 0
    %v110 = vsel %vm102, %v35, 0
    %v113 = vsel %vm102, %v36, 0
    %v116 = vsel %vm102, %v37, 0
    %v119 = vsel %vm102, %v38, 0
    %v122 = vsel %vm102, %v39, 0
    %v125 = vsel %vm102, %v40, 0
    %v128 = vsel %vm102, %v41, 0
    %v131 = vsel %vm102, %v42, 0
    %v134 = vsel %vm102, %v43, 0
    %v137 = vsel %vm102, %v44, 0
    %v140 = vsel %vm102, %v45, 0
    %v143 = vsel %vm102, %v46, 0
    %v146 = vsel %vm102, %v47, 0
    %v149 = vsel %vm102, %v48, 0
    %v152 = vsel %vm102, %v49, 0
    %v155 = vsel %vm102, %v50, 0
    %v158 = vsel %vm102, %v51, 0
    %v161 = vsel %vm102, %v52, 0
    %v164 = vsel %vm102, %v53, 0
    %v167 = vsel %vm102, %v54, 0
    %v170 = vsel %vm102, %v55, 0
    %v173 = vsel %vm102, %v56, 0
    %v176 = vsel %vm102, %v57, 0
    %v179 = vsel %vm102, %v58, 0
    %v182 = vsel %vm102, %v59, 0
    %v185 = vsel %vm102, %v60, 0
    %v188 = vsel %vm102, %v61, 0
    %v191 = vsel %vm102, %v62, 0
    %v194 = vsel %vm102, %v63, 0
    %v197 = vsel %vm102, %v64, 0
    %v200 = vsel %vm102, %v65, 0
    %v203 = vsel %vm102, %v66, 0
    %v206 = vsel %vm102, %v67, 0
    %v209 = vsel %vm102, %v68, 0
    %v212 = vsel %vm102, %v69, 0
    %v215 = vsel %vm102, %v70, 0
    %v218 = vsel %vm102, %v71, 0
    %v221 = vsel %vm102, %v72, 0
    %v224 = vsel %vm102, %v73, 0
    %v227 = vsel %vm102, %v74, 0
    %v230 = vsel %vm102, %v75, 0
    %v233 = vsel %vm102, %v76, 0
    %v236 = vsel %vm102, %v77, 0
    %v239 = vsel %vm102, %v78, 0
    %v242 = vsel %vm102, %v79, 0
    %v245 = vsel %vm102, %v80, 0
    %v248 = vsel %vm102, %v81, 0
    %v251 = vsel %vm102, %v82, 0
    %v254 = vsel %vm102, %v83, 0
    %v257 = vsel %vm102, %v84, 0
    %v260 = vsel %vm102, %v85, 0
    %v263 = vsel %vm102, %v86, 0
    %v266 = vsel %vm102, %v87, 0
    %v269 = vsel %vm102, %v88, 0
    %v272 = vsel %vm102, %v89, 0
    %v275 = vsel %vm102, %v90, 0
    %v278 = vsel %vm102, %v91, 0
    %v281 = vsel %vm102, %v92, 0
    %v284 = vsel %vm102, %v93, 0
    %v287 = vsel %vm102, %v94, 0
    %v290 = vsel %vm102, %v95, 0
    %v293 = vsel %vm102, %v96, 0
    %v296 = vsel %vm102, %v97, 0
    %v299 = vsel %vm102, %v98, 0
    %vm301 = vcmask 1040384
    %v303 = vsel %vm301, %v101, 0
    %305 = vmatprep.subr.mxu0 0.0
    %306 = vmatpush1.msra.mxu0 %v99
    %307 = vmatprep.subr.mxu0 0.0
    %308 = vmatpush1.msra.mxu0 %v100
    %309 = vmatprep.subr.mxu0 0.0
    %310 = vmatpush1.msra.mxu0 %v303
    %311 = vmatprep.subr.mxu0 0.0
    %312 = vmatpush1.msra.mxu0 0.0
    %313 = vmatprep.subr.mxu0 0.0
    %314 = vmatpush1.msra.mxu0 0.0
    %315 = vmatprep.subr.mxu0 0.0
    %316 = vmatpush1.msra.mxu0 0.0
    %317 = vmatprep.subr.mxu0 0.0
    %318 = vmatpush1.msra.mxu0 0.0
    %319 = vmatprep.subr.mxu0 0.0
    %320 = vmatpush1.msra.mxu0 0.0
    %321 = vmatprep.subr.mxu0 0.0
    %322 = vmatpush1.msra.mxu0 0.0
    %323 = vmatprep.subr.mxu0 0.0
    %324 = vmatpush1.msra.mxu0 0.0
    %325 = vmatprep.subr.mxu0 0.0
    %326 = vmatpush1.msra.mxu0 0.0
    %327 = vmatprep.subr.mxu0 0.0
    %328 = vmatpush1.msra.mxu0 0.0
    %329 = vmatprep.subr.mxu0 0.0
    %330 = vmatpush1.msra.mxu0 0.0
    %331 = vmatprep.subr.mxu0 0.0
    %332 = vmatpush1.msra.mxu0 0.0
    %333 = vmatprep.subr.mxu0 0.0
    %334 = vmatpush1.msra.mxu0 0.0
    %335 = vmatprep.subr.mxu0 0.0
    %336 = vmatpush1.msra.mxu0 0.0
    %337 = vmatprep.subr.mxu0 0.0
    %338 = vmatpush1.msra.mxu0 0.0
    %339 = vmatprep.subr.mxu0 0.0
    %340 = vmatpush1.msra.mxu0 0.0
    %341 = vmatprep.subr.mxu0 0.0
    %342 = vmatpush1.msra.mxu0 0.0
    %343 = vmatprep.subr.mxu0 0.0
    %344 = vmatpush1.msra.mxu0 0.0
    %345 = vmatprep.subr.mxu0 0.0
    %346 = vmatpush1.msra.mxu0 0.0
    %347 = vmatprep.subr.mxu0 0.0
    %348 = vmatpush1.msra.mxu0 0.0
    %349 = vmatprep.subr.mxu0 0.0
    %350 = vmatpush1.msra.mxu0 0.0
    %351 = vmatprep.subr.mxu0 0.0
    %352 = vmatpush1.msra.mxu0 0.0
    %353 = vmatprep.subr.mxu0 0.0
    %354 = vmatpush1.msra.mxu0 0.0
    %355 = vmatprep.subr.mxu0 0.0
    %356 = vmatpush1.msra.mxu0 0.0
    %357 = vmatprep.subr.mxu0 0.0
    %358 = vmatpush1.msra.mxu0 0.0
    %359 = vmatprep.subr.mxu0 0.0
    %360 = vmatpush1.msra.mxu0 0.0
    %361 = vmatprep.subr.mxu0 0.0
    %362 = vmatpush1.msra.mxu0 0.0
    %363 = vmatprep.subr.mxu0 0.0
    %364 = vmatpush1.msra.mxu0 0.0
    %365 = vmatprep.subr.mxu0 0.0
    %366 = vmatpush1.msra.mxu0 0.0
    %367 = vmatprep.subr.mxu0 0.0
    %368 = vmatpush1.msra.mxu0 0.0
    %369 = vmatprep.mubr.f32.mxu0 0.0
    %370 = vmatmul.mubr.f32.gmra.mrb[0].mxu0 %v104
    %v371 = vpop.f32.mrb[0].mxu0
    %v372 = vadd.f32 0.0, %v371
    %v373 = vpop.f32.mrb[0].mxu0
    %374 = vmatprep.mubr.f32.mxu0 0.0
    %375 = vmatmul.mubr.f32.gmra.mrb[0].mxu0 %v107
    %v376 = vpop.f32.mrb[0].mxu0
    %v377 = vadd.f32 0.0, %v376
    %v378 = vpop.f32.mrb[0].mxu0
    %379 = vmatprep.mubr.f32.mxu0 0.0
    %380 = vmatmul.mubr.f32.gmra.mrb[0].mxu0 %v110
    %v381 = vpop.f32.mrb[0].mxu0
    %v382 = vadd.f32 0.0, %v381
    %v383 = vpop.f32.mrb[0].mxu0
    %384 = vmatprep.mubr.f32.mxu0 0.0
    %385 = vmatmul.mubr.f32.gmra.mrb[0].mxu0 %v113
    %v386 = vpop.f32.mrb[0].mxu0
    %v387 = vadd.f32 0.0, %v386
    %v388 = vpop.f32.mrb[0].mxu0
    %389 = vmatprep.mubr.f32.mxu0 0.0
    %390 = vmatmul.mubr.f32.gmra.mrb[0].mxu0 %v116
    %v391 = vpop.f32.mrb[0].mxu0
    %v392 = vadd.f32 0.0, %v391
    %v393 = vpop.f32.mrb[0].mxu0
    %394 = vmatprep.mubr.f32.mxu0 0.0
    %395 = vmatmul.mubr.f32.gmra.mrb[0].mxu0 %v119
    %v396 = vpop.f32.mrb[0].mxu0
    %v397 = vadd.f32 0.0, %v396
    %v398 = vpop.f32.mrb[0].mxu0
    %399 = vmatprep.mubr.f32.mxu0 0.0
    %400 = vmatmul.mubr.f32.gmra.mrb[0].mxu0 %v122
    %v401 = vpop.f32.mrb[0].mxu0
    %v402 = vadd.f32 0.0, %v401
    %v403 = vpop.f32.mrb[0].mxu0
    %404 = vmatprep.mubr.f32.mxu0 0.0
    %405 = vmatmul.mubr.f32.gmra.mrb[0].mxu0 %v125
    %v406 = vpop.f32.mrb[0].mxu0
    %v407 = vadd.f32 0.0, %v406
    %v408 = vpop.f32.mrb[0].mxu0
    %409 = vmatprep.mubr.f32.mxu0 0.0
    %410 = vmatmul.mubr.f32.gmra.mrb[0].mxu0 %v128
    %v411 = vpop.f32.mrb[0].mxu0
    %v412 = vadd.f32 0.0, %v411
    %v413 = vpop.f32.mrb[0].mxu0
    %414 = vmatprep.mubr.f32.mxu0 0.0
    %415 = vmatmul.mubr.f32.gmra.mrb[0].mxu0 %v131
    %v416 = vpop.f32.mrb[0].mxu0
    %v417 = vadd.f32 0.0, %v416
    %v418 = vpop.f32.mrb[0].mxu0
    %419 = vmatprep.mubr.f32.mxu0 0.0
    %420 = vmatmul.mubr.f32.gmra.mrb[0].mxu0 %v134
    %v421 = vpop.f32.mrb[0].mxu0
    %v422 = vadd.f32 0.0, %v421
    %v423 = vpop.f32.mrb[0].mxu0
    %424 = vmatprep.mubr.f32.mxu0 0.0
    %425 = vmatmul.mubr.f32.gmra.mrb[0].mxu0 %v137
    %v426 = vpop.f32.mrb[0].mxu0
    %v427 = vadd.f32 0.0, %v426
    %v428 = vpop.f32.mrb[0].mxu0
    %429 = vmatprep.mubr.f32.mxu0 0.0
    %430 = vmatmul.mubr.f32.gmra.mrb[0].mxu0 %v140
    %v431 = vpop.f32.mrb[0].mxu0
    %v432 = vadd.f32 0.0, %v431
    %v433 = vpop.f32.mrb[0].mxu0
    %434 = vmatprep.mubr.f32.mxu0 0.0
    %435 = vmatmul.mubr.f32.gmra.mrb[0].mxu0 %v143
    %v436 = vpop.f32.mrb[0].mxu0
    %v437 = vadd.f32 0.0, %v436
    %v438 = vpop.f32.mrb[0].mxu0
    %439 = vmatprep.mubr.f32.mxu0 0.0
    %440 = vmatmul.mubr.f32.gmra.mrb[0].mxu0 %v146
    %v441 = vpop.f32.mrb[0].mxu0
    %v442 = vadd.f32 0.0, %v441
    %v443 = vpop.f32.mrb[0].mxu0
    %444 = vmatprep.mubr.f32.mxu0 0.0
    %445 = vmatmul.mubr.f32.gmra.mrb[0].mxu0 %v149
    %v446 = vpop.f32.mrb[0].mxu0
    %v447 = vadd.f32 0.0, %v446
    %v448 = vpop.f32.mrb[0].mxu0
    %449 = vmatprep.mubr.f32.mxu0 0.0
    %450 = vmatmul.mubr.f32.gmra.mrb[0].mxu0 %v152
    %v451 = vpop.f32.mrb[0].mxu0
    %v452 = vadd.f32 0.0, %v451
    %v453 = vpop.f32.mrb[0].mxu0
    %454 = vmatprep.mubr.f32.mxu0 0.0
    %455 = vmatmul.mubr.f32.gmra.mrb[0].mxu0 %v155
    %v456 = vpop.f32.mrb[0].mxu0
    %v457 = vadd.f32 0.0, %v456
    %v458 = vpop.f32.mrb[0].mxu0
    %459 = vmatprep.mubr.f32.mxu0 0.0
    %460 = vmatmul.mubr.f32.gmra.mrb[0].mxu0 %v158
    %v461 = vpop.f32.mrb[0].mxu0
    %v462 = vadd.f32 0.0, %v461
    %v463 = vpop.f32.mrb[0].mxu0
    %464 = vmatprep.mubr.f32.mxu0 0.0
    %465 = vmatmul.mubr.f32.gmra.mrb[0].mxu0 %v161
    %v466 = vpop.f32.mrb[0].mxu0
    %v467 = vadd.f32 0.0, %v466
    %v468 = vpop.f32.mrb[0].mxu0
    %469 = vmatprep.mubr.f32.mxu0 0.0
    %470 = vmatmul.mubr.f32.gmra.mrb[0].mxu0 %v164
    %v471 = vpop.f32.mrb[0].mxu0
    %v472 = vadd.f32 0.0, %v471
    %v473 = vpop.f32.mrb[0].mxu0
    %474 = vmatprep.mubr.f32.mxu0 0.0
    %475 = vmatmul.mubr.f32.gmra.mrb[0].mxu0 %v167
    %v476 = vpop.f32.mrb[0].mxu0
    %v477 = vadd.f32 0.0, %v476
    %v478 = vpop.f32.mrb[0].mxu0
    %479 = vmatprep.mubr.f32.mxu0 0.0
    %480 = vmatmul.mubr.f32.gmra.mrb[0].mxu0 %v170
    %v481 = vpop.f32.mrb[0].mxu0
    %v482 = vadd.f32 0.0, %v481
    %v483 = vpop.f32.mrb[0].mxu0
    %484 = vmatprep.mubr.f32.mxu0 0.0
    %485 = vmatmul.mubr.f32.gmra.mrb[0].mxu0 %v173
    %v486 = vpop.f32.mrb[0].mxu0
    %v487 = vadd.f32 0.0, %v486
    %v488 = vpop.f32.mrb[0].mxu0
    %489 = vmatprep.mubr.f32.mxu0 0.0
    %490 = vmatmul.mubr.f32.gmra.mrb[0].mxu0 %v176
    %v491 = vpop.f32.mrb[0].mxu0
    %v492 = vadd.f32 0.0, %v491
    %v493 = vpop.f32.mrb[0].mxu0
    %494 = vmatprep.mubr.f32.mxu0 0.0
    %495 = vmatmul.mubr.f32.gmra.mrb[0].mxu0 %v179
    %v496 = vpop.f32.mrb[0].mxu0
    %v497 = vadd.f32 0.0, %v496
    %v498 = vpop.f32.mrb[0].mxu0
    %499 = vmatprep.mubr.f32.mxu0 0.0
    %500 = vmatmul.mubr.f32.gmra.mrb[0].mxu0 %v182
    %v501 = vpop.f32.mrb[0].mxu0
    %v502 = vadd.f32 0.0, %v501
    %v503 = vpop.f32.mrb[0].mxu0
    %504 = vmatprep.mubr.f32.mxu0 0.0
    %505 = vmatmul.mubr.f32.gmra.mrb[0].mxu0 %v185
    %v506 = vpop.f32.mrb[0].mxu0
    %v507 = vadd.f32 0.0, %v506
    %v508 = vpop.f32.mrb[0].mxu0
    %509 = vmatprep.mubr.f32.mxu0 0.0
    %510 = vmatmul.mubr.f32.gmra.mrb[0].mxu0 %v188
    %v511 = vpop.f32.mrb[0].mxu0
    %v512 = vadd.f32 0.0, %v511
    %v513 = vpop.f32.mrb[0].mxu0
    %514 = vmatprep.mubr.f32.mxu0 0.0
    %515 = vmatmul.mubr.f32.gmra.mrb[0].mxu0 %v191
    %v516 = vpop.f32.mrb[0].mxu0
    %v517 = vadd.f32 0.0, %v516
    %v518 = vpop.f32.mrb[0].mxu0
    %519 = vmatprep.mubr.f32.mxu0 0.0
    %520 = vmatmul.mubr.f32.gmra.mrb[0].mxu0 %v194
    %v521 = vpop.f32.mrb[0].mxu0
    %v522 = vadd.f32 0.0, %v521
    %v523 = vpop.f32.mrb[0].mxu0
    %524 = vmatprep.mubr.f32.mxu0 0.0
    %525 = vmatmul.mubr.f32.gmra.mrb[0].mxu0 %v197
    %v526 = vpop.f32.mrb[0].mxu0
    %v527 = vadd.f32 0.0, %v526
    %v528 = vpop.f32.mrb[0].mxu0
    %529 = vmatprep.mubr.f32.mxu0 0.0
    %530 = vmatmul.mubr.f32.gmra.mrb[0].mxu0 %v200
    %v531 = vpop.f32.mrb[0].mxu0
    %v532 = vadd.f32 0.0, %v531
    %v533 = vpop.f32.mrb[0].mxu0
    %534 = vmatprep.mubr.f32.mxu0 0.0
    %535 = vmatmul.mubr.f32.gmra.mrb[0].mxu0 %v203
    %v536 = vpop.f32.mrb[0].mxu0
    %v537 = vadd.f32 0.0, %v536
    %v538 = vpop.f32.mrb[0].mxu0
    %539 = vmatprep.mubr.f32.mxu0 0.0
    %540 = vmatmul.mubr.f32.gmra.mrb[0].mxu0 %v206
    %v541 = vpop.f32.mrb[0].mxu0
    %v542 = vadd.f32 0.0, %v541
    %v543 = vpop.f32.mrb[0].mxu0
    %544 = vmatprep.mubr.f32.mxu0 0.0
    %545 = vmatmul.mubr.f32.gmra.mrb[0].mxu0 %v209
    %v546 = vpop.f32.mrb[0].mxu0
    %v547 = vadd.f32 0.0, %v546
    %v548 = vpop.f32.mrb[0].mxu0
    %549 = vmatprep.mubr.f32.mxu0 0.0
    %550 = vmatmul.mubr.f32.gmra.mrb[0].mxu0 %v212
    %v551 = vpop.f32.mrb[0].mxu0
    %v552 = vadd.f32 0.0, %v551
    %v553 = vpop.f32.mrb[0].mxu0
    %554 = vmatprep.mubr.f32.mxu0 0.0
    %555 = vmatmul.mubr.f32.gmra.mrb[0].mxu0 %v215
    %v556 = vpop.f32.mrb[0].mxu0
    %v557 = vadd.f32 0.0, %v556
    %v558 = vpop.f32.mrb[0].mxu0
    %559 = vmatprep.mubr.f32.mxu0 0.0
    %560 = vmatmul.mubr.f32.gmra.mrb[0].mxu0 %v218
    %v561 = vpop.f32.mrb[0].mxu0
    %v562 = vadd.f32 0.0, %v561
    %v563 = vpop.f32.mrb[0].mxu0
    %564 = vmatprep.mubr.f32.mxu0 0.0
    %565 = vmatmul.mubr.f32.gmra.mrb[0].mxu0 %v221
    %v566 = vpop.f32.mrb[0].mxu0
    %v567 = vadd.f32 0.0, %v566
    %v568 = vpop.f32.mrb[0].mxu0
    %569 = vmatprep.mubr.f32.mxu0 0.0
    %570 = vmatmul.mubr.f32.gmra.mrb[0].mxu0 %v224
    %v571 = vpop.f32.mrb[0].mxu0
    %v572 = vadd.f32 0.0, %v571
    %v573 = vpop.f32.mrb[0].mxu0
    %574 = vmatprep.mubr.f32.mxu0 0.0
    %575 = vmatmul.mubr.f32.gmra.mrb[0].mxu0 %v227
    %v576 = vpop.f32.mrb[0].mxu0
    %v577 = vadd.f32 0.0, %v576
    %v578 = vpop.f32.mrb[0].mxu0
    %579 = vmatprep.mubr.f32.mxu0 0.0
    %580 = vmatmul.mubr.f32.gmra.mrb[0].mxu0 %v230
    %v581 = vpop.f32.mrb[0].mxu0
    %v582 = vadd.f32 0.0, %v581
    %v583 = vpop.f32.mrb[0].mxu0
    %584 = vmatprep.mubr.f32.mxu0 0.0
    %585 = vmatmul.mubr.f32.gmra.mrb[0].mxu0 %v233
    %v586 = vpop.f32.mrb[0].mxu0
    %v587 = vadd.f32 0.0, %v586
    %v588 = vpop.f32.mrb[0].mxu0
    %589 = vmatprep.mubr.f32.mxu0 0.0
    %590 = vmatmul.mubr.f32.gmra.mrb[0].mxu0 %v236
    %v591 = vpop.f32.mrb[0].mxu0
    %v592 = vadd.f32 0.0, %v591
    %v593 = vpop.f32.mrb[0].mxu0
    %594 = vmatprep.mubr.f32.mxu0 0.0
    %595 = vmatmul.mubr.f32.gmra.mrb[0].mxu0 %v239
    %v596 = vpop.f32.mrb[0].mxu0
    %v597 = vadd.f32 0.0, %v596
    %v598 = vpop.f32.mrb[0].mxu0
    %599 = vmatprep.mubr.f32.mxu0 0.0
    %600 = vmatmul.mubr.f32.gmra.mrb[0].mxu0 %v242
    %v601 = vpop.f32.mrb[0].mxu0
    %v602 = vadd.f32 0.0, %v601
    %v603 = vpop.f32.mrb[0].mxu0
    %604 = vmatprep.mubr.f32.mxu0 0.0
    %605 = vmatmul.mubr.f32.gmra.mrb[0].mxu0 %v245
    %v606 = vpop.f32.mrb[0].mxu0
    %v607 = vadd.f32 0.0, %v606
    %v608 = vpop.f32.mrb[0].mxu0
    %609 = vmatprep.mubr.f32.mxu0 0.0
    %610 = vmatmul.mubr.f32.gmra.mrb[0].mxu0 %v248
    %v611 = vpop.f32.mrb[0].mxu0
    %v612 = vadd.f32 0.0, %v611
    %v613 = vpop.f32.mrb[0].mxu0
    %614 = vmatprep.mubr.f32.mxu0 0.0
    %615 = vmatmul.mubr.f32.gmra.mrb[0].mxu0 %v251
    %v616 = vpop.f32.mrb[0].mxu0
    %v617 = vadd.f32 0.0, %v616
    %v618 = vpop.f32.mrb[0].mxu0
    %619 = vmatprep.mubr.f32.mxu0 0.0
    %620 = vmatmul.mubr.f32.gmra.mrb[0].mxu0 %v254
    %v621 = vpop.f32.mrb[0].mxu0
    %v622 = vadd.f32 0.0, %v621
    %v623 = vpop.f32.mrb[0].mxu0
    %624 = vmatprep.mubr.f32.mxu0 0.0
    %625 = vmatmul.mubr.f32.gmra.mrb[0].mxu0 %v257
    %v626 = vpop.f32.mrb[0].mxu0
    %v627 = vadd.f32 0.0, %v626
    %v628 = vpop.f32.mrb[0].mxu0
    %629 = vmatprep.mubr.f32.mxu0 0.0
    %630 = vmatmul.mubr.f32.gmra.mrb[0].mxu0 %v260
    %v631 = vpop.f32.mrb[0].mxu0
    %v632 = vadd.f32 0.0, %v631
    %v633 = vpop.f32.mrb[0].mxu0
    %634 = vmatprep.mubr.f32.mxu0 0.0
    %635 = vmatmul.mubr.f32.gmra.mrb[0].mxu0 %v263
    %v636 = vpop.f32.mrb[0].mxu0
    %v637 = vadd.f32 0.0, %v636
    %v638 = vpop.f32.mrb[0].mxu0
    %639 = vmatprep.mubr.f32.mxu0 0.0
    %640 = vmatmul.mubr.f32.gmra.mrb[0].mxu0 %v266
    %v641 = vpop.f32.mrb[0].mxu0
    %v642 = vadd.f32 0.0, %v641
    %v643 = vpop.f32.mrb[0].mxu0
    %644 = vmatprep.mubr.f32.mxu0 0.0
    %645 = vmatmul.mubr.f32.gmra.mrb[0].mxu0 %v269
    %v646 = vpop.f32.mrb[0].mxu0
    %v647 = vadd.f32 0.0, %v646
    %v648 = vpop.f32.mrb[0].mxu0
    %649 = vmatprep.mubr.f32.mxu0 0.0
    %650 = vmatmul.mubr.f32.gmra.mrb[0].mxu0 %v272
    %v651 = vpop.f32.mrb[0].mxu0
    %v652 = vadd.f32 0.0, %v651
    %v653 = vpop.f32.mrb[0].mxu0
    %654 = vmatprep.mubr.f32.mxu0 0.0
    %655 = vmatmul.mubr.f32.gmra.mrb[0].mxu0 %v275
    %v656 = vpop.f32.mrb[0].mxu0
    %v657 = vadd.f32 0.0, %v656
    %v658 = vpop.f32.mrb[0].mxu0
    %659 = vmatprep.mubr.f32.mxu0 0.0
    %660 = vmatmul.mubr.f32.gmra.mrb[0].mxu0 %v278
    %v661 = vpop.f32.mrb[0].mxu0
    %v662 = vadd.f32 0.0, %v661
    %v663 = vpop.f32.mrb[0].mxu0
    %664 = vmatprep.mubr.f32.mxu0 0.0
    %665 = vmatmul.mubr.f32.gmra.mrb[0].mxu0 %v281
    %v666 = vpop.f32.mrb[0].mxu0
    %v667 = vadd.f32 0.0, %v666
    %v668 = vpop.f32.mrb[0].mxu0
    %669 = vmatprep.mubr.f32.mxu0 0.0
    %670 = vmatmul.mubr.f32.gmra.mrb[0].mxu0 %v284
    %v671 = vpop.f32.mrb[0].mxu0
    %v672 = vadd.f32 0.0, %v671
    %v673 = vpop.f32.mrb[0].mxu0
    %674 = vmatprep.mubr.f32.mxu0 0.0
    %675 = vmatmul.mubr.f32.gmra.mrb[0].mxu0 %v287
    %v676 = vpop.f32.mrb[0].mxu0
    %v677 = vadd.f32 0.0, %v676
    %v678 = vpop.f32.mrb[0].mxu0
    %679 = vmatprep.mubr.f32.mxu0 0.0
    %680 = vmatmul.mubr.f32.gmra.mrb[0].mxu0 %v290
    %v681 = vpop.f32.mrb[0].mxu0
    %v682 = vadd.f32 0.0, %v681
    %v683 = vpop.f32.mrb[0].mxu0
    %684 = vmatprep.mubr.f32.mxu0 0.0
    %685 = vmatmul.mubr.f32.gmra.mrb[0].mxu0 %v293
    %v686 = vpop.f32.mrb[0].mxu0
    %v687 = vadd.f32 0.0, %v686
    %v688 = vpop.f32.mrb[0].mxu0
    %689 = vmatprep.mubr.f32.mxu0 0.0
    %690 = vmatmul.mubr.f32.gmra.mrb[0].mxu0 %v296
    %v691 = vpop.f32.mrb[0].mxu0
    %v692 = vadd.f32 0.0, %v691
    %v693 = vpop.f32.mrb[0].mxu0
    %694 = vmatprep.mubr.f32.mxu0 0.0
    %695 = vmatmul.mubr.f32.gmra.mrb[0].mxu0 %v299
    %v696 = vpop.f32.mrb[0].mxu0
    %v697 = vadd.f32 0.0, %v696
    %v698 = vpop.f32.mrb[0].mxu0
    %699 = vdwg.mxu0
    %766 = vrot.lane.b32.xlu0 %v372, 96
    %v767 = vpop.permute.xlu0 %766
    %768 = vrot.lane.b32.xlu0 %v377, 96
    %v769 = vpop.permute.xlu0 %768
    %770 = vrot.lane.b32.xlu0 %v382, 96
    %v771 = vpop.permute.xlu0 %770
    %772 = vrot.lane.b32.xlu0 %v387, 96
    %v773 = vpop.permute.xlu0 %772
    %774 = vrot.lane.b32.xlu0 %v392, 96
    %v775 = vpop.permute.xlu0 %774
    %776 = vrot.lane.b32.xlu0 %v397, 96
    %v777 = vpop.permute.xlu0 %776
    %778 = vrot.lane.b32.xlu0 %v402, 96
    %v779 = vpop.permute.xlu0 %778
    %780 = vrot.lane.b32.xlu0 %v407, 96
    %v781 = vpop.permute.xlu0 %780
    %782 = vrot.lane.b32.xlu0 %v412, 96
    %v783 = vpop.permute.xlu0 %782
    %784 = vrot.lane.b32.xlu0 %v417, 96
    %v785 = vpop.permute.xlu0 %784
    %786 = vrot.lane.b32.xlu0 %v422, 96
    %v787 = vpop.permute.xlu0 %786
    %788 = vrot.lane.b32.xlu0 %v427, 96
    %v789 = vpop.permute.xlu0 %788
    %790 = vrot.lane.b32.xlu0 %v432, 96
    %v791 = vpop.permute.xlu0 %790
    %792 = vrot.lane.b32.xlu0 %v437, 96
    %v793 = vpop.permute.xlu0 %792
    %794 = vrot.lane.b32.xlu0 %v442, 96
    %v795 = vpop.permute.xlu0 %794
    %796 = vrot.lane.b32.xlu0 %v447, 96
    %v797 = vpop.permute.xlu0 %796
    %798 = vrot.lane.b32.xlu0 %v452, 96
    %v799 = vpop.permute.xlu0 %798
    %800 = vrot.lane.b32.xlu0 %v457, 96
    %v801 = vpop.permute.xlu0 %800
    %802 = vrot.lane.b32.xlu0 %v462, 96
    %v803 = vpop.permute.xlu0 %802
    %804 = vrot.lane.b32.xlu0 %v467, 96
    %v805 = vpop.permute.xlu0 %804
    %806 = vrot.lane.b32.xlu0 %v472, 96
    %v807 = vpop.permute.xlu0 %806
    %808 = vrot.lane.b32.xlu0 %v477, 96
    %v809 = vpop.permute.xlu0 %808
    %810 = vrot.lane.b32.xlu0 %v482, 96
    %v811 = vpop.permute.xlu0 %810
    %812 = vrot.lane.b32.xlu0 %v487, 96
    %v813 = vpop.permute.xlu0 %812
    %814 = vrot.lane.b32.xlu0 %v492, 96
    %v815 = vpop.permute.xlu0 %814
    %816 = vrot.lane.b32.xlu0 %v497, 96
    %v817 = vpop.permute.xlu0 %816
    %818 = vrot.lane.b32.xlu0 %v502, 96
    %v819 = vpop.permute.xlu0 %818
    %820 = vrot.lane.b32.xlu0 %v507, 96
    %v821 = vpop.permute.xlu0 %820
    %822 = vrot.lane.b32.xlu0 %v512, 96
    %v823 = vpop.permute.xlu0 %822
    %824 = vrot.lane.b32.xlu0 %v517, 96
    %v825 = vpop.permute.xlu0 %824
    %826 = vrot.lane.b32.xlu0 %v522, 96
    %v827 = vpop.permute.xlu0 %826
    %828 = vrot.lane.b32.xlu0 %v527, 96
    %v829 = vpop.permute.xlu0 %828
    %830 = vrot.lane.b32.xlu0 %v532, 96
    %v831 = vpop.permute.xlu0 %830
    %832 = vrot.lane.b32.xlu0 %v537, 96
    %v833 = vpop.permute.xlu0 %832
    %834 = vrot.lane.b32.xlu0 %v542, 96
    %v835 = vpop.permute.xlu0 %834
    %836 = vrot.lane.b32.xlu0 %v547, 96
    %v837 = vpop.permute.xlu0 %836
    %838 = vrot.lane.b32.xlu0 %v552, 96
    %v839 = vpop.permute.xlu0 %838
    %840 = vrot.lane.b32.xlu0 %v557, 96
    %v841 = vpop.permute.xlu0 %840
    %842 = vrot.lane.b32.xlu0 %v562, 96
    %v843 = vpop.permute.xlu0 %842
    %844 = vrot.lane.b32.xlu0 %v567, 96
    %v845 = vpop.permute.xlu0 %844
    %846 = vrot.lane.b32.xlu0 %v572, 96
    %v847 = vpop.permute.xlu0 %846
    %848 = vrot.lane.b32.xlu0 %v577, 96
    %v849 = vpop.permute.xlu0 %848
    %850 = vrot.lane.b32.xlu0 %v582, 96
    %v851 = vpop.permute.xlu0 %850
    %852 = vrot.lane.b32.xlu0 %v587, 96
    %v853 = vpop.permute.xlu0 %852
    %854 = vrot.lane.b32.xlu0 %v592, 96
    %v855 = vpop.permute.xlu0 %854
    %856 = vrot.lane.b32.xlu0 %v597, 96
    %v857 = vpop.permute.xlu0 %856
    %858 = vrot.lane.b32.xlu0 %v602, 96
    %v859 = vpop.permute.xlu0 %858
    %860 = vrot.lane.b32.xlu0 %v607, 96
    %v861 = vpop.permute.xlu0 %860
    %862 = vrot.lane.b32.xlu0 %v612, 96
    %v863 = vpop.permute.xlu0 %862
    %864 = vrot.lane.b32.xlu0 %v617, 96
    %v865 = vpop.permute.xlu0 %864
    %866 = vrot.lane.b32.xlu0 %v622, 96
    %v867 = vpop.permute.xlu0 %866
    %868 = vrot.lane.b32.xlu0 %v627, 96
    %v869 = vpop.permute.xlu0 %868
    %870 = vrot.lane.b32.xlu0 %v632, 96
    %v871 = vpop.permute.xlu0 %870
    %872 = vrot.lane.b32.xlu0 %v637, 96
    %v873 = vpop.permute.xlu0 %872
    %874 = vrot.lane.b32.xlu0 %v642, 96
    %v875 = vpop.permute.xlu0 %874
    %876 = vrot.lane.b32.xlu0 %v647, 96
    %v877 = vpop.permute.xlu0 %876
    %878 = vrot.lane.b32.xlu0 %v652, 96
    %v879 = vpop.permute.xlu0 %878
    %880 = vrot.lane.b32.xlu0 %v657, 96
    %v881 = vpop.permute.xlu0 %880
    %882 = vrot.lane.b32.xlu0 %v662, 96
    %v883 = vpop.permute.xlu0 %882
    %884 = vrot.lane.b32.xlu0 %v667, 96
    %v885 = vpop.permute.xlu0 %884
    %886 = vrot.lane.b32.xlu0 %v672, 96
    %v887 = vpop.permute.xlu0 %886
    %888 = vrot.lane.b32.xlu0 %v677, 96
    %v889 = vpop.permute.xlu0 %888
    %890 = vrot.lane.b32.xlu0 %v682, 96
    %v891 = vpop.permute.xlu0 %890
    %892 = vrot.lane.b32.xlu0 %v687, 96
    %v893 = vpop.permute.xlu0 %892
    %894 = vrot.lane.b32.xlu0 %v692, 96
    %v895 = vpop.permute.xlu0 %894
    %896 = vrot.lane.b32.xlu0 %v697, 96
    %v897 = vpop.permute.xlu0 %896
    %v964 = vmax.f32 %v372, %v767
    %v965 = vmax.f32 %v377, %v769
    %v966 = vmax.f32 %v382, %v771
    %v967 = vmax.f32 %v387, %v773
    %v968 = vmax.f32 %v392, %v775
    %v969 = vmax.f32 %v397, %v777
    %v970 = vmax.f32 %v402, %v779
    %v971 = vmax.f32 %v407, %v781
    %v972 = vmax.f32 %v412, %v783
    %v973 = vmax.f32 %v417, %v785
    %v974 = vmax.f32 %v422, %v787
    %v975 = vmax.f32 %v427, %v789
    %v976 = vmax.f32 %v432, %v791
    %v977 = vmax.f32 %v437, %v793
    %v978 = vmax.f32 %v442, %v795
    %v979 = vmax.f32 %v447, %v797
    %v980 = vmax.f32 %v452, %v799
    %v981 = vmax.f32 %v457, %v801
    %v982 = vmax.f32 %v462, %v803
    %v983 = vmax.f32 %v467, %v805
    %v984 = vmax.f32 %v472, %v807
    %v985 = vmax.f32 %v477, %v809
    %v986 = vmax.f32 %v482, %v811
    %v987 = vmax.f32 %v487, %v813
    %v988 = vmax.f32 %v492, %v815
    %v989 = vmax.f32 %v497, %v817
    %v990 = vmax.f32 %v502, %v819
    %v991 = vmax.f32 %v507, %v821
    %v992 = vmax.f32 %v512, %v823
    %v993 = vmax.f32 %v517, %v825
    %v994 = vmax.f32 %v522, %v827
    %v995 = vmax.f32 %v527, %v829
    %v996 = vmax.f32 %v532, %v831
    %v997 = vmax.f32 %v537, %v833
    %v998 = vmax.f32 %v542, %v835
    %v999 = vmax.f32 %v547, %v837
    %v1000 = vmax.f32 %v552, %v839
    %v1001 = vmax.f32 %v557, %v841
    %v1002 = vmax.f32 %v562, %v843
    %v1003 = vmax.f32 %v567, %v845
    %v1004 = vmax.f32 %v572, %v847
    %v1005 = vmax.f32 %v577, %v849
    %v1006 = vmax.f32 %v582, %v851
    %v1007 = vmax.f32 %v587, %v853
    %v1008 = vmax.f32 %v592, %v855
    %v1009 = vmax.f32 %v597, %v857
    %v1010 = vmax.f32 %v602, %v859
    %v1011 = vmax.f32 %v607, %v861
    %v1012 = vmax.f32 %v612, %v863
    %v1013 = vmax.f32 %v617, %v865
    %v1014 = vmax.f32 %v622, %v867
    %v1015 = vmax.f32 %v627, %v869
    %v1016 = vmax.f32 %v632, %v871
    %v1017 = vmax.f32 %v637, %v873
    %v1018 = vmax.f32 %v642, %v875
    %v1019 = vmax.f32 %v647, %v877
    %v1020 = vmax.f32 %v652, %v879
    %v1021 = vmax.f32 %v657, %v881
    %v1022 = vmax.f32 %v662, %v883
    %v1023 = vmax.f32 %v667, %v885
    %v1024 = vmax.f32 %v672, %v887
    %v1025 = vmax.f32 %v677, %v889
    %v1026 = vmax.f32 %v682, %v891
    %v1027 = vmax.f32 %v687, %v893
    %v1028 = vmax.f32 %v692, %v895
    %v1029 = vmax.f32 %v697, %v897
    %1096 = vrot.lane.b32.xlu0 %v964, 64
    %v1097 = vpop.permute.xlu0 %1096
    %1098 = vrot.lane.b32.xlu0 %v965, 64
    %v1099 = vpop.permute.xlu0 %1098
    %1100 = vrot.lane.b32.xlu0 %v966, 64
    %v1101 = vpop.permute.xlu0 %1100
    %1102 = vrot.lane.b32.xlu0 %v967, 64
    %v1103 = vpop.permute.xlu0 %1102
    %1104 = vrot.lane.b32.xlu0 %v968, 64
    %v1105 = vpop.permute.xlu0 %1104
    %1106 = vrot.lane.b32.xlu0 %v969, 64
    %v1107 = vpop.permute.xlu0 %1106
    %1108 = vrot.lane.b32.xlu0 %v970, 64
    %v1109 = vpop.permute.xlu0 %1108
    %1110 = vrot.lane.b32.xlu0 %v971, 64
    %v1111 = vpop.permute.xlu0 %1110
    %1112 = vrot.lane.b32.xlu0 %v972, 64
    %v1113 = vpop.permute.xlu0 %1112
    %1114 = vrot.lane.b32.xlu0 %v973, 64
    %v1115 = vpop.permute.xlu0 %1114
    %1116 = vrot.lane.b32.xlu0 %v974, 64
    %v1117 = vpop.permute.xlu0 %1116
    %1118 = vrot.lane.b32.xlu0 %v975, 64
    %v1119 = vpop.permute.xlu0 %1118
    %1120 = vrot.lane.b32.xlu0 %v976, 64
    %v1121 = vpop.permute.xlu0 %1120
    %1122 = vrot.lane.b32.xlu0 %v977, 64
    %v1123 = vpop.permute.xlu0 %1122
    %1124 = vrot.lane.b32.xlu0 %v978, 64
    %v1125 = vpop.permute.xlu0 %1124
    %1126 = vrot.lane.b32.xlu0 %v979, 64
    %v1127 = vpop.permute.xlu0 %1126
    %1128 = vrot.lane.b32.xlu0 %v980, 64
    %v1129 = vpop.permute.xlu0 %1128
    %1130 = vrot.lane.b32.xlu0 %v981, 64
    %v1131 = vpop.permute.xlu0 %1130
    %1132 = vrot.lane.b32.xlu0 %v982, 64
    %v1133 = vpop.permute.xlu0 %1132
    %1134 = vrot.lane.b32.xlu0 %v983, 64
    %v1135 = vpop.permute.xlu0 %1134
    %1136 = vrot.lane.b32.xlu0 %v984, 64
    %v1137 = vpop.permute.xlu0 %1136
    %1138 = vrot.lane.b32.xlu0 %v985, 64
    %v1139 = vpop.permute.xlu0 %1138
    %1140 = vrot.lane.b32.xlu0 %v986, 64
    %v1141 = vpop.permute.xlu0 %1140
    %1142 = vrot.lane.b32.xlu0 %v987, 64
    %v1143 = vpop.permute.xlu0 %1142
    %1144 = vrot.lane.b32.xlu0 %v988, 64
    %v1145 = vpop.permute.xlu0 %1144
    %1146 = vrot.lane.b32.xlu0 %v989, 64
    %v1147 = vpop.permute.xlu0 %1146
    %1148 = vrot.lane.b32.xlu0 %v990, 64
    %v1149 = vpop.permute.xlu0 %1148
    %1150 = vrot.lane.b32.xlu0 %v991, 64
    %v1151 = vpop.permute.xlu0 %1150
    %1152 = vrot.lane.b32.xlu0 %v992, 64
    %v1153 = vpop.permute.xlu0 %1152
    %1154 = vrot.lane.b32.xlu0 %v993, 64
    %v1155 = vpop.permute.xlu0 %1154
    %1156 = vrot.lane.b32.xlu0 %v994, 64
    %v1157 = vpop.permute.xlu0 %1156
    %1158 = vrot.lane.b32.xlu0 %v995, 64
    %v1159 = vpop.permute.xlu0 %1158
    %1160 = vrot.lane.b32.xlu0 %v996, 64
    %v1161 = vpop.permute.xlu0 %1160
    %1162 = vrot.lane.b32.xlu0 %v997, 64
    %v1163 = vpop.permute.xlu0 %1162
    %1164 = vrot.lane.b32.xlu0 %v998, 64
    %v1165 = vpop.permute.xlu0 %1164
    %1166 = vrot.lane.b32.xlu0 %v999, 64
    %v1167 = vpop.permute.xlu0 %1166
    %1168 = vrot.lane.b32.xlu0 %v1000, 64
    %v1169 = vpop.permute.xlu0 %1168
    %1170 = vrot.lane.b32.xlu0 %v1001, 64
    %v1171 = vpop.permute.xlu0 %1170
    %1172 = vrot.lane.b32.xlu0 %v1002, 64
    %v1173 = vpop.permute.xlu0 %1172
    %1174 = vrot.lane.b32.xlu0 %v1003, 64
    %v1175 = vpop.permute.xlu0 %1174
    %1176 = vrot.lane.b32.xlu0 %v1004, 64
    %v1177 = vpop.permute.xlu0 %1176
    %1178 = vrot.lane.b32.xlu0 %v1005, 64
    %v1179 = vpop.permute.xlu0 %1178
    %1180 = vrot.lane.b32.xlu0 %v1006, 64
    %v1181 = vpop.permute.xlu0 %1180
    %1182 = vrot.lane.b32.xlu0 %v1007, 64
    %v1183 = vpop.permute.xlu0 %1182
    %1184 = vrot.lane.b32.xlu0 %v1008, 64
    %v1185 = vpop.permute.xlu0 %1184
    %1186 = vrot.lane.b32.xlu0 %v1009, 64
    %v1187 = vpop.permute.xlu0 %1186
    %1188 = vrot.lane.b32.xlu0 %v1010, 64
    %v1189 = vpop.permute.xlu0 %1188
    %1190 = vrot.lane.b32.xlu0 %v1011, 64
    %v1191 = vpop.permute.xlu0 %1190
    %1192 = vrot.lane.b32.xlu0 %v1012, 64
    %v1193 = vpop.permute.xlu0 %1192
    %1194 = vrot.lane.b32.xlu0 %v1013, 64
    %v1195 = vpop.permute.xlu0 %1194
    %1196 = vrot.lane.b32.xlu0 %v1014, 64
    %v1197 = vpop.permute.xlu0 %1196
    %1198 = vrot.lane.b32.xlu0 %v1015, 64
    %v1199 = vpop.permute.xlu0 %1198
    %1200 = vrot.lane.b32.xlu0 %v1016, 64
    %v1201 = vpop.permute.xlu0 %1200
    %1202 = vrot.lane.b32.xlu0 %v1017, 64
    %v1203 = vpop.permute.xlu0 %1202
    %1204 = vrot.lane.b32.xlu0 %v1018, 64
    %v1205 = vpop.permute.xlu0 %1204
    %1206 = vrot.lane.b32.xlu0 %v1019, 64
    %v1207 = vpop.permute.xlu0 %1206
    %1208 = vrot.lane.b32.xlu0 %v1020, 64
    %v1209 = vpop.permute.xlu0 %1208
    %1210 = vrot.lane.b32.xlu0 %v1021, 64
    %v1211 = vpop.permute.xlu0 %1210
    %1212 = vrot.lane.b32.xlu0 %v1022, 64
    %v1213 = vpop.permute.xlu0 %1212
    %1214 = vrot.lane.b32.xlu0 %v1023, 64
    %v1215 = vpop.permute.xlu0 %1214
    %1216 = vrot.lane.b32.xlu0 %v1024, 64
    %v1217 = vpop.permute.xlu0 %1216
    %1218 = vrot.lane.b32.xlu0 %v1025, 64
    %v1219 = vpop.permute.xlu0 %1218
    %1220 = vrot.lane.b32.xlu0 %v1026, 64
    %v1221 = vpop.permute.xlu0 %1220
    %1222 = vrot.lane.b32.xlu0 %v1027, 64
    %v1223 = vpop.permute.xlu0 %1222
    %1224 = vrot.lane.b32.xlu0 %v1028, 64
    %v1225 = vpop.permute.xlu0 %1224
    %1226 = vrot.lane.b32.xlu0 %v1029, 64
    %v1227 = vpop.permute.xlu0 %1226
    %v1294 = vmax.f32 %v964, %v1097
    %v1295 = vmax.f32 %v965, %v1099
    %v1296 = vmax.f32 %v966, %v1101
    %v1297 = vmax.f32 %v967, %v1103
    %v1298 = vmax.f32 %v968, %v1105
    %v1299 = vmax.f32 %v969, %v1107
    %v1300 = vmax.f32 %v970, %v1109
    %v1301 = vmax.f32 %v971, %v1111
    %v1302 = vmax.f32 %v972, %v1113
    %v1303 = vmax.f32 %v973, %v1115
    %v1304 = vmax.f32 %v974, %v1117
    %v1305 = vmax.f32 %v975, %v1119
    %v1306 = vmax.f32 %v976, %v1121
    %v1307 = vmax.f32 %v977, %v1123
    %v1308 = vmax.f32 %v978, %v1125
    %v1309 = vmax.f32 %v979, %v1127
    %v1310 = vmax.f32 %v980, %v1129
    %v1311 = vmax.f32 %v981, %v1131
    %v1312 = vmax.f32 %v982, %v1133
    %v1313 = vmax.f32 %v983, %v1135
    %v1314 = vmax.f32 %v984, %v1137
    %v1315 = vmax.f32 %v985, %v1139
    %v1316 = vmax.f32 %v986, %v1141
    %v1317 = vmax.f32 %v987, %v1143
    %v1318 = vmax.f32 %v988, %v1145
    %v1319 = vmax.f32 %v989, %v1147
    %v1320 = vmax.f32 %v990, %v1149
    %v1321 = vmax.f32 %v991, %v1151
    %v1322 = vmax.f32 %v992, %v1153
    %v1323 = vmax.f32 %v993, %v1155
    %v1324 = vmax.f32 %v994, %v1157
    %v1325 = vmax.f32 %v995, %v1159
    %v1326 = vmax.f32 %v996, %v1161
    %v1327 = vmax.f32 %v997, %v1163
    %v1328 = vmax.f32 %v998, %v1165
    %v1329 = vmax.f32 %v999, %v1167
    %v1330 = vmax.f32 %v1000, %v1169
    %v1331 = vmax.f32 %v1001, %v1171
    %v1332 = vmax.f32 %v1002, %v1173
    %v1333 = vmax.f32 %v1003, %v1175
    %v1334 = vmax.f32 %v1004, %v1177
    %v1335 = vmax.f32 %v1005, %v1179
    %v1336 = vmax.f32 %v1006, %v1181
    %v1337 = vmax.f32 %v1007, %v1183
    %v1338 = vmax.f32 %v1008, %v1185
    %v1339 = vmax.f32 %v1009, %v1187
    %v1340 = vmax.f32 %v1010, %v1189
    %v1341 = vmax.f32 %v1011, %v1191
    %v1342 = vmax.f32 %v1012, %v1193
    %v1343 = vmax.f32 %v1013, %v1195
    %v1344 = vmax.f32 %v1014, %v1197
    %v1345 = vmax.f32 %v1015, %v1199
    %v1346 = vmax.f32 %v1016, %v1201
    %v1347 = vmax.f32 %v1017, %v1203
    %v1348 = vmax.f32 %v1018, %v1205
    %v1349 = vmax.f32 %v1019, %v1207
    %v1350 = vmax.f32 %v1020, %v1209
    %v1351 = vmax.f32 %v1021, %v1211
    %v1352 = vmax.f32 %v1022, %v1213
    %v1353 = vmax.f32 %v1023, %v1215
    %v1354 = vmax.f32 %v1024, %v1217
    %v1355 = vmax.f32 %v1025, %v1219
    %v1356 = vmax.f32 %v1026, %v1221
    %v1357 = vmax.f32 %v1027, %v1223
    %v1358 = vmax.f32 %v1028, %v1225
    %v1359 = vmax.f32 %v1029, %v1227
    %v1360 = vmax.f32 %v1294, 0.0
    %v1361 = vmax.f32 %v1295, 0.0
    %v1362 = vmax.f32 %v1296, 0.0
    %v1363 = vmax.f32 %v1297, 0.0
    %v1364 = vmax.f32 %v1298, 0.0
    %v1365 = vmax.f32 %v1299, 0.0
    %v1366 = vmax.f32 %v1300, 0.0
    %v1367 = vmax.f32 %v1301, 0.0
    %v1368 = vmax.f32 %v1302, 0.0
    %v1369 = vmax.f32 %v1303, 0.0
    %v1370 = vmax.f32 %v1304, 0.0
    %v1371 = vmax.f32 %v1305, 0.0
    %v1372 = vmax.f32 %v1306, 0.0
    %v1373 = vmax.f32 %v1307, 0.0
    %v1374 = vmax.f32 %v1308, 0.0
    %v1375 = vmax.f32 %v1309, 0.0
    %v1376 = vmax.f32 %v1310, 0.0
    %v1377 = vmax.f32 %v1311, 0.0
    %v1378 = vmax.f32 %v1312, 0.0
    %v1379 = vmax.f32 %v1313, 0.0
    %v1380 = vmax.f32 %v1314, 0.0
    %v1381 = vmax.f32 %v1315, 0.0
    %v1382 = vmax.f32 %v1316, 0.0
    %v1383 = vmax.f32 %v1317, 0.0
    %v1384 = vmax.f32 %v1318, 0.0
    %v1385 = vmax.f32 %v1319, 0.0
    %v1386 = vmax.f32 %v1320, 0.0
    %v1387 = vmax.f32 %v1321, 0.0
    %v1388 = vmax.f32 %v1322, 0.0
    %v1389 = vmax.f32 %v1323, 0.0
    %v1390 = vmax.f32 %v1324, 0.0
    %v1391 = vmax.f32 %v1325, 0.0
    %v1392 = vmax.f32 %v1326, 0.0
    %v1393 = vmax.f32 %v1327, 0.0
    %v1394 = vmax.f32 %v1328, 0.0
    %v1395 = vmax.f32 %v1329, 0.0
    %v1396 = vmax.f32 %v1330, 0.0
    %v1397 = vmax.f32 %v1331, 0.0
    %v1398 = vmax.f32 %v1332, 0.0
    %v1399 = vmax.f32 %v1333, 0.0
    %v1400 = vmax.f32 %v1334, 0.0
    %v1401 = vmax.f32 %v1335, 0.0
    %v1402 = vmax.f32 %v1336, 0.0
    %v1403 = vmax.f32 %v1337, 0.0
    %v1404 = vmax.f32 %v1338, 0.0
    %v1405 = vmax.f32 %v1339, 0.0
    %v1406 = vmax.f32 %v1340, 0.0
    %v1407 = vmax.f32 %v1341, 0.0
    %v1408 = vmax.f32 %v1342, 0.0
    %v1409 = vmax.f32 %v1343, 0.0
    %v1410 = vmax.f32 %v1344, 0.0
    %v1411 = vmax.f32 %v1345, 0.0
    %v1412 = vmax.f32 %v1346, 0.0
    %v1413 = vmax.f32 %v1347, 0.0
    %v1414 = vmax.f32 %v1348, 0.0
    %v1415 = vmax.f32 %v1349, 0.0
    %v1416 = vmax.f32 %v1350, 0.0
    %v1417 = vmax.f32 %v1351, 0.0
    %v1418 = vmax.f32 %v1352, 0.0
    %v1419 = vmax.f32 %v1353, 0.0
    %v1420 = vmax.f32 %v1354, 0.0
    %v1421 = vmax.f32 %v1355, 0.0
    %v1422 = vmax.f32 %v1356, 0.0
    %v1423 = vmax.f32 %v1357, 0.0
    %v1424 = vmax.f32 %v1358, 0.0
    %v1425 = vmax.f32 %v1359, 0.0
    %vm1426 = vcmask 261120
    %1427 = vst.msk [vmem:[#allocation2] sm:$0xff] %vm1426, %v1360
    %1428 = vst.msk [vmem:[#allocation2 + $0x18] sm:$0xff] %vm1426, %v1361
    %1429 = vst.msk [vmem:[#allocation2 + $0x30] sm:$0xff] %vm1426, %v1362
    %1430 = vst.msk [vmem:[#allocation2 + $0x48] sm:$0xff] %vm1426, %v1363
    %1431 = vst.msk [vmem:[#allocation2 + $0x60] sm:$0xff] %vm1426, %v1364
    %1432 = vst.msk [vmem:[#allocation2 + $0x78] sm:$0xff] %vm1426, %v1365
    %1433 = vst.msk [vmem:[#allocation2 + $0x90] sm:$0xff] %vm1426, %v1366
    %1434 = vst.msk [vmem:[#allocation2 + $0xa8] sm:$0xff] %vm1426, %v1367
    %1435 = vst.msk [vmem:[#allocation2 + $0xc0] sm:$0xff] %vm1426, %v1368
    %1436 = vst.msk [vmem:[#allocation2 + $0xd8] sm:$0xff] %vm1426, %v1369
    %1437 = vst.msk [vmem:[#allocation2 + $0xf0] sm:$0xff] %vm1426, %v1370
    %1438 = vst.msk [vmem:[#allocation2 + $0x108] sm:$0xff] %vm1426, %v1371
    %1439 = vst.msk [vmem:[#allocation2 + $0x120] sm:$0xff] %vm1426, %v1372
    %1440 = vst.msk [vmem:[#allocation2 + $0x138] sm:$0xff] %vm1426, %v1373
    %1441 = vst.msk [vmem:[#allocation2 + $0x150] sm:$0xff] %vm1426, %v1374
    %1442 = vst.msk [vmem:[#allocation2 + $0x168] sm:$0xff] %vm1426, %v1375
    %1443 = vst.msk [vmem:[#allocation2 + $0x180] sm:$0xff] %vm1426, %v1376
    %1444 = vst.msk [vmem:[#allocation2 + $0x198] sm:$0xff] %vm1426, %v1377
    %1445 = vst.msk [vmem:[#allocation2 + $0x1b0] sm:$0xff] %vm1426, %v1378
    %1446 = vst.msk [vmem:[#allocation2 + $0x1c8] sm:$0xff] %vm1426, %v1379
    %1447 = vst.msk [vmem:[#allocation2 + $0x1e0] sm:$0xff] %vm1426, %v1380
    %1448 = vst.msk [vmem:[#allocation2 + $0x1f8] sm:$0xff] %vm1426, %v1381
    %1449 = vst.msk [vmem:[#allocation2 + $0x210] sm:$0xff] %vm1426, %v1382
    %1450 = vst.msk [vmem:[#allocation2 + $0x228] sm:$0xff] %vm1426, %v1383
    %1451 = vst.msk [vmem:[#allocation2 + $0x240] sm:$0xff] %vm1426, %v1384
    %1452 = vst.msk [vmem:[#allocation2 + $0x258] sm:$0xff] %vm1426, %v1385
    %1453 = vst.msk [vmem:[#allocation2 + $0x270] sm:$0xff] %vm1426, %v1386
    %1454 = vst.msk [vmem:[#allocation2 + $0x288] sm:$0xff] %vm1426, %v1387
    %1455 = vst.msk [vmem:[#allocation2 + $0x2a0] sm:$0xff] %vm1426, %v1388
    %1456 = vst.msk [vmem:[#allocation2 + $0x2b8] sm:$0xff] %vm1426, %v1389
    %1457 = vst.msk [vmem:[#allocation2 + $0x2d0] sm:$0xff] %vm1426, %v1390
    %1458 = vst.msk [vmem:[#allocation2 + $0x2e8] sm:$0xff] %vm1426, %v1391
    %1459 = vst.msk [vmem:[#allocation2 + $0x300] sm:$0xff] %vm1426, %v1392
    %1460 = vst.msk [vmem:[#allocation2 + $0x318] sm:$0xff] %vm1426, %v1393
    %1461 = vst.msk [vmem:[#allocation2 + $0x330] sm:$0xff] %vm1426, %v1394
    %1462 = vst.msk [vmem:[#allocation2 + $0x348] sm:$0xff] %vm1426, %v1395
    %1463 = vst.msk [vmem:[#allocation2 + $0x360] sm:$0xff] %vm1426, %v1396
    %1464 = vst.msk [vmem:[#allocation2 + $0x378] sm:$0xff] %vm1426, %v1397
    %1465 = vst.msk [vmem:[#allocation2 + $0x390] sm:$0xff] %vm1426, %v1398
    %1466 = vst.msk [vmem:[#allocation2 + $0x3a8] sm:$0xff] %vm1426, %v1399
    %1467 = vst.msk [vmem:[#allocation2 + $0x3c0] sm:$0xff] %vm1426, %v1400
    %1468 = vst.msk [vmem:[#allocation2 + $0x3d8] sm:$0xff] %vm1426, %v1401
    %1469 = vst.msk [vmem:[#allocation2 + $0x3f0] sm:$0xff] %vm1426, %v1402
    %1470 = vst.msk [vmem:[#allocation2 + $0x408] sm:$0xff] %vm1426, %v1403
    %1471 = vst.msk [vmem:[#allocation2 + $0x420] sm:$0xff] %vm1426, %v1404
    %1472 = vst.msk [vmem:[#allocation2 + $0x438] sm:$0xff] %vm1426, %v1405
    %1473 = vst.msk [vmem:[#allocation2 + $0x450] sm:$0xff] %vm1426, %v1406
    %1474 = vst.msk [vmem:[#allocation2 + $0x468] sm:$0xff] %vm1426, %v1407
    %1475 = vst.msk [vmem:[#allocation2 + $0x480] sm:$0xff] %vm1426, %v1408
    %1476 = vst.msk [vmem:[#allocation2 + $0x498] sm:$0xff] %vm1426, %v1409
    %1477 = vst.msk [vmem:[#allocation2 + $0x4b0] sm:$0xff] %vm1426, %v1410
    %1478 = vst.msk [vmem:[#allocation2 + $0x4c8] sm:$0xff] %vm1426, %v1411
    %1479 = vst.msk [vmem:[#allocation2 + $0x4e0] sm:$0xff] %vm1426, %v1412
    %1480 = vst.msk [vmem:[#allocation2 + $0x4f8] sm:$0xff] %vm1426, %v1413
    %1481 = vst.msk [vmem:[#allocation2 + $0x510] sm:$0xff] %vm1426, %v1414
    %1482 = vst.msk [vmem:[#allocation2 + $0x528] sm:$0xff] %vm1426, %v1415
    %1483 = vst.msk [vmem:[#allocation2 + $0x540] sm:$0xff] %vm1426, %v1416
    %1484 = vst.msk [vmem:[#allocation2 + $0x558] sm:$0xff] %vm1426, %v1417
    %1485 = vst.msk [vmem:[#allocation2 + $0x570] sm:$0xff] %vm1426, %v1418
    %1486 = vst.msk [vmem:[#allocation2 + $0x588] sm:$0xff] %vm1426, %v1419
    %1487 = vst.msk [vmem:[#allocation2 + $0x5a0] sm:$0xff] %vm1426, %v1420
    %vm1550 = vcmask 1046528
    %v1551 = vrot.slane %v1360, 1
    %v1552 = vrot.slane %v1361, 1
    %v1553 = vsel %vm1550, %v1551, %v1552
    %v1554 = vrot.slane %v1362, 1
    %v1555 = vsel %vm1550, %v1552, %v1554
    %v1556 = vrot.slane %v1363, 1
    %v1557 = vsel %vm1550, %v1554, %v1556
    %v1558 = vrot.slane %v1364, 1
    %v1559 = vsel %vm1550, %v1556, %v1558
    %v1560 = vrot.slane %v1365, 1
    %v1561 = vsel %vm1550, %v1558, %v1560
    %v1562 = vrot.slane %v1366, 1
    %v1563 = vsel %vm1550, %v1560, %v1562
    %v1564 = vrot.slane %v1367, 1
    %v1565 = vsel %vm1550, %v1562, %v1564
    %v1566 = vrot.slane %v1368, 1
    %v1567 = vsel %vm1550, %v1564, %v1566
    %v1568 = vrot.slane %v1369, 1
    %v1569 = vsel %vm1550, %v1566, %v1568
    %v1570 = vrot.slane %v1370, 1
    %v1571 = vsel %vm1550, %v1568, %v1570
    %v1572 = vrot.slane %v1371, 1
    %v1573 = vsel %vm1550, %v1570, %v1572
    %v1574 = vrot.slane %v1372, 1
    %v1575 = vsel %vm1550, %v1572, %v1574
    %v1576 = vrot.slane %v1373, 1
    %v1577 = vsel %vm1550, %v1574, %v1576
    %v1578 = vrot.slane %v1374, 1
    %v1579 = vsel %vm1550, %v1576, %v1578
    %v1580 = vrot.slane %v1375, 1
    %v1581 = vsel %vm1550, %v1578, %v1580
    %v1582 = vrot.slane %v1376, 1
    %v1583 = vsel %vm1550, %v1580, %v1582
    %v1584 = vrot.slane %v1377, 1
    %v1585 = vsel %vm1550, %v1582, %v1584
    %v1586 = vrot.slane %v1378, 1
    %v1587 = vsel %vm1550, %v1584, %v1586
    %v1588 = vrot.slane %v1379, 1
    %v1589 = vsel %vm1550, %v1586, %v1588
    %v1590 = vrot.slane %v1380, 1
    %v1591 = vsel %vm1550, %v1588, %v1590
    %v1592 = vrot.slane %v1381, 1
    %v1593 = vsel %vm1550, %v1590, %v1592
    %v1594 = vrot.slane %v1382, 1
    %v1595 = vsel %vm1550, %v1592, %v1594
    %v1596 = vrot.slane %v1383, 1
    %v1597 = vsel %vm1550, %v1594, %v1596
    %v1598 = vrot.slane %v1384, 1
    %v1599 = vsel %vm1550, %v1596, %v1598
    %v1600 = vrot.slane %v1385, 1
    %v1601 = vsel %vm1550, %v1598, %v1600
    %v1602 = vrot.slane %v1386, 1
    %v1603 = vsel %vm1550, %v1600, %v1602
    %v1604 = vrot.slane %v1387, 1
    %v1605 = vsel %vm1550, %v1602, %v1604
    %v1606 = vrot.slane %v1388, 1
    %v1607 = vsel %vm1550, %v1604, %v1606
    %v1608 = vrot.slane %v1389, 1
    %v1609 = vsel %vm1550, %v1606, %v1608
    %v1610 = vrot.slane %v1390, 1
    %v1611 = vsel %vm1550, %v1608, %v1610
    %v1612 = vrot.slane %v1391, 1
    %v1613 = vsel %vm1550, %v1610, %v1612
    %v1614 = vrot.slane %v1392, 1
    %v1615 = vsel %vm1550, %v1612, %v1614
    %v1616 = vrot.slane %v1393, 1
    %v1617 = vsel %vm1550, %v1614, %v1616
    %v1618 = vrot.slane %v1394, 1
    %v1619 = vsel %vm1550, %v1616, %v1618
    %v1620 = vrot.slane %v1395, 1
    %v1621 = vsel %vm1550, %v1618, %v1620
    %v1622 = vrot.slane %v1396, 1
    %v1623 = vsel %vm1550, %v1620, %v1622
    %v1624 = vrot.slane %v1397, 1
    %v1625 = vsel %vm1550, %v1622, %v1624
    %v1626 = vrot.slane %v1398, 1
    %v1627 = vsel %vm1550, %v1624, %v1626
    %v1628 = vrot.slane %v1399, 1
    %v1629 = vsel %vm1550, %v1626, %v1628
    %v1630 = vrot.slane %v1400, 1
    %v1631 = vsel %vm1550, %v1628, %v1630
    %v1632 = vrot.slane %v1401, 1
    %v1633 = vsel %vm1550, %v1630, %v1632
    %v1634 = vrot.slane %v1402, 1
    %v1635 = vsel %vm1550, %v1632, %v1634
    %v1636 = vrot.slane %v1403, 1
    %v1637 = vsel %vm1550, %v1634, %v1636
    %v1638 = vrot.slane %v1404, 1
    %v1639 = vsel %vm1550, %v1636, %v1638
    %v1640 = vrot.slane %v1405, 1
    %v1641 = vsel %vm1550, %v1638, %v1640
    %v1642 = vrot.slane %v1406, 1
    %v1643 = vsel %vm1550, %v1640, %v1642
    %v1644 = vrot.slane %v1407, 1
    %v1645 = vsel %vm1550, %v1642, %v1644
    %v1646 = vrot.slane %v1408, 1
    %v1647 = vsel %vm1550, %v1644, %v1646
    %v1648 = vrot.slane %v1409, 1
    %v1649 = vsel %vm1550, %v1646, %v1648
    %v1650 = vrot.slane %v1410, 1
    %v1651 = vsel %vm1550, %v1648, %v1650
    %v1652 = vrot.slane %v1411, 1
    %v1653 = vsel %vm1550, %v1650, %v1652
    %v1654 = vrot.slane %v1412, 1
    %v1655 = vsel %vm1550, %v1652, %v1654
    %v1656 = vrot.slane %v1413, 1
    %v1657 = vsel %vm1550, %v1654, %v1656
    %v1658 = vrot.slane %v1414, 1
    %v1659 = vsel %vm1550, %v1656, %v1658
    %v1660 = vrot.slane %v1415, 1
    %v1661 = vsel %vm1550, %v1658, %v1660
    %v1662 = vrot.slane %v1416, 1
    %v1663 = vsel %vm1550, %v1660, %v1662
    %v1664 = vrot.slane %v1417, 1
    %v1665 = vsel %vm1550, %v1662, %v1664
    %v1666 = vrot.slane %v1418, 1
    %v1667 = vsel %vm1550, %v1664, %v1666
    %v1668 = vrot.slane %v1419, 1
    %v1669 = vsel %vm1550, %v1666, %v1668
    %v1670 = vrot.slane %v1420, 1
    %v1671 = vsel %vm1550, %v1668, %v1670
    %v1672 = vrot.slane %v1421, 1
    %v1673 = vsel %vm1550, %v1670, %v1672
    %1674 = vrot.lane.b32.xlu0 %v1553, 32
    %v1675 = vpop.permute.xlu0 %1674
    %1676 = vrot.lane.b32.xlu0 %v1555, 32
    %v1677 = vpop.permute.xlu0 %1676
    %1678 = vrot.lane.b32.xlu0 %v1557, 32
    %v1679 = vpop.permute.xlu0 %1678
    %1680 = vrot.lane.b32.xlu0 %v1559, 32
    %v1681 = vpop.permute.xlu0 %1680
    %1682 = vrot.lane.b32.xlu0 %v1561, 32
    %v1683 = vpop.permute.xlu0 %1682
    %1684 = vrot.lane.b32.xlu0 %v1563, 32
    %v1685 = vpop.permute.xlu0 %1684
    %1686 = vrot.lane.b32.xlu0 %v1565, 32
    %v1687 = vpop.permute.xlu0 %1686
    %1688 = vrot.lane.b32.xlu0 %v1567, 32
    %v1689 = vpop.permute.xlu0 %1688
    %1690 = vrot.lane.b32.xlu0 %v1569, 32
    %v1691 = vpop.permute.xlu0 %1690
    %1692 = vrot.lane.b32.xlu0 %v1571, 32
    %v1693 = vpop.permute.xlu0 %1692
    %1694 = vrot.lane.b32.xlu0 %v1573, 32
    %v1695 = vpop.permute.xlu0 %1694
    %1696 = vrot.lane.b32.xlu0 %v1575, 32
    %v1697 = vpop.permute.xlu0 %1696
    %1698 = vrot.lane.b32.xlu0 %v1577, 32
    %v1699 = vpop.permute.xlu0 %1698
    %1700 = vrot.lane.b32.xlu0 %v1579, 32
    %v1701 = vpop.permute.xlu0 %1700
    %1702 = vrot.lane.b32.xlu0 %v1581, 32
    %v1703 = vpop.permute.xlu0 %1702
    %1704 = vrot.lane.b32.xlu0 %v1583, 32
    %v1705 = vpop.permute.xlu0 %1704
    %1706 = vrot.lane.b32.xlu0 %v1585, 32
    %v1707 = vpop.permute.xlu0 %1706
    %1708 = vrot.lane.b32.xlu0 %v1587, 32
    %v1709 = vpop.permute.xlu0 %1708
    %1710 = vrot.lane.b32.xlu0 %v1589, 32
    %v1711 = vpop.permute.xlu0 %1710
    %1712 = vrot.lane.b32.xlu0 %v1591, 32
    %v1713 = vpop.permute.xlu0 %1712
    %1714 = vrot.lane.b32.xlu0 %v1593, 32
    %v1715 = vpop.permute.xlu0 %1714
    %1716 = vrot.lane.b32.xlu0 %v1595, 32
    %v1717 = vpop.permute.xlu0 %1716
    %1718 = vrot.lane.b32.xlu0 %v1597, 32
    %v1719 = vpop.permute.xlu0 %1718
    %1720 = vrot.lane.b32.xlu0 %v1599, 32
    %v1721 = vpop.permute.xlu0 %1720
    %1722 = vrot.lane.b32.xlu0 %v1601, 32
    %v1723 = vpop.permute.xlu0 %1722
    %1724 = vrot.lane.b32.xlu0 %v1603, 32
    %v1725 = vpop.permute.xlu0 %1724
    %1726 = vrot.lane.b32.xlu0 %v1605, 32
    %v1727 = vpop.permute.xlu0 %1726
    %1728 = vrot.lane.b32.xlu0 %v1607, 32
    %v1729 = vpop.permute.xlu0 %1728
    %1730 = vrot.lane.b32.xlu0 %v1609, 32
    %v1731 = vpop.permute.xlu0 %1730
    %1732 = vrot.lane.b32.xlu0 %v1611, 32
    %v1733 = vpop.permute.xlu0 %1732
    %1734 = vrot.lane.b32.xlu0 %v1613, 32
    %v1735 = vpop.permute.xlu0 %1734
    %1736 = vrot.lane.b32.xlu0 %v1615, 32
    %v1737 = vpop.permute.xlu0 %1736
    %1738 = vrot.lane.b32.xlu0 %v1617, 32
    %v1739 = vpop.permute.xlu0 %1738
    %1740 = vrot.lane.b32.xlu0 %v1619, 32
    %v1741 = vpop.permute.xlu0 %1740
    %1742 = vrot.lane.b32.xlu0 %v1621, 32
    %v1743 = vpop.permute.xlu0 %1742
    %1744 = vrot.lane.b32.xlu0 %v1623, 32
    %v1745 = vpop.permute.xlu0 %1744
    %1746 = vrot.lane.b32.xlu0 %v1625, 32
    %v1747 = vpop.permute.xlu0 %1746
    %1748 = vrot.lane.b32.xlu0 %v1627, 32
    %v1749 = vpop.permute.xlu0 %1748
    %1750 = vrot.lane.b32.xlu0 %v1629, 32
    %v1751 = vpop.permute.xlu0 %1750
    %1752 = vrot.lane.b32.xlu0 %v1631, 32
    %v1753 = vpop.permute.xlu0 %1752
    %1754 = vrot.lane.b32.xlu0 %v1633, 32
    %v1755 = vpop.permute.xlu0 %1754
    %1756 = vrot.lane.b32.xlu0 %v1635, 32
    %v1757 = vpop.permute.xlu0 %1756
    %1758 = vrot.lane.b32.xlu0 %v1637, 32
    %v1759 = vpop.permute.xlu0 %1758
    %1760 = vrot.lane.b32.xlu0 %v1639, 32
    %v1761 = vpop.permute.xlu0 %1760
    %1762 = vrot.lane.b32.xlu0 %v1641, 32
    %v1763 = vpop.permute.xlu0 %1762
    %1764 = vrot.lane.b32.xlu0 %v1643, 32
    %v1765 = vpop.permute.xlu0 %1764
    %1766 = vrot.lane.b32.xlu0 %v1645, 32
    %v1767 = vpop.permute.xlu0 %1766
    %1768 = vrot.lane.b32.xlu0 %v1647, 32
    %v1769 = vpop.permute.xlu0 %1768
    %1770 = vrot.lane.b32.xlu0 %v1649, 32
    %v1771 = vpop.permute.xlu0 %1770
    %1772 = vrot.lane.b32.xlu0 %v1651, 32
    %v1773 = vpop.permute.xlu0 %1772
    %1774 = vrot.lane.b32.xlu0 %v1653, 32
    %v1775 = vpop.permute.xlu0 %1774
    %1776 = vrot.lane.b32.xlu0 %v1655, 32
    %v1777 = vpop.permute.xlu0 %1776
    %1778 = vrot.lane.b32.xlu0 %v1657, 32
    %v1779 = vpop.permute.xlu0 %1778
    %1780 = vrot.lane.b32.xlu0 %v1659, 32
    %v1781 = vpop.permute.xlu0 %1780
    %1782 = vrot.lane.b32.xlu0 %v1661, 32
    %v1783 = vpop.permute.xlu0 %1782
    %1784 = vrot.lane.b32.xlu0 %v1663, 32
    %v1785 = vpop.permute.xlu0 %1784
    %1786 = vrot.lane.b32.xlu0 %v1665, 32
    %v1787 = vpop.permute.xlu0 %1786
    %1788 = vrot.lane.b32.xlu0 %v1667, 32
    %v1789 = vpop.permute.xlu0 %1788
    %1790 = vrot.lane.b32.xlu0 %v1669, 32
    %v1791 = vpop.permute.xlu0 %1790
    %1792 = vrot.lane.b32.xlu0 %v1671, 32
    %v1793 = vpop.permute.xlu0 %1792
    %1794 = vrot.lane.b32.xlu0 %v1673, 32
    %v1795 = vpop.permute.xlu0 %1794
    %vm1857 = vcmask 523520
    %1858 = vst.msk [vmem:[#allocation2] sm:$0xff] %vm1857, %v1675
    %1859 = vst.msk [vmem:[#allocation2 + $0x18] sm:$0xff] %vm1857, %v1677
    %1860 = vst.msk [vmem:[#allocation2 + $0x30] sm:$0xff] %vm1857, %v1679
    %1861 = vst.msk [vmem:[#allocation2 + $0x48] sm:$0xff] %vm1857, %v1681
    %1862 = vst.msk [vmem:[#allocation2 + $0x60] sm:$0xff] %vm1857, %v1683
    %1863 = vst.msk [vmem:[#allocation2 + $0x78] sm:$0xff] %vm1857, %v1685
    %1864 = vst.msk [vmem:[#allocation2 + $0x90] sm:$0xff] %vm1857, %v1687
    %1865 = vst.msk [vmem:[#allocation2 + $0xa8] sm:$0xff] %vm1857, %v1689
    %1866 = vst.msk [vmem:[#allocation2 + $0xc0] sm:$0xff] %vm1857, %v1691
    %1867 = vst.msk [vmem:[#allocation2 + $0xd8] sm:$0xff] %vm1857, %v1693
    %1868 = vst.msk [vmem:[#allocation2 + $0xf0] sm:$0xff] %vm1857, %v1695
    %1869 = vst.msk [vmem:[#allocation2 + $0x108] sm:$0xff] %vm1857, %v1697
    %1870 = vst.msk [vmem:[#allocation2 + $0x120] sm:$0xff] %vm1857, %v1699
    %1871 = vst.msk [vmem:[#allocation2 + $0x138] sm:$0xff] %vm1857, %v1701
    %1872 = vst.msk [vmem:[#allocation2 + $0x150] sm:$0xff] %vm1857, %v1703
    %1873 = vst.msk [vmem:[#allocation2 + $0x168] sm:$0xff] %vm1857, %v1705
    %1874 = vst.msk [vmem:[#allocation2 + $0x180] sm:$0xff] %vm1857, %v1707
    %1875 = vst.msk [vmem:[#allocation2 + $0x198] sm:$0xff] %vm1857, %v1709
    %1876 = vst.msk [vmem:[#allocation2 + $0x1b0] sm:$0xff] %vm1857, %v1711
    %1877 = vst.msk [vmem:[#allocation2 + $0x1c8] sm:$0xff] %vm1857, %v1713
    %1878 = vst.msk [vmem:[#allocation2 + $0x1e0] sm:$0xff] %vm1857, %v1715
    %1879 = vst.msk [vmem:[#allocation2 + $0x1f8] sm:$0xff] %vm1857, %v1717
    %1880 = vst.msk [vmem:[#allocation2 + $0x210] sm:$0xff] %vm1857, %v1719
    %1881 = vst.msk [vmem:[#allocation2 + $0x228] sm:$0xff] %vm1857, %v1721
    %1882 = vst.msk [vmem:[#allocation2 + $0x240] sm:$0xff] %vm1857, %v1723
    %1883 = vst.msk [vmem:[#allocation2 + $0x258] sm:$0xff] %vm1857, %v1725
    %1884 = vst.msk [vmem:[#allocation2 + $0x270] sm:$0xff] %vm1857, %v1727
    %1885 = vst.msk [vmem:[#allocation2 + $0x288] sm:$0xff] %vm1857, %v1729
    %1886 = vst.msk [vmem:[#allocation2 + $0x2a0] sm:$0xff] %vm1857, %v1731
    %1887 = vst.msk [vmem:[#allocation2 + $0x2b8] sm:$0xff] %vm1857, %v1733
    %1888 = vst.msk [vmem:[#allocation2 + $0x2d0] sm:$0xff] %vm1857, %v1735
    %1889 = vst.msk [vmem:[#allocation2 + $0x2e8] sm:$0xff] %vm1857, %v1737
    %1890 = vst.msk [vmem:[#allocation2 + $0x300] sm:$0xff] %vm1857, %v1739
    %1891 = vst.msk [vmem:[#allocation2 + $0x318] sm:$0xff] %vm1857, %v1741
    %1892 = vst.msk [vmem:[#allocation2 + $0x330] sm:$0xff] %vm1857, %v1743
    %1893 = vst.msk [vmem:[#allocation2 + $0x348] sm:$0xff] %vm1857, %v1745
    %1894 = vst.msk [vmem:[#allocation2 + $0x360] sm:$0xff] %vm1857, %v1747
    %1895 = vst.msk [vmem:[#allocation2 + $0x378] sm:$0xff] %vm1857, %v1749
    %1896 = vst.msk [vmem:[#allocation2 + $0x390] sm:$0xff] %vm1857, %v1751
    %1897 = vst.msk [vmem:[#allocation2 + $0x3a8] sm:$0xff] %vm1857, %v1753
    %1898 = vst.msk [vmem:[#allocation2 + $0x3c0] sm:$0xff] %vm1857, %v1755
    %1899 = vst.msk [vmem:[#allocation2 + $0x3d8] sm:$0xff] %vm1857, %v1757
    %1900 = vst.msk [vmem:[#allocation2 + $0x3f0] sm:$0xff] %vm1857, %v1759
    %1901 = vst.msk [vmem:[#allocation2 + $0x408] sm:$0xff] %vm1857, %v1761
    %1902 = vst.msk [vmem:[#allocation2 + $0x420] sm:$0xff] %vm1857, %v1763
    %1903 = vst.msk [vmem:[#allocation2 + $0x438] sm:$0xff] %vm1857, %v1765
    %1904 = vst.msk [vmem:[#allocation2 + $0x450] sm:$0xff] %vm1857, %v1767
    %1905 = vst.msk [vmem:[#allocation2 + $0x468] sm:$0xff] %vm1857, %v1769
    %1906 = vst.msk [vmem:[#allocation2 + $0x480] sm:$0xff] %vm1857, %v1771
    %1907 = vst.msk [vmem:[#allocation2 + $0x498] sm:$0xff] %vm1857, %v1773
    %1908 = vst.msk [vmem:[#allocation2 + $0x4b0] sm:$0xff] %vm1857, %v1775
    %1909 = vst.msk [vmem:[#allocation2 + $0x4c8] sm:$0xff] %vm1857, %v1777
    %1910 = vst.msk [vmem:[#allocation2 + $0x4e0] sm:$0xff] %vm1857, %v1779
    %1911 = vst.msk [vmem:[#allocation2 + $0x4f8] sm:$0xff] %vm1857, %v1781
    %1912 = vst.msk [vmem:[#allocation2 + $0x510] sm:$0xff] %vm1857, %v1783
    %1913 = vst.msk [vmem:[#allocation2 + $0x528] sm:$0xff] %vm1857, %v1785
    %1914 = vst.msk [vmem:[#allocation2 + $0x540] sm:$0xff] %vm1857, %v1787
    %1915 = vst.msk [vmem:[#allocation2 + $0x558] sm:$0xff] %vm1857, %v1789
    %1916 = vst.msk [vmem:[#allocation2 + $0x570] sm:$0xff] %vm1857, %v1791
    %1917 = vst.msk [vmem:[#allocation2 + $0x588] sm:$0xff] %vm1857, %v1793
    %1918 = vst.msk [vmem:[#allocation2 + $0x5a0] sm:$0xff] %vm1857, %v1795
    %vm1919 = vcmask 1045504
    %v1920 = vrot.slane %v1360, 2
    %v1921 = vrot.slane %v1361, 2
    %v1922 = vsel %vm1919, %v1920, %v1921
    %v1923 = vrot.slane %v1362, 2
    %v1924 = vsel %vm1919, %v1921, %v1923
    %v1925 = vrot.slane %v1363, 2
    %v1926 = vsel %vm1919, %v1923, %v1925
    %v1927 = vrot.slane %v1364, 2
    %v1928 = vsel %vm1919, %v1925, %v1927
    %v1929 = vrot.slane %v1365, 2
    %v1930 = vsel %vm1919, %v1927, %v1929
    %v1931 = vrot.slane %v1366, 2
    %v1932 = vsel %vm1919, %v1929, %v1931
    %v1933 = vrot.slane %v1367, 2
    %v1934 = vsel %vm1919, %v1931, %v1933
    %v1935 = vrot.slane %v1368, 2
    %v1936 = vsel %vm1919, %v1933, %v1935
    %v1937 = vrot.slane %v1369, 2
    %v1938 = vsel %vm1919, %v1935, %v1937
    %v1939 = vrot.slane %v1370, 2
    %v1940 = vsel %vm1919, %v1937, %v1939
    %v1941 = vrot.slane %v1371, 2
    %v1942 = vsel %vm1919, %v1939, %v1941
    %v1943 = vrot.slane %v1372, 2
    %v1944 = vsel %vm1919, %v1941, %v1943
    %v1945 = vrot.slane %v1373, 2
    %v1946 = vsel %vm1919, %v1943, %v1945
    %v1947 = vrot.slane %v1374, 2
    %v1948 = vsel %vm1919, %v1945, %v1947
    %v1949 = vrot.slane %v1375, 2
    %v1950 = vsel %vm1919, %v1947, %v1949
    %v1951 = vrot.slane %v1376, 2
    %v1952 = vsel %vm1919, %v1949, %v1951
    %v1953 = vrot.slane %v1377, 2
    %v1954 = vsel %vm1919, %v1951, %v1953
    %v1955 = vrot.slane %v1378, 2
    %v1956 = vsel %vm1919, %v1953, %v1955
    %v1957 = vrot.slane %v1379, 2
    %v1958 = vsel %vm1919, %v1955, %v1957
    %v1959 = vrot.slane %v1380, 2
    %v1960 = vsel %vm1919, %v1957, %v1959
    %v1961 = vrot.slane %v1381, 2
    %v1962 = vsel %vm1919, %v1959, %v1961
    %v1963 = vrot.slane %v1382, 2
    %v1964 = vsel %vm1919, %v1961, %v1963
    %v1965 = vrot.slane %v1383, 2
    %v1966 = vsel %vm1919, %v1963, %v1965
    %v1967 = vrot.slane %v1384, 2
    %v1968 = vsel %vm1919, %v1965, %v1967
    %v1969 = vrot.slane %v1385, 2
    %v1970 = vsel %vm1919, %v1967, %v1969
    %v1971 = vrot.slane %v1386, 2
    %v1972 = vsel %vm1919, %v1969, %v1971
    %v1973 = vrot.slane %v1387, 2
    %v1974 = vsel %vm1919, %v1971, %v1973
    %v1975 = vrot.slane %v1388, 2
    %v1976 = vsel %vm1919, %v1973, %v1975
    %v1977 = vrot.slane %v1389, 2
    %v1978 = vsel %vm1919, %v1975, %v1977
    %v1979 = vrot.slane %v1390, 2
    %v1980 = vsel %vm1919, %v1977, %v1979
    %v1981 = vrot.slane %v1391, 2
    %v1982 = vsel %vm1919, %v1979, %v1981
    %v1983 = vrot.slane %v1392, 2
    %v1984 = vsel %vm1919, %v1981, %v1983
    %v1985 = vrot.slane %v1393, 2
    %v1986 = vsel %vm1919, %v1983, %v1985
    %v1987 = vrot.slane %v1394, 2
    %v1988 = vsel %vm1919, %v1985, %v1987
    %v1989 = vrot.slane %v1395, 2
    %v1990 = vsel %vm1919, %v1987, %v1989
    %v1991 = vrot.slane %v1396, 2
    %v1992 = vsel %vm1919, %v1989, %v1991
    %v1993 = vrot.slane %v1397, 2
    %v1994 = vsel %vm1919, %v1991, %v1993
    %v1995 = vrot.slane %v1398, 2
    %v1996 = vsel %vm1919, %v1993, %v1995
    %v1997 = vrot.slane %v1399, 2
    %v1998 = vsel %vm1919, %v1995, %v1997
    %v1999 = vrot.slane %v1400, 2
    %v2000 = vsel %vm1919, %v1997, %v1999
    %v2001 = vrot.slane %v1401, 2
    %v2002 = vsel %vm1919, %v1999, %v2001
    %v2003 = vrot.slane %v1402, 2
    %v2004 = vsel %vm1919, %v2001, %v2003
    %v2005 = vrot.slane %v1403, 2
    %v2006 = vsel %vm1919, %v2003, %v2005
    %v2007 = vrot.slane %v1404, 2
    %v2008 = vsel %vm1919, %v2005, %v2007
    %v2009 = vrot.slane %v1405, 2
    %v2010 = vsel %vm1919, %v2007, %v2009
    %v2011 = vrot.slane %v1406, 2
    %v2012 = vsel %vm1919, %v2009, %v2011
    %v2013 = vrot.slane %v1407, 2
    %v2014 = vsel %vm1919, %v2011, %v2013
    %v2015 = vrot.slane %v1408, 2
    %v2016 = vsel %vm1919, %v2013, %v2015
    %v2017 = vrot.slane %v1409, 2
    %v2018 = vsel %vm1919, %v2015, %v2017
    %v2019 = vrot.slane %v1410, 2
    %v2020 = vsel %vm1919, %v2017, %v2019
    %v2021 = vrot.slane %v1411, 2
    %v2022 = vsel %vm1919, %v2019, %v2021
    %v2023 = vrot.slane %v1412, 2
    %v2024 = vsel %vm1919, %v2021, %v2023
    %v2025 = vrot.slane %v1413, 2
    %v2026 = vsel %vm1919, %v2023, %v2025
    %v2027 = vrot.slane %v1414, 2
    %v2028 = vsel %vm1919, %v2025, %v2027
    %v2029 = vrot.slane %v1415, 2
    %v2030 = vsel %vm1919, %v2027, %v2029
    %v2031 = vrot.slane %v1416, 2
    %v2032 = vsel %vm1919, %v2029, %v2031
    %v2033 = vrot.slane %v1417, 2
    %v2034 = vsel %vm1919, %v2031, %v2033
    %v2035 = vrot.slane %v1418, 2
    %v2036 = vsel %vm1919, %v2033, %v2035
    %v2037 = vrot.slane %v1419, 2
    %v2038 = vsel %vm1919, %v2035, %v2037
    %v2039 = vrot.slane %v1420, 2
    %v2040 = vsel %vm1919, %v2037, %v2039
    %v2041 = vrot.slane %v1421, 2
    %v2042 = vsel %vm1919, %v2039, %v2041
    %2043 = vrot.lane.b32.xlu0 %v1922, 64
    %v2044 = vpop.permute.xlu0 %2043
    %2045 = vrot.lane.b32.xlu0 %v1924, 64
    %v2046 = vpop.permute.xlu0 %2045
    %2047 = vrot.lane.b32.xlu0 %v1926, 64
    %v2048 = vpop.permute.xlu0 %2047
    %2049 = vrot.lane.b32.xlu0 %v1928, 64
    %v2050 = vpop.permute.xlu0 %2049
    %2051 = vrot.lane.b32.xlu0 %v1930, 64
    %v2052 = vpop.permute.xlu0 %2051
    %2053 = vrot.lane.b32.xlu0 %v1932, 64
    %v2054 = vpop.permute.xlu0 %2053
    %2055 = vrot.lane.b32.xlu0 %v1934, 64
    %v2056 = vpop.permute.xlu0 %2055
    %2057 = vrot.lane.b32.xlu0 %v1936, 64
    %v2058 = vpop.permute.xlu0 %2057
    %2059 = vrot.lane.b32.xlu0 %v1938, 64
    %v2060 = vpop.permute.xlu0 %2059
    %2061 = vrot.lane.b32.xlu0 %v1940, 64
    %v2062 = vpop.permute.xlu0 %2061
    %2063 = vrot.lane.b32.xlu0 %v1942, 64
    %v2064 = vpop.permute.xlu0 %2063
    %2065 = vrot.lane.b32.xlu0 %v1944, 64
    %v2066 = vpop.permute.xlu0 %2065
    %2067 = vrot.lane.b32.xlu0 %v1946, 64
    %v2068 = vpop.permute.xlu0 %2067
    %2069 = vrot.lane.b32.xlu0 %v1948, 64
    %v2070 = vpop.permute.xlu0 %2069
    %2071 = vrot.lane.b32.xlu0 %v1950, 64
    %v2072 = vpop.permute.xlu0 %2071
    %2073 = vrot.lane.b32.xlu0 %v1952, 64
    %v2074 = vpop.permute.xlu0 %2073
    %2075 = vrot.lane.b32.xlu0 %v1954, 64
    %v2076 = vpop.permute.xlu0 %2075
    %2077 = vrot.lane.b32.xlu0 %v1956, 64
    %v2078 = vpop.permute.xlu0 %2077
    %2079 = vrot.lane.b32.xlu0 %v1958, 64
    %v2080 = vpop.permute.xlu0 %2079
    %2081 = vrot.lane.b32.xlu0 %v1960, 64
    %v2082 = vpop.permute.xlu0 %2081
    %2083 = vrot.lane.b32.xlu0 %v1962, 64
    %v2084 = vpop.permute.xlu0 %2083
    %2085 = vrot.lane.b32.xlu0 %v1964, 64
    %v2086 = vpop.permute.xlu0 %2085
    %2087 = vrot.lane.b32.xlu0 %v1966, 64
    %v2088 = vpop.permute.xlu0 %2087
    %2089 = vrot.lane.b32.xlu0 %v1968, 64
    %v2090 = vpop.permute.xlu0 %2089
    %2091 = vrot.lane.b32.xlu0 %v1970, 64
    %v2092 = vpop.permute.xlu0 %2091
    %2093 = vrot.lane.b32.xlu0 %v1972, 64
    %v2094 = vpop.permute.xlu0 %2093
    %2095 = vrot.lane.b32.xlu0 %v1974, 64
    %v2096 = vpop.permute.xlu0 %2095
    %2097 = vrot.lane.b32.xlu0 %v1976, 64
    %v2098 = vpop.permute.xlu0 %2097
    %2099 = vrot.lane.b32.xlu0 %v1978, 64
    %v2100 = vpop.permute.xlu0 %2099
    %2101 = vrot.lane.b32.xlu0 %v1980, 64
    %v2102 = vpop.permute.xlu0 %2101
    %2103 = vrot.lane.b32.xlu0 %v1982, 64
    %v2104 = vpop.permute.xlu0 %2103
    %2105 = vrot.lane.b32.xlu0 %v1984, 64
    %v2106 = vpop.permute.xlu0 %2105
    %2107 = vrot.lane.b32.xlu0 %v1986, 64
    %v2108 = vpop.permute.xlu0 %2107
    %2109 = vrot.lane.b32.xlu0 %v1988, 64
    %v2110 = vpop.permute.xlu0 %2109
    %2111 = vrot.lane.b32.xlu0 %v1990, 64
    %v2112 = vpop.permute.xlu0 %2111
    %2113 = vrot.lane.b32.xlu0 %v1992, 64
    %v2114 = vpop.permute.xlu0 %2113
    %2115 = vrot.lane.b32.xlu0 %v1994, 64
    %v2116 = vpop.permute.xlu0 %2115
    %2117 = vrot.lane.b32.xlu0 %v1996, 64
    %v2118 = vpop.permute.xlu0 %2117
    %2119 = vrot.lane.b32.xlu0 %v1998, 64
    %v2120 = vpop.permute.xlu0 %2119
    %2121 = vrot.lane.b32.xlu0 %v2000, 64
    %v2122 = vpop.permute.xlu0 %2121
    %2123 = vrot.lane.b32.xlu0 %v2002, 64
    %v2124 = vpop.permute.xlu0 %2123
    %2125 = vrot.lane.b32.xlu0 %v2004, 64
    %v2126 = vpop.permute.xlu0 %2125
    %2127 = vrot.lane.b32.xlu0 %v2006, 64
    %v2128 = vpop.permute.xlu0 %2127
    %2129 = vrot.lane.b32.xlu0 %v2008, 64
    %v2130 = vpop.permute.xlu0 %2129
    %2131 = vrot.lane.b32.xlu0 %v2010, 64
    %v2132 = vpop.permute.xlu0 %2131
    %2133 = vrot.lane.b32.xlu0 %v2012, 64
    %v2134 = vpop.permute.xlu0 %2133
    %2135 = vrot.lane.b32.xlu0 %v2014, 64
    %v2136 = vpop.permute.xlu0 %2135
    %2137 = vrot.lane.b32.xlu0 %v2016, 64
    %v2138 = vpop.permute.xlu0 %2137
    %2139 = vrot.lane.b32.xlu0 %v2018, 64
    %v2140 = vpop.permute.xlu0 %2139
    %2141 = vrot.lane.b32.xlu0 %v2020, 64
    %v2142 = vpop.permute.xlu0 %2141
    %2143 = vrot.lane.b32.xlu0 %v2022, 64
    %v2144 = vpop.permute.xlu0 %2143
    %2145 = vrot.lane.b32.xlu0 %v2024, 64
    %v2146 = vpop.permute.xlu0 %2145
    %2147 = vrot.lane.b32.xlu0 %v2026, 64
    %v2148 = vpop.permute.xlu0 %2147
    %2149 = vrot.lane.b32.xlu0 %v2028, 64
    %v2150 = vpop.permute.xlu0 %2149
    %2151 = vrot.lane.b32.xlu0 %v2030, 64
    %v2152 = vpop.permute.xlu0 %2151
    %2153 = vrot.lane.b32.xlu0 %v2032, 64
    %v2154 = vpop.permute.xlu0 %2153
    %2155 = vrot.lane.b32.xlu0 %v2034, 64
    %v2156 = vpop.permute.xlu0 %2155
    %2157 = vrot.lane.b32.xlu0 %v2036, 64
    %v2158 = vpop.permute.xlu0 %2157
    %2159 = vrot.lane.b32.xlu0 %v2038, 64
    %v2160 = vpop.permute.xlu0 %2159
    %2161 = vrot.lane.b32.xlu0 %v2040, 64
    %v2162 = vpop.permute.xlu0 %2161
    %2163 = vrot.lane.b32.xlu0 %v2042, 64
    %v2164 = vpop.permute.xlu0 %2163
    %vm2226 = vcmask 785920
    %2227 = vst.msk [vmem:[#allocation2] sm:$0xff] %vm2226, %v2044
    %2228 = vst.msk [vmem:[#allocation2 + $0x18] sm:$0xff] %vm2226, %v2046
    %2229 = vst.msk [vmem:[#allocation2 + $0x30] sm:$0xff] %vm2226, %v2048
    %2230 = vst.msk [vmem:[#allocation2 + $0x48] sm:$0xff] %vm2226, %v2050
    %2231 = vst.msk [vmem:[#allocation2 + $0x60] sm:$0xff] %vm2226, %v2052
    %2232 = vst.msk [vmem:[#allocation2 + $0x78] sm:$0xff] %vm2226, %v2054
    %2233 = vst.msk [vmem:[#allocation2 + $0x90] sm:$0xff] %vm2226, %v2056
    %2234 = vst.msk [vmem:[#allocation2 + $0xa8] sm:$0xff] %vm2226, %v2058
    %2235 = vst.msk [vmem:[#allocation2 + $0xc0] sm:$0xff] %vm2226, %v2060
    %2236 = vst.msk [vmem:[#allocation2 + $0xd8] sm:$0xff] %vm2226, %v2062
    %2237 = vst.msk [vmem:[#allocation2 + $0xf0] sm:$0xff] %vm2226, %v2064
    %2238 = vst.msk [vmem:[#allocation2 + $0x108] sm:$0xff] %vm2226, %v2066
    %2239 = vst.msk [vmem:[#allocation2 + $0x120] sm:$0xff] %vm2226, %v2068
    %2240 = vst.msk [vmem:[#allocation2 + $0x138] sm:$0xff] %vm2226, %v2070
    %2241 = vst.msk [vmem:[#allocation2 + $0x150] sm:$0xff] %vm2226, %v2072
    %2242 = vst.msk [vmem:[#allocation2 + $0x168] sm:$0xff] %vm2226, %v2074
    %2243 = vst.msk [vmem:[#allocation2 + $0x180] sm:$0xff] %vm2226, %v2076
    %2244 = vst.msk [vmem:[#allocation2 + $0x198] sm:$0xff] %vm2226, %v2078
    %2245 = vst.msk [vmem:[#allocation2 + $0x1b0] sm:$0xff] %vm2226, %v2080
    %2246 = vst.msk [vmem:[#allocation2 + $0x1c8] sm:$0xff] %vm2226, %v2082
    %2247 = vst.msk [vmem:[#allocation2 + $0x1e0] sm:$0xff] %vm2226, %v2084
    %2248 = vst.msk [vmem:[#allocation2 + $0x1f8] sm:$0xff] %vm2226, %v2086
    %2249 = vst.msk [vmem:[#allocation2 + $0x210] sm:$0xff] %vm2226, %v2088
    %2250 = vst.msk [vmem:[#allocation2 + $0x228] sm:$0xff] %vm2226, %v2090
    %2251 = vst.msk [vmem:[#allocation2 + $0x240] sm:$0xff] %vm2226, %v2092
    %2252 = vst.msk [vmem:[#allocation2 + $0x258] sm:$0xff] %vm2226, %v2094
    %2253 = vst.msk [vmem:[#allocation2 + $0x270] sm:$0xff] %vm2226, %v2096
    %2254 = vst.msk [vmem:[#allocation2 + $0x288] sm:$0xff] %vm2226, %v2098
    %2255 = vst.msk [vmem:[#allocation2 + $0x2a0] sm:$0xff] %vm2226, %v2100
    %2256 = vst.msk [vmem:[#allocation2 + $0x2b8] sm:$0xff] %vm2226, %v2102
    %2257 = vst.msk [vmem:[#allocation2 + $0x2d0] sm:$0xff] %vm2226, %v2104
    %2258 = vst.msk [vmem:[#allocation2 + $0x2e8] sm:$0xff] %vm2226, %v2106
    %2259 = vst.msk [vmem:[#allocation2 + $0x300] sm:$0xff] %vm2226, %v2108
    %2260 = vst.msk [vmem:[#allocation2 + $0x318] sm:$0xff] %vm2226, %v2110
    %2261 = vst.msk [vmem:[#allocation2 + $0x330] sm:$0xff] %vm2226, %v2112
    %2262 = vst.msk [vmem:[#allocation2 + $0x348] sm:$0xff] %vm2226, %v2114
    %2263 = vst.msk [vmem:[#allocation2 + $0x360] sm:$0xff] %vm2226, %v2116
    %2264 = vst.msk [vmem:[#allocation2 + $0x378] sm:$0xff] %vm2226, %v2118
    %2265 = vst.msk [vmem:[#allocation2 + $0x390] sm:$0xff] %vm2226, %v2120
    %2266 = vst.msk [vmem:[#allocation2 + $0x3a8] sm:$0xff] %vm2226, %v2122
    %2267 = vst.msk [vmem:[#allocation2 + $0x3c0] sm:$0xff] %vm2226, %v2124
    %2268 = vst.msk [vmem:[#allocation2 + $0x3d8] sm:$0xff] %vm2226, %v2126
    %2269 = vst.msk [vmem:[#allocation2 + $0x3f0] sm:$0xff] %vm2226, %v2128
    %2270 = vst.msk [vmem:[#allocation2 + $0x408] sm:$0xff] %vm2226, %v2130
    %2271 = vst.msk [vmem:[#allocation2 + $0x420] sm:$0xff] %vm2226, %v2132
    %2272 = vst.msk [vmem:[#allocation2 + $0x438] sm:$0xff] %vm2226, %v2134
    %2273 = vst.msk [vmem:[#allocation2 + $0x450] sm:$0xff] %vm2226, %v2136
    %2274 = vst.msk [vmem:[#allocation2 + $0x468] sm:$0xff] %vm2226, %v2138
    %2275 = vst.msk [vmem:[#allocation2 + $0x480] sm:$0xff] %vm2226, %v2140
    %2276 = vst.msk [vmem:[#allocation2 + $0x498] sm:$0xff] %vm2226, %v2142
    %2277 = vst.msk [vmem:[#allocation2 + $0x4b0] sm:$0xff] %vm2226, %v2144
    %2278 = vst.msk [vmem:[#allocation2 + $0x4c8] sm:$0xff] %vm2226, %v2146
    %2279 = vst.msk [vmem:[#allocation2 + $0x4e0] sm:$0xff] %vm2226, %v2148
    %2280 = vst.msk [vmem:[#allocation2 + $0x4f8] sm:$0xff] %vm2226, %v2150
    %2281 = vst.msk [vmem:[#allocation2 + $0x510] sm:$0xff] %vm2226, %v2152
    %2282 = vst.msk [vmem:[#allocation2 + $0x528] sm:$0xff] %vm2226, %v2154
    %2283 = vst.msk [vmem:[#allocation2 + $0x540] sm:$0xff] %vm2226, %v2156
    %2284 = vst.msk [vmem:[#allocation2 + $0x558] sm:$0xff] %vm2226, %v2158
    %2285 = vst.msk [vmem:[#allocation2 + $0x570] sm:$0xff] %vm2226, %v2160
    %2286 = vst.msk [vmem:[#allocation2 + $0x588] sm:$0xff] %vm2226, %v2162
    %2287 = vst.msk [vmem:[#allocation2 + $0x5a0] sm:$0xff] %vm2226, %v2164
    %2289 = vrot.lane.b32.xlu0 %v1362, 96
    %v2290 = vpop.permute.xlu0 %2289
    %2291 = vrot.lane.b32.xlu0 %v1363, 96
    %v2292 = vpop.permute.xlu0 %2291
    %2293 = vrot.lane.b32.xlu0 %v1364, 96
    %v2294 = vpop.permute.xlu0 %2293
    %2295 = vrot.lane.b32.xlu0 %v1365, 96
    %v2296 = vpop.permute.xlu0 %2295
    %2297 = vrot.lane.b32.xlu0 %v1366, 96
    %v2298 = vpop.permute.xlu0 %2297
    %2299 = vrot.lane.b32.xlu0 %v1367, 96
    %v2300 = vpop.permute.xlu0 %2299
    %2301 = vrot.lane.b32.xlu0 %v1368, 96
    %v2302 = vpop.permute.xlu0 %2301
    %2303 = vrot.lane.b32.xlu0 %v1369, 96
    %v2304 = vpop.permute.xlu0 %2303
    %2305 = vrot.lane.b32.xlu0 %v1370, 96
    %v2306 = vpop.permute.xlu0 %2305
    %2307 = vrot.lane.b32.xlu0 %v1371, 96
    %v2308 = vpop.permute.xlu0 %2307
    %2309 = vrot.lane.b32.xlu0 %v1372, 96
    %v2310 = vpop.permute.xlu0 %2309
    %2311 = vrot.lane.b32.xlu0 %v1373, 96
    %v2312 = vpop.permute.xlu0 %2311
    %2313 = vrot.lane.b32.xlu0 %v1374, 96
    %v2314 = vpop.permute.xlu0 %2313
    %2315 = vrot.lane.b32.xlu0 %v1375, 96
    %v2316 = vpop.permute.xlu0 %2315
    %2317 = vrot.lane.b32.xlu0 %v1376, 96
    %v2318 = vpop.permute.xlu0 %2317
    %2319 = vrot.lane.b32.xlu0 %v1377, 96
    %v2320 = vpop.permute.xlu0 %2319
    %2321 = vrot.lane.b32.xlu0 %v1378, 96
    %v2322 = vpop.permute.xlu0 %2321
    %2323 = vrot.lane.b32.xlu0 %v1379, 96
    %v2324 = vpop.permute.xlu0 %2323
    %2325 = vrot.lane.b32.xlu0 %v1380, 96
    %v2326 = vpop.permute.xlu0 %2325
    %2327 = vrot.lane.b32.xlu0 %v1381, 96
    %v2328 = vpop.permute.xlu0 %2327
    %2329 = vrot.lane.b32.xlu0 %v1382, 96
    %v2330 = vpop.permute.xlu0 %2329
    %2331 = vrot.lane.b32.xlu0 %v1383, 96
    %v2332 = vpop.permute.xlu0 %2331
    %2333 = vrot.lane.b32.xlu0 %v1384, 96
    %v2334 = vpop.permute.xlu0 %2333
    %2335 = vrot.lane.b32.xlu0 %v1385, 96
    %v2336 = vpop.permute.xlu0 %2335
    %2337 = vrot.lane.b32.xlu0 %v1386, 96
    %v2338 = vpop.permute.xlu0 %2337
    %2339 = vrot.lane.b32.xlu0 %v1387, 96
    %v2340 = vpop.permute.xlu0 %2339
    %2341 = vrot.lane.b32.xlu0 %v1388, 96
    %v2342 = vpop.permute.xlu0 %2341
    %2343 = vrot.lane.b32.xlu0 %v1389, 96
    %v2344 = vpop.permute.xlu0 %2343
    %2345 = vrot.lane.b32.xlu0 %v1390, 96
    %v2346 = vpop.permute.xlu0 %2345
    %2347 = vrot.lane.b32.xlu0 %v1391, 96
    %v2348 = vpop.permute.xlu0 %2347
    %2349 = vrot.lane.b32.xlu0 %v1392, 96
    %v2350 = vpop.permute.xlu0 %2349
    %2351 = vrot.lane.b32.xlu0 %v1393, 96
    %v2352 = vpop.permute.xlu0 %2351
    %2353 = vrot.lane.b32.xlu0 %v1394, 96
    %v2354 = vpop.permute.xlu0 %2353
    %2355 = vrot.lane.b32.xlu0 %v1395, 96
    %v2356 = vpop.permute.xlu0 %2355
    %2357 = vrot.lane.b32.xlu0 %v1396, 96
    %v2358 = vpop.permute.xlu0 %2357
    %2359 = vrot.lane.b32.xlu0 %v1397, 96
    %v2360 = vpop.permute.xlu0 %2359
    %2361 = vrot.lane.b32.xlu0 %v1398, 96
    %v2362 = vpop.permute.xlu0 %2361
    %2363 = vrot.lane.b32.xlu0 %v1399, 96
    %v2364 = vpop.permute.xlu0 %2363
    %2365 = vrot.lane.b32.xlu0 %v1400, 96
    %v2366 = vpop.permute.xlu0 %2365
    %2367 = vrot.lane.b32.xlu0 %v1401, 96
    %v2368 = vpop.permute.xlu0 %2367
    %2369 = vrot.lane.b32.xlu0 %v1402, 96
    %v2370 = vpop.permute.xlu0 %2369
    %2371 = vrot.lane.b32.xlu0 %v1403, 96
    %v2372 = vpop.permute.xlu0 %2371
    %2373 = vrot.lane.b32.xlu0 %v1404, 96
    %v2374 = vpop.permute.xlu0 %2373
    %2375 = vrot.lane.b32.xlu0 %v1405, 96
    %v2376 = vpop.permute.xlu0 %2375
    %2377 = vrot.lane.b32.xlu0 %v1406, 96
    %v2378 = vpop.permute.xlu0 %2377
    %2379 = vrot.lane.b32.xlu0 %v1407, 96
    %v2380 = vpop.permute.xlu0 %2379
    %2381 = vrot.lane.b32.xlu0 %v1408, 96
    %v2382 = vpop.permute.xlu0 %2381
    %2383 = vrot.lane.b32.xlu0 %v1409, 96
    %v2384 = vpop.permute.xlu0 %2383
    %2385 = vrot.lane.b32.xlu0 %v1410, 96
    %v2386 = vpop.permute.xlu0 %2385
    %2387 = vrot.lane.b32.xlu0 %v1411, 96
    %v2388 = vpop.permute.xlu0 %2387
    %2389 = vrot.lane.b32.xlu0 %v1412, 96
    %v2390 = vpop.permute.xlu0 %2389
    %2391 = vrot.lane.b32.xlu0 %v1413, 96
    %v2392 = vpop.permute.xlu0 %2391
    %2393 = vrot.lane.b32.xlu0 %v1414, 96
    %v2394 = vpop.permute.xlu0 %2393
    %2395 = vrot.lane.b32.xlu0 %v1415, 96
    %v2396 = vpop.permute.xlu0 %2395
    %2397 = vrot.lane.b32.xlu0 %v1416, 96
    %v2398 = vpop.permute.xlu0 %2397
    %2399 = vrot.lane.b32.xlu0 %v1417, 96
    %v2400 = vpop.permute.xlu0 %2399
    %2401 = vrot.lane.b32.xlu0 %v1418, 96
    %v2402 = vpop.permute.xlu0 %2401
    %2403 = vrot.lane.b32.xlu0 %v1419, 96
    %v2404 = vpop.permute.xlu0 %2403
    %2405 = vrot.lane.b32.xlu0 %v1420, 96
    %v2406 = vpop.permute.xlu0 %2405
    %2407 = vrot.lane.b32.xlu0 %v1421, 96
    %v2408 = vpop.permute.xlu0 %2407
    %2409 = vrot.lane.b32.xlu0 %v1422, 96
    %v2410 = vpop.permute.xlu0 %2409
    %vm2472 = vcmask 1048320
    %2473 = vst.msk [vmem:[#allocation2] sm:$0xff] %vm2472, %v2290
    %2474 = vst.msk [vmem:[#allocation2 + $0x18] sm:$0xff] %vm2472, %v2292
    %2475 = vst.msk [vmem:[#allocation2 + $0x30] sm:$0xff] %vm2472, %v2294
    %2476 = vst.msk [vmem:[#allocation2 + $0x48] sm:$0xff] %vm2472, %v2296
    %2477 = vst.msk [vmem:[#allocation2 + $0x60] sm:$0xff] %vm2472, %v2298
    %2478 = vst.msk [vmem:[#allocation2 + $0x78] sm:$0xff] %vm2472, %v2300
    %2479 = vst.msk [vmem:[#allocation2 + $0x90] sm:$0xff] %vm2472, %v2302
    %2480 = vst.msk [vmem:[#allocation2 + $0xa8] sm:$0xff] %vm2472, %v2304
    %2481 = vst.msk [vmem:[#allocation2 + $0xc0] sm:$0xff] %vm2472, %v2306
    %2482 = vst.msk [vmem:[#allocation2 + $0xd8] sm:$0xff] %vm2472, %v2308
    %2483 = vst.msk [vmem:[#allocation2 + $0xf0] sm:$0xff] %vm2472, %v2310
    %2484 = vst.msk [vmem:[#allocation2 + $0x108] sm:$0xff] %vm2472, %v2312
    %2485 = vst.msk [vmem:[#allocation2 + $0x120] sm:$0xff] %vm2472, %v2314
    %2486 = vst.msk [vmem:[#allocation2 + $0x138] sm:$0xff] %vm2472, %v2316
    %2487 = vst.msk [vmem:[#allocation2 + $0x150] sm:$0xff] %vm2472, %v2318
    %2488 = vst.msk [vmem:[#allocation2 + $0x168] sm:$0xff] %vm2472, %v2320
    %2489 = vst.msk [vmem:[#allocation2 + $0x180] sm:$0xff] %vm2472, %v2322
    %2490 = vst.msk [vmem:[#allocation2 + $0x198] sm:$0xff] %vm2472, %v2324
    %2491 = vst.msk [vmem:[#allocation2 + $0x1b0] sm:$0xff] %vm2472, %v2326
    %2492 = vst.msk [vmem:[#allocation2 + $0x1c8] sm:$0xff] %vm2472, %v2328
    %2493 = vst.msk [vmem:[#allocation2 + $0x1e0] sm:$0xff] %vm2472, %v2330
    %2494 = vst.msk [vmem:[#allocation2 + $0x1f8] sm:$0xff] %vm2472, %v2332
    %2495 = vst.msk [vmem:[#allocation2 + $0x210] sm:$0xff] %vm2472, %v2334
    %2496 = vst.msk [vmem:[#allocation2 + $0x228] sm:$0xff] %vm2472, %v2336
    %2497 = vst.msk [vmem:[#allocation2 + $0x240] sm:$0xff] %vm2472, %v2338
    %2498 = vst.msk [vmem:[#allocation2 + $0x258] sm:$0xff] %vm2472, %v2340
    %2499 = vst.msk [vmem:[#allocation2 + $0x270] sm:$0xff] %vm2472, %v2342
    %2500 = vst.msk [vmem:[#allocation2 + $0x288] sm:$0xff] %vm2472, %v2344
    %2501 = vst.msk [vmem:[#allocation2 + $0x2a0] sm:$0xff] %vm2472, %v2346
    %2502 = vst.msk [vmem:[#allocation2 + $0x2b8] sm:$0xff] %vm2472, %v2348
    %2503 = vst.msk [vmem:[#allocation2 + $0x2d0] sm:$0xff] %vm2472, %v2350
    %2504 = vst.msk [vmem:[#allocation2 + $0x2e8] sm:$0xff] %vm2472, %v2352
    %2505 = vst.msk [vmem:[#allocation2 + $0x300] sm:$0xff] %vm2472, %v2354
    %2506 = vst.msk [vmem:[#allocation2 + $0x318] sm:$0xff] %vm2472, %v2356
    %2507 = vst.msk [vmem:[#allocation2 + $0x330] sm:$0xff] %vm2472, %v2358
    %2508 = vst.msk [vmem:[#allocation2 + $0x348] sm:$0xff] %vm2472, %v2360
    %2509 = vst.msk [vmem:[#allocation2 + $0x360] sm:$0xff] %vm2472, %v2362
    %2510 = vst.msk [vmem:[#allocation2 + $0x378] sm:$0xff] %vm2472, %v2364
    %2511 = vst.msk [vmem:[#allocation2 + $0x390] sm:$0xff] %vm2472, %v2366
    %2512 = vst.msk [vmem:[#allocation2 + $0x3a8] sm:$0xff] %vm2472, %v2368
    %2513 = vst.msk [vmem:[#allocation2 + $0x3c0] sm:$0xff] %vm2472, %v2370
    %2514 = vst.msk [vmem:[#allocation2 + $0x3d8] sm:$0xff] %vm2472, %v2372
    %2515 = vst.msk [vmem:[#allocation2 + $0x3f0] sm:$0xff] %vm2472, %v2374
    %2516 = vst.msk [vmem:[#allocation2 + $0x408] sm:$0xff] %vm2472, %v2376
    %2517 = vst.msk [vmem:[#allocation2 + $0x420] sm:$0xff] %vm2472, %v2378
    %2518 = vst.msk [vmem:[#allocation2 + $0x438] sm:$0xff] %vm2472, %v2380
    %2519 = vst.msk [vmem:[#allocation2 + $0x450] sm:$0xff] %vm2472, %v2382
    %2520 = vst.msk [vmem:[#allocation2 + $0x468] sm:$0xff] %vm2472, %v2384
    %2521 = vst.msk [vmem:[#allocation2 + $0x480] sm:$0xff] %vm2472, %v2386
    %2522 = vst.msk [vmem:[#allocation2 + $0x498] sm:$0xff] %vm2472, %v2388
    %2523 = vst.msk [vmem:[#allocation2 + $0x4b0] sm:$0xff] %vm2472, %v2390
    %2524 = vst.msk [vmem:[#allocation2 + $0x4c8] sm:$0xff] %vm2472, %v2392
    %2525 = vst.msk [vmem:[#allocation2 + $0x4e0] sm:$0xff] %vm2472, %v2394
    %2526 = vst.msk [vmem:[#allocation2 + $0x4f8] sm:$0xff] %vm2472, %v2396
    %2527 = vst.msk [vmem:[#allocation2 + $0x510] sm:$0xff] %vm2472, %v2398
    %2528 = vst.msk [vmem:[#allocation2 + $0x528] sm:$0xff] %vm2472, %v2400
    %2529 = vst.msk [vmem:[#allocation2 + $0x540] sm:$0xff] %vm2472, %v2402
    %2530 = vst.msk [vmem:[#allocation2 + $0x558] sm:$0xff] %vm2472, %v2404
    %2531 = vst.msk [vmem:[#allocation2 + $0x570] sm:$0xff] %vm2472, %v2406
    %2532 = vst.msk [vmem:[#allocation2 + $0x588] sm:$0xff] %vm2472, %v2408
    %2533 = vst.msk [vmem:[#allocation2 + $0x5a0] sm:$0xff] %vm2472, %v2410
    %v2535 = vrot.slane %v1422, 1
    %v2536 = vsel %vm1550, %v1672, %v2535
    %v2537 = vrot.slane %v1423, 1
    %v2538 = vsel %vm1550, %v2535, %v2537
    %2600 = vst.msk [vmem:[#allocation2 + $0x8] sm:$0xff] %vm1426, %v1557
    %2601 = vst.msk [vmem:[#allocation2 + $0x20] sm:$0xff] %vm1426, %v1559
    %2602 = vst.msk [vmem:[#allocation2 + $0x38] sm:$0xff] %vm1426, %v1561
    %2603 = vst.msk [vmem:[#allocation2 + $0x50] sm:$0xff] %vm1426, %v1563
    %2604 = vst.msk [vmem:[#allocation2 + $0x68] sm:$0xff] %vm1426, %v1565
    %2605 = vst.msk [vmem:[#allocation2 + $0x80] sm:$0xff] %vm1426, %v1567
    %2606 = vst.msk [vmem:[#allocation2 + $0x98] sm:$0xff] %vm1426, %v1569
    %2607 = vst.msk [vmem:[#allocation2 + $0xb0] sm:$0xff] %vm1426, %v1571
    %2608 = vst.msk [vmem:[#allocation2 + $0xc8] sm:$0xff] %vm1426, %v1573
    %2609 = vst.msk [vmem:[#allocation2 + $0xe0] sm:$0xff] %vm1426, %v1575
    %2610 = vst.msk [vmem:[#allocation2 + $0xf8] sm:$0xff] %vm1426, %v1577
    %2611 = vst.msk [vmem:[#allocation2 + $0x110] sm:$0xff] %vm1426, %v1579
    %2612 = vst.msk [vmem:[#allocation2 + $0x128] sm:$0xff] %vm1426, %v1581
    %2613 = vst.msk [vmem:[#allocation2 + $0x140] sm:$0xff] %vm1426, %v1583
    %2614 = vst.msk [vmem:[#allocation2 + $0x158] sm:$0xff] %vm1426, %v1585
    %2615 = vst.msk [vmem:[#allocation2 + $0x170] sm:$0xff] %vm1426, %v1587
    %2616 = vst.msk [vmem:[#allocation2 + $0x188] sm:$0xff] %vm1426, %v1589
    %2617 = vst.msk [vmem:[#allocation2 + $0x1a0] sm:$0xff] %vm1426, %v1591
    %2618 = vst.msk [vmem:[#allocation2 + $0x1b8] sm:$0xff] %vm1426, %v1593
    %2619 = vst.msk [vmem:[#allocation2 + $0x1d0] sm:$0xff] %vm1426, %v1595
    %2620 = vst.msk [vmem:[#allocation2 + $0x1e8] sm:$0xff] %vm1426, %v1597
    %2621 = vst.msk [vmem:[#allocation2 + $0x200] sm:$0xff] %vm1426, %v1599
    %2622 = vst.msk [vmem:[#allocation2 + $0x218] sm:$0xff] %vm1426, %v1601
    %2623 = vst.msk [vmem:[#allocation2 + $0x230] sm:$0xff] %vm1426, %v1603
    %2624 = vst.msk [vmem:[#allocation2 + $0x248] sm:$0xff] %vm1426, %v1605
    %2625 = vst.msk [vmem:[#allocation2 + $0x260] sm:$0xff] %vm1426, %v1607
    %2626 = vst.msk [vmem:[#allocation2 + $0x278] sm:$0xff] %vm1426, %v1609
    %2627 = vst.msk [vmem:[#allocation2 + $0x290] sm:$0xff] %vm1426, %v1611
    %2628 = vst.msk [vmem:[#allocation2 + $0x2a8] sm:$0xff] %vm1426, %v1613
    %2629 = vst.msk [vmem:[#allocation2 + $0x2c0] sm:$0xff] %vm1426, %v1615
    %2630 = vst.msk [vmem:[#allocation2 + $0x2d8] sm:$0xff] %vm1426, %v1617
    %2631 = vst.msk [vmem:[#allocation2 + $0x2f0] sm:$0xff] %vm1426, %v1619
    %2632 = vst.msk [vmem:[#allocation2 + $0x308] sm:$0xff] %vm1426, %v1621
    %2633 = vst.msk [vmem:[#allocation2 + $0x320] sm:$0xff] %vm1426, %v1623
    %2634 = vst.msk [vmem:[#allocation2 + $0x338] sm:$0xff] %vm1426, %v1625
    %2635 = vst.msk [vmem:[#allocation2 + $0x350] sm:$0xff] %vm1426, %v1627
    %2636 = vst.msk [vmem:[#allocation2 + $0x368] sm:$0xff] %vm1426, %v1629
    %2637 = vst.msk [vmem:[#allocation2 + $0x380] sm:$0xff] %vm1426, %v1631
    %2638 = vst.msk [vmem:[#allocation2 + $0x398] sm:$0xff] %vm1426, %v1633
    %2639 = vst.msk [vmem:[#allocation2 + $0x3b0] sm:$0xff] %vm1426, %v1635
    %2640 = vst.msk [vmem:[#allocation2 + $0x3c8] sm:$0xff] %vm1426, %v1637
    %2641 = vst.msk [vmem:[#allocation2 + $0x3e0] sm:$0xff] %vm1426, %v1639
    %2642 = vst.msk [vmem:[#allocation2 + $0x3f8] sm:$0xff] %vm1426, %v1641
    %2643 = vst.msk [vmem:[#allocation2 + $0x410] sm:$0xff] %vm1426, %v1643
    %2644 = vst.msk [vmem:[#allocation2 + $0x428] sm:$0xff] %vm1426, %v1645
    %2645 = vst.msk [vmem:[#allocation2 + $0x440] sm:$0xff] %vm1426, %v1647
    %2646 = vst.msk [vmem:[#allocation2 + $0x458] sm:$0xff] %vm1426, %v1649
    %2647 = vst.msk [vmem:[#allocation2 + $0x470] sm:$0xff] %vm1426, %v1651
    %2648 = vst.msk [vmem:[#allocation2 + $0x488] sm:$0xff] %vm1426, %v1653
    %2649 = vst.msk [vmem:[#allocation2 + $0x4a0] sm:$0xff] %vm1426, %v1655
    %2650 = vst.msk [vmem:[#allocation2 + $0x4b8] sm:$0xff] %vm1426, %v1657
    %2651 = vst.msk [vmem:[#allocation2 + $0x4d0] sm:$0xff] %vm1426, %v1659
    %2652 = vst.msk [vmem:[#allocation2 + $0x4e8] sm:$0xff] %vm1426, %v1661
    %2653 = vst.msk [vmem:[#allocation2 + $0x500] sm:$0xff] %vm1426, %v1663
    %2654 = vst.msk [vmem:[#allocation2 + $0x518] sm:$0xff] %vm1426, %v1665
    %2655 = vst.msk [vmem:[#allocation2 + $0x530] sm:$0xff] %vm1426, %v1667
    %2656 = vst.msk [vmem:[#allocation2 + $0x548] sm:$0xff] %vm1426, %v1669
    %2657 = vst.msk [vmem:[#allocation2 + $0x560] sm:$0xff] %vm1426, %v1671
    %2658 = vst.msk [vmem:[#allocation2 + $0x578] sm:$0xff] %vm1426, %v1673
    %2659 = vst.msk [vmem:[#allocation2 + $0x590] sm:$0xff] %vm1426, %v2536
    %2660 = vst.msk [vmem:[#allocation2 + $0x5a8] sm:$0xff] %vm1426, %v2538
    %v2661 = vrot.slane %v1422, 2
    %v2662 = vsel %vm1919, %v2041, %v2661
    %v2663 = vrot.slane %v1423, 2
    %v2664 = vsel %vm1919, %v2661, %v2663
    %2665 = vrot.lane.b32.xlu0 %v1926, 32
    %v2666 = vpop.permute.xlu0 %2665
    %2667 = vrot.lane.b32.xlu0 %v1928, 32
    %v2668 = vpop.permute.xlu0 %2667
    %2669 = vrot.lane.b32.xlu0 %v1930, 32
    %v2670 = vpop.permute.xlu0 %2669
    %2671 = vrot.lane.b32.xlu0 %v1932, 32
    %v2672 = vpop.permute.xlu0 %2671
    %2673 = vrot.lane.b32.xlu0 %v1934, 32
    %v2674 = vpop.permute.xlu0 %2673
    %2675 = vrot.lane.b32.xlu0 %v1936, 32
    %v2676 = vpop.permute.xlu0 %2675
    %2677 = vrot.lane.b32.xlu0 %v1938, 32
    %v2678 = vpop.permute.xlu0 %2677
    %2679 = vrot.lane.b32.xlu0 %v1940, 32
    %v2680 = vpop.permute.xlu0 %2679
    %2681 = vrot.lane.b32.xlu0 %v1942, 32
    %v2682 = vpop.permute.xlu0 %2681
    %2683 = vrot.lane.b32.xlu0 %v1944, 32
    %v2684 = vpop.permute.xlu0 %2683
    %2685 = vrot.lane.b32.xlu0 %v1946, 32
    %v2686 = vpop.permute.xlu0 %2685
    %2687 = vrot.lane.b32.xlu0 %v1948, 32
    %v2688 = vpop.permute.xlu0 %2687
    %2689 = vrot.lane.b32.xlu0 %v1950, 32
    %v2690 = vpop.permute.xlu0 %2689
    %2691 = vrot.lane.b32.xlu0 %v1952, 32
    %v2692 = vpop.permute.xlu0 %2691
    %2693 = vrot.lane.b32.xlu0 %v1954, 32
    %v2694 = vpop.permute.xlu0 %2693
    %2695 = vrot.lane.b32.xlu0 %v1956, 32
    %v2696 = vpop.permute.xlu0 %2695
    %2697 = vrot.lane.b32.xlu0 %v1958, 32
    %v2698 = vpop.permute.xlu0 %2697
    %2699 = vrot.lane.b32.xlu0 %v1960, 32
    %v2700 = vpop.permute.xlu0 %2699
    %2701 = vrot.lane.b32.xlu0 %v1962, 32
    %v2702 = vpop.permute.xlu0 %2701
    %2703 = vrot.lane.b32.xlu0 %v1964, 32
    %v2704 = vpop.permute.xlu0 %2703
    %2705 = vrot.lane.b32.xlu0 %v1966, 32
    %v2706 = vpop.permute.xlu0 %2705
    %2707 = vrot.lane.b32.xlu0 %v1968, 32
    %v2708 = vpop.permute.xlu0 %2707
    %2709 = vrot.lane.b32.xlu0 %v1970, 32
    %v2710 = vpop.permute.xlu0 %2709
    %2711 = vrot.lane.b32.xlu0 %v1972, 32
    %v2712 = vpop.permute.xlu0 %2711
    %2713 = vrot.lane.b32.xlu0 %v1974, 32
    %v2714 = vpop.permute.xlu0 %2713
    %2715 = vrot.lane.b32.xlu0 %v1976, 32
    %v2716 = vpop.permute.xlu0 %2715
    %2717 = vrot.lane.b32.xlu0 %v1978, 32
    %v2718 = vpop.permute.xlu0 %2717
    %2719 = vrot.lane.b32.xlu0 %v1980, 32
    %v2720 = vpop.permute.xlu0 %2719
    %2721 = vrot.lane.b32.xlu0 %v1982, 32
    %v2722 = vpop.permute.xlu0 %2721
    %2723 = vrot.lane.b32.xlu0 %v1984, 32
    %v2724 = vpop.permute.xlu0 %2723
    %2725 = vrot.lane.b32.xlu0 %v1986, 32
    %v2726 = vpop.permute.xlu0 %2725
    %2727 = vrot.lane.b32.xlu0 %v1988, 32
    %v2728 = vpop.permute.xlu0 %2727
    %2729 = vrot.lane.b32.xlu0 %v1990, 32
    %v2730 = vpop.permute.xlu0 %2729
    %2731 = vrot.lane.b32.xlu0 %v1992, 32
    %v2732 = vpop.permute.xlu0 %2731
    %2733 = vrot.lane.b32.xlu0 %v1994, 32
    %v2734 = vpop.permute.xlu0 %2733
    %2735 = vrot.lane.b32.xlu0 %v1996, 32
    %v2736 = vpop.permute.xlu0 %2735
    %2737 = vrot.lane.b32.xlu0 %v1998, 32
    %v2738 = vpop.permute.xlu0 %2737
    %2739 = vrot.lane.b32.xlu0 %v2000, 32
    %v2740 = vpop.permute.xlu0 %2739
    %2741 = vrot.lane.b32.xlu0 %v2002, 32
    %v2742 = vpop.permute.xlu0 %2741
    %2743 = vrot.lane.b32.xlu0 %v2004, 32
    %v2744 = vpop.permute.xlu0 %2743
    %2745 = vrot.lane.b32.xlu0 %v2006, 32
    %v2746 = vpop.permute.xlu0 %2745
    %2747 = vrot.lane.b32.xlu0 %v2008, 32
    %v2748 = vpop.permute.xlu0 %2747
    %2749 = vrot.lane.b32.xlu0 %v2010, 32
    %v2750 = vpop.permute.xlu0 %2749
    %2751 = vrot.lane.b32.xlu0 %v2012, 32
    %v2752 = vpop.permute.xlu0 %2751
    %2753 = vrot.lane.b32.xlu0 %v2014, 32
    %v2754 = vpop.permute.xlu0 %2753
    %2755 = vrot.lane.b32.xlu0 %v2016, 32
    %v2756 = vpop.permute.xlu0 %2755
    %2757 = vrot.lane.b32.xlu0 %v2018, 32
    %v2758 = vpop.permute.xlu0 %2757
    %2759 = vrot.lane.b32.xlu0 %v2020, 32
    %v2760 = vpop.permute.xlu0 %2759
    %2761 = vrot.lane.b32.xlu0 %v2022, 32
    %v2762 = vpop.permute.xlu0 %2761
    %2763 = vrot.lane.b32.xlu0 %v2024, 32
    %v2764 = vpop.permute.xlu0 %2763
    %2765 = vrot.lane.b32.xlu0 %v2026, 32
    %v2766 = vpop.permute.xlu0 %2765
    %2767 = vrot.lane.b32.xlu0 %v2028, 32
    %v2768 = vpop.permute.xlu0 %2767
    %2769 = vrot.lane.b32.xlu0 %v2030, 32
    %v2770 = vpop.permute.xlu0 %2769
    %2771 = vrot.lane.b32.xlu0 %v2032, 32
    %v2772 = vpop.permute.xlu0 %2771
    %2773 = vrot.lane.b32.xlu0 %v2034, 32
    %v2774 = vpop.permute.xlu0 %2773
    %2775 = vrot.lane.b32.xlu0 %v2036, 32
    %v2776 = vpop.permute.xlu0 %2775
    %2777 = vrot.lane.b32.xlu0 %v2038, 32
    %v2778 = vpop.permute.xlu0 %2777
    %2779 = vrot.lane.b32.xlu0 %v2040, 32
    %v2780 = vpop.permute.xlu0 %2779
    %2781 = vrot.lane.b32.xlu0 %v2042, 32
    %v2782 = vpop.permute.xlu0 %2781
    %2783 = vrot.lane.b32.xlu0 %v2662, 32
    %v2784 = vpop.permute.xlu0 %2783
    %2785 = vrot.lane.b32.xlu0 %v2664, 32
    %v2786 = vpop.permute.xlu0 %2785
    %2848 = vst.msk [vmem:[#allocation2 + $0x8] sm:$0xff] %vm1857, %v2666
    %2849 = vst.msk [vmem:[#allocation2 + $0x20] sm:$0xff] %vm1857, %v2668
    %2850 = vst.msk [vmem:[#allocation2 + $0x38] sm:$0xff] %vm1857, %v2670
    %2851 = vst.msk [vmem:[#allocation2 + $0x50] sm:$0xff] %vm1857, %v2672
    %2852 = vst.msk [vmem:[#allocation2 + $0x68] sm:$0xff] %vm1857, %v2674
    %2853 = vst.msk [vmem:[#allocation2 + $0x80] sm:$0xff] %vm1857, %v2676
    %2854 = vst.msk [vmem:[#allocation2 + $0x98] sm:$0xff] %vm1857, %v2678
    %2855 = vst.msk [vmem:[#allocation2 + $0xb0] sm:$0xff] %vm1857, %v2680
    %2856 = vst.msk [vmem:[#allocation2 + $0xc8] sm:$0xff] %vm1857, %v2682
    %2857 = vst.msk [vmem:[#allocation2 + $0xe0] sm:$0xff] %vm1857, %v2684
    %2858 = vst.msk [vmem:[#allocation2 + $0xf8] sm:$0xff] %vm1857, %v2686
    %2859 = vst.msk [vmem:[#allocation2 + $0x110] sm:$0xff] %vm1857, %v2688
    %2860 = vst.msk [vmem:[#allocation2 + $0x128] sm:$0xff] %vm1857, %v2690
    %2861 = vst.msk [vmem:[#allocation2 + $0x140] sm:$0xff] %vm1857, %v2692
    %2862 = vst.msk [vmem:[#allocation2 + $0x158] sm:$0xff] %vm1857, %v2694
    %2863 = vst.msk [vmem:[#allocation2 + $0x170] sm:$0xff] %vm1857, %v2696
    %2864 = vst.msk [vmem:[#allocation2 + $0x188] sm:$0xff] %vm1857, %v2698
    %2865 = vst.msk [vmem:[#allocation2 + $0x1a0] sm:$0xff] %vm1857, %v2700
    %2866 = vst.msk [vmem:[#allocation2 + $0x1b8] sm:$0xff] %vm1857, %v2702
    %2867 = vst.msk [vmem:[#allocation2 + $0x1d0] sm:$0xff] %vm1857, %v2704
    %2868 = vst.msk [vmem:[#allocation2 + $0x1e8] sm:$0xff] %vm1857, %v2706
    %2869 = vst.msk [vmem:[#allocation2 + $0x200] sm:$0xff] %vm1857, %v2708
    %2870 = vst.msk [vmem:[#allocation2 + $0x218] sm:$0xff] %vm1857, %v2710
    %2871 = vst.msk [vmem:[#allocation2 + $0x230] sm:$0xff] %vm1857, %v2712
    %2872 = vst.msk [vmem:[#allocation2 + $0x248] sm:$0xff] %vm1857, %v2714
    %2873 = vst.msk [vmem:[#allocation2 + $0x260] sm:$0xff] %vm1857, %v2716
    %2874 = vst.msk [vmem:[#allocation2 + $0x278] sm:$0xff] %vm1857, %v2718
    %2875 = vst.msk [vmem:[#allocation2 + $0x290] sm:$0xff] %vm1857, %v2720
    %2876 = vst.msk [vmem:[#allocation2 + $0x2a8] sm:$0xff] %vm1857, %v2722
    %2877 = vst.msk [vmem:[#allocation2 + $0x2c0] sm:$0xff] %vm1857, %v2724
    %2878 = vst.msk [vmem:[#allocation2 + $0x2d8] sm:$0xff] %vm1857, %v2726
    %2879 = vst.msk [vmem:[#allocation2 + $0x2f0] sm:$0xff] %vm1857, %v2728
    %2880 = vst.msk [vmem:[#allocation2 + $0x308] sm:$0xff] %vm1857, %v2730
    %2881 = vst.msk [vmem:[#allocation2 + $0x320] sm:$0xff] %vm1857, %v2732
    %2882 = vst.msk [vmem:[#allocation2 + $0x338] sm:$0xff] %vm1857, %v2734
    %2883 = vst.msk [vmem:[#allocation2 + $0x350] sm:$0xff] %vm1857, %v2736
    %2884 = vst.msk [vmem:[#allocation2 + $0x368] sm:$0xff] %vm1857, %v2738
    %2885 = vst.msk [vmem:[#allocation2 + $0x380] sm:$0xff] %vm1857, %v2740
    %2886 = vst.msk [vmem:[#allocation2 + $0x398] sm:$0xff] %vm1857, %v2742
    %2887 = vst.msk [vmem:[#allocation2 + $0x3b0] sm:$0xff] %vm1857, %v2744
    %2888 = vst.msk [vmem:[#allocation2 + $0x3c8] sm:$0xff] %vm1857, %v2746
    %2889 = vst.msk [vmem:[#allocation2 + $0x3e0] sm:$0xff] %vm1857, %v2748
    %2890 = vst.msk [vmem:[#allocation2 + $0x3f8] sm:$0xff] %vm1857, %v2750
    %2891 = vst.msk [vmem:[#allocation2 + $0x410] sm:$0xff] %vm1857, %v2752
    %2892 = vst.msk [vmem:[#allocation2 + $0x428] sm:$0xff] %vm1857, %v2754
    %2893 = vst.msk [vmem:[#allocation2 + $0x440] sm:$0xff] %vm1857, %v2756
    %2894 = vst.msk [vmem:[#allocation2 + $0x458] sm:$0xff] %vm1857, %v2758
    %2895 = vst.msk [vmem:[#allocation2 + $0x470] sm:$0xff] %vm1857, %v2760
    %2896 = vst.msk [vmem:[#allocation2 + $0x488] sm:$0xff] %vm1857, %v2762
    %2897 = vst.msk [vmem:[#allocation2 + $0x4a0] sm:$0xff] %vm1857, %v2764
    %2898 = vst.msk [vmem:[#allocation2 + $0x4b8] sm:$0xff] %vm1857, %v2766
    %2899 = vst.msk [vmem:[#allocation2 + $0x4d0] sm:$0xff] %vm1857, %v2768
    %2900 = vst.msk [vmem:[#allocation2 + $0x4e8] sm:$0xff] %vm1857, %v2770
    %2901 = vst.msk [vmem:[#allocation2 + $0x500] sm:$0xff] %vm1857, %v2772
    %2902 = vst.msk [vmem:[#allocation2 + $0x518] sm:$0xff] %vm1857, %v2774
    %2903 = vst.msk [vmem:[#allocation2 + $0x530] sm:$0xff] %vm1857, %v2776
    %2904 = vst.msk [vmem:[#allocation2 + $0x548] sm:$0xff] %vm1857, %v2778
    %2905 = vst.msk [vmem:[#allocation2 + $0x560] sm:$0xff] %vm1857, %v2780
    %2906 = vst.msk [vmem:[#allocation2 + $0x578] sm:$0xff] %vm1857, %v2782
    %2907 = vst.msk [vmem:[#allocation2 + $0x590] sm:$0xff] %vm1857, %v2784
    %2908 = vst.msk [vmem:[#allocation2 + $0x5a8] sm:$0xff] %vm1857, %v2786
    %2910 = vrot.lane.b32.xlu0 %v1364, 64
    %v2911 = vpop.permute.xlu0 %2910
    %2912 = vrot.lane.b32.xlu0 %v1365, 64
    %v2913 = vpop.permute.xlu0 %2912
    %2914 = vrot.lane.b32.xlu0 %v1366, 64
    %v2915 = vpop.permute.xlu0 %2914
    %2916 = vrot.lane.b32.xlu0 %v1367, 64
    %v2917 = vpop.permute.xlu0 %2916
    %2918 = vrot.lane.b32.xlu0 %v1368, 64
    %v2919 = vpop.permute.xlu0 %2918
    %2920 = vrot.lane.b32.xlu0 %v1369, 64
    %v2921 = vpop.permute.xlu0 %2920
    %2922 = vrot.lane.b32.xlu0 %v1370, 64
    %v2923 = vpop.permute.xlu0 %2922
    %2924 = vrot.lane.b32.xlu0 %v1371, 64
    %v2925 = vpop.permute.xlu0 %2924
    %2926 = vrot.lane.b32.xlu0 %v1372, 64
    %v2927 = vpop.permute.xlu0 %2926
    %2928 = vrot.lane.b32.xlu0 %v1373, 64
    %v2929 = vpop.permute.xlu0 %2928
    %2930 = vrot.lane.b32.xlu0 %v1374, 64
    %v2931 = vpop.permute.xlu0 %2930
    %2932 = vrot.lane.b32.xlu0 %v1375, 64
    %v2933 = vpop.permute.xlu0 %2932
    %2934 = vrot.lane.b32.xlu0 %v1376, 64
    %v2935 = vpop.permute.xlu0 %2934
    %2936 = vrot.lane.b32.xlu0 %v1377, 64
    %v2937 = vpop.permute.xlu0 %2936
    %2938 = vrot.lane.b32.xlu0 %v1378, 64
    %v2939 = vpop.permute.xlu0 %2938
    %2940 = vrot.lane.b32.xlu0 %v1379, 64
    %v2941 = vpop.permute.xlu0 %2940
    %2942 = vrot.lane.b32.xlu0 %v1380, 64
    %v2943 = vpop.permute.xlu0 %2942
    %2944 = vrot.lane.b32.xlu0 %v1381, 64
    %v2945 = vpop.permute.xlu0 %2944
    %2946 = vrot.lane.b32.xlu0 %v1382, 64
    %v2947 = vpop.permute.xlu0 %2946
    %2948 = vrot.lane.b32.xlu0 %v1383, 64
    %v2949 = vpop.permute.xlu0 %2948
    %2950 = vrot.lane.b32.xlu0 %v1384, 64
    %v2951 = vpop.permute.xlu0 %2950
    %2952 = vrot.lane.b32.xlu0 %v1385, 64
    %v2953 = vpop.permute.xlu0 %2952
    %2954 = vrot.lane.b32.xlu0 %v1386, 64
    %v2955 = vpop.permute.xlu0 %2954
    %2956 = vrot.lane.b32.xlu0 %v1387, 64
    %v2957 = vpop.permute.xlu0 %2956
    %2958 = vrot.lane.b32.xlu0 %v1388, 64
    %v2959 = vpop.permute.xlu0 %2958
    %2960 = vrot.lane.b32.xlu0 %v1389, 64
    %v2961 = vpop.permute.xlu0 %2960
    %2962 = vrot.lane.b32.xlu0 %v1390, 64
    %v2963 = vpop.permute.xlu0 %2962
    %2964 = vrot.lane.b32.xlu0 %v1391, 64
    %v2965 = vpop.permute.xlu0 %2964
    %2966 = vrot.lane.b32.xlu0 %v1392, 64
    %v2967 = vpop.permute.xlu0 %2966
    %2968 = vrot.lane.b32.xlu0 %v1393, 64
    %v2969 = vpop.permute.xlu0 %2968
    %2970 = vrot.lane.b32.xlu0 %v1394, 64
    %v2971 = vpop.permute.xlu0 %2970
    %2972 = vrot.lane.b32.xlu0 %v1395, 64
    %v2973 = vpop.permute.xlu0 %2972
    %2974 = vrot.lane.b32.xlu0 %v1396, 64
    %v2975 = vpop.permute.xlu0 %2974
    %2976 = vrot.lane.b32.xlu0 %v1397, 64
    %v2977 = vpop.permute.xlu0 %2976
    %2978 = vrot.lane.b32.xlu0 %v1398, 64
    %v2979 = vpop.permute.xlu0 %2978
    %2980 = vrot.lane.b32.xlu0 %v1399, 64
    %v2981 = vpop.permute.xlu0 %2980
    %2982 = vrot.lane.b32.xlu0 %v1400, 64
    %v2983 = vpop.permute.xlu0 %2982
    %2984 = vrot.lane.b32.xlu0 %v1401, 64
    %v2985 = vpop.permute.xlu0 %2984
    %2986 = vrot.lane.b32.xlu0 %v1402, 64
    %v2987 = vpop.permute.xlu0 %2986
    %2988 = vrot.lane.b32.xlu0 %v1403, 64
    %v2989 = vpop.permute.xlu0 %2988
    %2990 = vrot.lane.b32.xlu0 %v1404, 64
    %v2991 = vpop.permute.xlu0 %2990
    %2992 = vrot.lane.b32.xlu0 %v1405, 64
    %v2993 = vpop.permute.xlu0 %2992
    %2994 = vrot.lane.b32.xlu0 %v1406, 64
    %v2995 = vpop.permute.xlu0 %2994
    %2996 = vrot.lane.b32.xlu0 %v1407, 64
    %v2997 = vpop.permute.xlu0 %2996
    %2998 = vrot.lane.b32.xlu0 %v1408, 64
    %v2999 = vpop.permute.xlu0 %2998
    %3000 = vrot.lane.b32.xlu0 %v1409, 64
    %v3001 = vpop.permute.xlu0 %3000
    %3002 = vrot.lane.b32.xlu0 %v1410, 64
    %v3003 = vpop.permute.xlu0 %3002
    %3004 = vrot.lane.b32.xlu0 %v1411, 64
    %v3005 = vpop.permute.xlu0 %3004
    %3006 = vrot.lane.b32.xlu0 %v1412, 64
    %v3007 = vpop.permute.xlu0 %3006
    %3008 = vrot.lane.b32.xlu0 %v1413, 64
    %v3009 = vpop.permute.xlu0 %3008
    %3010 = vrot.lane.b32.xlu0 %v1414, 64
    %v3011 = vpop.permute.xlu0 %3010
    %3012 = vrot.lane.b32.xlu0 %v1415, 64
    %v3013 = vpop.permute.xlu0 %3012
    %3014 = vrot.lane.b32.xlu0 %v1416, 64
    %v3015 = vpop.permute.xlu0 %3014
    %3016 = vrot.lane.b32.xlu0 %v1417, 64
    %v3017 = vpop.permute.xlu0 %3016
    %3018 = vrot.lane.b32.xlu0 %v1418, 64
    %v3019 = vpop.permute.xlu0 %3018
    %3020 = vrot.lane.b32.xlu0 %v1419, 64
    %v3021 = vpop.permute.xlu0 %3020
    %3022 = vrot.lane.b32.xlu0 %v1420, 64
    %v3023 = vpop.permute.xlu0 %3022
    %3024 = vrot.lane.b32.xlu0 %v1421, 64
    %v3025 = vpop.permute.xlu0 %3024
    %3026 = vrot.lane.b32.xlu0 %v1422, 64
    %v3027 = vpop.permute.xlu0 %3026
    %3028 = vrot.lane.b32.xlu0 %v1423, 64
    %v3029 = vpop.permute.xlu0 %3028
    %3030 = vrot.lane.b32.xlu0 %v1424, 64
    %v3031 = vpop.permute.xlu0 %3030
    %3093 = vst.msk [vmem:[#allocation2 + $0x8] sm:$0xff] %vm2226, %v2911
    %3094 = vst.msk [vmem:[#allocation2 + $0x20] sm:$0xff] %vm2226, %v2913
    %3095 = vst.msk [vmem:[#allocation2 + $0x38] sm:$0xff] %vm2226, %v2915
    %3096 = vst.msk [vmem:[#allocation2 + $0x50] sm:$0xff] %vm2226, %v2917
    %3097 = vst.msk [vmem:[#allocation2 + $0x68] sm:$0xff] %vm2226, %v2919
    %3098 = vst.msk [vmem:[#allocation2 + $0x80] sm:$0xff] %vm2226, %v2921
    %3099 = vst.msk [vmem:[#allocation2 + $0x98] sm:$0xff] %vm2226, %v2923
    %3100 = vst.msk [vmem:[#allocation2 + $0xb0] sm:$0xff] %vm2226, %v2925
    %3101 = vst.msk [vmem:[#allocation2 + $0xc8] sm:$0xff] %vm2226, %v2927
    %3102 = vst.msk [vmem:[#allocation2 + $0xe0] sm:$0xff] %vm2226, %v2929
    %3103 = vst.msk [vmem:[#allocation2 + $0xf8] sm:$0xff] %vm2226, %v2931
    %3104 = vst.msk [vmem:[#allocation2 + $0x110] sm:$0xff] %vm2226, %v2933
    %3105 = vst.msk [vmem:[#allocation2 + $0x128] sm:$0xff] %vm2226, %v2935
    %3106 = vst.msk [vmem:[#allocation2 + $0x140] sm:$0xff] %vm2226, %v2937
    %3107 = vst.msk [vmem:[#allocation2 + $0x158] sm:$0xff] %vm2226, %v2939
    %3108 = vst.msk [vmem:[#allocation2 + $0x170] sm:$0xff] %vm2226, %v2941
    %3109 = vst.msk [vmem:[#allocation2 + $0x188] sm:$0xff] %vm2226, %v2943
    %3110 = vst.msk [vmem:[#allocation2 + $0x1a0] sm:$0xff] %vm2226, %v2945
    %3111 = vst.msk [vmem:[#allocation2 + $0x1b8] sm:$0xff] %vm2226, %v2947
    %3112 = vst.msk [vmem:[#allocation2 + $0x1d0] sm:$0xff] %vm2226, %v2949
    %3113 = vst.msk [vmem:[#allocation2 + $0x1e8] sm:$0xff] %vm2226, %v2951
    %3114 = vst.msk [vmem:[#allocation2 + $0x200] sm:$0xff] %vm2226, %v2953
    %3115 = vst.msk [vmem:[#allocation2 + $0x218] sm:$0xff] %vm2226, %v2955
    %3116 = vst.msk [vmem:[#allocation2 + $0x230] sm:$0xff] %vm2226, %v2957
    %3117 = vst.msk [vmem:[#allocation2 + $0x248] sm:$0xff] %vm2226, %v2959
    %3118 = vst.msk [vmem:[#allocation2 + $0x260] sm:$0xff] %vm2226, %v2961
    %3119 = vst.msk [vmem:[#allocation2 + $0x278] sm:$0xff] %vm2226, %v2963
    %3120 = vst.msk [vmem:[#allocation2 + $0x290] sm:$0xff] %vm2226, %v2965
    %3121 = vst.msk [vmem:[#allocation2 + $0x2a8] sm:$0xff] %vm2226, %v2967
    %3122 = vst.msk [vmem:[#allocation2 + $0x2c0] sm:$0xff] %vm2226, %v2969
    %3123 = vst.msk [vmem:[#allocation2 + $0x2d8] sm:$0xff] %vm2226, %v2971
    %3124 = vst.msk [vmem:[#allocation2 + $0x2f0] sm:$0xff] %vm2226, %v2973
    %3125 = vst.msk [vmem:[#allocation2 + $0x308] sm:$0xff] %vm2226, %v2975
    %3126 = vst.msk [vmem:[#allocation2 + $0x320] sm:$0xff] %vm2226, %v2977
    %3127 = vst.msk [vmem:[#allocation2 + $0x338] sm:$0xff] %vm2226, %v2979
    %3128 = vst.msk [vmem:[#allocation2 + $0x350] sm:$0xff] %vm2226, %v2981
    %3129 = vst.msk [vmem:[#allocation2 + $0x368] sm:$0xff] %vm2226, %v2983
    %3130 = vst.msk [vmem:[#allocation2 + $0x380] sm:$0xff] %vm2226, %v2985
    %3131 = vst.msk [vmem:[#allocation2 + $0x398] sm:$0xff] %vm2226, %v2987
    %3132 = vst.msk [vmem:[#allocation2 + $0x3b0] sm:$0xff] %vm2226, %v2989
    %3133 = vst.msk [vmem:[#allocation2 + $0x3c8] sm:$0xff] %vm2226, %v2991
    %3134 = vst.msk [vmem:[#allocation2 + $0x3e0] sm:$0xff] %vm2226, %v2993
    %3135 = vst.msk [vmem:[#allocation2 + $0x3f8] sm:$0xff] %vm2226, %v2995
    %3136 = vst.msk [vmem:[#allocation2 + $0x410] sm:$0xff] %vm2226, %v2997
    %3137 = vst.msk [vmem:[#allocation2 + $0x428] sm:$0xff] %vm2226, %v2999
    %3138 = vst.msk [vmem:[#allocation2 + $0x440] sm:$0xff] %vm2226, %v3001
    %3139 = vst.msk [vmem:[#allocation2 + $0x458] sm:$0xff] %vm2226, %v3003
    %3140 = vst.msk [vmem:[#allocation2 + $0x470] sm:$0xff] %vm2226, %v3005
    %3141 = vst.msk [vmem:[#allocation2 + $0x488] sm:$0xff] %vm2226, %v3007
    %3142 = vst.msk [vmem:[#allocation2 + $0x4a0] sm:$0xff] %vm2226, %v3009
    %3143 = vst.msk [vmem:[#allocation2 + $0x4b8] sm:$0xff] %vm2226, %v3011
    %3144 = vst.msk [vmem:[#allocation2 + $0x4d0] sm:$0xff] %vm2226, %v3013
    %3145 = vst.msk [vmem:[#allocation2 + $0x4e8] sm:$0xff] %vm2226, %v3015
    %3146 = vst.msk [vmem:[#allocation2 + $0x500] sm:$0xff] %vm2226, %v3017
    %3147 = vst.msk [vmem:[#allocation2 + $0x518] sm:$0xff] %vm2226, %v3019
    %3148 = vst.msk [vmem:[#allocation2 + $0x530] sm:$0xff] %vm2226, %v3021
    %3149 = vst.msk [vmem:[#allocation2 + $0x548] sm:$0xff] %vm2226, %v3023
    %3150 = vst.msk [vmem:[#allocation2 + $0x560] sm:$0xff] %vm2226, %v3025
    %3151 = vst.msk [vmem:[#allocation2 + $0x578] sm:$0xff] %vm2226, %v3027
    %3152 = vst.msk [vmem:[#allocation2 + $0x590] sm:$0xff] %vm2226, %v3029
    %3153 = vst.msk [vmem:[#allocation2 + $0x5a8] sm:$0xff] %vm2226, %v3031
    %v3155 = vrot.slane %v1424, 1
    %v3156 = vsel %vm1550, %v2537, %v3155
    %v3157 = vrot.slane %v1425, 1
    %v3158 = vsel %vm1550, %v3155, %v3157
    %3159 = vrot.lane.b32.xlu0 %v1561, 96
    %v3160 = vpop.permute.xlu0 %3159
    %3161 = vrot.lane.b32.xlu0 %v1563, 96
    %v3162 = vpop.permute.xlu0 %3161
    %3163 = vrot.lane.b32.xlu0 %v1565, 96
    %v3164 = vpop.permute.xlu0 %3163
    %3165 = vrot.lane.b32.xlu0 %v1567, 96
    %v3166 = vpop.permute.xlu0 %3165
    %3167 = vrot.lane.b32.xlu0 %v1569, 96
    %v3168 = vpop.permute.xlu0 %3167
    %3169 = vrot.lane.b32.xlu0 %v1571, 96
    %v3170 = vpop.permute.xlu0 %3169
    %3171 = vrot.lane.b32.xlu0 %v1573, 96
    %v3172 = vpop.permute.xlu0 %3171
    %3173 = vrot.lane.b32.xlu0 %v1575, 96
    %v3174 = vpop.permute.xlu0 %3173
    %3175 = vrot.lane.b32.xlu0 %v1577, 96
    %v3176 = vpop.permute.xlu0 %3175
    %3177 = vrot.lane.b32.xlu0 %v1579, 96
    %v3178 = vpop.permute.xlu0 %3177
    %3179 = vrot.lane.b32.xlu0 %v1581, 96
    %v3180 = vpop.permute.xlu0 %3179
    %3181 = vrot.lane.b32.xlu0 %v1583, 96
    %v3182 = vpop.permute.xlu0 %3181
    %3183 = vrot.lane.b32.xlu0 %v1585, 96
    %v3184 = vpop.permute.xlu0 %3183
    %3185 = vrot.lane.b32.xlu0 %v1587, 96
    %v3186 = vpop.permute.xlu0 %3185
    %3187 = vrot.lane.b32.xlu0 %v1589, 96
    %v3188 = vpop.permute.xlu0 %3187
    %3189 = vrot.lane.b32.xlu0 %v1591, 96
    %v3190 = vpop.permute.xlu0 %3189
    %3191 = vrot.lane.b32.xlu0 %v1593, 96
    %v3192 = vpop.permute.xlu0 %3191
    %3193 = vrot.lane.b32.xlu0 %v1595, 96
    %v3194 = vpop.permute.xlu0 %3193
    %3195 = vrot.lane.b32.xlu0 %v1597, 96
    %v3196 = vpop.permute.xlu0 %3195
    %3197 = vrot.lane.b32.xlu0 %v1599, 96
    %v3198 = vpop.permute.xlu0 %3197
    %3199 = vrot.lane.b32.xlu0 %v1601, 96
    %v3200 = vpop.permute.xlu0 %3199
    %3201 = vrot.lane.b32.xlu0 %v1603, 96
    %v3202 = vpop.permute.xlu0 %3201
    %3203 = vrot.lane.b32.xlu0 %v1605, 96
    %v3204 = vpop.permute.xlu0 %3203
    %3205 = vrot.lane.b32.xlu0 %v1607, 96
    %v3206 = vpop.permute.xlu0 %3205
    %3207 = vrot.lane.b32.xlu0 %v1609, 96
    %v3208 = vpop.permute.xlu0 %3207
    %3209 = vrot.lane.b32.xlu0 %v1611, 96
    %v3210 = vpop.permute.xlu0 %3209
    %3211 = vrot.lane.b32.xlu0 %v1613, 96
    %v3212 = vpop.permute.xlu0 %3211
    %3213 = vrot.lane.b32.xlu0 %v1615, 96
    %v3214 = vpop.permute.xlu0 %3213
    %3215 = vrot.lane.b32.xlu0 %v1617, 96
    %v3216 = vpop.permute.xlu0 %3215
    %3217 = vrot.lane.b32.xlu0 %v1619, 96
    %v3218 = vpop.permute.xlu0 %3217
    %3219 = vrot.lane.b32.xlu0 %v1621, 96
    %v3220 = vpop.permute.xlu0 %3219
    %3221 = vrot.lane.b32.xlu0 %v1623, 96
    %v3222 = vpop.permute.xlu0 %3221
    %3223 = vrot.lane.b32.xlu0 %v1625, 96
    %v3224 = vpop.permute.xlu0 %3223
    %3225 = vrot.lane.b32.xlu0 %v1627, 96
    %v3226 = vpop.permute.xlu0 %3225
    %3227 = vrot.lane.b32.xlu0 %v1629, 96
    %v3228 = vpop.permute.xlu0 %3227
    %3229 = vrot.lane.b32.xlu0 %v1631, 96
    %v3230 = vpop.permute.xlu0 %3229
    %3231 = vrot.lane.b32.xlu0 %v1633, 96
    %v3232 = vpop.permute.xlu0 %3231
    %3233 = vrot.lane.b32.xlu0 %v1635, 96
    %v3234 = vpop.permute.xlu0 %3233
    %3235 = vrot.lane.b32.xlu0 %v1637, 96
    %v3236 = vpop.permute.xlu0 %3235
    %3237 = vrot.lane.b32.xlu0 %v1639, 96
    %v3238 = vpop.permute.xlu0 %3237
    %3239 = vrot.lane.b32.xlu0 %v1641, 96
    %v3240 = vpop.permute.xlu0 %3239
    %3241 = vrot.lane.b32.xlu0 %v1643, 96
    %v3242 = vpop.permute.xlu0 %3241
    %3243 = vrot.lane.b32.xlu0 %v1645, 96
    %v3244 = vpop.permute.xlu0 %3243
    %3245 = vrot.lane.b32.xlu0 %v1647, 96
    %v3246 = vpop.permute.xlu0 %3245
    %3247 = vrot.lane.b32.xlu0 %v1649, 96
    %v3248 = vpop.permute.xlu0 %3247
    %3249 = vrot.lane.b32.xlu0 %v1651, 96
    %v3250 = vpop.permute.xlu0 %3249
    %3251 = vrot.lane.b32.xlu0 %v1653, 96
    %v3252 = vpop.permute.xlu0 %3251
    %3253 = vrot.lane.b32.xlu0 %v1655, 96
    %v3254 = vpop.permute.xlu0 %3253
    %3255 = vrot.lane.b32.xlu0 %v1657, 96
    %v3256 = vpop.permute.xlu0 %3255
    %3257 = vrot.lane.b32.xlu0 %v1659, 96
    %v3258 = vpop.permute.xlu0 %3257
    %3259 = vrot.lane.b32.xlu0 %v1661, 96
    %v3260 = vpop.permute.xlu0 %3259
    %3261 = vrot.lane.b32.xlu0 %v1663, 96
    %v3262 = vpop.permute.xlu0 %3261
    %3263 = vrot.lane.b32.xlu0 %v1665, 96
    %v3264 = vpop.permute.xlu0 %3263
    %3265 = vrot.lane.b32.xlu0 %v1667, 96
    %v3266 = vpop.permute.xlu0 %3265
    %3267 = vrot.lane.b32.xlu0 %v1669, 96
    %v3268 = vpop.permute.xlu0 %3267
    %3269 = vrot.lane.b32.xlu0 %v1671, 96
    %v3270 = vpop.permute.xlu0 %3269
    %3271 = vrot.lane.b32.xlu0 %v1673, 96
    %v3272 = vpop.permute.xlu0 %3271
    %3273 = vrot.lane.b32.xlu0 %v2536, 96
    %v3274 = vpop.permute.xlu0 %3273
    %3275 = vrot.lane.b32.xlu0 %v2538, 96
    %v3276 = vpop.permute.xlu0 %3275
    %3277 = vrot.lane.b32.xlu0 %v3156, 96
    %v3278 = vpop.permute.xlu0 %3277
    %3279 = vrot.lane.b32.xlu0 %v3158, 96
    %v3280 = vpop.permute.xlu0 %3279
    %3342 = vst.msk [vmem:[#allocation2 + $0x8] sm:$0xff] %vm2472, %v3160
    %3343 = vst.msk [vmem:[#allocation2 + $0x20] sm:$0xff] %vm2472, %v3162
    %3344 = vst.msk [vmem:[#allocation2 + $0x38] sm:$0xff] %vm2472, %v3164
    %3345 = vst.msk [vmem:[#allocation2 + $0x50] sm:$0xff] %vm2472, %v3166
    %3346 = vst.msk [vmem:[#allocation2 + $0x68] sm:$0xff] %vm2472, %v3168
    %3347 = vst.msk [vmem:[#allocation2 + $0x80] sm:$0xff] %vm2472, %v3170
    %3348 = vst.msk [vmem:[#allocation2 + $0x98] sm:$0xff] %vm2472, %v3172
    %3349 = vst.msk [vmem:[#allocation2 + $0xb0] sm:$0xff] %vm2472, %v3174
    %3350 = vst.msk [vmem:[#allocation2 + $0xc8] sm:$0xff] %vm2472, %v3176
    %3351 = vst.msk [vmem:[#allocation2 + $0xe0] sm:$0xff] %vm2472, %v3178
    %3352 = vst.msk [vmem:[#allocation2 + $0xf8] sm:$0xff] %vm2472, %v3180
    %3353 = vst.msk [vmem:[#allocation2 + $0x110] sm:$0xff] %vm2472, %v3182
    %3354 = vst.msk [vmem:[#allocation2 + $0x128] sm:$0xff] %vm2472, %v3184
    %3355 = vst.msk [vmem:[#allocation2 + $0x140] sm:$0xff] %vm2472, %v3186
    %3356 = vst.msk [vmem:[#allocation2 + $0x158] sm:$0xff] %vm2472, %v3188
    %3357 = vst.msk [vmem:[#allocation2 + $0x170] sm:$0xff] %vm2472, %v3190
    %3358 = vst.msk [vmem:[#allocation2 + $0x188] sm:$0xff] %vm2472, %v3192
    %3359 = vst.msk [vmem:[#allocation2 + $0x1a0] sm:$0xff] %vm2472, %v3194
    %3360 = vst.msk [vmem:[#allocation2 + $0x1b8] sm:$0xff] %vm2472, %v3196
    %3361 = vst.msk [vmem:[#allocation2 + $0x1d0] sm:$0xff] %vm2472, %v3198
    %3362 = vst.msk [vmem:[#allocation2 + $0x1e8] sm:$0xff] %vm2472, %v3200
    %3363 = vst.msk [vmem:[#allocation2 + $0x200] sm:$0xff] %vm2472, %v3202
    %3364 = vst.msk [vmem:[#allocation2 + $0x218] sm:$0xff] %vm2472, %v3204
    %3365 = vst.msk [vmem:[#allocation2 + $0x230] sm:$0xff] %vm2472, %v3206
    %3366 = vst.msk [vmem:[#allocation2 + $0x248] sm:$0xff] %vm2472, %v3208
    %3367 = vst.msk [vmem:[#allocation2 + $0x260] sm:$0xff] %vm2472, %v3210
    %3368 = vst.msk [vmem:[#allocation2 + $0x278] sm:$0xff] %vm2472, %v3212
    %3369 = vst.msk [vmem:[#allocation2 + $0x290] sm:$0xff] %vm2472, %v3214
    %3370 = vst.msk [vmem:[#allocation2 + $0x2a8] sm:$0xff] %vm2472, %v3216
    %3371 = vst.msk [vmem:[#allocation2 + $0x2c0] sm:$0xff] %vm2472, %v3218
    %3372 = vst.msk [vmem:[#allocation2 + $0x2d8] sm:$0xff] %vm2472, %v3220
    %3373 = vst.msk [vmem:[#allocation2 + $0x2f0] sm:$0xff] %vm2472, %v3222
    %3374 = vst.msk [vmem:[#allocation2 + $0x308] sm:$0xff] %vm2472, %v3224
    %3375 = vst.msk [vmem:[#allocation2 + $0x320] sm:$0xff] %vm2472, %v3226
    %3376 = vst.msk [vmem:[#allocation2 + $0x338] sm:$0xff] %vm2472, %v3228
    %3377 = vst.msk [vmem:[#allocation2 + $0x350] sm:$0xff] %vm2472, %v3230
    %3378 = vst.msk [vmem:[#allocation2 + $0x368] sm:$0xff] %vm2472, %v3232
    %3379 = vst.msk [vmem:[#allocation2 + $0x380] sm:$0xff] %vm2472, %v3234
    %3380 = vst.msk [vmem:[#allocation2 + $0x398] sm:$0xff] %vm2472, %v3236
    %3381 = vst.msk [vmem:[#allocation2 + $0x3b0] sm:$0xff] %vm2472, %v3238
    %3382 = vst.msk [vmem:[#allocation2 + $0x3c8] sm:$0xff] %vm2472, %v3240
    %3383 = vst.msk [vmem:[#allocation2 + $0x3e0] sm:$0xff] %vm2472, %v3242
    %3384 = vst.msk [vmem:[#allocation2 + $0x3f8] sm:$0xff] %vm2472, %v3244
    %3385 = vst.msk [vmem:[#allocation2 + $0x410] sm:$0xff] %vm2472, %v3246
    %3386 = vst.msk [vmem:[#allocation2 + $0x428] sm:$0xff] %vm2472, %v3248
    %3387 = vst.msk [vmem:[#allocation2 + $0x440] sm:$0xff] %vm2472, %v3250
    %3388 = vst.msk [vmem:[#allocation2 + $0x458] sm:$0xff] %vm2472, %v3252
    %3389 = vst.msk [vmem:[#allocation2 + $0x470] sm:$0xff] %vm2472, %v3254
    %3390 = vst.msk [vmem:[#allocation2 + $0x488] sm:$0xff] %vm2472, %v3256
    %3391 = vst.msk [vmem:[#allocation2 + $0x4a0] sm:$0xff] %vm2472, %v3258
    %3392 = vst.msk [vmem:[#allocation2 + $0x4b8] sm:$0xff] %vm2472, %v3260
    %3393 = vst.msk [vmem:[#allocation2 + $0x4d0] sm:$0xff] %vm2472, %v3262
    %3394 = vst.msk [vmem:[#allocation2 + $0x4e8] sm:$0xff] %vm2472, %v3264
    %3395 = vst.msk [vmem:[#allocation2 + $0x500] sm:$0xff] %vm2472, %v3266
    %3396 = vst.msk [vmem:[#allocation2 + $0x518] sm:$0xff] %vm2472, %v3268
    %3397 = vst.msk [vmem:[#allocation2 + $0x530] sm:$0xff] %vm2472, %v3270
    %3398 = vst.msk [vmem:[#allocation2 + $0x548] sm:$0xff] %vm2472, %v3272
    %3399 = vst.msk [vmem:[#allocation2 + $0x560] sm:$0xff] %vm2472, %v3274
    %3400 = vst.msk [vmem:[#allocation2 + $0x578] sm:$0xff] %vm2472, %v3276
    %3401 = vst.msk [vmem:[#allocation2 + $0x590] sm:$0xff] %vm2472, %v3278
    %3402 = vst.msk [vmem:[#allocation2 + $0x5a8] sm:$0xff] %vm2472, %v3280
    %v3403 = vrot.slane %v1424, 2
    %v3404 = vsel %vm1919, %v2663, %v3403
    %v3405 = vrot.slane %v1425, 2
    %v3406 = vsel %vm1919, %v3403, %v3405
    %3468 = vst.msk [vmem:[#allocation2 + $0x10] sm:$0xff] %vm1426, %v1930
    %3469 = vst.msk [vmem:[#allocation2 + $0x28] sm:$0xff] %vm1426, %v1932
    %3470 = vst.msk [vmem:[#allocation2 + $0x40] sm:$0xff] %vm1426, %v1934
    %3471 = vst.msk [vmem:[#allocation2 + $0x58] sm:$0xff] %vm1426, %v1936
    %3472 = vst.msk [vmem:[#allocation2 + $0x70] sm:$0xff] %vm1426, %v1938
    %3473 = vst.msk [vmem:[#allocation2 + $0x88] sm:$0xff] %vm1426, %v1940
    %3474 = vst.msk [vmem:[#allocation2 + $0xa0] sm:$0xff] %vm1426, %v1942
    %3475 = vst.msk [vmem:[#allocation2 + $0xb8] sm:$0xff] %vm1426, %v1944
    %3476 = vst.msk [vmem:[#allocation2 + $0xd0] sm:$0xff] %vm1426, %v1946
    %3477 = vst.msk [vmem:[#allocation2 + $0xe8] sm:$0xff] %vm1426, %v1948
    %3478 = vst.msk [vmem:[#allocation2 + $0x100] sm:$0xff] %vm1426, %v1950
    %3479 = vst.msk [vmem:[#allocation2 + $0x118] sm:$0xff] %vm1426, %v1952
    %3480 = vst.msk [vmem:[#allocation2 + $0x130] sm:$0xff] %vm1426, %v1954
    %3481 = vst.msk [vmem:[#allocation2 + $0x148] sm:$0xff] %vm1426, %v1956
    %3482 = vst.msk [vmem:[#allocation2 + $0x160] sm:$0xff] %vm1426, %v1958
    %3483 = vst.msk [vmem:[#allocation2 + $0x178] sm:$0xff] %vm1426, %v1960
    %3484 = vst.msk [vmem:[#allocation2 + $0x190] sm:$0xff] %vm1426, %v1962
    %3485 = vst.msk [vmem:[#allocation2 + $0x1a8] sm:$0xff] %vm1426, %v1964
    %3486 = vst.msk [vmem:[#allocation2 + $0x1c0] sm:$0xff] %vm1426, %v1966
    %3487 = vst.msk [vmem:[#allocation2 + $0x1d8] sm:$0xff] %vm1426, %v1968
    %3488 = vst.msk [vmem:[#allocation2 + $0x1f0] sm:$0xff] %vm1426, %v1970
    %3489 = vst.msk [vmem:[#allocation2 + $0x208] sm:$0xff] %vm1426, %v1972
    %3490 = vst.msk [vmem:[#allocation2 + $0x220] sm:$0xff] %vm1426, %v1974
    %3491 = vst.msk [vmem:[#allocation2 + $0x238] sm:$0xff] %vm1426, %v1976
    %3492 = vst.msk [vmem:[#allocation2 + $0x250] sm:$0xff] %vm1426, %v1978
    %3493 = vst.msk [vmem:[#allocation2 + $0x268] sm:$0xff] %vm1426, %v1980
    %3494 = vst.msk [vmem:[#allocation2 + $0x280] sm:$0xff] %vm1426, %v1982
    %3495 = vst.msk [vmem:[#allocation2 + $0x298] sm:$0xff] %vm1426, %v1984
    %3496 = vst.msk [vmem:[#allocation2 + $0x2b0] sm:$0xff] %vm1426, %v1986
    %3497 = vst.msk [vmem:[#allocation2 + $0x2c8] sm:$0xff] %vm1426, %v1988
    %3498 = vst.msk [vmem:[#allocation2 + $0x2e0] sm:$0xff] %vm1426, %v1990
    %3499 = vst.msk [vmem:[#allocation2 + $0x2f8] sm:$0xff] %vm1426, %v1992
    %3500 = vst.msk [vmem:[#allocation2 + $0x310] sm:$0xff] %vm1426, %v1994
    %3501 = vst.msk [vmem:[#allocation2 + $0x328] sm:$0xff] %vm1426, %v1996
    %3502 = vst.msk [vmem:[#allocation2 + $0x340] sm:$0xff] %vm1426, %v1998
    %3503 = vst.msk [vmem:[#allocation2 + $0x358] sm:$0xff] %vm1426, %v2000
    %3504 = vst.msk [vmem:[#allocation2 + $0x370] sm:$0xff] %vm1426, %v2002
    %3505 = vst.msk [vmem:[#allocation2 + $0x388] sm:$0xff] %vm1426, %v2004
    %3506 = vst.msk [vmem:[#allocation2 + $0x3a0] sm:$0xff] %vm1426, %v2006
    %3507 = vst.msk [vmem:[#allocation2 + $0x3b8] sm:$0xff] %vm1426, %v2008
    %3508 = vst.msk [vmem:[#allocation2 + $0x3d0] sm:$0xff] %vm1426, %v2010
    %3509 = vst.msk [vmem:[#allocation2 + $0x3e8] sm:$0xff] %vm1426, %v2012
    %3510 = vst.msk [vmem:[#allocation2 + $0x400] sm:$0xff] %vm1426, %v2014
    %3511 = vst.msk [vmem:[#allocation2 + $0x418] sm:$0xff] %vm1426, %v2016
    %3512 = vst.msk [vmem:[#allocation2 + $0x430] sm:$0xff] %vm1426, %v2018
    %3513 = vst.msk [vmem:[#allocation2 + $0x448] sm:$0xff] %vm1426, %v2020
    %3514 = vst.msk [vmem:[#allocation2 + $0x460] sm:$0xff] %vm1426, %v2022
    %3515 = vst.msk [vmem:[#allocation2 + $0x478] sm:$0xff] %vm1426, %v2024
    %3516 = vst.msk [vmem:[#allocation2 + $0x490] sm:$0xff] %vm1426, %v2026
    %3517 = vst.msk [vmem:[#allocation2 + $0x4a8] sm:$0xff] %vm1426, %v2028
    %3518 = vst.msk [vmem:[#allocation2 + $0x4c0] sm:$0xff] %vm1426, %v2030
    %3519 = vst.msk [vmem:[#allocation2 + $0x4d8] sm:$0xff] %vm1426, %v2032
    %3520 = vst.msk [vmem:[#allocation2 + $0x4f0] sm:$0xff] %vm1426, %v2034
    %3521 = vst.msk [vmem:[#allocation2 + $0x508] sm:$0xff] %vm1426, %v2036
    %3522 = vst.msk [vmem:[#allocation2 + $0x520] sm:$0xff] %vm1426, %v2038
    %3523 = vst.msk [vmem:[#allocation2 + $0x538] sm:$0xff] %vm1426, %v2040
    %3524 = vst.msk [vmem:[#allocation2 + $0x550] sm:$0xff] %vm1426, %v2042
    %3525 = vst.msk [vmem:[#allocation2 + $0x568] sm:$0xff] %vm1426, %v2662
    %3526 = vst.msk [vmem:[#allocation2 + $0x580] sm:$0xff] %vm1426, %v2664
    %3527 = vst.msk [vmem:[#allocation2 + $0x598] sm:$0xff] %vm1426, %v3404
    %3528 = vst.msk [vmem:[#allocation2 + $0x5b0] sm:$0xff] %vm1426, %v3406
    %v3529 = vld [vmem:[#allocation2] sm:$0xff]
    %v3530 = vld [vmem:[#allocation2 + $0x8] sm:$0xff]
    %v3531 = vld [vmem:[#allocation2 + $0x10] sm:$0xff]
    %v3532 = vld [vmem:[#allocation2 + $0x18] sm:$0xff]
    %v3533 = vld [vmem:[#allocation2 + $0x20] sm:$0xff]
    %v3534 = vld [vmem:[#allocation2 + $0x28] sm:$0xff]
    %v3535 = vld [vmem:[#allocation2 + $0x30] sm:$0xff]
    %v3536 = vld [vmem:[#allocation2 + $0x38] sm:$0xff]
    %v3537 = vld [vmem:[#allocation2 + $0x40] sm:$0xff]
    %v3538 = vld [vmem:[#allocation2 + $0x48] sm:$0xff]
    %v3539 = vld [vmem:[#allocation2 + $0x50] sm:$0xff]
    %v3540 = vld [vmem:[#allocation2 + $0x58] sm:$0xff]
    %v3541 = vld [vmem:[#allocation2 + $0x60] sm:$0xff]
    %v3542 = vld [vmem:[#allocation2 + $0x68] sm:$0xff]
    %v3543 = vld [vmem:[#allocation2 + $0x70] sm:$0xff]
    %v3544 = vld [vmem:[#allocation2 + $0x78] sm:$0xff]
    %v3545 = vld [vmem:[#allocation2 + $0x80] sm:$0xff]
    %v3546 = vld [vmem:[#allocation2 + $0x88] sm:$0xff]
    %v3547 = vld [vmem:[#allocation2 + $0x90] sm:$0xff]
    %v3548 = vld [vmem:[#allocation2 + $0x98] sm:$0xff]
    %v3549 = vld [vmem:[#allocation2 + $0xa0] sm:$0xff]
    %v3550 = vld [vmem:[#allocation2 + $0xa8] sm:$0xff]
    %v3551 = vld [vmem:[#allocation2 + $0xb0] sm:$0xff]
    %v3552 = vld [vmem:[#allocation2 + $0xb8] sm:$0xff]
    %v3553 = vld [vmem:[#allocation2 + $0xc0] sm:$0xff]
    %v3554 = vld [vmem:[#allocation2 + $0xc8] sm:$0xff]
    %v3555 = vld [vmem:[#allocation2 + $0xd0] sm:$0xff]
    %v3556 = vld [vmem:[#allocation2 + $0xd8] sm:$0xff]
    %v3557 = vld [vmem:[#allocation2 + $0xe0] sm:$0xff]
    %v3558 = vld [vmem:[#allocation2 + $0xe8] sm:$0xff]
    %v3559 = vld [vmem:[#allocation2 + $0xf0] sm:$0xff]
    %v3560 = vld [vmem:[#allocation2 + $0xf8] sm:$0xff]
    %v3561 = vld [vmem:[#allocation2 + $0x100] sm:$0xff]
    %v3562 = vld [vmem:[#allocation2 + $0x108] sm:$0xff]
    %v3563 = vld [vmem:[#allocation2 + $0x110] sm:$0xff]
    %v3564 = vld [vmem:[#allocation2 + $0x118] sm:$0xff]
    %v3565 = vld [vmem:[#allocation2 + $0x120] sm:$0xff]
    %v3566 = vld [vmem:[#allocation2 + $0x128] sm:$0xff]
    %v3567 = vld [vmem:[#allocation2 + $0x130] sm:$0xff]
    %v3568 = vld [vmem:[#allocation2 + $0x138] sm:$0xff]
    %v3569 = vld [vmem:[#allocation2 + $0x140] sm:$0xff]
    %v3570 = vld [vmem:[#allocation2 + $0x148] sm:$0xff]
    %v3571 = vld [vmem:[#allocation2 + $0x150] sm:$0xff]
    %v3572 = vld [vmem:[#allocation2 + $0x158] sm:$0xff]
    %v3573 = vld [vmem:[#allocation2 + $0x160] sm:$0xff]
    %v3574 = vld [vmem:[#allocation2 + $0x168] sm:$0xff]
    %v3575 = vld [vmem:[#allocation2 + $0x170] sm:$0xff]
    %v3576 = vld [vmem:[#allocation2 + $0x178] sm:$0xff]
    %v3577 = vld [vmem:[#allocation2 + $0x180] sm:$0xff]
    %v3578 = vld [vmem:[#allocation2 + $0x188] sm:$0xff]
    %v3579 = vld [vmem:[#allocation2 + $0x190] sm:$0xff]
    %v3580 = vld [vmem:[#allocation2 + $0x198] sm:$0xff]
    %v3581 = vld [vmem:[#allocation2 + $0x1a0] sm:$0xff]
    %v3582 = vld [vmem:[#allocation2 + $0x1a8] sm:$0xff]
    %v3583 = vld [vmem:[#allocation2 + $0x1b0] sm:$0xff]
    %v3584 = vld [vmem:[#allocation2 + $0x1b8] sm:$0xff]
    %v3585 = vld [vmem:[#allocation2 + $0x1c0] sm:$0xff]
    %v3586 = vld [vmem:[#allocation2 + $0x1c8] sm:$0xff]
    %v3587 = vld [vmem:[#allocation2 + $0x1d0] sm:$0xff]
    %v3588 = vld [vmem:[#allocation2 + $0x1d8] sm:$0xff]
    %v3589 = vld [vmem:[#allocation2 + $0x1e0] sm:$0xff]
    %v3590 = vld [vmem:[#allocation2 + $0x1e8] sm:$0xff]
    %v3591 = vld [vmem:[#allocation2 + $0x1f0] sm:$0xff]
    %v3592 = vld [vmem:[#allocation2 + $0x1f8] sm:$0xff]
    %v3593 = vld [vmem:[#allocation2 + $0x200] sm:$0xff]
    %v3594 = vld [vmem:[#allocation2 + $0x208] sm:$0xff]
    %v3595 = vld [vmem:[#allocation2 + $0x210] sm:$0xff]
    %v3596 = vld [vmem:[#allocation2 + $0x218] sm:$0xff]
    %v3597 = vld [vmem:[#allocation2 + $0x220] sm:$0xff]
    %v3598 = vld [vmem:[#allocation2 + $0x228] sm:$0xff]
    %v3599 = vld [vmem:[#allocation2 + $0x230] sm:$0xff]
    %v3600 = vld [vmem:[#allocation2 + $0x238] sm:$0xff]
    %v3601 = vld [vmem:[#allocation2 + $0x240] sm:$0xff]
    %v3602 = vld [vmem:[#allocation2 + $0x248] sm:$0xff]
    %v3603 = vld [vmem:[#allocation2 + $0x250] sm:$0xff]
    %v3604 = vld [vmem:[#allocation2 + $0x258] sm:$0xff]
    %v3605 = vld [vmem:[#allocation2 + $0x260] sm:$0xff]
    %v3606 = vld [vmem:[#allocation2 + $0x268] sm:$0xff]
    %v3607 = vld [vmem:[#allocation2 + $0x270] sm:$0xff]
    %v3608 = vld [vmem:[#allocation2 + $0x278] sm:$0xff]
    %v3609 = vld [vmem:[#allocation2 + $0x280] sm:$0xff]
    %v3610 = vld [vmem:[#allocation2 + $0x288] sm:$0xff]
    %v3611 = vld [vmem:[#allocation2 + $0x290] sm:$0xff]
    %v3612 = vld [vmem:[#allocation2 + $0x298] sm:$0xff]
    %v3613 = vld [vmem:[#allocation2 + $0x2a0] sm:$0xff]
    %v3614 = vld [vmem:[#allocation2 + $0x2a8] sm:$0xff]
    %v3615 = vld [vmem:[#allocation2 + $0x2b0] sm:$0xff]
    %v3616 = vld [vmem:[#allocation2 + $0x2b8] sm:$0xff]
    %v3617 = vld [vmem:[#allocation2 + $0x2c0] sm:$0xff]
    %v3618 = vld [vmem:[#allocation2 + $0x2c8] sm:$0xff]
    %v3619 = vld [vmem:[#allocation2 + $0x2d0] sm:$0xff]
    %v3620 = vld [vmem:[#allocation2 + $0x2d8] sm:$0xff]
    %v3621 = vld [vmem:[#allocation2 + $0x2e0] sm:$0xff]
    %v3622 = vld [vmem:[#allocation2 + $0x2e8] sm:$0xff]
    %v3623 = vld [vmem:[#allocation2 + $0x2f0] sm:$0xff]
    %v3624 = vld [vmem:[#allocation2 + $0x2f8] sm:$0xff]
    %v3625 = vld [vmem:[#allocation2 + $0x300] sm:$0xff]
    %v3626 = vld [vmem:[#allocation2 + $0x308] sm:$0xff]
    %v3627 = vld [vmem:[#allocation2 + $0x310] sm:$0xff]
    %v3628 = vld [vmem:[#allocation2 + $0x318] sm:$0xff]
    %v3629 = vld [vmem:[#allocation2 + $0x320] sm:$0xff]
    %v3630 = vld [vmem:[#allocation2 + $0x328] sm:$0xff]
    %v3631 = vld [vmem:[#allocation2 + $0x330] sm:$0xff]
    %v3632 = vld [vmem:[#allocation2 + $0x338] sm:$0xff]
    %v3633 = vld [vmem:[#allocation2 + $0x340] sm:$0xff]
    %v3634 = vld [vmem:[#allocation2 + $0x348] sm:$0xff]
    %v3635 = vld [vmem:[#allocation2 + $0x350] sm:$0xff]
    %v3636 = vld [vmem:[#allocation2 + $0x358] sm:$0xff]
    %v3637 = vld [vmem:[#allocation2 + $0x360] sm:$0xff]
    %v3638 = vld [vmem:[#allocation2 + $0x368] sm:$0xff]
    %v3639 = vld [vmem:[#allocation2 + $0x370] sm:$0xff]
    %v3640 = vld [vmem:[#allocation2 + $0x378] sm:$0xff]
    %v3641 = vld [vmem:[#allocation2 + $0x380] sm:$0xff]
    %v3642 = vld [vmem:[#allocation2 + $0x388] sm:$0xff]
    %v3643 = vld [vmem:[#allocation2 + $0x390] sm:$0xff]
    %v3644 = vld [vmem:[#allocation2 + $0x398] sm:$0xff]
    %v3645 = vld [vmem:[#allocation2 + $0x3a0] sm:$0xff]
    %v3646 = vld [vmem:[#allocation2 + $0x3a8] sm:$0xff]
    %v3647 = vld [vmem:[#allocation2 + $0x3b0] sm:$0xff]
    %v3648 = vld [vmem:[#allocation2 + $0x3b8] sm:$0xff]
    %v3649 = vld [vmem:[#allocation2 + $0x3c0] sm:$0xff]
    %v3650 = vld [vmem:[#allocation2 + $0x3c8] sm:$0xff]
    %v3651 = vld [vmem:[#allocation2 + $0x3d0] sm:$0xff]
    %v3652 = vld [vmem:[#allocation2 + $0x3d8] sm:$0xff]
    %v3653 = vld [vmem:[#allocation2 + $0x3e0] sm:$0xff]
    %v3654 = vld [vmem:[#allocation2 + $0x3e8] sm:$0xff]
    %v3655 = vld [vmem:[#allocation2 + $0x3f0] sm:$0xff]
    %v3656 = vld [vmem:[#allocation2 + $0x3f8] sm:$0xff]
    %v3657 = vld [vmem:[#allocation2 + $0x400] sm:$0xff]
    %v3658 = vld [vmem:[#allocation2 + $0x408] sm:$0xff]
    %v3659 = vld [vmem:[#allocation2 + $0x410] sm:$0xff]
    %v3660 = vld [vmem:[#allocation2 + $0x418] sm:$0xff]
    %v3661 = vld [vmem:[#allocation2 + $0x420] sm:$0xff]
    %v3662 = vld [vmem:[#allocation2 + $0x428] sm:$0xff]
    %v3663 = vld [vmem:[#allocation2 + $0x430] sm:$0xff]
    %v3664 = vld [vmem:[#allocation2 + $0x438] sm:$0xff]
    %v3665 = vld [vmem:[#allocation2 + $0x440] sm:$0xff]
    %v3666 = vld [vmem:[#allocation2 + $0x448] sm:$0xff]
    %v3667 = vld [vmem:[#allocation2 + $0x450] sm:$0xff]
    %v3668 = vld [vmem:[#allocation2 + $0x458] sm:$0xff]
    %v3669 = vld [vmem:[#allocation2 + $0x460] sm:$0xff]
    %v3670 = vld [vmem:[#allocation2 + $0x468] sm:$0xff]
    %v3671 = vld [vmem:[#allocation2 + $0x470] sm:$0xff]
    %v3672 = vld [vmem:[#allocation2 + $0x478] sm:$0xff]
    %v3673 = vld [vmem:[#allocation2 + $0x480] sm:$0xff]
    %v3674 = vld [vmem:[#allocation2 + $0x488] sm:$0xff]
    %v3675 = vld [vmem:[#allocation2 + $0x490] sm:$0xff]
    %v3676 = vld [vmem:[#allocation2 + $0x498] sm:$0xff]
    %v3677 = vld [vmem:[#allocation2 + $0x4a0] sm:$0xff]
    %v3678 = vld [vmem:[#allocation2 + $0x4a8] sm:$0xff]
    %v3679 = vld [vmem:[#allocation2 + $0x4b0] sm:$0xff]
    %v3680 = vld [vmem:[#allocation2 + $0x4b8] sm:$0xff]
    %v3681 = vld [vmem:[#allocation2 + $0x4c0] sm:$0xff]
    %v3682 = vld [vmem:[#allocation2 + $0x4c8] sm:$0xff]
    %v3683 = vld [vmem:[#allocation2 + $0x4d0] sm:$0xff]
    %v3684 = vld [vmem:[#allocation2 + $0x4d8] sm:$0xff]
    %v3685 = vld [vmem:[#allocation2 + $0x4e0] sm:$0xff]
    %v3686 = vld [vmem:[#allocation2 + $0x4e8] sm:$0xff]
    %v3687 = vld [vmem:[#allocation2 + $0x4f0] sm:$0xff]
    %v3688 = vld [vmem:[#allocation2 + $0x4f8] sm:$0xff]
    %v3689 = vld [vmem:[#allocation2 + $0x500] sm:$0xff]
    %v3690 = vld [vmem:[#allocation2 + $0x508] sm:$0xff]
    %v3691 = vld [vmem:[#allocation2 + $0x510] sm:$0xff]
    %v3692 = vld [vmem:[#allocation2 + $0x518] sm:$0xff]
    %v3693 = vld [vmem:[#allocation2 + $0x520] sm:$0xff]
    %v3694 = vld [vmem:[#allocation2 + $0x528] sm:$0xff]
    %v3695 = vld [vmem:[#allocation2 + $0x530] sm:$0xff]
    %v3696 = vld [vmem:[#allocation2 + $0x538] sm:$0xff]
    %v3697 = vld [vmem:[#allocation2 + $0x540] sm:$0xff]
    %v3698 = vld [vmem:[#allocation2 + $0x548] sm:$0xff]
    %v3699 = vld [vmem:[#allocation2 + $0x550] sm:$0xff]
    %v3700 = vld [vmem:[#allocation2 + $0x558] sm:$0xff]
    %v3701 = vld [vmem:[#allocation2 + $0x560] sm:$0xff]
    %v3702 = vld [vmem:[#allocation2 + $0x568] sm:$0xff]
    %v3703 = vld [vmem:[#allocation2 + $0x570] sm:$0xff]
    %v3704 = vld [vmem:[#allocation2 + $0x578] sm:$0xff]
    %v3705 = vld [vmem:[#allocation2 + $0x580] sm:$0xff]
    %v3706 = vld [vmem:[#allocation2 + $0x588] sm:$0xff]
    %v3707 = vld [vmem:[#allocation2 + $0x590] sm:$0xff]
    %v3708 = vld [vmem:[#allocation2 + $0x598] sm:$0xff]
    %v3709 = vld [vmem:[#allocation2 + $0x5a0] sm:$0xff]
    %v3710 = vld [vmem:[#allocation2 + $0x5a8] sm:$0xff]
    %v3711 = vld [vmem:[#allocation2 + $0x5b0] sm:$0xff]
    %v3712 = vld [vmem:[%s2] sm:$0xff]
    %v3713 = vld [vmem:[%s2 + $0x8] sm:$0xff]
    %v3714 = vld [vmem:[%s2 + $0x10] sm:$0xff]
    %v3715 = vld [vmem:[%s2 + $0x18] sm:$0xff]
    %v3716 = vld [vmem:[%s2 + $0x20] sm:$0xff]
    %v3717 = vld [vmem:[%s2 + $0x28] sm:$0xff]
    %v3718 = vld [vmem:[%s2 + $0x30] sm:$0xff]
    %v3719 = vld [vmem:[%s2 + $0x38] sm:$0xff]
    %v3720 = vld [vmem:[%s2 + $0x40] sm:$0xff]
    %v3721 = vld [vmem:[%s2 + $0x48] sm:$0xff]
    %v3722 = vld [vmem:[%s2 + $0x50] sm:$0xff]
    %v3723 = vld [vmem:[%s2 + $0x58] sm:$0xff]
    %v3724 = vld [vmem:[%s2 + $0x60] sm:$0xff]
    %v3725 = vld [vmem:[%s2 + $0x68] sm:$0xff]
    %v3726 = vld [vmem:[%s2 + $0x70] sm:$0xff]
    %v3727 = vld [vmem:[%s2 + $0x78] sm:$0xff]
    %v3728 = vld [vmem:[%s2 + $0x80] sm:$0xff]
    %v3729 = vld [vmem:[%s2 + $0x88] sm:$0xff]
    %v3730 = vld [vmem:[%s2 + $0x90] sm:$0xff]
    %v3731 = vld [vmem:[%s2 + $0x98] sm:$0xff]
    %v3732 = vld [vmem:[%s2 + $0xa0] sm:$0xff]
    %v3733 = vld [vmem:[%s2 + $0xa8] sm:$0xff]
    %v3734 = vld [vmem:[%s2 + $0xb0] sm:$0xff]
    %v3735 = vld [vmem:[%s2 + $0xb8] sm:$0xff]
    %v3736 = vld [vmem:[%s2 + $0xc0] sm:$0xff]
    %v3737 = vld [vmem:[%s2 + $0xc8] sm:$0xff]
    %v3738 = vld [vmem:[%s2 + $0xd0] sm:$0xff]
    %v3739 = vld [vmem:[%s2 + $0xd8] sm:$0xff]
    %v3740 = vld [vmem:[%s2 + $0xe0] sm:$0xff]
    %v3741 = vld [vmem:[%s2 + $0xe8] sm:$0xff]
    %v3742 = vld [vmem:[%s2 + $0xf0] sm:$0xff]
    %v3743 = vld [vmem:[%s2 + $0xf8] sm:$0xff]
    %v3744 = vld [vmem:[%s2 + $0x100] sm:$0xff]
    %v3745 = vld [vmem:[%s2 + $0x108] sm:$0xff]
    %v3746 = vld [vmem:[%s2 + $0x110] sm:$0xff]
    %v3747 = vld [vmem:[%s2 + $0x118] sm:$0xff]
    %v3748 = vld [vmem:[%s3] sm:$0x1]
    %v3750 = vlaneseq
    %v3751 = vshrl.u32 %v3750, 7
    %v3752 = vsub.s32 0, %v3751
    %v3753 = vrot.slane %v3748, %v3752
    %v3756 = vsel %vm1426, %v3531, 0
    %v3759 = vsel %vm1426, %v3534, 0
    %v3762 = vsel %vm1426, %v3537, 0
    %v3765 = vsel %vm1426, %v3540, 0
    %v3768 = vsel %vm1426, %v3543, 0
    %v3771 = vsel %vm1426, %v3546, 0
    %v3774 = vsel %vm1426, %v3549, 0
    %v3777 = vsel %vm1426, %v3552, 0
    %v3780 = vsel %vm1426, %v3555, 0
    %v3783 = vsel %vm1426, %v3558, 0
    %v3786 = vsel %vm1426, %v3561, 0
    %v3789 = vsel %vm1426, %v3564, 0
    %v3792 = vsel %vm1426, %v3567, 0
    %v3795 = vsel %vm1426, %v3570, 0
    %v3798 = vsel %vm1426, %v3573, 0
    %v3801 = vsel %vm1426, %v3576, 0
    %v3804 = vsel %vm1426, %v3579, 0
    %v3807 = vsel %vm1426, %v3582, 0
    %v3810 = vsel %vm1426, %v3585, 0
    %v3813 = vsel %vm1426, %v3588, 0
    %v3816 = vsel %vm1426, %v3591, 0
    %v3819 = vsel %vm1426, %v3594, 0
    %v3822 = vsel %vm1426, %v3597, 0
    %v3825 = vsel %vm1426, %v3600, 0
    %v3828 = vsel %vm1426, %v3603, 0
    %v3831 = vsel %vm1426, %v3606, 0
    %v3834 = vsel %vm1426, %v3609, 0
    %v3837 = vsel %vm1426, %v3612, 0
    %v3840 = vsel %vm1426, %v3615, 0
    %v3843 = vsel %vm1426, %v3618, 0
    %v3846 = vsel %vm1426, %v3621, 0
    %v3849 = vsel %vm1426, %v3624, 0
    %v3852 = vsel %vm1426, %v3627, 0
    %v3855 = vsel %vm1426, %v3630, 0
    %v3858 = vsel %vm1426, %v3633, 0
    %v3861 = vsel %vm1426, %v3636, 0
    %v3864 = vsel %vm1426, %v3639, 0
    %v3867 = vsel %vm1426, %v3642, 0
    %v3870 = vsel %vm1426, %v3645, 0
    %v3873 = vsel %vm1426, %v3648, 0
    %v3876 = vsel %vm1426, %v3651, 0
    %v3879 = vsel %vm1426, %v3654, 0
    %v3882 = vsel %vm1426, %v3657, 0
    %v3885 = vsel %vm1426, %v3660, 0
    %v3888 = vsel %vm1426, %v3663, 0
    %v3891 = vsel %vm1426, %v3666, 0
    %v3894 = vsel %vm1426, %v3669, 0
    %v3897 = vsel %vm1426, %v3672, 0
    %v3900 = vsel %vm1426, %v3675, 0
    %v3903 = vsel %vm1426, %v3678, 0
    %v3906 = vsel %vm1426, %v3681, 0
    %v3909 = vsel %vm1426, %v3684, 0
    %v3912 = vsel %vm1426, %v3687, 0
    %v3915 = vsel %vm1426, %v3690, 0
    %v3918 = vsel %vm1426, %v3693, 0
    %v3921 = vsel %vm1426, %v3696, 0
    %v3924 = vsel %vm1426, %v3699, 0
    %v3927 = vsel %vm1426, %v3702, 0
    %v3930 = vsel %vm1426, %v3705, 0
    %v3933 = vsel %vm1426, %v3708, 0
    %v3936 = vsel %vm1426, %v3711, 0
    %3938 = vmatprep.subr.mxu0 0.0
    %3939 = vmatpush1.msra.mxu0 %v3712
    %3940 = vmatprep.subr.mxu0 0.0
    %3941 = vmatpush1.msra.mxu0 %v3713
    %3942 = vmatprep.subr.mxu0 0.0
    %3943 = vmatpush1.msra.mxu0 %v3714
    %3944 = vmatprep.subr.mxu0 0.0
    %3945 = vmatpush1.msra.mxu0 %v3715
    %3946 = vmatprep.subr.mxu0 0.0
    %3947 = vmatpush1.msra.mxu0 %v3716
    %3948 = vmatprep.subr.mxu0 0.0
    %3949 = vmatpush1.msra.mxu0 %v3717
    %3950 = vmatprep.subr.mxu0 0.0
    %3951 = vmatpush1.msra.mxu0 %v3718
    %3952 = vmatprep.subr.mxu0 0.0
    %3953 = vmatpush1.msra.mxu0 %v3719
    %3954 = vmatprep.subr.mxu0 0.0
    %3955 = vmatpush1.msra.mxu0 %v3720
    %3956 = vmatprep.subr.mxu0 0.0
    %3957 = vmatpush1.msra.mxu0 %v3721
    %3958 = vmatprep.subr.mxu0 0.0
    %3959 = vmatpush1.msra.mxu0 %v3722
    %3960 = vmatprep.subr.mxu0 0.0
    %3961 = vmatpush1.msra.mxu0 %v3723
    %3962 = vmatprep.subr.mxu0 0.0
    %3963 = vmatpush1.msra.mxu0 %v3724
    %3964 = vmatprep.subr.mxu0 0.0
    %3965 = vmatpush1.msra.mxu0 %v3725
    %3966 = vmatprep.subr.mxu0 0.0
    %3967 = vmatpush1.msra.mxu0 %v3726
    %3968 = vmatprep.subr.mxu0 0.0
    %3969 = vmatpush1.msra.mxu0 %v3727
    %3970 = vmatprep.subr.mxu0 0.0
    %3971 = vmatpush1.msra.mxu0 %v3728
    %3972 = vmatprep.subr.mxu0 0.0
    %3973 = vmatpush1.msra.mxu0 %v3729
    %3974 = vmatprep.subr.mxu0 0.0
    %3975 = vmatpush1.msra.mxu0 %v3730
    %3976 = vmatprep.subr.mxu0 0.0
    %3977 = vmatpush1.msra.mxu0 %v3731
    %3978 = vmatprep.subr.mxu0 0.0
    %3979 = vmatpush1.msra.mxu0 %v3732
    %3980 = vmatprep.subr.mxu0 0.0
    %3981 = vmatpush1.msra.mxu0 %v3733
    %3982 = vmatprep.subr.mxu0 0.0
    %3983 = vmatpush1.msra.mxu0 %v3734
    %3984 = vmatprep.subr.mxu0 0.0
    %3985 = vmatpush1.msra.mxu0 %v3735
    %3986 = vmatprep.subr.mxu0 0.0
    %3987 = vmatpush1.msra.mxu0 %v3736
    %3988 = vmatprep.subr.mxu0 0.0
    %3989 = vmatpush1.msra.mxu0 %v3737
    %3990 = vmatprep.subr.mxu0 0.0
    %3991 = vmatpush1.msra.mxu0 %v3738
    %3992 = vmatprep.subr.mxu0 0.0
    %3993 = vmatpush1.msra.mxu0 %v3739
    %3994 = vmatprep.subr.mxu0 0.0
    %3995 = vmatpush1.msra.mxu0 %v3740
    %3996 = vmatprep.subr.mxu0 0.0
    %3997 = vmatpush1.msra.mxu0 %v3741
    %3998 = vmatprep.subr.mxu0 0.0
    %3999 = vmatpush1.msra.mxu0 %v3742
    %4000 = vmatprep.subr.mxu0 0.0
    %4001 = vmatpush1.msra.mxu0 %v3743
    %4002 = vmatprep.mubr.f32.mxu0 %v3530
    %4003 = vmatmul.mubr.f32.gmra.mrb[0].mxu0 %v3529
    %v4004 = vpop.f32.mrb[0].mxu0
    %v4005 = vadd.f32 %v3753, %v4004
    %v4006 = vpop.f32.mrb[0].mxu0
    %4007 = vmatprep.mubr.f32.mxu0 %v3533
    %4008 = vmatmul.mubr.f32.gmra.mrb[0].mxu0 %v3532
    %v4009 = vpop.f32.mrb[0].mxu0
    %v4010 = vadd.f32 %v3753, %v4009
    %v4011 = vpop.f32.mrb[0].mxu0
    %4012 = vmatprep.mubr.f32.mxu0 %v3536
    %4013 = vmatmul.mubr.f32.gmra.mrb[0].mxu0 %v3535
    %v4014 = vpop.f32.mrb[0].mxu0
    %v4015 = vadd.f32 %v3753, %v4014
    %v4016 = vpop.f32.mrb[0].mxu0
    %4017 = vmatprep.mubr.f32.mxu0 %v3539
    %4018 = vmatmul.mubr.f32.gmra.mrb[0].mxu0 %v3538
    %v4019 = vpop.f32.mrb[0].mxu0
    %v4020 = vadd.f32 %v3753, %v4019
    %v4021 = vpop.f32.mrb[0].mxu0
    %4022 = vmatprep.mubr.f32.mxu0 %v3542
    %4023 = vmatmul.mubr.f32.gmra.mrb[0].mxu0 %v3541
    %v4024 = vpop.f32.mrb[0].mxu0
    %v4025 = vadd.f32 %v3753, %v4024
    %v4026 = vpop.f32.mrb[0].mxu0
    %4027 = vmatprep.mubr.f32.mxu0 %v3545
    %4028 = vmatmul.mubr.f32.gmra.mrb[0].mxu0 %v3544
    %v4029 = vpop.f32.mrb[0].mxu0
    %v4030 = vadd.f32 %v3753, %v4029
    %v4031 = vpop.f32.mrb[0].mxu0
    %4032 = vmatprep.mubr.f32.mxu0 %v3548
    %4033 = vmatmul.mubr.f32.gmra.mrb[0].mxu0 %v3547
    %v4034 = vpop.f32.mrb[0].mxu0
    %v4035 = vadd.f32 %v3753, %v4034
    %v4036 = vpop.f32.mrb[0].mxu0
    %4037 = vmatprep.mubr.f32.mxu0 %v3551
    %4038 = vmatmul.mubr.f32.gmra.mrb[0].mxu0 %v3550
    %v4039 = vpop.f32.mrb[0].mxu0
    %v4040 = vadd.f32 %v3753, %v4039
    %v4041 = vpop.f32.mrb[0].mxu0
    %4042 = vmatprep.mubr.f32.mxu0 %v3554
    %4043 = vmatmul.mubr.f32.gmra.mrb[0].mxu0 %v3553
    %v4044 = vpop.f32.mrb[0].mxu0
    %v4045 = vadd.f32 %v3753, %v4044
    %v4046 = vpop.f32.mrb[0].mxu0
    %4047 = vmatprep.mubr.f32.mxu0 %v3557
    %4048 = vmatmul.mubr.f32.gmra.mrb[0].mxu0 %v3556
    %v4049 = vpop.f32.mrb[0].mxu0
    %v4050 = vadd.f32 %v3753, %v4049
    %v4051 = vpop.f32.mrb[0].mxu0
    %4052 = vmatprep.mubr.f32.mxu0 %v3560
    %4053 = vmatmul.mubr.f32.gmra.mrb[0].mxu0 %v3559
    %v4054 = vpop.f32.mrb[0].mxu0
    %v4055 = vadd.f32 %v3753, %v4054
    %v4056 = vpop.f32.mrb[0].mxu0
    %4057 = vmatprep.mubr.f32.mxu0 %v3563
    %4058 = vmatmul.mubr.f32.gmra.mrb[0].mxu0 %v3562
    %v4059 = vpop.f32.mrb[0].mxu0
    %v4060 = vadd.f32 %v3753, %v4059
    %v4061 = vpop.f32.mrb[0].mxu0
    %4062 = vmatprep.mubr.f32.mxu0 %v3566
    %4063 = vmatmul.mubr.f32.gmra.mrb[0].mxu0 %v3565
    %v4064 = vpop.f32.mrb[0].mxu0
    %v4065 = vadd.f32 %v3753, %v4064
    %v4066 = vpop.f32.mrb[0].mxu0
    %4067 = vmatprep.mubr.f32.mxu0 %v3569
    %4068 = vmatmul.mubr.f32.gmra.mrb[0].mxu0 %v3568
    %v4069 = vpop.f32.mrb[0].mxu0
    %v4070 = vadd.f32 %v3753, %v4069
    %v4071 = vpop.f32.mrb[0].mxu0
    %4072 = vmatprep.mubr.f32.mxu0 %v3572
    %4073 = vmatmul.mubr.f32.gmra.mrb[0].mxu0 %v3571
    %v4074 = vpop.f32.mrb[0].mxu0
    %v4075 = vadd.f32 %v3753, %v4074
    %v4076 = vpop.f32.mrb[0].mxu0
    %4077 = vmatprep.mubr.f32.mxu0 %v3575
    %4078 = vmatmul.mubr.f32.gmra.mrb[0].mxu0 %v3574
    %v4079 = vpop.f32.mrb[0].mxu0
    %v4080 = vadd.f32 %v3753, %v4079
    %v4081 = vpop.f32.mrb[0].mxu0
    %4082 = vmatprep.mubr.f32.mxu0 %v3578
    %4083 = vmatmul.mubr.f32.gmra.mrb[0].mxu0 %v3577
    %v4084 = vpop.f32.mrb[0].mxu0
    %v4085 = vadd.f32 %v3753, %v4084
    %v4086 = vpop.f32.mrb[0].mxu0
    %4087 = vmatprep.mubr.f32.mxu0 %v3581
    %4088 = vmatmul.mubr.f32.gmra.mrb[0].mxu0 %v3580
    %v4089 = vpop.f32.mrb[0].mxu0
    %v4090 = vadd.f32 %v3753, %v4089
    %v4091 = vpop.f32.mrb[0].mxu0
    %4092 = vmatprep.mubr.f32.mxu0 %v3584
    %4093 = vmatmul.mubr.f32.gmra.mrb[0].mxu0 %v3583
    %v4094 = vpop.f32.mrb[0].mxu0
    %v4095 = vadd.f32 %v3753, %v4094
    %v4096 = vpop.f32.mrb[0].mxu0
    %4097 = vmatprep.mubr.f32.mxu0 %v3587
    %4098 = vmatmul.mubr.f32.gmra.mrb[0].mxu0 %v3586
    %v4099 = vpop.f32.mrb[0].mxu0
    %v4100 = vadd.f32 %v3753, %v4099
    %v4101 = vpop.f32.mrb[0].mxu0
    %4102 = vmatprep.mubr.f32.mxu0 %v3590
    %4103 = vmatmul.mubr.f32.gmra.mrb[0].mxu0 %v3589
    %v4104 = vpop.f32.mrb[0].mxu0
    %v4105 = vadd.f32 %v3753, %v4104
    %v4106 = vpop.f32.mrb[0].mxu0
    %4107 = vmatprep.mubr.f32.mxu0 %v3593
    %4108 = vmatmul.mubr.f32.gmra.mrb[0].mxu0 %v3592
    %v4109 = vpop.f32.mrb[0].mxu0
    %v4110 = vadd.f32 %v3753, %v4109
    %v4111 = vpop.f32.mrb[0].mxu0
    %4112 = vmatprep.mubr.f32.mxu0 %v3596
    %4113 = vmatmul.mubr.f32.gmra.mrb[0].mxu0 %v3595
    %v4114 = vpop.f32.mrb[0].mxu0
    %v4115 = vadd.f32 %v3753, %v4114
    %v4116 = vpop.f32.mrb[0].mxu0
    %4117 = vmatprep.mubr.f32.mxu0 %v3599
    %4118 = vmatmul.mubr.f32.gmra.mrb[0].mxu0 %v3598
    %v4119 = vpop.f32.mrb[0].mxu0
    %v4120 = vadd.f32 %v3753, %v4119
    %v4121 = vpop.f32.mrb[0].mxu0
    %4122 = vmatprep.mubr.f32.mxu0 %v3602
    %4123 = vmatmul.mubr.f32.gmra.mrb[0].mxu0 %v3601
    %v4124 = vpop.f32.mrb[0].mxu0
    %v4125 = vadd.f32 %v3753, %v4124
    %v4126 = vpop.f32.mrb[0].mxu0
    %4127 = vmatprep.mubr.f32.mxu0 %v3605
    %4128 = vmatmul.mubr.f32.gmra.mrb[0].mxu0 %v3604
    %v4129 = vpop.f32.mrb[0].mxu0
    %v4130 = vadd.f32 %v3753, %v4129
    %v4131 = vpop.f32.mrb[0].mxu0
    %4132 = vmatprep.mubr.f32.mxu0 %v3608
    %4133 = vmatmul.mubr.f32.gmra.mrb[0].mxu0 %v3607
    %v4134 = vpop.f32.mrb[0].mxu0
    %v4135 = vadd.f32 %v3753, %v4134
    %v4136 = vpop.f32.mrb[0].mxu0
    %4137 = vmatprep.mubr.f32.mxu0 %v3611
    %4138 = vmatmul.mubr.f32.gmra.mrb[0].mxu0 %v3610
    %v4139 = vpop.f32.mrb[0].mxu0
    %v4140 = vadd.f32 %v3753, %v4139
    %v4141 = vpop.f32.mrb[0].mxu0
    %4142 = vmatprep.mubr.f32.mxu0 %v3614
    %4143 = vmatmul.mubr.f32.gmra.mrb[0].mxu0 %v3613
    %v4144 = vpop.f32.mrb[0].mxu0
    %v4145 = vadd.f32 %v3753, %v4144
    %v4146 = vpop.f32.mrb[0].mxu0
    %4147 = vmatprep.mubr.f32.mxu0 %v3617
    %4148 = vmatmul.mubr.f32.gmra.mrb[0].mxu0 %v3616
    %v4149 = vpop.f32.mrb[0].mxu0
    %v4150 = vpop.f32.mrb[0].mxu0
    %4151 = vmatprep.mubr.f32.mxu0 %v3620
    %4152 = vmatmul.mubr.f32.gmra.mrb[0].mxu0 %v3619
    %v4153 = vpop.f32.mrb[0].mxu0
    %v4154 = vpop.f32.mrb[0].mxu0
    %4155 = vmatprep.mubr.f32.mxu0 %v3623
    %4156 = vmatmul.mubr.f32.gmra.mrb[0].mxu0 %v3622
    %v4157 = vpop.f32.mrb[0].mxu0
    %v4158 = vpop.f32.mrb[0].mxu0
    %4159 = vmatprep.mubr.f32.mxu0 %v3626
    %4160 = vmatmul.mubr.f32.gmra.mrb[0].mxu0 %v3625
    %v4161 = vpop.f32.mrb[0].mxu0
    %v4162 = vpop.f32.mrb[0].mxu0
    %4163 = vmatprep.mubr.f32.mxu0 %v3629
    %4164 = vmatmul.mubr.f32.gmra.mrb[0].mxu0 %v3628
    %v4165 = vpop.f32.mrb[0].mxu0
    %v4166 = vadd.f32 %v3753, %v4165
    %v4167 = vpop.f32.mrb[0].mxu0
    %4168 = vmatprep.mubr.f32.mxu0 %v3632
    %4169 = vmatmul.mubr.f32.gmra.mrb[0].mxu0 %v3631
    %v4170 = vpop.f32.mrb[0].mxu0
    %v4171 = vadd.f32 %v3753, %v4170
    %v4172 = vpop.f32.mrb[0].mxu0
    %4173 = vmatprep.mubr.f32.mxu0 %v3635
    %4174 = vmatmul.mubr.f32.gmra.mrb[0].mxu0 %v3634
    %v4175 = vpop.f32.mrb[0].mxu0
    %v4176 = vadd.f32 %v3753, %v4175
    %v4177 = vpop.f32.mrb[0].mxu0
    %4178 = vmatprep.mubr.f32.mxu0 %v3638
    %4179 = vmatmul.mubr.f32.gmra.mrb[0].mxu0 %v3637
    %v4180 = vpop.f32.mrb[0].mxu0
    %v4181 = vadd.f32 %v3753, %v4180
    %v4182 = vpop.f32.mrb[0].mxu0
    %4183 = vmatprep.mubr.f32.mxu0 %v3641
    %4184 = vmatmul.mubr.f32.gmra.mrb[0].mxu0 %v3640
    %v4185 = vpop.f32.mrb[0].mxu0
    %v4186 = vadd.f32 %v3753, %v4185
    %v4187 = vpop.f32.mrb[0].mxu0
    %4188 = vmatprep.mubr.f32.mxu0 %v3644
    %4189 = vmatmul.mubr.f32.gmra.mrb[0].mxu0 %v3643
    %v4190 = vpop.f32.mrb[0].mxu0
    %v4191 = vadd.f32 %v3753, %v4190
    %v4192 = vpop.f32.mrb[0].mxu0
    %4193 = vmatprep.mubr.f32.mxu0 %v3647
    %4194 = vmatmul.mubr.f32.gmra.mrb[0].mxu0 %v3646
    %v4195 = vpop.f32.mrb[0].mxu0
    %v4196 = vadd.f32 %v3753, %v4195
    %v4197 = vpop.f32.mrb[0].mxu0
    %4198 = vmatprep.mubr.f32.mxu0 %v3650
    %4199 = vmatmul.mubr.f32.gmra.mrb[0].mxu0 %v3649
    %v4200 = vpop.f32.mrb[0].mxu0
    %v4201 = vadd.f32 %v3753, %v4200
    %v4202 = vpop.f32.mrb[0].mxu0
    %4203 = vmatprep.mubr.f32.mxu0 %v3653
    %4204 = vmatmul.mubr.f32.gmra.mrb[0].mxu0 %v3652
    %v4205 = vpop.f32.mrb[0].mxu0
    %v4206 = vadd.f32 %v3753, %v4205
    %v4207 = vpop.f32.mrb[0].mxu0
    %4208 = vmatprep.mubr.f32.mxu0 %v3656
    %4209 = vmatmul.mubr.f32.gmra.mrb[0].mxu0 %v3655
    %v4210 = vpop.f32.mrb[0].mxu0
    %v4211 = vadd.f32 %v3753, %v4210
    %v4212 = vpop.f32.mrb[0].mxu0
    %4213 = vmatprep.mubr.f32.mxu0 %v3659
    %4214 = vmatmul.mubr.f32.gmra.mrb[0].mxu0 %v3658
    %v4215 = vpop.f32.mrb[0].mxu0
    %v4216 = vadd.f32 %v3753, %v4215
    %v4217 = vpop.f32.mrb[0].mxu0
    %4218 = vmatprep.mubr.f32.mxu0 %v3662
    %4219 = vmatmul.mubr.f32.gmra.mrb[0].mxu0 %v3661
    %v4220 = vpop.f32.mrb[0].mxu0
    %v4221 = vadd.f32 %v3753, %v4220
    %v4222 = vpop.f32.mrb[0].mxu0
    %4223 = vmatprep.mubr.f32.mxu0 %v3665
    %4224 = vmatmul.mubr.f32.gmra.mrb[0].mxu0 %v3664
    %v4225 = vpop.f32.mrb[0].mxu0
    %v4226 = vadd.f32 %v3753, %v4225
    %v4227 = vpop.f32.mrb[0].mxu0
    %4228 = vmatprep.mubr.f32.mxu0 %v3668
    %4229 = vmatmul.mubr.f32.gmra.mrb[0].mxu0 %v3667
    %v4230 = vpop.f32.mrb[0].mxu0
    %v4231 = vadd.f32 %v3753, %v4230
    %v4232 = vpop.f32.mrb[0].mxu0
    %4233 = vmatprep.mubr.f32.mxu0 %v3671
    %4234 = vmatmul.mubr.f32.gmra.mrb[0].mxu0 %v3670
    %v4235 = vpop.f32.mrb[0].mxu0
    %v4236 = vadd.f32 %v3753, %v4235
    %v4237 = vpop.f32.mrb[0].mxu0
    %4238 = vmatprep.mubr.f32.mxu0 %v3674
    %4239 = vmatmul.mubr.f32.gmra.mrb[0].mxu0 %v3673
    %v4240 = vpop.f32.mrb[0].mxu0
    %v4241 = vadd.f32 %v3753, %v4240
    %v4242 = vpop.f32.mrb[0].mxu0
    %4243 = vmatprep.mubr.f32.mxu0 %v3677
    %4244 = vmatmul.mubr.f32.gmra.mrb[0].mxu0 %v3676
    %v4245 = vpop.f32.mrb[0].mxu0
    %v4246 = vadd.f32 %v3753, %v4245
    %v4247 = vpop.f32.mrb[0].mxu0
    %4248 = vmatprep.mubr.f32.mxu0 %v3680
    %4249 = vmatmul.mubr.f32.gmra.mrb[0].mxu0 %v3679
    %v4250 = vpop.f32.mrb[0].mxu0
    %v4251 = vadd.f32 %v3753, %v4250
    %v4252 = vpop.f32.mrb[0].mxu0
    %4253 = vmatprep.mubr.f32.mxu0 %v3683
    %4254 = vmatmul.mubr.f32.gmra.mrb[0].mxu0 %v3682
    %v4255 = vpop.f32.mrb[0].mxu0
    %v4256 = vadd.f32 %v3753, %v4255
    %v4257 = vpop.f32.mrb[0].mxu0
    %4258 = vmatprep.mubr.f32.mxu0 %v3686
    %4259 = vmatmul.mubr.f32.gmra.mrb[0].mxu0 %v3685
    %v4260 = vpop.f32.mrb[0].mxu0
    %v4261 = vadd.f32 %v3753, %v4260
    %v4262 = vpop.f32.mrb[0].mxu0
    %4263 = vmatprep.mubr.f32.mxu0 %v3689
    %4264 = vmatmul.mubr.f32.gmra.mrb[0].mxu0 %v3688
    %v4265 = vpop.f32.mrb[0].mxu0
    %v4266 = vadd.f32 %v3753, %v4265
    %v4267 = vpop.f32.mrb[0].mxu0
    %4268 = vmatprep.mubr.f32.mxu0 %v3692
    %4269 = vmatmul.mubr.f32.gmra.mrb[0].mxu0 %v3691
    %v4270 = vpop.f32.mrb[0].mxu0
    %v4271 = vadd.f32 %v3753, %v4270
    %v4272 = vpop.f32.mrb[0].mxu0
    %4273 = vmatprep.mubr.f32.mxu0 %v3695
    %4274 = vmatmul.mubr.f32.gmra.mrb[0].mxu0 %v3694
    %v4275 = vpop.f32.mrb[0].mxu0
    %v4276 = vadd.f32 %v3753, %v4275
    %v4277 = vpop.f32.mrb[0].mxu0
    %4278 = vmatprep.mubr.f32.mxu0 %v3698
    %4279 = vmatmul.mubr.f32.gmra.mrb[0].mxu0 %v3697
    %v4280 = vpop.f32.mrb[0].mxu0
    %v4281 = vadd.f32 %v3753, %v4280
    %v4282 = vpop.f32.mrb[0].mxu0
    %4283 = vmatprep.mubr.f32.mxu0 %v3701
    %4284 = vmatmul.mubr.f32.gmra.mrb[0].mxu0 %v3700
    %v4285 = vpop.f32.mrb[0].mxu0
    %v4286 = vadd.f32 %v3753, %v4285
    %v4287 = vpop.f32.mrb[0].mxu0
    %4288 = vmatprep.mubr.f32.mxu0 %v3704
    %4289 = vmatmul.mubr.f32.gmra.mrb[0].mxu0 %v3703
    %v4290 = vpop.f32.mrb[0].mxu0
    %v4291 = vadd.f32 %v3753, %v4290
    %v4292 = vpop.f32.mrb[0].mxu0
    %4293 = vmatprep.mubr.f32.mxu0 %v3707
    %4294 = vmatmul.mubr.f32.gmra.mrb[0].mxu0 %v3706
    %v4295 = vpop.f32.mrb[0].mxu0
    %v4296 = vadd.f32 %v3753, %v4295
    %v4297 = vpop.f32.mrb[0].mxu0
    %4298 = vmatprep.mubr.f32.mxu0 %v3710
    %4299 = vmatmul.mubr.f32.gmra.mrb[0].mxu0 %v3709
    %v4300 = vpop.f32.mrb[0].mxu0
    %v4301 = vadd.f32 %v3753, %v4300
    %v4302 = vpop.f32.mrb[0].mxu0
    %4303 = vdwg.mxu0
    %4304 = vmatprep.subr.mxu0 0.0
    %4305 = vmatpush1.msra.mxu0 %v3744
    %4306 = vmatprep.subr.mxu0 0.0
    %4307 = vmatpush1.msra.mxu0 %v3745
    %4308 = vmatprep.subr.mxu0 0.0
    %4309 = vmatpush1.msra.mxu0 %v3746
    %4310 = vmatprep.subr.mxu0 0.0
    %4311 = vmatpush1.msra.mxu0 %v3747
    %4312 = vmatprep.subr.mxu0 0.0
    %4313 = vmatpush1.msra.mxu0 0.0
    %4314 = vmatprep.subr.mxu0 0.0
    %4315 = vmatpush1.msra.mxu0 0.0
    %4316 = vmatprep.subr.mxu0 0.0
    %4317 = vmatpush1.msra.mxu0 0.0
    %4318 = vmatprep.subr.mxu0 0.0
    %4319 = vmatpush1.msra.mxu0 0.0
    %4320 = vmatprep.subr.mxu0 0.0
    %4321 = vmatpush1.msra.mxu0 0.0
    %4322 = vmatprep.subr.mxu0 0.0
    %4323 = vmatpush1.msra.mxu0 0.0
    %4324 = vmatprep.subr.mxu0 0.0
    %4325 = vmatpush1.msra.mxu0 0.0
    %4326 = vmatprep.subr.mxu0 0.0
    %4327 = vmatpush1.msra.mxu0 0.0
    %4328 = vmatprep.subr.mxu0 0.0
    %4329 = vmatpush1.msra.mxu0 0.0
    %4330 = vmatprep.subr.mxu0 0.0
    %4331 = vmatpush1.msra.mxu0 0.0
    %4332 = vmatprep.subr.mxu0 0.0
    %4333 = vmatpush1.msra.mxu0 0.0
    %4334 = vmatprep.subr.mxu0 0.0
    %4335 = vmatpush1.msra.mxu0 0.0
    %4336 = vmatprep.subr.mxu0 0.0
    %4337 = vmatpush1.msra.mxu0 0.0
    %4338 = vmatprep.subr.mxu0 0.0
    %4339 = vmatpush1.msra.mxu0 0.0
    %4340 = vmatprep.subr.mxu0 0.0
    %4341 = vmatpush1.msra.mxu0 0.0
    %4342 = vmatprep.subr.mxu0 0.0
    %4343 = vmatpush1.msra.mxu0 0.0
    %4344 = vmatprep.subr.mxu0 0.0
    %4345 = vmatpush1.msra.mxu0 0.0
    %4346 = vmatprep.subr.mxu0 0.0
    %4347 = vmatpush1.msra.mxu0 0.0
    %4348 = vmatprep.subr.mxu0 0.0
    %4349 = vmatpush1.msra.mxu0 0.0
    %4350 = vmatprep.subr.mxu0 0.0
    %4351 = vmatpush1.msra.mxu0 0.0
    %4352 = vmatprep.subr.mxu0 0.0
    %4353 = vmatpush1.msra.mxu0 0.0
    %4354 = vmatprep.subr.mxu0 0.0
    %4355 = vmatpush1.msra.mxu0 0.0
    %4356 = vmatprep.subr.mxu0 0.0
    %4357 = vmatpush1.msra.mxu0 0.0
    %4358 = vmatprep.subr.mxu0 0.0
    %4359 = vmatpush1.msra.mxu0 0.0
    %4360 = vmatprep.subr.mxu0 0.0
    %4361 = vmatpush1.msra.mxu0 0.0
    %4362 = vmatprep.subr.mxu0 0.0
    %4363 = vmatpush1.msra.mxu0 0.0
    %4364 = vmatprep.subr.mxu0 0.0
    %4365 = vmatpush1.msra.mxu0 0.0
    %4366 = vmatprep.subr.mxu0 0.0
    %4367 = vmatpush1.msra.mxu0 0.0
    %4368 = vmatprep.mubr.f32.mxu0 0.0
    %4369 = vmatmul.mubr.f32.gmra.mrb[0].mxu0 %v3756
    %v4370 = vpop.f32.mrb[0].mxu0
    %v4371 = vadd.f32 %v4005, %v4370
    %v4372 = vpop.f32.mrb[0].mxu0
    %4373 = vmatprep.mubr.f32.mxu0 0.0
    %4374 = vmatmul.mubr.f32.gmra.mrb[0].mxu0 %v3759
    %v4375 = vpop.f32.mrb[0].mxu0
    %v4376 = vadd.f32 %v4010, %v4375
    %v4377 = vpop.f32.mrb[0].mxu0
    %4378 = vmatprep.mubr.f32.mxu0 0.0
    %4379 = vmatmul.mubr.f32.gmra.mrb[0].mxu0 %v3762
    %v4380 = vpop.f32.mrb[0].mxu0
    %v4381 = vadd.f32 %v4015, %v4380
    %v4382 = vpop.f32.mrb[0].mxu0
    %4383 = vmatprep.mubr.f32.mxu0 0.0
    %4384 = vmatmul.mubr.f32.gmra.mrb[0].mxu0 %v3765
    %v4385 = vpop.f32.mrb[0].mxu0
    %v4386 = vadd.f32 %v4020, %v4385
    %v4387 = vpop.f32.mrb[0].mxu0
    %4388 = vmatprep.mubr.f32.mxu0 0.0
    %4389 = vmatmul.mubr.f32.gmra.mrb[0].mxu0 %v3768
    %v4390 = vpop.f32.mrb[0].mxu0
    %v4391 = vadd.f32 %v4025, %v4390
    %v4392 = vpop.f32.mrb[0].mxu0
    %4393 = vmatprep.mubr.f32.mxu0 0.0
    %4394 = vmatmul.mubr.f32.gmra.mrb[0].mxu0 %v3771
    %v4395 = vpop.f32.mrb[0].mxu0
    %v4396 = vadd.f32 %v4030, %v4395
    %v4397 = vpop.f32.mrb[0].mxu0
    %4398 = vmatprep.mubr.f32.mxu0 0.0
    %4399 = vmatmul.mubr.f32.gmra.mrb[0].mxu0 %v3774
    %v4400 = vpop.f32.mrb[0].mxu0
    %v4401 = vadd.f32 %v4035, %v4400
    %v4402 = vpop.f32.mrb[0].mxu0
    %4403 = vmatprep.mubr.f32.mxu0 0.0
    %4404 = vmatmul.mubr.f32.gmra.mrb[0].mxu0 %v3777
    %v4405 = vpop.f32.mrb[0].mxu0
    %v4406 = vadd.f32 %v4040, %v4405
    %v4407 = vpop.f32.mrb[0].mxu0
    %4408 = vmatprep.mubr.f32.mxu0 0.0
    %4409 = vmatmul.mubr.f32.gmra.mrb[0].mxu0 %v3780
    %v4410 = vpop.f32.mrb[0].mxu0
    %v4411 = vadd.f32 %v4045, %v4410
    %v4412 = vpop.f32.mrb[0].mxu0
    %4413 = vmatprep.mubr.f32.mxu0 0.0
    %4414 = vmatmul.mubr.f32.gmra.mrb[0].mxu0 %v3783
    %v4415 = vpop.f32.mrb[0].mxu0
    %v4416 = vadd.f32 %v4050, %v4415
    %v4417 = vpop.f32.mrb[0].mxu0
    %4418 = vmatprep.mubr.f32.mxu0 0.0
    %4419 = vmatmul.mubr.f32.gmra.mrb[0].mxu0 %v3786
    %v4420 = vpop.f32.mrb[0].mxu0
    %v4421 = vadd.f32 %v4055, %v4420
    %v4422 = vpop.f32.mrb[0].mxu0
    %4423 = vmatprep.mubr.f32.mxu0 0.0
    %4424 = vmatmul.mubr.f32.gmra.mrb[0].mxu0 %v3789
    %v4425 = vpop.f32.mrb[0].mxu0
    %v4426 = vadd.f32 %v4060, %v4425
    %v4427 = vpop.f32.mrb[0].mxu0
    %4428 = vmatprep.mubr.f32.mxu0 0.0
    %4429 = vmatmul.mubr.f32.gmra.mrb[0].mxu0 %v3792
    %v4430 = vpop.f32.mrb[0].mxu0
    %v4431 = vadd.f32 %v4065, %v4430
    %v4432 = vpop.f32.mrb[0].mxu0
    %4433 = vmatprep.mubr.f32.mxu0 0.0
    %4434 = vmatmul.mubr.f32.gmra.mrb[0].mxu0 %v3795
    %v4435 = vpop.f32.mrb[0].mxu0
    %v4436 = vadd.f32 %v4070, %v4435
    %v4437 = vpop.f32.mrb[0].mxu0
    %4438 = vmatprep.mubr.f32.mxu0 0.0
    %4439 = vmatmul.mubr.f32.gmra.mrb[0].mxu0 %v3798
    %v4440 = vpop.f32.mrb[0].mxu0
    %v4441 = vadd.f32 %v4075, %v4440
    %v4442 = vpop.f32.mrb[0].mxu0
    %4443 = vmatprep.mubr.f32.mxu0 0.0
    %4444 = vmatmul.mubr.f32.gmra.mrb[0].mxu0 %v3801
    %v4445 = vpop.f32.mrb[0].mxu0
    %v4446 = vadd.f32 %v4080, %v4445
    %v4447 = vpop.f32.mrb[0].mxu0
    %4448 = vmatprep.mubr.f32.mxu0 0.0
    %4449 = vmatmul.mubr.f32.gmra.mrb[0].mxu0 %v3804
    %v4450 = vpop.f32.mrb[0].mxu0
    %v4451 = vadd.f32 %v4085, %v4450
    %v4452 = vpop.f32.mrb[0].mxu0
    %4453 = vmatprep.mubr.f32.mxu0 0.0
    %4454 = vmatmul.mubr.f32.gmra.mrb[0].mxu0 %v3807
    %v4455 = vpop.f32.mrb[0].mxu0
    %v4456 = vadd.f32 %v4090, %v4455
    %v4457 = vpop.f32.mrb[0].mxu0
    %4458 = vmatprep.mubr.f32.mxu0 0.0
    %4459 = vmatmul.mubr.f32.gmra.mrb[0].mxu0 %v3810
    %v4460 = vpop.f32.mrb[0].mxu0
    %v4461 = vadd.f32 %v4095, %v4460
    %v4462 = vpop.f32.mrb[0].mxu0
    %4463 = vmatprep.mubr.f32.mxu0 0.0
    %4464 = vmatmul.mubr.f32.gmra.mrb[0].mxu0 %v3813
    %v4465 = vpop.f32.mrb[0].mxu0
    %v4466 = vadd.f32 %v4100, %v4465
    %v4467 = vpop.f32.mrb[0].mxu0
    %4468 = vmatprep.mubr.f32.mxu0 0.0
    %4469 = vmatmul.mubr.f32.gmra.mrb[0].mxu0 %v3816
    %v4470 = vpop.f32.mrb[0].mxu0
    %v4471 = vadd.f32 %v4105, %v4470
    %v4472 = vpop.f32.mrb[0].mxu0
    %4473 = vmatprep.mubr.f32.mxu0 0.0
    %4474 = vmatmul.mubr.f32.gmra.mrb[0].mxu0 %v3819
    %v4475 = vpop.f32.mrb[0].mxu0
    %v4476 = vadd.f32 %v4110, %v4475
    %v4477 = vpop.f32.mrb[0].mxu0
    %4478 = vmatprep.mubr.f32.mxu0 0.0
    %4479 = vmatmul.mubr.f32.gmra.mrb[0].mxu0 %v3822
    %v4480 = vpop.f32.mrb[0].mxu0
    %v4481 = vadd.f32 %v4115, %v4480
    %v4482 = vpop.f32.mrb[0].mxu0
    %4483 = vmatprep.mubr.f32.mxu0 0.0
    %4484 = vmatmul.mubr.f32.gmra.mrb[0].mxu0 %v3825
    %v4485 = vpop.f32.mrb[0].mxu0
    %v4486 = vadd.f32 %v4120, %v4485
    %v4487 = vpop.f32.mrb[0].mxu0
    %4488 = vmatprep.mubr.f32.mxu0 0.0
    %4489 = vmatmul.mubr.f32.gmra.mrb[0].mxu0 %v3828
    %v4490 = vpop.f32.mrb[0].mxu0
    %v4491 = vadd.f32 %v4125, %v4490
    %v4492 = vpop.f32.mrb[0].mxu0
    %4493 = vmatprep.mubr.f32.mxu0 0.0
    %4494 = vmatmul.mubr.f32.gmra.mrb[0].mxu0 %v3831
    %v4495 = vpop.f32.mrb[0].mxu0
    %v4496 = vadd.f32 %v4130, %v4495
    %v4497 = vpop.f32.mrb[0].mxu0
    %4498 = vmatprep.mubr.f32.mxu0 0.0
    %4499 = vmatmul.mubr.f32.gmra.mrb[0].mxu0 %v3834
    %v4500 = vpop.f32.mrb[0].mxu0
    %v4501 = vadd.f32 %v4135, %v4500
    %v4502 = vpop.f32.mrb[0].mxu0
    %4503 = vmatprep.mubr.f32.mxu0 0.0
    %4504 = vmatmul.mubr.f32.gmra.mrb[0].mxu0 %v3837
    %v4505 = vpop.f32.mrb[0].mxu0
    %v4506 = vadd.f32 %v4140, %v4505
    %v4507 = vpop.f32.mrb[0].mxu0
    %4508 = vmatprep.mubr.f32.mxu0 0.0
    %4509 = vmatmul.mubr.f32.gmra.mrb[0].mxu0 %v3840
    %v4510 = vpop.f32.mrb[0].mxu0
    %v4511 = vadd.f32 %v4145, %v4510
    %v4512 = vpop.f32.mrb[0].mxu0
    %4513 = vmatprep.mubr.f32.mxu0 0.0
    %4514 = vmatmul.mubr.f32.gmra.mrb[0].mxu0 %v3843
    %v4515 = vpop.f32.mrb[0].mxu0
    %v4516 = vpop.f32.mrb[0].mxu0
    %4517 = vmatprep.mubr.f32.mxu0 0.0
    %4518 = vmatmul.mubr.f32.gmra.mrb[0].mxu0 %v3846
    %v4519 = vpop.f32.mrb[0].mxu0
    %v4520 = vpop.f32.mrb[0].mxu0
    %4521 = vmatprep.mubr.f32.mxu0 0.0
    %4522 = vmatmul.mubr.f32.gmra.mrb[0].mxu0 %v3849
    %v4523 = vpop.f32.mrb[0].mxu0
    %v4524 = vpop.f32.mrb[0].mxu0
    %4525 = vmatprep.mubr.f32.mxu0 0.0
    %4526 = vmatmul.mubr.f32.gmra.mrb[0].mxu0 %v3852
    %v4527 = vpop.f32.mrb[0].mxu0
    %v4528 = vpop.f32.mrb[0].mxu0
    %4529 = vmatprep.mubr.f32.mxu0 0.0
    %4530 = vmatmul.mubr.f32.gmra.mrb[0].mxu0 %v3855
    %v4531 = vpop.f32.mrb[0].mxu0
    %v4532 = vadd.f32 %v4166, %v4531
    %v4533 = vpop.f32.mrb[0].mxu0
    %4534 = vmatprep.mubr.f32.mxu0 0.0
    %4535 = vmatmul.mubr.f32.gmra.mrb[0].mxu0 %v3858
    %v4536 = vpop.f32.mrb[0].mxu0
    %v4537 = vadd.f32 %v4171, %v4536
    %v4538 = vpop.f32.mrb[0].mxu0
    %4539 = vmatprep.mubr.f32.mxu0 0.0
    %4540 = vmatmul.mubr.f32.gmra.mrb[0].mxu0 %v3861
    %v4541 = vpop.f32.mrb[0].mxu0
    %v4542 = vadd.f32 %v4176, %v4541
    %v4543 = vpop.f32.mrb[0].mxu0
    %4544 = vmatprep.mubr.f32.mxu0 0.0
    %4545 = vmatmul.mubr.f32.gmra.mrb[0].mxu0 %v3864
    %v4546 = vpop.f32.mrb[0].mxu0
    %v4547 = vadd.f32 %v4181, %v4546
    %v4548 = vpop.f32.mrb[0].mxu0
    %4549 = vmatprep.mubr.f32.mxu0 0.0
    %4550 = vmatmul.mubr.f32.gmra.mrb[0].mxu0 %v3867
    %v4551 = vpop.f32.mrb[0].mxu0
    %v4552 = vadd.f32 %v4186, %v4551
    %v4553 = vpop.f32.mrb[0].mxu0
    %4554 = vmatprep.mubr.f32.mxu0 0.0
    %4555 = vmatmul.mubr.f32.gmra.mrb[0].mxu0 %v3870
    %v4556 = vpop.f32.mrb[0].mxu0
    %v4557 = vadd.f32 %v4191, %v4556
    %v4558 = vpop.f32.mrb[0].mxu0
    %4559 = vmatprep.mubr.f32.mxu0 0.0
    %4560 = vmatmul.mubr.f32.gmra.mrb[0].mxu0 %v3873
    %v4561 = vpop.f32.mrb[0].mxu0
    %v4562 = vadd.f32 %v4196, %v4561
    %v4563 = vpop.f32.mrb[0].mxu0
    %4564 = vmatprep.mubr.f32.mxu0 0.0
    %4565 = vmatmul.mubr.f32.gmra.mrb[0].mxu0 %v3876
    %v4566 = vpop.f32.mrb[0].mxu0
    %v4567 = vadd.f32 %v4201, %v4566
    %v4568 = vpop.f32.mrb[0].mxu0
    %4569 = vmatprep.mubr.f32.mxu0 0.0
    %4570 = vmatmul.mubr.f32.gmra.mrb[0].mxu0 %v3879
    %v4571 = vpop.f32.mrb[0].mxu0
    %v4572 = vadd.f32 %v4206, %v4571
    %v4573 = vpop.f32.mrb[0].mxu0
    %4574 = vmatprep.mubr.f32.mxu0 0.0
    %4575 = vmatmul.mubr.f32.gmra.mrb[0].mxu0 %v3882
    %v4576 = vpop.f32.mrb[0].mxu0
    %v4577 = vadd.f32 %v4211, %v4576
    %v4578 = vpop.f32.mrb[0].mxu0
    %4579 = vmatprep.mubr.f32.mxu0 0.0
    %4580 = vmatmul.mubr.f32.gmra.mrb[0].mxu0 %v3885
    %v4581 = vpop.f32.mrb[0].mxu0
    %v4582 = vadd.f32 %v4216, %v4581
    %v4583 = vpop.f32.mrb[0].mxu0
    %4584 = vmatprep.mubr.f32.mxu0 0.0
    %4585 = vmatmul.mubr.f32.gmra.mrb[0].mxu0 %v3888
    %v4586 = vpop.f32.mrb[0].mxu0
    %v4587 = vadd.f32 %v4221, %v4586
    %v4588 = vpop.f32.mrb[0].mxu0
    %4589 = vmatprep.mubr.f32.mxu0 0.0
    %4590 = vmatmul.mubr.f32.gmra.mrb[0].mxu0 %v3891
    %v4591 = vpop.f32.mrb[0].mxu0
    %v4592 = vadd.f32 %v4226, %v4591
    %v4593 = vpop.f32.mrb[0].mxu0
    %4594 = vmatprep.mubr.f32.mxu0 0.0
    %4595 = vmatmul.mubr.f32.gmra.mrb[0].mxu0 %v3894
    %v4596 = vpop.f32.mrb[0].mxu0
    %v4597 = vadd.f32 %v4231, %v4596
    %v4598 = vpop.f32.mrb[0].mxu0
    %4599 = vmatprep.mubr.f32.mxu0 0.0
    %4600 = vmatmul.mubr.f32.gmra.mrb[0].mxu0 %v3897
    %v4601 = vpop.f32.mrb[0].mxu0
    %v4602 = vadd.f32 %v4236, %v4601
    %v4603 = vpop.f32.mrb[0].mxu0
    %4604 = vmatprep.mubr.f32.mxu0 0.0
    %4605 = vmatmul.mubr.f32.gmra.mrb[0].mxu0 %v3900
    %v4606 = vpop.f32.mrb[0].mxu0
    %v4607 = vadd.f32 %v4241, %v4606
    %v4608 = vpop.f32.mrb[0].mxu0
    %4609 = vmatprep.mubr.f32.mxu0 0.0
    %4610 = vmatmul.mubr.f32.gmra.mrb[0].mxu0 %v3903
    %v4611 = vpop.f32.mrb[0].mxu0
    %v4612 = vadd.f32 %v4246, %v4611
    %v4613 = vpop.f32.mrb[0].mxu0
    %4614 = vmatprep.mubr.f32.mxu0 0.0
    %4615 = vmatmul.mubr.f32.gmra.mrb[0].mxu0 %v3906
    %v4616 = vpop.f32.mrb[0].mxu0
    %v4617 = vadd.f32 %v4251, %v4616
    %v4618 = vpop.f32.mrb[0].mxu0
    %4619 = vmatprep.mubr.f32.mxu0 0.0
    %4620 = vmatmul.mubr.f32.gmra.mrb[0].mxu0 %v3909
    %v4621 = vpop.f32.mrb[0].mxu0
    %v4622 = vadd.f32 %v4256, %v4621
    %v4623 = vpop.f32.mrb[0].mxu0
    %4624 = vmatprep.mubr.f32.mxu0 0.0
    %4625 = vmatmul.mubr.f32.gmra.mrb[0].mxu0 %v3912
    %v4626 = vpop.f32.mrb[0].mxu0
    %v4627 = vadd.f32 %v4261, %v4626
    %v4628 = vpop.f32.mrb[0].mxu0
    %4629 = vmatprep.mubr.f32.mxu0 0.0
    %4630 = vmatmul.mubr.f32.gmra.mrb[0].mxu0 %v3915
    %v4631 = vpop.f32.mrb[0].mxu0
    %v4632 = vadd.f32 %v4266, %v4631
    %v4633 = vpop.f32.mrb[0].mxu0
    %4634 = vmatprep.mubr.f32.mxu0 0.0
    %4635 = vmatmul.mubr.f32.gmra.mrb[0].mxu0 %v3918
    %v4636 = vpop.f32.mrb[0].mxu0
    %v4637 = vadd.f32 %v4271, %v4636
    %v4638 = vpop.f32.mrb[0].mxu0
    %4639 = vmatprep.mubr.f32.mxu0 0.0
    %4640 = vmatmul.mubr.f32.gmra.mrb[0].mxu0 %v3921
    %v4641 = vpop.f32.mrb[0].mxu0
    %v4642 = vadd.f32 %v4276, %v4641
    %v4643 = vpop.f32.mrb[0].mxu0
    %4644 = vmatprep.mubr.f32.mxu0 0.0
    %4645 = vmatmul.mubr.f32.gmra.mrb[0].mxu0 %v3924
    %v4646 = vpop.f32.mrb[0].mxu0
    %v4647 = vadd.f32 %v4281, %v4646
    %v4648 = vpop.f32.mrb[0].mxu0
    %4649 = vmatprep.mubr.f32.mxu0 0.0
    %4650 = vmatmul.mubr.f32.gmra.mrb[0].mxu0 %v3927
    %v4651 = vpop.f32.mrb[0].mxu0
    %v4652 = vadd.f32 %v4286, %v4651
    %v4653 = vpop.f32.mrb[0].mxu0
    %4654 = vmatprep.mubr.f32.mxu0 0.0
    %4655 = vmatmul.mubr.f32.gmra.mrb[0].mxu0 %v3930
    %v4656 = vpop.f32.mrb[0].mxu0
    %v4657 = vadd.f32 %v4291, %v4656
    %v4658 = vpop.f32.mrb[0].mxu0
    %4659 = vmatprep.mubr.f32.mxu0 0.0
    %4660 = vmatmul.mubr.f32.gmra.mrb[0].mxu0 %v3933
    %v4661 = vpop.f32.mrb[0].mxu0
    %v4662 = vadd.f32 %v4296, %v4661
    %v4663 = vpop.f32.mrb[0].mxu0
    %4664 = vmatprep.mubr.f32.mxu0 0.0
    %4665 = vmatmul.mubr.f32.gmra.mrb[0].mxu0 %v3936
    %v4666 = vpop.f32.mrb[0].mxu0
    %v4667 = vadd.f32 %v4301, %v4666
    %v4668 = vpop.f32.mrb[0].mxu0
    %4669 = vdwg.mxu0
    %v4670 = vmax.f32 %v4371, 0.0
    %v4671 = vmax.f32 %v4376, 0.0
    %v4672 = vmax.f32 %v4381, 0.0
    %v4673 = vmax.f32 %v4386, 0.0
    %v4674 = vmax.f32 %v4391, 0.0
    %v4675 = vmax.f32 %v4396, 0.0
    %v4676 = vmax.f32 %v4401, 0.0
    %v4677 = vmax.f32 %v4406, 0.0
    %v4678 = vmax.f32 %v4411, 0.0
    %v4679 = vmax.f32 %v4416, 0.0
    %v4680 = vmax.f32 %v4421, 0.0
    %v4681 = vmax.f32 %v4426, 0.0
    %v4682 = vmax.f32 %v4431, 0.0
    %v4683 = vmax.f32 %v4436, 0.0
    %v4684 = vmax.f32 %v4441, 0.0
    %v4685 = vmax.f32 %v4446, 0.0
    %v4686 = vmax.f32 %v4451, 0.0
    %v4687 = vmax.f32 %v4456, 0.0
    %v4688 = vmax.f32 %v4461, 0.0
    %v4689 = vmax.f32 %v4466, 0.0
    %v4690 = vmax.f32 %v4471, 0.0
    %v4691 = vmax.f32 %v4476, 0.0
    %v4692 = vmax.f32 %v4481, 0.0
    %v4693 = vmax.f32 %v4486, 0.0
    %v4694 = vmax.f32 %v4491, 0.0
    %v4695 = vmax.f32 %v4496, 0.0
    %v4696 = vmax.f32 %v4501, 0.0
    %v4697 = vmax.f32 %v4506, 0.0
    %v4698 = vmax.f32 %v4511, 0.0
    %v4699 = vmax.f32 %v4532, 0.0
    %v4700 = vmax.f32 %v4537, 0.0
    %v4701 = vmax.f32 %v4542, 0.0
    %v4702 = vmax.f32 %v4547, 0.0
    %v4703 = vmax.f32 %v4552, 0.0
    %v4704 = vmax.f32 %v4557, 0.0
    %v4705 = vmax.f32 %v4562, 0.0
    %v4706 = vmax.f32 %v4567, 0.0
    %v4707 = vmax.f32 %v4572, 0.0
    %v4708 = vmax.f32 %v4577, 0.0
    %v4709 = vmax.f32 %v4582, 0.0
    %v4710 = vmax.f32 %v4587, 0.0
    %v4711 = vmax.f32 %v4592, 0.0
    %v4712 = vmax.f32 %v4597, 0.0
    %v4713 = vmax.f32 %v4602, 0.0
    %v4714 = vmax.f32 %v4607, 0.0
    %v4715 = vmax.f32 %v4612, 0.0
    %v4716 = vmax.f32 %v4617, 0.0
    %v4717 = vmax.f32 %v4622, 0.0
    %v4718 = vmax.f32 %v4627, 0.0
    %v4719 = vmax.f32 %v4632, 0.0
    %v4720 = vmax.f32 %v4637, 0.0
    %v4721 = vmax.f32 %v4642, 0.0
    %v4722 = vmax.f32 %v4647, 0.0
    %v4723 = vmax.f32 %v4652, 0.0
    %v4724 = vmax.f32 %v4657, 0.0
    %v4725 = vmax.f32 %v4662, 0.0
    %v4726 = vmax.f32 %v4667, 0.0
    %v4784 = vrot.slane %v4670, 1
    %v4785 = vrot.slane %v4671, 1
    %v4786 = vsel %vm1550, %v4784, %v4785
    %v4787 = vrot.slane %v4672, 1
    %v4788 = vsel %vm1550, %v4785, %v4787
    %v4789 = vrot.slane %v4673, 1
    %v4790 = vsel %vm1550, %v4787, %v4789
    %v4791 = vrot.slane %v4674, 1
    %v4792 = vsel %vm1550, %v4789, %v4791
    %v4793 = vrot.slane %v4675, 1
    %v4794 = vsel %vm1550, %v4791, %v4793
    %v4795 = vrot.slane %v4676, 1
    %v4796 = vsel %vm1550, %v4793, %v4795
    %v4797 = vrot.slane %v4677, 1
    %v4798 = vsel %vm1550, %v4795, %v4797
    %v4799 = vrot.slane %v4678, 1
    %v4800 = vsel %vm1550, %v4797, %v4799
    %v4801 = vrot.slane %v4679, 1
    %v4802 = vsel %vm1550, %v4799, %v4801
    %v4803 = vrot.slane %v4680, 1
    %v4804 = vsel %vm1550, %v4801, %v4803
    %v4805 = vrot.slane %v4681, 1
    %v4806 = vsel %vm1550, %v4803, %v4805
    %v4807 = vrot.slane %v4682, 1
    %v4808 = vsel %vm1550, %v4805, %v4807
    %v4809 = vrot.slane %v4683, 1
    %v4810 = vsel %vm1550, %v4807, %v4809
    %v4811 = vrot.slane %v4684, 1
    %v4812 = vsel %vm1550, %v4809, %v4811
    %v4813 = vrot.slane %v4685, 1
    %v4814 = vsel %vm1550, %v4811, %v4813
    %v4815 = vrot.slane %v4686, 1
    %v4816 = vsel %vm1550, %v4813, %v4815
    %v4817 = vrot.slane %v4687, 1
    %v4818 = vsel %vm1550, %v4815, %v4817
    %v4819 = vrot.slane %v4688, 1
    %v4820 = vsel %vm1550, %v4817, %v4819
    %v4821 = vrot.slane %v4689, 1
    %v4822 = vsel %vm1550, %v4819, %v4821
    %v4823 = vrot.slane %v4690, 1
    %v4824 = vsel %vm1550, %v4821, %v4823
    %v4825 = vrot.slane %v4691, 1
    %v4826 = vsel %vm1550, %v4823, %v4825
    %v4827 = vrot.slane %v4692, 1
    %v4828 = vsel %vm1550, %v4825, %v4827
    %v4829 = vrot.slane %v4693, 1
    %v4830 = vsel %vm1550, %v4827, %v4829
    %v4831 = vrot.slane %v4694, 1
    %v4832 = vsel %vm1550, %v4829, %v4831
    %v4833 = vrot.slane %v4695, 1
    %v4834 = vsel %vm1550, %v4831, %v4833
    %v4835 = vrot.slane %v4696, 1
    %v4836 = vsel %vm1550, %v4833, %v4835
    %v4837 = vrot.slane %v4697, 1
    %v4838 = vsel %vm1550, %v4835, %v4837
    %v4839 = vrot.slane %v4698, 1
    %v4840 = vsel %vm1550, %v4837, %v4839
    %v4841 = vrot.slane %v4699, 1
    %v4842 = vrot.slane %v4700, 1
    %v4843 = vsel %vm1550, %v4841, %v4842
    %v4844 = vrot.slane %v4701, 1
    %v4845 = vsel %vm1550, %v4842, %v4844
    %v4846 = vrot.slane %v4702, 1
    %v4847 = vsel %vm1550, %v4844, %v4846
    %v4848 = vrot.slane %v4703, 1
    %v4849 = vsel %vm1550, %v4846, %v4848
    %v4850 = vrot.slane %v4704, 1
    %v4851 = vsel %vm1550, %v4848, %v4850
    %v4852 = vrot.slane %v4705, 1
    %v4853 = vsel %vm1550, %v4850, %v4852
    %v4854 = vrot.slane %v4706, 1
    %v4855 = vsel %vm1550, %v4852, %v4854
    %v4856 = vrot.slane %v4707, 1
    %v4857 = vsel %vm1550, %v4854, %v4856
    %v4858 = vrot.slane %v4708, 1
    %v4859 = vsel %vm1550, %v4856, %v4858
    %v4860 = vrot.slane %v4709, 1
    %v4861 = vsel %vm1550, %v4858, %v4860
    %v4862 = vrot.slane %v4710, 1
    %v4863 = vsel %vm1550, %v4860, %v4862
    %v4864 = vrot.slane %v4711, 1
    %v4865 = vsel %vm1550, %v4862, %v4864
    %v4866 = vrot.slane %v4712, 1
    %v4867 = vsel %vm1550, %v4864, %v4866
    %v4868 = vrot.slane %v4713, 1
    %v4869 = vsel %vm1550, %v4866, %v4868
    %v4870 = vrot.slane %v4714, 1
    %v4871 = vsel %vm1550, %v4868, %v4870
    %v4872 = vrot.slane %v4715, 1
    %v4873 = vsel %vm1550, %v4870, %v4872
    %v4874 = vrot.slane %v4716, 1
    %v4875 = vsel %vm1550, %v4872, %v4874
    %v4876 = vrot.slane %v4717, 1
    %v4877 = vsel %vm1550, %v4874, %v4876
    %v4878 = vrot.slane %v4718, 1
    %v4879 = vsel %vm1550, %v4876, %v4878
    %v4880 = vrot.slane %v4719, 1
    %v4881 = vsel %vm1550, %v4878, %v4880
    %v4882 = vrot.slane %v4720, 1
    %v4883 = vsel %vm1550, %v4880, %v4882
    %v4884 = vrot.slane %v4721, 1
    %v4885 = vsel %vm1550, %v4882, %v4884
    %v4886 = vrot.slane %v4722, 1
    %v4887 = vsel %vm1550, %v4884, %v4886
    %v4888 = vrot.slane %v4723, 1
    %v4889 = vsel %vm1550, %v4886, %v4888
    %v4890 = vrot.slane %v4724, 1
    %v4891 = vsel %vm1550, %v4888, %v4890
    %v4892 = vrot.slane %v4725, 1
    %v4893 = vsel %vm1550, %v4890, %v4892
    %v4894 = vrot.slane %v4726, 1
    %v4895 = vsel %vm1550, %v4892, %v4894
    %v4952 = vmax.f32 %v4670, %v4786
    %v4953 = vmax.f32 %v4671, %v4788
    %v4954 = vmax.f32 %v4672, %v4790
    %v4955 = vmax.f32 %v4673, %v4792
    %v4956 = vmax.f32 %v4674, %v4794
    %v4957 = vmax.f32 %v4675, %v4796
    %v4958 = vmax.f32 %v4676, %v4798
    %v4959 = vmax.f32 %v4677, %v4800
    %v4960 = vmax.f32 %v4678, %v4802
    %v4961 = vmax.f32 %v4679, %v4804
    %v4962 = vmax.f32 %v4680, %v4806
    %v4963 = vmax.f32 %v4681, %v4808
    %v4964 = vmax.f32 %v4682, %v4810
    %v4965 = vmax.f32 %v4683, %v4812
    %v4966 = vmax.f32 %v4684, %v4814
    %v4967 = vmax.f32 %v4685, %v4816
    %v4968 = vmax.f32 %v4686, %v4818
    %v4969 = vmax.f32 %v4687, %v4820
    %v4970 = vmax.f32 %v4688, %v4822
    %v4971 = vmax.f32 %v4689, %v4824
    %v4972 = vmax.f32 %v4690, %v4826
    %v4973 = vmax.f32 %v4691, %v4828
    %v4974 = vmax.f32 %v4692, %v4830
    %v4975 = vmax.f32 %v4693, %v4832
    %v4976 = vmax.f32 %v4694, %v4834
    %v4977 = vmax.f32 %v4695, %v4836
    %v4978 = vmax.f32 %v4696, %v4838
    %v4979 = vmax.f32 %v4697, %v4840
    %v4980 = vmax.f32 %v4699, %v4843
    %v4981 = vmax.f32 %v4700, %v4845
    %v4982 = vmax.f32 %v4701, %v4847
    %v4983 = vmax.f32 %v4702, %v4849
    %v4984 = vmax.f32 %v4703, %v4851
    %v4985 = vmax.f32 %v4704, %v4853
    %v4986 = vmax.f32 %v4705, %v4855
    %v4987 = vmax.f32 %v4706, %v4857
    %v4988 = vmax.f32 %v4707, %v4859
    %v4989 = vmax.f32 %v4708, %v4861
    %v4990 = vmax.f32 %v4709, %v4863
    %v4991 = vmax.f32 %v4710, %v4865
    %v4992 = vmax.f32 %v4711, %v4867
    %v4993 = vmax.f32 %v4712, %v4869
    %v4994 = vmax.f32 %v4713, %v4871
    %v4995 = vmax.f32 %v4714, %v4873
    %v4996 = vmax.f32 %v4715, %v4875
    %v4997 = vmax.f32 %v4716, %v4877
    %v4998 = vmax.f32 %v4717, %v4879
    %v4999 = vmax.f32 %v4718, %v4881
    %v5000 = vmax.f32 %v4719, %v4883
    %v5001 = vmax.f32 %v4720, %v4885
    %v5002 = vmax.f32 %v4721, %v4887
    %v5003 = vmax.f32 %v4722, %v4889
    %v5004 = vmax.f32 %v4723, %v4891
    %v5005 = vmax.f32 %v4724, %v4893
    %v5006 = vmax.f32 %v4725, %v4895
    %v5007 = vmax.f32 %v4726, %v4894
    %v5008 = vmax.f32 %v4952, %v4954
    %v5009 = vmax.f32 %v4953, %v4955
    %v5010 = vmax.f32 %v4954, %v4956
    %v5011 = vmax.f32 %v4955, %v4957
    %v5012 = vmax.f32 %v4956, %v4958
    %v5013 = vmax.f32 %v4957, %v4959
    %v5014 = vmax.f32 %v4958, %v4960
    %v5015 = vmax.f32 %v4959, %v4961
    %v5016 = vmax.f32 %v4960, %v4962
    %v5017 = vmax.f32 %v4961, %v4963
    %v5018 = vmax.f32 %v4962, %v4964
    %v5019 = vmax.f32 %v4963, %v4965
    %v5020 = vmax.f32 %v4964, %v4966
    %v5021 = vmax.f32 %v4965, %v4967
    %v5022 = vmax.f32 %v4966, %v4968
    %v5023 = vmax.f32 %v4967, %v4969
    %v5024 = vmax.f32 %v4968, %v4970
    %v5025 = vmax.f32 %v4969, %v4971
    %v5026 = vmax.f32 %v4970, %v4972
    %v5027 = vmax.f32 %v4971, %v4973
    %v5028 = vmax.f32 %v4972, %v4974
    %v5029 = vmax.f32 %v4973, %v4975
    %v5030 = vmax.f32 %v4974, %v4976
    %v5031 = vmax.f32 %v4975, %v4977
    %v5032 = vmax.f32 %v4976, %v4978
    %v5033 = vmax.f32 %v4977, %v4979
    %v5034 = vmax.f32 %v4980, %v4982
    %v5035 = vmax.f32 %v4981, %v4983
    %v5036 = vmax.f32 %v4982, %v4984
    %v5037 = vmax.f32 %v4983, %v4985
    %v5038 = vmax.f32 %v4984, %v4986
    %v5039 = vmax.f32 %v4985, %v4987
    %v5040 = vmax.f32 %v4986, %v4988
    %v5041 = vmax.f32 %v4987, %v4989
    %v5042 = vmax.f32 %v4988, %v4990
    %v5043 = vmax.f32 %v4989, %v4991
    %v5044 = vmax.f32 %v4990, %v4992
    %v5045 = vmax.f32 %v4991, %v4993
    %v5046 = vmax.f32 %v4992, %v4994
    %v5047 = vmax.f32 %v4993, %v4995
    %v5048 = vmax.f32 %v4994, %v4996
    %v5049 = vmax.f32 %v4995, %v4997
    %v5050 = vmax.f32 %v4996, %v4998
    %v5051 = vmax.f32 %v4997, %v4999
    %v5052 = vmax.f32 %v4998, %v5000
    %v5053 = vmax.f32 %v4999, %v5001
    %v5054 = vmax.f32 %v5000, %v5002
    %v5055 = vmax.f32 %v5001, %v5003
    %v5056 = vmax.f32 %v5002, %v5004
    %v5057 = vmax.f32 %v5003, %v5005
    %v5058 = vmax.f32 %v5004, %v5006
    %v5059 = vmax.f32 %v5005, %v5007
    %v5060 = vld [vmem:[%s4] sm:$0xff]
    %v5061 = vld [vmem:[%s4 + $0x8] sm:$0xff]
    %v5062 = vld [vmem:[%s4 + $0x10] sm:$0xff]
    %v5063 = vld [vmem:[%s4 + $0x18] sm:$0xff]
    %v5064 = vld [vmem:[%s4 + $0x20] sm:$0xff]
    %v5065 = vld [vmem:[%s4 + $0x28] sm:$0xff]
    %v5066 = vld [vmem:[%s4 + $0x30] sm:$0xff]
    %v5067 = vld [vmem:[%s4 + $0x38] sm:$0xff]
    %v5068 = vld [vmem:[%s4 + $0x40] sm:$0xff]
    %v5069 = vld [vmem:[%s4 + $0x48] sm:$0xff]
    %v5070 = vld [vmem:[%s4 + $0x50] sm:$0xff]
    %v5071 = vld [vmem:[%s4 + $0x58] sm:$0xff]
    %v5072 = vld [vmem:[%s4 + $0x60] sm:$0x1]
    %v5073 = vld [vmem:[%s4 + $0x68] sm:$0x1]
    %vm5074 = vcmask 646144
    %v5076 = vsel %vm5074, %v5061, 0
    %v5079 = vsel %vm5074, %v5063, 0
    %v5082 = vsel %vm5074, %v5065, 0
    %v5085 = vsel %vm5074, %v5067, 0
    %v5088 = vsel %vm5074, %v5069, 0
    %v5091 = vsel %vm5074, %v5071, 0
    %v5094 = vsel %vm5074, %v5073, 0
    %v5097 = vsel %vm1550, %v5033, 0
    %5099 = vmatprep.subr.mxu0 0.0
    %5100 = vmatpush1.msra.mxu0 %v5008
    %5101 = vmatprep.subr.mxu0 0.0
    %5102 = vmatpush1.msra.mxu0 %v5009
    %5103 = vmatprep.subr.mxu0 0.0
    %5104 = vmatpush1.msra.mxu0 %v5010
    %5105 = vmatprep.subr.mxu0 0.0
    %5106 = vmatpush1.msra.mxu0 %v5011
    %5107 = vmatprep.subr.mxu0 0.0
    %5108 = vmatpush1.msra.mxu0 %v5012
    %5109 = vmatprep.subr.mxu0 0.0
    %5110 = vmatpush1.msra.mxu0 %v5013
    %5111 = vmatprep.subr.mxu0 0.0
    %5112 = vmatpush1.msra.mxu0 %v5014
    %5113 = vmatprep.subr.mxu0 0.0
    %5114 = vmatpush1.msra.mxu0 %v5015
    %5115 = vmatprep.subr.mxu0 0.0
    %5116 = vmatpush1.msra.mxu0 %v5016
    %5117 = vmatprep.subr.mxu0 0.0
    %5118 = vmatpush1.msra.mxu0 %v5017
    %5119 = vmatprep.subr.mxu0 0.0
    %5120 = vmatpush1.msra.mxu0 %v5018
    %5121 = vmatprep.subr.mxu0 0.0
    %5122 = vmatpush1.msra.mxu0 %v5019
    %5123 = vmatprep.subr.mxu0 0.0
    %5124 = vmatpush1.msra.mxu0 %v5020
    %5125 = vmatprep.subr.mxu0 0.0
    %5126 = vmatpush1.msra.mxu0 %v5021
    %5127 = vmatprep.subr.mxu0 0.0
    %5128 = vmatpush1.msra.mxu0 %v5022
    %5129 = vmatprep.subr.mxu0 0.0
    %5130 = vmatpush1.msra.mxu0 %v5023
    %5131 = vmatprep.subr.mxu0 0.0
    %5132 = vmatpush1.msra.mxu0 %v5024
    %5133 = vmatprep.subr.mxu0 0.0
    %5134 = vmatpush1.msra.mxu0 %v5025
    %5135 = vmatprep.subr.mxu0 0.0
    %5136 = vmatpush1.msra.mxu0 %v5026
    %5137 = vmatprep.subr.mxu0 0.0
    %5138 = vmatpush1.msra.mxu0 %v5027
    %5139 = vmatprep.subr.mxu0 0.0
    %5140 = vmatpush1.msra.mxu0 %v5028
    %5141 = vmatprep.subr.mxu0 0.0
    %5142 = vmatpush1.msra.mxu0 %v5029
    %5143 = vmatprep.subr.mxu0 0.0
    %5144 = vmatpush1.msra.mxu0 %v5030
    %5145 = vmatprep.subr.mxu0 0.0
    %5146 = vmatpush1.msra.mxu0 %v5031
    %5147 = vmatprep.subr.mxu0 0.0
    %5148 = vmatpush1.msra.mxu0 %v5032
    %5149 = vmatprep.subr.mxu0 0.0
    %5150 = vmatpush1.msra.mxu0 %v5097
    %5151 = vmatprep.subr.mxu0 0.0
    %5152 = vmatpush1.msra.mxu0 0.0
    %5153 = vmatprep.subr.mxu0 0.0
    %5154 = vmatpush1.msra.mxu0 0.0
    %5155 = vmatprep.subr.mxu0 0.0
    %5156 = vmatpush1.msra.mxu0 0.0
    %5157 = vmatprep.subr.mxu0 0.0
    %5158 = vmatpush1.msra.mxu0 0.0
    %5159 = vmatprep.subr.mxu0 0.0
    %5160 = vmatpush1.msra.mxu0 0.0
    %5161 = vmatprep.subr.mxu0 0.0
    %5162 = vmatpush1.msra.mxu0 0.0
    %5163 = vmatprep.mubr.f32.mxu0 %v5076
    %5164 = vmatmul.mubr.f32.gmra.mrb[0].mxu0 %v5060
    %v5165 = vpop.f32.mrb[0].mxu0
    %v5166 = vadd.f32 0.0, %v5165
    %v5167 = vpop.f32.mrb[0].mxu0
    %5168 = vmatprep.mubr.f32.mxu0 %v5079
    %5169 = vmatmul.mubr.f32.gmra.mrb[0].mxu0 %v5062
    %v5170 = vpop.f32.mrb[0].mxu0
    %v5171 = vadd.f32 0.0, %v5170
    %v5172 = vpop.f32.mrb[0].mxu0
    %5173 = vmatprep.mubr.f32.mxu0 %v5082
    %5174 = vmatmul.mubr.f32.gmra.mrb[0].mxu0 %v5064
    %v5175 = vpop.f32.mrb[0].mxu0
    %v5176 = vadd.f32 0.0, %v5175
    %v5177 = vpop.f32.mrb[0].mxu0
    %5178 = vmatprep.mubr.f32.mxu0 %v5085
    %5179 = vmatmul.mubr.f32.gmra.mrb[0].mxu0 %v5066
    %v5180 = vpop.f32.mrb[0].mxu0
    %v5181 = vadd.f32 0.0, %v5180
    %v5182 = vpop.f32.mrb[0].mxu0
    %5183 = vmatprep.mubr.f32.mxu0 %v5088
    %5184 = vmatmul.mubr.f32.gmra.mrb[0].mxu0 %v5068
    %v5185 = vpop.f32.mrb[0].mxu0
    %v5186 = vadd.f32 0.0, %v5185
    %v5187 = vpop.f32.mrb[0].mxu0
    %5188 = vmatprep.mubr.f32.mxu0 %v5091
    %5189 = vmatmul.mubr.f32.gmra.mrb[0].mxu0 %v5070
    %v5190 = vpop.f32.mrb[0].mxu0
    %v5191 = vadd.f32 0.0, %v5190
    %v5192 = vpop.f32.mrb[0].mxu0
    %5193 = vmatprep.mubr.f32.mxu0 %v5094
    %5194 = vmatmul.mubr.f32.gmra.mrb[0].mxu0 %v5072
    %v5195 = vpop.f32.mrb[0].mxu0
    %v5196 = vadd.f32 0.0, %v5195
    %v5197 = vpop.f32.mrb[0].mxu0
    %5198 = vdwg.mxu0
    %vm5199 = vcmask 522240
    %5200 = vst.msk [vmem:[#allocation3] sm:$0x7f] %vm5199, %v5166
    %v5203 = vrot.slane %v5166, 7
    %v5204 = vrot.slane %v5171, 7
    %v5205 = vsel %vm301, %v5203, %v5204
    %5206 = vrot.lane.b32.xlu0 %v5205, 64
    %v5207 = vpop.permute.xlu0 %5206
    %vm5209 = vcmask 1047040
    %5210 = vst.msk [vmem:[#allocation3] sm:$0x7f] %vm5209, %v5207
    %vm5212 = vcmask 1041408
    %v5213 = vrot.slane %v5171, 6
    %v5214 = vrot.slane %v5176, 6
    %v5215 = vsel %vm5212, %v5213, %v5214
    %5217 = vst.msk [vmem:[#allocation3 + $0x8] sm:$0x7f] %vm5199, %v5215
    %vm5219 = vcmask 1042432
    %v5220 = vrot.slane %v5176, 5
    %v5221 = vrot.slane %v5181, 5
    %v5222 = vsel %vm5219, %v5220, %v5221
    %5223 = vrot.lane.b32.xlu0 %v5222, 64
    %v5224 = vpop.permute.xlu0 %5223
    %5226 = vst.msk [vmem:[#allocation3 + $0x8] sm:$0x7f] %vm5209, %v5224
    %vm5228 = vcmask 1043456
    %v5229 = vrot.slane %v5181, 4
    %v5230 = vrot.slane %v5186, 4
    %v5231 = vsel %vm5228, %v5229, %v5230
    %5233 = vst.msk [vmem:[#allocation3 + $0x10] sm:$0x7f] %vm5199, %v5231
    %vm5235 = vcmask 1044480
    %v5236 = vrot.slane %v5186, 3
    %v5237 = vrot.slane %v5191, 3
    %v5238 = vsel %vm5235, %v5236, %v5237
    %5239 = vrot.lane.b32.xlu0 %v5238, 64
    %v5240 = vpop.permute.xlu0 %5239
    %5242 = vst.msk [vmem:[#allocation3 + $0x10] sm:$0x7f] %vm5209, %v5240
    %v5244 = vrot.slane %v5191, 2
    %v5245 = vrot.slane %v5196, 2
    %v5246 = vsel %vm1919, %v5244, %v5245
    %5248 = vst.msk [vmem:[#allocation3 + $0x18] sm:$0x7f] %vm5199, %v5246
    %v5250 = vsel %vm1550, %v5059, 0
    %5252 = vmatprep.subr.mxu0 0.0
    %5253 = vmatpush1.msra.mxu0 %v5034
    %5254 = vmatprep.subr.mxu0 0.0
    %5255 = vmatpush1.msra.mxu0 %v5035
    %5256 = vmatprep.subr.mxu0 0.0
    %5257 = vmatpush1.msra.mxu0 %v5036
    %5258 = vmatprep.subr.mxu0 0.0
    %5259 = vmatpush1.msra.mxu0 %v5037
    %5260 = vmatprep.subr.mxu0 0.0
    %5261 = vmatpush1.msra.mxu0 %v5038
    %5262 = vmatprep.subr.mxu0 0.0
    %5263 = vmatpush1.msra.mxu0 %v5039
    %5264 = vmatprep.subr.mxu0 0.0
    %5265 = vmatpush1.msra.mxu0 %v5040
    %5266 = vmatprep.subr.mxu0 0.0
    %5267 = vmatpush1.msra.mxu0 %v5041
    %5268 = vmatprep.subr.mxu0 0.0
    %5269 = vmatpush1.msra.mxu0 %v5042
    %5270 = vmatprep.subr.mxu0 0.0
    %5271 = vmatpush1.msra.mxu0 %v5043
    %5272 = vmatprep.subr.mxu0 0.0
    %5273 = vmatpush1.msra.mxu0 %v5044
    %5274 = vmatprep.subr.mxu0 0.0
    %5275 = vmatpush1.msra.mxu0 %v5045
    %5276 = vmatprep.subr.mxu0 0.0
    %5277 = vmatpush1.msra.mxu0 %v5046
    %5278 = vmatprep.subr.mxu0 0.0
    %5279 = vmatpush1.msra.mxu0 %v5047
    %5280 = vmatprep.subr.mxu0 0.0
    %5281 = vmatpush1.msra.mxu0 %v5048
    %5282 = vmatprep.subr.mxu0 0.0
    %5283 = vmatpush1.msra.mxu0 %v5049
    %5284 = vmatprep.subr.mxu0 0.0
    %5285 = vmatpush1.msra.mxu0 %v5050
    %5286 = vmatprep.subr.mxu0 0.0
    %5287 = vmatpush1.msra.mxu0 %v5051
    %5288 = vmatprep.subr.mxu0 0.0
    %5289 = vmatpush1.msra.mxu0 %v5052
    %5290 = vmatprep.subr.mxu0 0.0
    %5291 = vmatpush1.msra.mxu0 %v5053
    %5292 = vmatprep.subr.mxu0 0.0
    %5293 = vmatpush1.msra.mxu0 %v5054
    %5294 = vmatprep.subr.mxu0 0.0
    %5295 = vmatpush1.msra.mxu0 %v5055
    %5296 = vmatprep.subr.mxu0 0.0
    %5297 = vmatpush1.msra.mxu0 %v5056
    %5298 = vmatprep.subr.mxu0 0.0
    %5299 = vmatpush1.msra.mxu0 %v5057
    %5300 = vmatprep.subr.mxu0 0.0
    %5301 = vmatpush1.msra.mxu0 %v5058
    %5302 = vmatprep.subr.mxu0 0.0
    %5303 = vmatpush1.msra.mxu0 %v5250
    %5304 = vmatprep.subr.mxu0 0.0
    %5305 = vmatpush1.msra.mxu0 0.0
    %5306 = vmatprep.subr.mxu0 0.0
    %5307 = vmatpush1.msra.mxu0 0.0
    %5308 = vmatprep.subr.mxu0 0.0
    %5309 = vmatpush1.msra.mxu0 0.0
    %5310 = vmatprep.subr.mxu0 0.0
    %5311 = vmatpush1.msra.mxu0 0.0
    %5312 = vmatprep.subr.mxu0 0.0
    %5313 = vmatpush1.msra.mxu0 0.0
    %5314 = vmatprep.subr.mxu0 0.0
    %5315 = vmatpush1.msra.mxu0 0.0
    %5316 = vmatprep.mubr.f32.mxu0 %v5076
    %5317 = vmatmul.mubr.f32.gmra.mrb[0].mxu0 %v5060
    %v5318 = vpop.f32.mrb[0].mxu0
    %v5319 = vadd.f32 0.0, %v5318
    %v5320 = vpop.f32.mrb[0].mxu0
    %5321 = vmatprep.mubr.f32.mxu0 %v5079
    %5322 = vmatmul.mubr.f32.gmra.mrb[0].mxu0 %v5062
    %v5323 = vpop.f32.mrb[0].mxu0
    %v5324 = vadd.f32 0.0, %v5323
    %v5325 = vpop.f32.mrb[0].mxu0
    %5326 = vmatprep.mubr.f32.mxu0 %v5082
    %5327 = vmatmul.mubr.f32.gmra.mrb[0].mxu0 %v5064
    %v5328 = vpop.f32.mrb[0].mxu0
    %v5329 = vadd.f32 0.0, %v5328
    %v5330 = vpop.f32.mrb[0].mxu0
    %5331 = vmatprep.mubr.f32.mxu0 %v5085
    %5332 = vmatmul.mubr.f32.gmra.mrb[0].mxu0 %v5066
    %v5333 = vpop.f32.mrb[0].mxu0
    %v5334 = vadd.f32 0.0, %v5333
    %v5335 = vpop.f32.mrb[0].mxu0
    %5336 = vmatprep.mubr.f32.mxu0 %v5088
    %5337 = vmatmul.mubr.f32.gmra.mrb[0].mxu0 %v5068
    %v5338 = vpop.f32.mrb[0].mxu0
    %v5339 = vadd.f32 0.0, %v5338
    %v5340 = vpop.f32.mrb[0].mxu0
    %5341 = vmatprep.mubr.f32.mxu0 %v5091
    %5342 = vmatmul.mubr.f32.gmra.mrb[0].mxu0 %v5070
    %v5343 = vpop.f32.mrb[0].mxu0
    %v5344 = vadd.f32 0.0, %v5343
    %v5345 = vpop.f32.mrb[0].mxu0
    %5346 = vmatprep.mubr.f32.mxu0 %v5094
    %5347 = vmatmul.mubr.f32.gmra.mrb[0].mxu0 %v5072
    %v5348 = vpop.f32.mrb[0].mxu0
    %v5349 = vadd.f32 0.0, %v5348
    %v5350 = vpop.f32.mrb[0].mxu0
    %5351 = vdwg.mxu0
    %v5353 = vrot.slane %v5319, 1
    %vm5355 = vcmask 523271
    %5356 = vst.msk [vmem:[#allocation3] sm:$0x80] %vm5355, %v5353
    %vm5357 = vcmask 521216
    %5358 = vst.msk [vmem:[#allocation3 + $0x20] sm:$0x3f] %vm5357, %v5353
    %5360 = vrot.lane.b32.xlu0 %v5319, 64
    %v5361 = vpop.permute.xlu0 %5360
    %5362 = vrot.lane.b32.xlu0 %v5324, 64
    %v5363 = vpop.permute.xlu0 %5362
    %vm5366 = vcmask 1048071
    %5367 = vst.msk [vmem:[#allocation3] sm:$0x80] %vm5366, %v5361
    %vm5368 = vcmask 1046016
    %5369 = vst.msk [vmem:[#allocation3 + $0x20] sm:$0x3f] %vm5368, %v5363
    %v5371 = vrot.slane %v5324, 7
    %v5372 = vrot.slane %v5329, 7
    %v5373 = vsel %vm301, %v5371, %v5372
    %5376 = vst.msk [vmem:[#allocation3 + $0x8] sm:$0x80] %vm5355, %v5371
    %5377 = vst.msk [vmem:[#allocation3 + $0x28] sm:$0x3f] %vm5357, %v5373
    %v5379 = vrot.slane %v5329, 6
    %v5380 = vrot.slane %v5334, 6
    %v5381 = vsel %vm5212, %v5379, %v5380
    %5382 = vrot.lane.b32.xlu0 %v5379, 64
    %v5383 = vpop.permute.xlu0 %5382
    %5384 = vrot.lane.b32.xlu0 %v5381, 64
    %v5385 = vpop.permute.xlu0 %5384
    %5388 = vst.msk [vmem:[#allocation3 + $0x8] sm:$0x80] %vm5366, %v5383
    %5389 = vst.msk [vmem:[#allocation3 + $0x28] sm:$0x3f] %vm5368, %v5385
    %v5391 = vrot.slane %v5334, 5
    %v5392 = vrot.slane %v5339, 5
    %v5393 = vsel %vm5219, %v5391, %v5392
    %5396 = vst.msk [vmem:[#allocation3 + $0x10] sm:$0x80] %vm5355, %v5391
    %5397 = vst.msk [vmem:[#allocation3 + $0x30] sm:$0x3f] %vm5357, %v5393
    %v5399 = vrot.slane %v5339, 4
    %v5400 = vrot.slane %v5344, 4
    %v5401 = vsel %vm5228, %v5399, %v5400
    %5402 = vrot.lane.b32.xlu0 %v5399, 64
    %v5403 = vpop.permute.xlu0 %5402
    %5404 = vrot.lane.b32.xlu0 %v5401, 64
    %v5405 = vpop.permute.xlu0 %5404
    %5408 = vst.msk [vmem:[#allocation3 + $0x10] sm:$0x80] %vm5366, %v5403
    %5409 = vst.msk [vmem:[#allocation3 + $0x30] sm:$0x3f] %vm5368, %v5405
    %v5411 = vrot.slane %v5344, 3
    %v5412 = vrot.slane %v5349, 3
    %v5413 = vsel %vm5235, %v5411, %v5412
    %5416 = vst.msk [vmem:[#allocation3 + $0x18] sm:$0x80] %vm5355, %v5411
    %5417 = vst.msk [vmem:[#allocation3 + $0x38] sm:$0x3f] %vm5357, %v5413
    %v5418 = vld [vmem:[#allocation3] sm:$0xff]
    %v5419 = vld [vmem:[#allocation3 + $0x8] sm:$0xff]
    %v5420 = vld [vmem:[#allocation3 + $0x10] sm:$0xff]
    %v5421 = vld [vmem:[#allocation3 + $0x18] sm:$0xff]
    %v5422 = vld [vmem:[#allocation3 + $0x20] sm:$0x3f]
    %v5423 = vld [vmem:[#allocation3 + $0x28] sm:$0x3f]
    %v5424 = vld [vmem:[#allocation3 + $0x30] sm:$0x3f]
    %v5425 = vld [vmem:[#allocation3 + $0x38] sm:$0x3f]
    %v5426 = vld [vmem:[%s5] sm:$0xff]
    %v5427 = vld [vmem:[%s5 + $0x8] sm:$0xff]
    %v5428 = vld [vmem:[%s5 + $0x10] sm:$0xff]
    %v5429 = vld [vmem:[%s5 + $0x18] sm:$0xff]
    %v5430 = vld [vmem:[%s5 + $0x20] sm:$0xff]
    %v5431 = vld [vmem:[%s5 + $0x28] sm:$0xff]
    %v5432 = vld [vmem:[%s5 + $0x30] sm:$0xff]
    %v5433 = vld [vmem:[%s5 + $0x38] sm:$0xff]
    %v5434 = vld [vmem:[%s5 + $0x40] sm:$0xff]
    %v5435 = vld [vmem:[%s5 + $0x48] sm:$0xff]
    %v5436 = vld [vmem:[%s5 + $0x50] sm:$0xff]
    %v5437 = vld [vmem:[%s5 + $0x58] sm:$0xff]
    %v5438 = vld [vmem:[%s5 + $0x60] sm:$0xff]
    %v5439 = vld [vmem:[%s5 + $0x68] sm:$0xff]
    %v5440 = vld [vmem:[%s5 + $0x70] sm:$0xff]
    %v5441 = vld [vmem:[%s5 + $0x78] sm:$0xff]
    %v5442 = vld [vmem:[%s5 + $0x80] sm:$0xff]
    %v5443 = vld [vmem:[%s5 + $0x88] sm:$0xff]
    %v5444 = vld [vmem:[%s5 + $0x90] sm:$0xff]
    %v5445 = vld [vmem:[%s5 + $0x98] sm:$0xff]
    %v5446 = vld [vmem:[%s5 + $0xa0] sm:$0xff]
    %v5447 = vld [vmem:[%s5 + $0xa8] sm:$0xff]
    %v5448 = vld [vmem:[%s5 + $0xb0] sm:$0xff]
    %v5449 = vld [vmem:[%s5 + $0xb8] sm:$0xff]
    %v5450 = vld [vmem:[%s5 + $0xc0] sm:$0xff]
    %v5451 = vld [vmem:[%s5 + $0xc8] sm:$0xff]
    %v5452 = vld [vmem:[%s5 + $0xd0] sm:$0xff]
    %v5453 = vld [vmem:[%s5 + $0xd8] sm:$0xff]
    %v5454 = vld [vmem:[%s5 + $0xe0] sm:$0xff]
    %v5455 = vld [vmem:[%s5 + $0xe8] sm:$0xff]
    %v5456 = vld [vmem:[%s5 + $0xf0] sm:$0xff]
    %v5457 = vld [vmem:[%s5 + $0xf8] sm:$0xff]
    %v5458 = vld [vmem:[%s5 + $0x100] sm:$0xff]
    %v5459 = vld [vmem:[%s5 + $0x108] sm:$0xff]
    %v5460 = vld [vmem:[%s5 + $0x110] sm:$0xff]
    %v5461 = vld [vmem:[%s5 + $0x118] sm:$0xff]
    %v5462 = vld [vmem:[%s5 + $0x120] sm:$0xff]
    %v5463 = vld [vmem:[%s5 + $0x128] sm:$0xff]
    %v5464 = vld [vmem:[%s5 + $0x130] sm:$0xff]
    %v5465 = vld [vmem:[%s5 + $0x138] sm:$0xff]
    %v5466 = vld [vmem:[%s5 + $0x140] sm:$0xff]
    %v5467 = vld [vmem:[%s5 + $0x148] sm:$0xff]
    %v5468 = vld [vmem:[%s5 + $0x150] sm:$0xff]
    %v5469 = vld [vmem:[%s5 + $0x158] sm:$0xff]
    %v5470 = vld [vmem:[%s5 + $0x160] sm:$0xff]
    %v5471 = vld [vmem:[%s5 + $0x168] sm:$0xff]
    %v5472 = vld [vmem:[%s5 + $0x170] sm:$0xff]
    %v5473 = vld [vmem:[%s5 + $0x178] sm:$0xff]
    %v5474 = vld [vmem:[%s5 + $0x180] sm:$0xff]
    %v5475 = vld [vmem:[%s5 + $0x188] sm:$0xff]
    %v5476 = vld [vmem:[%s5 + $0x190] sm:$0xff]
    %v5477 = vld [vmem:[%s5 + $0x198] sm:$0xff]
    %v5478 = vld [vmem:[%s5 + $0x1a0] sm:$0xff]
    %v5479 = vld [vmem:[%s5 + $0x1a8] sm:$0xff]
    %v5480 = vld [vmem:[%s5 + $0x1b0] sm:$0xff]
    %v5481 = vld [vmem:[%s5 + $0x1b8] sm:$0xff]
    %v5482 = vld [vmem:[%s5 + $0x1c0] sm:$0xff]
    %v5483 = vld [vmem:[%s5 + $0x1c8] sm:$0xff]
    %v5484 = vld [vmem:[%s5 + $0x1d0] sm:$0xff]
    %v5485 = vld [vmem:[%s5 + $0x1d8] sm:$0xff]
    %v5486 = vld [vmem:[%s5 + $0x1e0] sm:$0xff]
    %v5487 = vld [vmem:[%s5 + $0x1e8] sm:$0xff]
    %v5488 = vld [vmem:[%s5 + $0x1f0] sm:$0xff]
    %v5489 = vld [vmem:[%s5 + $0x1f8] sm:$0xff]
    %v5490 = vld [vmem:[%s5 + $0x200] sm:$0xff]
    %v5491 = vld [vmem:[%s5 + $0x208] sm:$0xff]
    %v5492 = vld [vmem:[%s5 + $0x210] sm:$0xff]
    %v5493 = vld [vmem:[%s5 + $0x218] sm:$0xff]
    %v5494 = vld [vmem:[%s5 + $0x220] sm:$0xff]
    %v5495 = vld [vmem:[%s5 + $0x228] sm:$0xff]
    %v5496 = vld [vmem:[%s5 + $0x230] sm:$0xff]
    %v5497 = vld [vmem:[%s5 + $0x238] sm:$0xff]
    %v5498 = vld [vmem:[%s5 + $0x240] sm:$0xff]
    %v5499 = vld [vmem:[%s5 + $0x248] sm:$0xff]
    %v5500 = vld [vmem:[%s5 + $0x250] sm:$0xff]
    %v5501 = vld [vmem:[%s5 + $0x258] sm:$0xff]
    %v5502 = vld [vmem:[%s5 + $0x260] sm:$0xff]
    %v5503 = vld [vmem:[%s5 + $0x268] sm:$0xff]
    %v5504 = vld [vmem:[%s5 + $0x270] sm:$0xff]
    %v5505 = vld [vmem:[%s5 + $0x278] sm:$0xff]
    %v5506 = vld [vmem:[%s5 + $0x280] sm:$0xff]
    %v5507 = vld [vmem:[%s5 + $0x288] sm:$0xff]
    %v5508 = vld [vmem:[%s5 + $0x290] sm:$0xff]
    %v5509 = vld [vmem:[%s5 + $0x298] sm:$0xff]
    %v5510 = vld [vmem:[%s5 + $0x2a0] sm:$0xff]
    %v5511 = vld [vmem:[%s5 + $0x2a8] sm:$0xff]
    %v5512 = vld [vmem:[%s5 + $0x2b0] sm:$0xff]
    %v5513 = vld [vmem:[%s5 + $0x2b8] sm:$0xff]
    %v5514 = vld [vmem:[%s5 + $0x2c0] sm:$0xff]
    %v5515 = vld [vmem:[%s5 + $0x2c8] sm:$0xff]
    %v5516 = vld [vmem:[%s5 + $0x2d0] sm:$0xff]
    %v5517 = vld [vmem:[%s5 + $0x2d8] sm:$0xff]
    %v5518 = vld [vmem:[%s5 + $0x2e0] sm:$0xff]
    %v5519 = vld [vmem:[%s5 + $0x2e8] sm:$0xff]
    %v5520 = vld [vmem:[%s5 + $0x2f0] sm:$0xff]
    %v5521 = vld [vmem:[%s5 + $0x2f8] sm:$0xff]
    %v5522 = vld [vmem:[%s5 + $0x300] sm:$0xff]
    %v5523 = vld [vmem:[%s5 + $0x308] sm:$0xff]
    %v5524 = vld [vmem:[%s5 + $0x310] sm:$0xff]
    %v5525 = vld [vmem:[%s5 + $0x318] sm:$0xff]
    %v5526 = vld [vmem:[%s5 + $0x320] sm:$0xff]
    %v5527 = vld [vmem:[%s5 + $0x328] sm:$0xff]
    %v5528 = vld [vmem:[%s5 + $0x330] sm:$0xff]
    %v5529 = vld [vmem:[%s5 + $0x338] sm:$0xff]
    %v5530 = vld [vmem:[%s5 + $0x340] sm:$0xff]
    %v5531 = vld [vmem:[%s5 + $0x348] sm:$0xff]
    %v5532 = vld [vmem:[%s5 + $0x350] sm:$0xff]
    %v5533 = vld [vmem:[%s5 + $0x358] sm:$0xff]
    %v5534 = vld [vmem:[%s5 + $0x360] sm:$0xff]
    %v5535 = vld [vmem:[%s5 + $0x368] sm:$0xff]
    %v5536 = vld [vmem:[%s5 + $0x370] sm:$0xff]
    %v5537 = vld [vmem:[%s5 + $0x378] sm:$0xff]
    %v5538 = vld [vmem:[%s5 + $0x380] sm:$0xff]
    %v5539 = vld [vmem:[%s5 + $0x388] sm:$0xff]
    %v5540 = vld [vmem:[%s5 + $0x390] sm:$0xff]
    %v5541 = vld [vmem:[%s5 + $0x398] sm:$0xff]
    %v5542 = vld [vmem:[%s5 + $0x3a0] sm:$0xff]
    %v5543 = vld [vmem:[%s5 + $0x3a8] sm:$0xff]
    %v5544 = vld [vmem:[%s5 + $0x3b0] sm:$0xff]
    %v5545 = vld [vmem:[%s5 + $0x3b8] sm:$0xff]
    %v5546 = vld [vmem:[%s5 + $0x3c0] sm:$0xff]
    %v5547 = vld [vmem:[%s5 + $0x3c8] sm:$0xff]
    %v5548 = vld [vmem:[%s5 + $0x3d0] sm:$0xff]
    %v5549 = vld [vmem:[%s5 + $0x3d8] sm:$0xff]
    %v5550 = vld [vmem:[%s5 + $0x3e0] sm:$0xff]
    %v5551 = vld [vmem:[%s5 + $0x3e8] sm:$0xff]
    %v5552 = vld [vmem:[%s5 + $0x3f0] sm:$0xff]
    %v5553 = vld [vmem:[%s5 + $0x3f8] sm:$0xff]
    %v5554 = vld [vmem:[%s5 + $0x400] sm:$0xff]
    %v5555 = vld [vmem:[%s5 + $0x408] sm:$0xff]
    %v5556 = vld [vmem:[%s5 + $0x410] sm:$0xff]
    %v5557 = vld [vmem:[%s5 + $0x418] sm:$0xff]
    %v5558 = vld [vmem:[%s5 + $0x420] sm:$0xff]
    %v5559 = vld [vmem:[%s5 + $0x428] sm:$0xff]
    %v5560 = vld [vmem:[%s5 + $0x430] sm:$0xff]
    %v5561 = vld [vmem:[%s5 + $0x438] sm:$0xff]
    %v5562 = vld [vmem:[%s5 + $0x440] sm:$0xff]
    %v5563 = vld [vmem:[%s5 + $0x448] sm:$0xff]
    %v5564 = vld [vmem:[%s5 + $0x450] sm:$0xff]
    %v5565 = vld [vmem:[%s5 + $0x458] sm:$0xff]
    %v5566 = vld [vmem:[%s5 + $0x460] sm:$0xff]
    %v5567 = vld [vmem:[%s5 + $0x468] sm:$0xff]
    %v5568 = vld [vmem:[%s5 + $0x470] sm:$0xff]
    %v5569 = vld [vmem:[%s5 + $0x478] sm:$0xff]
    %v5570 = vld [vmem:[%s5 + $0x480] sm:$0xff]
    %v5571 = vld [vmem:[%s5 + $0x488] sm:$0xff]
    %v5572 = vld [vmem:[%s5 + $0x490] sm:$0xff]
    %v5573 = vld [vmem:[%s5 + $0x498] sm:$0xff]
    %v5574 = vld [vmem:[%s5 + $0x4a0] sm:$0xff]
    %v5575 = vld [vmem:[%s5 + $0x4a8] sm:$0xff]
    %v5576 = vld [vmem:[%s5 + $0x4b0] sm:$0xff]
    %v5577 = vld [vmem:[%s5 + $0x4b8] sm:$0xff]
    %v5578 = vld [vmem:[%s5 + $0x4c0] sm:$0xff]
    %v5579 = vld [vmem:[%s5 + $0x4c8] sm:$0xff]
    %v5580 = vld [vmem:[%s5 + $0x4d0] sm:$0xff]
    %v5581 = vld [vmem:[%s5 + $0x4d8] sm:$0xff]
    %v5582 = vld [vmem:[%s5 + $0x4e0] sm:$0xff]
    %v5583 = vld [vmem:[%s5 + $0x4e8] sm:$0xff]
    %v5584 = vld [vmem:[%s5 + $0x4f0] sm:$0xff]
    %v5585 = vld [vmem:[%s5 + $0x4f8] sm:$0xff]
    %v5586 = vld [vmem:[%s5 + $0x500] sm:$0xff]
    %v5587 = vld [vmem:[%s5 + $0x508] sm:$0xff]
    %v5588 = vld [vmem:[%s5 + $0x510] sm:$0xff]
    %v5589 = vld [vmem:[%s5 + $0x518] sm:$0xff]
    %v5590 = vld [vmem:[%s5 + $0x520] sm:$0xff]
    %v5591 = vld [vmem:[%s5 + $0x528] sm:$0xff]
    %v5592 = vld [vmem:[%s5 + $0x530] sm:$0xff]
    %v5593 = vld [vmem:[%s5 + $0x538] sm:$0xff]
    %v5594 = vld [vmem:[%s5 + $0x540] sm:$0xff]
    %v5595 = vld [vmem:[%s5 + $0x548] sm:$0xff]
    %v5596 = vld [vmem:[%s5 + $0x550] sm:$0xff]
    %v5597 = vld [vmem:[%s5 + $0x558] sm:$0xff]
    %v5598 = vld [vmem:[%s5 + $0x560] sm:$0xff]
    %v5599 = vld [vmem:[%s5 + $0x568] sm:$0xff]
    %v5600 = vld [vmem:[%s5 + $0x570] sm:$0xff]
    %v5601 = vld [vmem:[%s5 + $0x578] sm:$0xff]
    %v5602 = vld [vmem:[%s5 + $0x580] sm:$0xff]
    %v5603 = vld [vmem:[%s5 + $0x588] sm:$0xff]
    %v5604 = vld [vmem:[%s5 + $0x590] sm:$0xff]
    %v5605 = vld [vmem:[%s5 + $0x598] sm:$0xff]
    %v5606 = vld [vmem:[%s5 + $0x5a0] sm:$0xff]
    %v5607 = vld [vmem:[%s5 + $0x5a8] sm:$0xff]
    %v5608 = vld [vmem:[%s5 + $0x5b0] sm:$0xff]
    %v5609 = vld [vmem:[%s5 + $0x5b8] sm:$0xff]
    %v5610 = vld [vmem:[%s5 + $0x5c0] sm:$0xff]
    %v5611 = vld [vmem:[%s5 + $0x5c8] sm:$0xff]
    %v5612 = vld [vmem:[%s5 + $0x5d0] sm:$0xff]
    %v5613 = vld [vmem:[%s5 + $0x5d8] sm:$0xff]
    %v5614 = vld [vmem:[%s5 + $0x5e0] sm:$0xff]
    %v5615 = vld [vmem:[%s5 + $0x5e8] sm:$0xff]
    %v5616 = vld [vmem:[%s5 + $0x5f0] sm:$0xff]
    %v5617 = vld [vmem:[%s5 + $0x5f8] sm:$0xff]
    %v5618 = vld [vmem:[%s5 + $0x600] sm:$0xff]
    %v5619 = vld [vmem:[%s5 + $0x608] sm:$0xff]
    %v5620 = vld [vmem:[%s5 + $0x610] sm:$0xff]
    %v5621 = vld [vmem:[%s5 + $0x618] sm:$0xff]
    %v5622 = vld [vmem:[%s5 + $0x620] sm:$0xff]
    %v5623 = vld [vmem:[%s5 + $0x628] sm:$0xff]
    %v5624 = vld [vmem:[%s5 + $0x630] sm:$0xff]
    %v5625 = vld [vmem:[%s5 + $0x638] sm:$0xff]
    %v5626 = vld [vmem:[%s5 + $0x640] sm:$0xff]
    %v5627 = vld [vmem:[%s5 + $0x648] sm:$0xff]
    %v5628 = vld [vmem:[%s5 + $0x650] sm:$0xff]
    %v5629 = vld [vmem:[%s5 + $0x658] sm:$0xff]
    %v5630 = vld [vmem:[%s5 + $0x660] sm:$0xff]
    %v5631 = vld [vmem:[%s5 + $0x668] sm:$0xff]
    %v5632 = vld [vmem:[%s5 + $0x670] sm:$0xff]
    %v5633 = vld [vmem:[%s5 + $0x678] sm:$0xff]
    %v5634 = vld [vmem:[%s5 + $0x680] sm:$0xff]
    %v5635 = vld [vmem:[%s5 + $0x688] sm:$0xff]
    %v5636 = vld [vmem:[%s5 + $0x690] sm:$0xff]
    %v5637 = vld [vmem:[%s5 + $0x698] sm:$0xff]
    %v5638 = vld [vmem:[%s5 + $0x6a0] sm:$0xff]
    %v5639 = vld [vmem:[%s5 + $0x6a8] sm:$0xff]
    %v5640 = vld [vmem:[%s5 + $0x6b0] sm:$0xff]
    %v5641 = vld [vmem:[%s5 + $0x6b8] sm:$0xff]
    %v5642 = vld [vmem:[%s5 + $0x6c0] sm:$0xff]
    %v5643 = vld [vmem:[%s5 + $0x6c8] sm:$0xff]
    %v5644 = vld [vmem:[%s5 + $0x6d0] sm:$0xff]
    %v5645 = vld [vmem:[%s5 + $0x6d8] sm:$0xff]
    %v5646 = vld [vmem:[%s5 + $0x6e0] sm:$0xff]
    %v5647 = vld [vmem:[%s5 + $0x6e8] sm:$0xff]
    %v5648 = vld [vmem:[%s5 + $0x6f0] sm:$0xff]
    %v5649 = vld [vmem:[%s5 + $0x6f8] sm:$0xff]
    %v5650 = vld [vmem:[%s5 + $0x700] sm:$0xff]
    %v5651 = vld [vmem:[%s5 + $0x708] sm:$0xff]
    %v5652 = vld [vmem:[%s5 + $0x710] sm:$0xff]
    %v5653 = vld [vmem:[%s5 + $0x718] sm:$0xff]
    %v5654 = vld [vmem:[%s5 + $0x720] sm:$0xff]
    %v5655 = vld [vmem:[%s5 + $0x728] sm:$0xff]
    %v5656 = vld [vmem:[%s5 + $0x730] sm:$0xff]
    %v5657 = vld [vmem:[%s5 + $0x738] sm:$0xff]
    %v5658 = vld [vmem:[%s5 + $0x740] sm:$0xff]
    %v5659 = vld [vmem:[%s5 + $0x748] sm:$0xff]
    %v5660 = vld [vmem:[%s5 + $0x750] sm:$0xff]
    %v5661 = vld [vmem:[%s5 + $0x758] sm:$0xff]
    %v5662 = vld [vmem:[%s5 + $0x760] sm:$0xff]
    %v5663 = vld [vmem:[%s5 + $0x768] sm:$0xff]
    %v5664 = vld [vmem:[%s5 + $0x770] sm:$0xff]
    %v5665 = vld [vmem:[%s5 + $0x778] sm:$0xff]
    %v5666 = vld [vmem:[%s5 + $0x780] sm:$0xff]
    %v5667 = vld [vmem:[%s5 + $0x788] sm:$0xff]
    %v5668 = vld [vmem:[%s5 + $0x790] sm:$0xff]
    %v5669 = vld [vmem:[%s5 + $0x798] sm:$0xff]
    %v5670 = vld [vmem:[%s5 + $0x7a0] sm:$0xff]
    %v5671 = vld [vmem:[%s5 + $0x7a8] sm:$0xff]
    %v5672 = vld [vmem:[%s5 + $0x7b0] sm:$0xff]
    %v5673 = vld [vmem:[%s5 + $0x7b8] sm:$0xff]
    %v5674 = vld [vmem:[%s5 + $0x7c0] sm:$0xff]
    %v5675 = vld [vmem:[%s5 + $0x7c8] sm:$0xff]
    %v5676 = vld [vmem:[%s5 + $0x7d0] sm:$0xff]
    %v5677 = vld [vmem:[%s5 + $0x7d8] sm:$0xff]
    %v5678 = vld [vmem:[%s5 + $0x7e0] sm:$0xff]
    %v5679 = vld [vmem:[%s5 + $0x7e8] sm:$0xff]
    %v5680 = vld [vmem:[%s5 + $0x7f0] sm:$0xff]
    %v5681 = vld [vmem:[%s5 + $0x7f8] sm:$0xff]
    %v5682 = vld [vmem:[%s5 + $0x800] sm:$0xff]
    %v5683 = vld [vmem:[%s5 + $0x808] sm:$0xff]
    %v5684 = vld [vmem:[%s5 + $0x810] sm:$0xff]
    %v5685 = vld [vmem:[%s5 + $0x818] sm:$0xff]
    %v5686 = vld [vmem:[%s5 + $0x820] sm:$0xff]
    %v5687 = vld [vmem:[%s5 + $0x828] sm:$0xff]
    %v5688 = vld [vmem:[%s5 + $0x830] sm:$0xff]
    %v5689 = vld [vmem:[%s5 + $0x838] sm:$0xff]
    %v5690 = vld [vmem:[%s5 + $0x840] sm:$0xff]
    %v5691 = vld [vmem:[%s5 + $0x848] sm:$0xff]
    %v5692 = vld [vmem:[%s5 + $0x850] sm:$0xff]
    %v5693 = vld [vmem:[%s5 + $0x858] sm:$0xff]
    %v5694 = vld [vmem:[%s5 + $0x860] sm:$0xff]
    %v5695 = vld [vmem:[%s5 + $0x868] sm:$0xff]
    %v5696 = vld [vmem:[%s5 + $0x870] sm:$0xff]
    %v5697 = vld [vmem:[%s5 + $0x878] sm:$0xff]
    %v5698 = vld [vmem:[%s5 + $0x880] sm:$0xff]
    %v5699 = vld [vmem:[%s5 + $0x888] sm:$0xff]
    %v5700 = vld [vmem:[%s5 + $0x890] sm:$0xff]
    %v5701 = vld [vmem:[%s5 + $0x898] sm:$0xff]
    %v5702 = vld [vmem:[%s5 + $0x8a0] sm:$0xff]
    %v5703 = vld [vmem:[%s5 + $0x8a8] sm:$0xff]
    %v5704 = vld [vmem:[%s5 + $0x8b0] sm:$0xff]
    %v5705 = vld [vmem:[%s5 + $0x8b8] sm:$0xff]
    %v5706 = vld [vmem:[%s5 + $0x8c0] sm:$0xff]
    %v5707 = vld [vmem:[%s5 + $0x8c8] sm:$0xff]
    %v5708 = vld [vmem:[%s5 + $0x8d0] sm:$0xff]
    %v5709 = vld [vmem:[%s5 + $0x8d8] sm:$0xff]
    %v5710 = vld [vmem:[%s5 + $0x8e0] sm:$0xff]
    %v5711 = vld [vmem:[%s5 + $0x8e8] sm:$0xff]
    %v5712 = vld [vmem:[%s5 + $0x8f0] sm:$0xff]
    %v5713 = vld [vmem:[%s5 + $0x8f8] sm:$0xff]
    %v5714 = vld [vmem:[%s5 + $0x900] sm:$0xff]
    %v5715 = vld [vmem:[%s5 + $0x908] sm:$0xff]
    %v5716 = vld [vmem:[%s5 + $0x910] sm:$0xff]
    %v5717 = vld [vmem:[%s5 + $0x918] sm:$0xff]
    %v5718 = vld [vmem:[%s5 + $0x920] sm:$0xff]
    %v5719 = vld [vmem:[%s5 + $0x928] sm:$0xff]
    %v5720 = vld [vmem:[%s5 + $0x930] sm:$0xff]
    %v5721 = vld [vmem:[%s5 + $0x938] sm:$0xff]
    %v5722 = vld [vmem:[%s5 + $0x940] sm:$0xff]
    %v5723 = vld [vmem:[%s5 + $0x948] sm:$0xff]
    %v5724 = vld [vmem:[%s5 + $0x950] sm:$0xff]
    %v5725 = vld [vmem:[%s5 + $0x958] sm:$0xff]
    %v5726 = vld [vmem:[%s5 + $0x960] sm:$0xff]
    %v5727 = vld [vmem:[%s5 + $0x968] sm:$0xff]
    %v5728 = vld [vmem:[%s5 + $0x970] sm:$0xff]
    %v5729 = vld [vmem:[%s5 + $0x978] sm:$0xff]
    %v5730 = vld [vmem:[%s5 + $0x980] sm:$0xff]
    %v5731 = vld [vmem:[%s5 + $0x988] sm:$0xff]
    %v5732 = vld [vmem:[%s5 + $0x990] sm:$0xff]
    %v5733 = vld [vmem:[%s5 + $0x998] sm:$0xff]
    %v5734 = vld [vmem:[%s5 + $0x9a0] sm:$0xff]
    %v5735 = vld [vmem:[%s5 + $0x9a8] sm:$0xff]
    %v5736 = vld [vmem:[%s5 + $0x9b0] sm:$0xff]
    %v5737 = vld [vmem:[%s5 + $0x9b8] sm:$0xff]
    %v5738 = vld [vmem:[%s5 + $0x9c0] sm:$0xff]
    %v5739 = vld [vmem:[%s5 + $0x9c8] sm:$0xff]
    %v5740 = vld [vmem:[%s5 + $0x9d0] sm:$0xff]
    %v5741 = vld [vmem:[%s5 + $0x9d8] sm:$0xff]
    %v5742 = vld [vmem:[%s5 + $0x9e0] sm:$0xff]
    %v5743 = vld [vmem:[%s5 + $0x9e8] sm:$0xff]
    %v5744 = vld [vmem:[%s5 + $0x9f0] sm:$0xff]
    %v5745 = vld [vmem:[%s5 + $0x9f8] sm:$0xff]
    %v5746 = vld [vmem:[%s5 + $0xa00] sm:$0xff]
    %v5747 = vld [vmem:[%s5 + $0xa08] sm:$0xff]
    %v5748 = vld [vmem:[%s5 + $0xa10] sm:$0xff]
    %v5749 = vld [vmem:[%s5 + $0xa18] sm:$0xff]
    %v5750 = vld [vmem:[%s5 + $0xa20] sm:$0xff]
    %v5751 = vld [vmem:[%s5 + $0xa28] sm:$0xff]
    %v5752 = vld [vmem:[%s5 + $0xa30] sm:$0xff]
    %v5753 = vld [vmem:[%s5 + $0xa38] sm:$0xff]
    %v5754 = vld [vmem:[%s5 + $0xa40] sm:$0xff]
    %v5755 = vld [vmem:[%s5 + $0xa48] sm:$0xff]
    %v5756 = vld [vmem:[%s5 + $0xa50] sm:$0xff]
    %v5757 = vld [vmem:[%s5 + $0xa58] sm:$0xff]
    %v5758 = vld [vmem:[%s5 + $0xa60] sm:$0xff]
    %v5759 = vld [vmem:[%s5 + $0xa68] sm:$0xff]
    %v5760 = vld [vmem:[%s5 + $0xa70] sm:$0xff]
    %v5761 = vld [vmem:[%s5 + $0xa78] sm:$0xff]
    %v5762 = vld [vmem:[%s5 + $0xa80] sm:$0xff]
    %v5763 = vld [vmem:[%s5 + $0xa88] sm:$0xff]
    %v5764 = vld [vmem:[%s5 + $0xa90] sm:$0xff]
    %v5765 = vld [vmem:[%s5 + $0xa98] sm:$0xff]
    %v5766 = vld [vmem:[%s5 + $0xaa0] sm:$0xff]
    %v5767 = vld [vmem:[%s5 + $0xaa8] sm:$0xff]
    %v5768 = vld [vmem:[%s5 + $0xab0] sm:$0xff]
    %v5769 = vld [vmem:[%s5 + $0xab8] sm:$0xff]
    %v5770 = vld [vmem:[%s5 + $0xac0] sm:$0xff]
    %v5771 = vld [vmem:[%s5 + $0xac8] sm:$0xff]
    %v5772 = vld [vmem:[%s5 + $0xad0] sm:$0xff]
    %v5773 = vld [vmem:[%s5 + $0xad8] sm:$0xff]
    %v5774 = vld [vmem:[%s5 + $0xae0] sm:$0xff]
    %v5775 = vld [vmem:[%s5 + $0xae8] sm:$0xff]
    %v5776 = vld [vmem:[%s5 + $0xaf0] sm:$0xff]
    %v5777 = vld [vmem:[%s5 + $0xaf8] sm:$0xff]
    %v5778 = vld [vmem:[%s5 + $0xb00] sm:$0xff]
    %v5779 = vld [vmem:[%s5 + $0xb08] sm:$0xff]
    %v5780 = vld [vmem:[%s5 + $0xb10] sm:$0xff]
    %v5781 = vld [vmem:[%s5 + $0xb18] sm:$0xff]
    %v5782 = vld [vmem:[%s5 + $0xb20] sm:$0xff]
    %v5783 = vld [vmem:[%s5 + $0xb28] sm:$0xff]
    %v5784 = vld [vmem:[%s5 + $0xb30] sm:$0xff]
    %v5785 = vld [vmem:[%s5 + $0xb38] sm:$0xff]
    %v5786 = vld [vmem:[%s5 + $0xb40] sm:$0xff]
    %v5787 = vld [vmem:[%s5 + $0xb48] sm:$0xff]
    %v5788 = vld [vmem:[%s5 + $0xb50] sm:$0xff]
    %v5789 = vld [vmem:[%s5 + $0xb58] sm:$0xff]
    %v5790 = vld [vmem:[%s5 + $0xb60] sm:$0xff]
    %v5791 = vld [vmem:[%s5 + $0xb68] sm:$0xff]
    %v5792 = vld [vmem:[%s5 + $0xb70] sm:$0xff]
    %v5793 = vld [vmem:[%s5 + $0xb78] sm:$0xff]
    %v5794 = vld [vmem:[%s5 + $0xb80] sm:$0xff]
    %v5795 = vld [vmem:[%s5 + $0xb88] sm:$0xff]
    %v5796 = vld [vmem:[%s5 + $0xb90] sm:$0xff]
    %v5797 = vld [vmem:[%s5 + $0xb98] sm:$0xff]
    %v5798 = vld [vmem:[%s5 + $0xba0] sm:$0xff]
    %v5799 = vld [vmem:[%s5 + $0xba8] sm:$0xff]
    %v5800 = vld [vmem:[%s5 + $0xbb0] sm:$0xff]
    %v5801 = vld [vmem:[%s5 + $0xbb8] sm:$0xff]
    %v5802 = vld [vmem:[%s5 + $0xbc0] sm:$0xff]
    %v5803 = vld [vmem:[%s5 + $0xbc8] sm:$0xff]
    %v5804 = vld [vmem:[%s5 + $0xbd0] sm:$0xff]
    %v5805 = vld [vmem:[%s5 + $0xbd8] sm:$0xff]
    %v5806 = vld [vmem:[%s5 + $0xbe0] sm:$0xff]
    %v5807 = vld [vmem:[%s5 + $0xbe8] sm:$0xff]
    %v5808 = vld [vmem:[%s5 + $0xbf0] sm:$0xff]
    %v5809 = vld [vmem:[%s5 + $0xbf8] sm:$0xff]
    %v5810 = vld [vmem:[%s5 + $0xc00] sm:$0xff]
    %v5811 = vld [vmem:[%s5 + $0xc08] sm:$0xff]
    %v5812 = vld [vmem:[%s5 + $0xc10] sm:$0xff]
    %v5813 = vld [vmem:[%s5 + $0xc18] sm:$0xff]
    %v5814 = vld [vmem:[%s5 + $0xc20] sm:$0xff]
    %v5815 = vld [vmem:[%s5 + $0xc28] sm:$0xff]
    %v5816 = vld [vmem:[%s5 + $0xc30] sm:$0xff]
    %v5817 = vld [vmem:[%s5 + $0xc38] sm:$0xff]
    %vm5818 = vcmask 523264
    %v5820 = vsel %vm5818, %v5421, 0
    %v5823 = vsel %vm5818, %v5425, 0
    %5825 = vmatprep.subr.mxu0 %v5427
    %5826 = vmatpush1.msra.mxu0 %v5426
    %5827 = vmatprep.subr.mxu0 %v5434
    %5828 = vmatpush1.msra.mxu0 %v5433
    %5829 = vmatprep.subr.mxu0 %v5441
    %5830 = vmatpush1.msra.mxu0 %v5440
    %5831 = vmatprep.subr.mxu0 %v5448
    %5832 = vmatpush1.msra.mxu0 %v5447
    %5833 = vmatprep.subr.mxu0 %v5455
    %5834 = vmatpush1.msra.mxu0 %v5454
    %5835 = vmatprep.subr.mxu0 %v5462
    %5836 = vmatpush1.msra.mxu0 %v5461
    %5837 = vmatprep.subr.mxu0 %v5469
    %5838 = vmatpush1.msra.mxu0 %v5468
    %5839 = vmatprep.subr.mxu0 %v5476
    %5840 = vmatpush1.msra.mxu0 %v5475
    %5841 = vmatprep.subr.mxu0 %v5483
    %5842 = vmatpush1.msra.mxu0 %v5482
    %5843 = vmatprep.subr.mxu0 %v5490
    %5844 = vmatpush1.msra.mxu0 %v5489
    %5845 = vmatprep.subr.mxu0 %v5497
    %5846 = vmatpush1.msra.mxu0 %v5496
    %5847 = vmatprep.subr.mxu0 %v5504
    %5848 = vmatpush1.msra.mxu0 %v5503
    %5849 = vmatprep.subr.mxu0 %v5511
    %5850 = vmatpush1.msra.mxu0 %v5510
    %5851 = vmatprep.subr.mxu0 %v5518
    %5852 = vmatpush1.msra.mxu0 %v5517
    %5853 = vmatprep.subr.mxu0 %v5525
    %5854 = vmatpush1.msra.mxu0 %v5524
    %5855 = vmatprep.subr.mxu0 %v5532
    %5856 = vmatpush1.msra.mxu0 %v5531
    %5857 = vmatprep.subr.mxu0 %v5539
    %5858 = vmatpush1.msra.mxu0 %v5538
    %5859 = vmatprep.subr.mxu0 %v5546
    %5860 = vmatpush1.msra.mxu0 %v5545
    %5861 = vmatprep.subr.mxu0 %v5553
    %5862 = vmatpush1.msra.mxu0 %v5552
    %5863 = vmatprep.subr.mxu0 %v5560
    %5864 = vmatpush1.msra.mxu0 %v5559
    %5865 = vmatprep.subr.mxu0 %v5567
    %5866 = vmatpush1.msra.mxu0 %v5566
    %5867 = vmatprep.subr.mxu0 %v5574
    %5868 = vmatpush1.msra.mxu0 %v5573
    %5869 = vmatprep.subr.mxu0 %v5581
    %5870 = vmatpush1.msra.mxu0 %v5580
    %5871 = vmatprep.subr.mxu0 %v5588
    %5872 = vmatpush1.msra.mxu0 %v5587
    %5873 = vmatprep.subr.mxu0 %v5595
    %5874 = vmatpush1.msra.mxu0 %v5594
    %5875 = vmatprep.subr.mxu0 %v5602
    %5876 = vmatpush1.msra.mxu0 %v5601
    %5877 = vmatprep.subr.mxu0 %v5609
    %5878 = vmatpush1.msra.mxu0 %v5608
    %5879 = vmatprep.subr.mxu0 %v5616
    %5880 = vmatpush1.msra.mxu0 %v5615
    %5881 = vmatprep.subr.mxu0 %v5623
    %5882 = vmatpush1.msra.mxu0 %v5622
    %5883 = vmatprep.subr.mxu0 %v5630
    %5884 = vmatpush1.msra.mxu0 %v5629
    %5885 = vmatprep.subr.mxu0 %v5637
    %5886 = vmatpush1.msra.mxu0 %v5636
    %5887 = vmatprep.subr.mxu0 %v5644
    %5888 = vmatpush1.msra.mxu0 %v5643
    %5889 = vmatprep.mubr.f32.mxu0 %v5419
    %5890 = vmatmul.mubr.f32.gmra.mrb[0].mxu0 %v5418
    %v5891 = vpop.f32.mrb[0].mxu0
    %v5892 = vadd.f32 0.0, %v5891
    %v5893 = vpop.f32.mrb[0].mxu0
    %v5894 = vadd.f32 0.0, %v5893
    %5895 = vmatprep.mubr.f32.mxu0 %v5423
    %5896 = vmatmul.mubr.f32.gmra.mrb[0].mxu0 %v5422
    %v5897 = vpop.f32.mrb[0].mxu0
    %v5898 = vpop.f32.mrb[0].mxu0
    %v5899 = vadd.f32 0.0, %v5898
    %5900 = vdwg.mxu0
    %5901 = vmatprep.subr.mxu0 %v5651
    %5902 = vmatpush1.msra.mxu0 %v5650
    %5903 = vmatprep.subr.mxu0 %v5658
    %5904 = vmatpush1.msra.mxu0 %v5657
    %5905 = vmatprep.subr.mxu0 %v5665
    %5906 = vmatpush1.msra.mxu0 %v5664
    %5907 = vmatprep.subr.mxu0 %v5672
    %5908 = vmatpush1.msra.mxu0 %v5671
    %5909 = vmatprep.subr.mxu0 %v5679
    %5910 = vmatpush1.msra.mxu0 %v5678
    %5911 = vmatprep.subr.mxu0 %v5686
    %5912 = vmatpush1.msra.mxu0 %v5685
    %5913 = vmatprep.subr.mxu0 %v5693
    %5914 = vmatpush1.msra.mxu0 %v5692
    %5915 = vmatprep.subr.mxu0 %v5700
    %5916 = vmatpush1.msra.mxu0 %v5699
    %5917 = vmatprep.subr.mxu0 %v5707
    %5918 = vmatpush1.msra.mxu0 %v5706
    %5919 = vmatprep.subr.mxu0 %v5714
    %5920 = vmatpush1.msra.mxu0 %v5713
    %5921 = vmatprep.subr.mxu0 %v5721
    %5922 = vmatpush1.msra.mxu0 %v5720
    %5923 = vmatprep.subr.mxu0 %v5728
    %5924 = vmatpush1.msra.mxu0 %v5727
    %5925 = vmatprep.subr.mxu0 %v5735
    %5926 = vmatpush1.msra.mxu0 %v5734
    %5927 = vmatprep.subr.mxu0 %v5742
    %5928 = vmatpush1.msra.mxu0 %v5741
    %5929 = vmatprep.subr.mxu0 %v5749
    %5930 = vmatpush1.msra.mxu0 %v5748
    %5931 = vmatprep.subr.mxu0 %v5756
    %5932 = vmatpush1.msra.mxu0 %v5755
    %5933 = vmatprep.subr.mxu0 %v5763
    %5934 = vmatpush1.msra.mxu0 %v5762
    %5935 = vmatprep.subr.mxu0 %v5770
    %5936 = vmatpush1.msra.mxu0 %v5769
    %5937 = vmatprep.subr.mxu0 %v5777
    %5938 = vmatpush1.msra.mxu0 %v5776
    %5939 = vmatprep.subr.mxu0 %v5784
    %5940 = vmatpush1.msra.mxu0 %v5783
    %5941 = vmatprep.subr.mxu0 %v5791
    %5942 = vmatpush1.msra.mxu0 %v5790
    %5943 = vmatprep.subr.mxu0 %v5798
    %5944 = vmatpush1.msra.mxu0 %v5797
    %5945 = vmatprep.subr.mxu0 %v5805
    %5946 = vmatpush1.msra.mxu0 %v5804
    %5947 = vmatprep.subr.mxu0 %v5812
    %5948 = vmatpush1.msra.mxu0 %v5811
    %5949 = vmatprep.subr.mxu0 0.0
    %5950 = vmatpush1.msra.mxu0 0.0
    %5951 = vmatprep.subr.mxu0 0.0
    %5952 = vmatpush1.msra.mxu0 0.0
    %5953 = vmatprep.subr.mxu0 0.0
    %5954 = vmatpush1.msra.mxu0 0.0
    %5955 = vmatprep.subr.mxu0 0.0
    %5956 = vmatpush1.msra.mxu0 0.0
    %5957 = vmatprep.subr.mxu0 0.0
    %5958 = vmatpush1.msra.mxu0 0.0
    %5959 = vmatprep.subr.mxu0 0.0
    %5960 = vmatpush1.msra.mxu0 0.0
    %5961 = vmatprep.subr.mxu0 0.0
    %5962 = vmatpush1.msra.mxu0 0.0
    %5963 = vmatprep.subr.mxu0 0.0
    %5964 = vmatpush1.msra.mxu0 0.0
    %5965 = vmatprep.mubr.f32.mxu0 %v5820
    %5966 = vmatmul.mubr.f32.gmra.mrb[0].mxu0 %v5420
    %v5967 = vpop.f32.mrb[0].mxu0
    %v5968 = vadd.f32 %v5892, %v5967
    %v5969 = vpop.f32.mrb[0].mxu0
    %v5970 = vadd.f32 %v5894, %v5969
    %5971 = vmatprep.mubr.f32.mxu0 %v5823
    %5972 = vmatmul.mubr.f32.gmra.mrb[0].mxu0 %v5424
    %v5973 = vpop.f32.mrb[0].mxu0
    %v5974 = vpop.f32.mrb[0].mxu0
    %v5975 = vadd.f32 %v5899, %v5974
    %5976 = vdwg.mxu0
    %5977 = vmatprep.subr.mxu0 %v5429
    %5978 = vmatpush1.msra.mxu0 %v5428
    %5979 = vmatprep.subr.mxu0 %v5436
    %5980 = vmatpush1.msra.mxu0 %v5435
    %5981 = vmatprep.subr.mxu0 %v5443
    %5982 = vmatpush1.msra.mxu0 %v5442
    %5983 = vmatprep.subr.mxu0 %v5450
    %5984 = vmatpush1.msra.mxu0 %v5449
    %5985 = vmatprep.subr.mxu0 %v5457
    %5986 = vmatpush1.msra.mxu0 %v5456
    %5987 = vmatprep.subr.mxu0 %v5464
    %5988 = vmatpush1.msra.mxu0 %v5463
    %5989 = vmatprep.subr.mxu0 %v5471
    %5990 = vmatpush1.msra.mxu0 %v5470
    %5991 = vmatprep.subr.mxu0 %v5478
    %5992 = vmatpush1.msra.mxu0 %v5477
    %5993 = vmatprep.subr.mxu0 %v5485
    %5994 = vmatpush1.msra.mxu0 %v5484
    %5995 = vmatprep.subr.mxu0 %v5492
    %5996 = vmatpush1.msra.mxu0 %v5491
    %5997 = vmatprep.subr.mxu0 %v5499
    %5998 = vmatpush1.msra.mxu0 %v5498
    %5999 = vmatprep.subr.mxu0 %v5506
    %6000 = vmatpush1.msra.mxu0 %v5505
    %6001 = vmatprep.subr.mxu0 %v5513
    %6002 = vmatpush1.msra.mxu0 %v5512
    %6003 = vmatprep.subr.mxu0 %v5520
    %6004 = vmatpush1.msra.mxu0 %v5519
    %6005 = vmatprep.subr.mxu0 %v5527
    %6006 = vmatpush1.msra.mxu0 %v5526
    %6007 = vmatprep.subr.mxu0 %v5534
    %6008 = vmatpush1.msra.mxu0 %v5533
    %6009 = vmatprep.subr.mxu0 %v5541
    %6010 = vmatpush1.msra.mxu0 %v5540
    %6011 = vmatprep.subr.mxu0 %v5548
    %6012 = vmatpush1.msra.mxu0 %v5547
    %6013 = vmatprep.subr.mxu0 %v5555
    %6014 = vmatpush1.msra.mxu0 %v5554
    %6015 = vmatprep.subr.mxu0 %v5562
    %6016 = vmatpush1.msra.mxu0 %v5561
    %6017 = vmatprep.subr.mxu0 %v5569
    %6018 = vmatpush1.msra.mxu0 %v5568
    %6019 = vmatprep.subr.mxu0 %v5576
    %6020 = vmatpush1.msra.mxu0 %v5575
    %6021 = vmatprep.subr.mxu0 %v5583
    %6022 = vmatpush1.msra.mxu0 %v5582
    %6023 = vmatprep.subr.mxu0 %v5590
    %6024 = vmatpush1.msra.mxu0 %v5589
    %6025 = vmatprep.subr.mxu0 %v5597
    %6026 = vmatpush1.msra.mxu0 %v5596
    %6027 = vmatprep.subr.mxu0 %v5604
    %6028 = vmatpush1.msra.mxu0 %v5603
    %6029 = vmatprep.subr.mxu0 %v5611
    %6030 = vmatpush1.msra.mxu0 %v5610
    %6031 = vmatprep.subr.mxu0 %v5618
    %6032 = vmatpush1.msra.mxu0 %v5617
    %6033 = vmatprep.subr.mxu0 %v5625
    %6034 = vmatpush1.msra.mxu0 %v5624
    %6035 = vmatprep.subr.mxu0 %v5632
    %6036 = vmatpush1.msra.mxu0 %v5631
    %6037 = vmatprep.subr.mxu0 %v5639
    %6038 = vmatpush1.msra.mxu0 %v5638
    %6039 = vmatprep.subr.mxu0 %v5646
    %6040 = vmatpush1.msra.mxu0 %v5645
    %6041 = vmatprep.mubr.f32.mxu0 %v5419
    %6042 = vmatmul.mubr.f32.gmra.mrb[0].mxu0 %v5418
    %v6043 = vpop.f32.mrb[0].mxu0
    %v6044 = vadd.f32 0.0, %v6043
    %v6045 = vpop.f32.mrb[0].mxu0
    %v6046 = vadd.f32 0.0, %v6045
    %6047 = vmatprep.mubr.f32.mxu0 %v5423
    %6048 = vmatmul.mubr.f32.gmra.mrb[0].mxu0 %v5422
    %v6049 = vpop.f32.mrb[0].mxu0
    %v6050 = vadd.f32 0.0, %v6049
    %v6051 = vpop.f32.mrb[0].mxu0
    %v6052 = vadd.f32 0.0, %v6051
    %6053 = vdwg.mxu0
    %6054 = vmatprep.subr.mxu0 %v5653
    %6055 = vmatpush1.msra.mxu0 %v5652
    %6056 = vmatprep.subr.mxu0 %v5660
    %6057 = vmatpush1.msra.mxu0 %v5659
    %6058 = vmatprep.subr.mxu0 %v5667
    %6059 = vmatpush1.msra.mxu0 %v5666
    %6060 = vmatprep.subr.mxu0 %v5674
    %6061 = vmatpush1.msra.mxu0 %v5673
    %6062 = vmatprep.subr.mxu0 %v5681
    %6063 = vmatpush1.msra.mxu0 %v5680
    %6064 = vmatprep.subr.mxu0 %v5688
    %6065 = vmatpush1.msra.mxu0 %v5687
    %6066 = vmatprep.subr.mxu0 %v5695
    %6067 = vmatpush1.msra.mxu0 %v5694
    %6068 = vmatprep.subr.mxu0 %v5702
    %6069 = vmatpush1.msra.mxu0 %v5701
    %6070 = vmatprep.subr.mxu0 %v5709
    %6071 = vmatpush1.msra.mxu0 %v5708
    %6072 = vmatprep.subr.mxu0 %v5716
    %6073 = vmatpush1.msra.mxu0 %v5715
    %6074 = vmatprep.subr.mxu0 %v5723
    %6075 = vmatpush1.msra.mxu0 %v5722
    %6076 = vmatprep.subr.mxu0 %v5730
    %6077 = vmatpush1.msra.mxu0 %v5729
    %6078 = vmatprep.subr.mxu0 %v5737
    %6079 = vmatpush1.msra.mxu0 %v5736
    %6080 = vmatprep.subr.mxu0 %v5744
    %6081 = vmatpush1.msra.mxu0 %v5743
    %6082 = vmatprep.subr.mxu0 %v5751
    %6083 = vmatpush1.msra.mxu0 %v5750
    %6084 = vmatprep.subr.mxu0 %v5758
    %6085 = vmatpush1.msra.mxu0 %v5757
    %6086 = vmatprep.subr.mxu0 %v5765
    %6087 = vmatpush1.msra.mxu0 %v5764
    %6088 = vmatprep.subr.mxu0 %v5772
    %6089 = vmatpush1.msra.mxu0 %v5771
    %6090 = vmatprep.subr.mxu0 %v5779
    %6091 = vmatpush1.msra.mxu0 %v5778
    %6092 = vmatprep.subr.mxu0 %v5786
    %6093 = vmatpush1.msra.mxu0 %v5785
    %6094 = vmatprep.subr.mxu0 %v5793
    %6095 = vmatpush1.msra.mxu0 %v5792
    %6096 = vmatprep.subr.mxu0 %v5800
    %6097 = vmatpush1.msra.mxu0 %v5799
    %6098 = vmatprep.subr.mxu0 %v5807
    %6099 = vmatpush1.msra.mxu0 %v5806
    %6100 = vmatprep.subr.mxu0 %v5814
    %6101 = vmatpush1.msra.mxu0 %v5813
    %6102 = vmatprep.subr.mxu0 0.0
    %6103 = vmatpush1.msra.mxu0 0.0
    %6104 = vmatprep.subr.mxu0 0.0
    %6105 = vmatpush1.msra.mxu0 0.0
    %6106 = vmatprep.subr.mxu0 0.0
    %6107 = vmatpush1.msra.mxu0 0.0
    %6108 = vmatprep.subr.mxu0 0.0
    %6109 = vmatpush1.msra.mxu0 0.0
    %6110 = vmatprep.subr.mxu0 0.0
    %6111 = vmatpush1.msra.mxu0 0.0
    %6112 = vmatprep.subr.mxu0 0.0
    %6113 = vmatpush1.msra.mxu0 0.0
    %6114 = vmatprep.subr.mxu0 0.0
    %6115 = vmatpush1.msra.mxu0 0.0
    %6116 = vmatprep.subr.mxu0 0.0
    %6117 = vmatpush1.msra.mxu0 0.0
    %6118 = vmatprep.mubr.f32.mxu0 %v5820
    %6119 = vmatmul.mubr.f32.gmra.mrb[0].mxu0 %v5420
    %v6120 = vpop.f32.mrb[0].mxu0
    %v6121 = vadd.f32 %v6044, %v6120
    %v6122 = vpop.f32.mrb[0].mxu0
    %v6123 = vadd.f32 %v6046, %v6122
    %6124 = vmatprep.mubr.f32.mxu0 %v5823
    %6125 = vmatmul.mubr.f32.gmra.mrb[0].mxu0 %v5424
    %v6126 = vpop.f32.mrb[0].mxu0
    %v6127 = vadd.f32 %v6050, %v6126
    %v6128 = vpop.f32.mrb[0].mxu0
    %v6129 = vadd.f32 %v6052, %v6128
    %6130 = vdwg.mxu0
    %6131 = vmatprep.subr.mxu0 %v5431
    %6132 = vmatpush1.msra.mxu0 %v5430
    %6133 = vmatprep.subr.mxu0 %v5438
    %6134 = vmatpush1.msra.mxu0 %v5437
    %6135 = vmatprep.subr.mxu0 %v5445
    %6136 = vmatpush1.msra.mxu0 %v5444
    %6137 = vmatprep.subr.mxu0 %v5452
    %6138 = vmatpush1.msra.mxu0 %v5451
    %6139 = vmatprep.subr.mxu0 %v5459
    %6140 = vmatpush1.msra.mxu0 %v5458
    %6141 = vmatprep.subr.mxu0 %v5466
    %6142 = vmatpush1.msra.mxu0 %v5465
    %6143 = vmatprep.subr.mxu0 %v5473
    %6144 = vmatpush1.msra.mxu0 %v5472
    %6145 = vmatprep.subr.mxu0 %v5480
    %6146 = vmatpush1.msra.mxu0 %v5479
    %6147 = vmatprep.subr.mxu0 %v5487
    %6148 = vmatpush1.msra.mxu0 %v5486
    %6149 = vmatprep.subr.mxu0 %v5494
    %6150 = vmatpush1.msra.mxu0 %v5493
    %6151 = vmatprep.subr.mxu0 %v5501
    %6152 = vmatpush1.msra.mxu0 %v5500
    %6153 = vmatprep.subr.mxu0 %v5508
    %6154 = vmatpush1.msra.mxu0 %v5507
    %6155 = vmatprep.subr.mxu0 %v5515
    %6156 = vmatpush1.msra.mxu0 %v5514
    %6157 = vmatprep.subr.mxu0 %v5522
    %6158 = vmatpush1.msra.mxu0 %v5521
    %6159 = vmatprep.subr.mxu0 %v5529
    %6160 = vmatpush1.msra.mxu0 %v5528
    %6161 = vmatprep.subr.mxu0 %v5536
    %6162 = vmatpush1.msra.mxu0 %v5535
    %6163 = vmatprep.subr.mxu0 %v5543
    %6164 = vmatpush1.msra.mxu0 %v5542
    %6165 = vmatprep.subr.mxu0 %v5550
    %6166 = vmatpush1.msra.mxu0 %v5549
    %6167 = vmatprep.subr.mxu0 %v5557
    %6168 = vmatpush1.msra.mxu0 %v5556
    %6169 = vmatprep.subr.mxu0 %v5564
    %6170 = vmatpush1.msra.mxu0 %v5563
    %6171 = vmatprep.subr.mxu0 %v5571
    %6172 = vmatpush1.msra.mxu0 %v5570
    %6173 = vmatprep.subr.mxu0 %v5578
    %6174 = vmatpush1.msra.mxu0 %v5577
    %6175 = vmatprep.subr.mxu0 %v5585
    %6176 = vmatpush1.msra.mxu0 %v5584
    %6177 = vmatprep.subr.mxu0 %v5592
    %6178 = vmatpush1.msra.mxu0 %v5591
    %6179 = vmatprep.subr.mxu0 %v5599
    %6180 = vmatpush1.msra.mxu0 %v5598
    %6181 = vmatprep.subr.mxu0 %v5606
    %6182 = vmatpush1.msra.mxu0 %v5605
    %6183 = vmatprep.subr.mxu0 %v5613
    %6184 = vmatpush1.msra.mxu0 %v5612
    %6185 = vmatprep.subr.mxu0 %v5620
    %6186 = vmatpush1.msra.mxu0 %v5619
    %6187 = vmatprep.subr.mxu0 %v5627
    %6188 = vmatpush1.msra.mxu0 %v5626
    %6189 = vmatprep.subr.mxu0 %v5634
    %6190 = vmatpush1.msra.mxu0 %v5633
    %6191 = vmatprep.subr.mxu0 %v5641
    %6192 = vmatpush1.msra.mxu0 %v5640
    %6193 = vmatprep.subr.mxu0 %v5648
    %6194 = vmatpush1.msra.mxu0 %v5647
    %6195 = vmatprep.mubr.f32.mxu0 %v5419
    %6196 = vmatmul.mubr.f32.gmra.mrb[0].mxu0 %v5418
    %v6197 = vpop.f32.mrb[0].mxu0
    %v6198 = vadd.f32 0.0, %v6197
    %v6199 = vpop.f32.mrb[0].mxu0
    %v6200 = vadd.f32 0.0, %v6199
    %6201 = vmatprep.mubr.f32.mxu0 %v5423
    %6202 = vmatmul.mubr.f32.gmra.mrb[0].mxu0 %v5422
    %v6203 = vpop.f32.mrb[0].mxu0
    %v6204 = vadd.f32 0.0, %v6203
    %v6205 = vpop.f32.mrb[0].mxu0
    %v6206 = vadd.f32 0.0, %v6205
    %6207 = vdwg.mxu0
    %6208 = vmatprep.subr.mxu0 %v5655
    %6209 = vmatpush1.msra.mxu0 %v5654
    %6210 = vmatprep.subr.mxu0 %v5662
    %6211 = vmatpush1.msra.mxu0 %v5661
    %6212 = vmatprep.subr.mxu0 %v5669
    %6213 = vmatpush1.msra.mxu0 %v5668
    %6214 = vmatprep.subr.mxu0 %v5676
    %6215 = vmatpush1.msra.mxu0 %v5675
    %6216 = vmatprep.subr.mxu0 %v5683
    %6217 = vmatpush1.msra.mxu0 %v5682
    %6218 = vmatprep.subr.mxu0 %v5690
    %6219 = vmatpush1.msra.mxu0 %v5689
    %6220 = vmatprep.subr.mxu0 %v5697
    %6221 = vmatpush1.msra.mxu0 %v5696
    %6222 = vmatprep.subr.mxu0 %v5704
    %6223 = vmatpush1.msra.mxu0 %v5703
    %6224 = vmatprep.subr.mxu0 %v5711
    %6225 = vmatpush1.msra.mxu0 %v5710
    %6226 = vmatprep.subr.mxu0 %v5718
    %6227 = vmatpush1.msra.mxu0 %v5717
    %6228 = vmatprep.subr.mxu0 %v5725
    %6229 = vmatpush1.msra.mxu0 %v5724
    %6230 = vmatprep.subr.mxu0 %v5732
    %6231 = vmatpush1.msra.mxu0 %v5731
    %6232 = vmatprep.subr.mxu0 %v5739
    %6233 = vmatpush1.msra.mxu0 %v5738
    %6234 = vmatprep.subr.mxu0 %v5746
    %6235 = vmatpush1.msra.mxu0 %v5745
    %6236 = vmatprep.subr.mxu0 %v5753
    %6237 = vmatpush1.msra.mxu0 %v5752
    %6238 = vmatprep.subr.mxu0 %v5760
    %6239 = vmatpush1.msra.mxu0 %v5759
    %6240 = vmatprep.subr.mxu0 %v5767
    %6241 = vmatpush1.msra.mxu0 %v5766
    %6242 = vmatprep.subr.mxu0 %v5774
    %6243 = vmatpush1.msra.mxu0 %v5773
    %6244 = vmatprep.subr.mxu0 %v5781
    %6245 = vmatpush1.msra.mxu0 %v5780
    %6246 = vmatprep.subr.mxu0 %v5788
    %6247 = vmatpush1.msra.mxu0 %v5787
    %6248 = vmatprep.subr.mxu0 %v5795
    %6249 = vmatpush1.msra.mxu0 %v5794
    %6250 = vmatprep.subr.mxu0 %v5802
    %6251 = vmatpush1.msra.mxu0 %v5801
    %6252 = vmatprep.subr.mxu0 %v5809
    %6253 = vmatpush1.msra.mxu0 %v5808
    %6254 = vmatprep.subr.mxu0 %v5816
    %6255 = vmatpush1.msra.mxu0 %v5815
    %6256 = vmatprep.subr.mxu0 0.0
    %6257 = vmatpush1.msra.mxu0 0.0
    %6258 = vmatprep.subr.mxu0 0.0
    %6259 = vmatpush1.msra.mxu0 0.0
    %6260 = vmatprep.subr.mxu0 0.0
    %6261 = vmatpush1.msra.mxu0 0.0
    %6262 = vmatprep.subr.mxu0 0.0
    %6263 = vmatpush1.msra.mxu0 0.0
    %6264 = vmatprep.subr.mxu0 0.0
    %6265 = vmatpush1.msra.mxu0 0.0
    %6266 = vmatprep.subr.mxu0 0.0
    %6267 = vmatpush1.msra.mxu0 0.0
    %6268 = vmatprep.subr.mxu0 0.0
    %6269 = vmatpush1.msra.mxu0 0.0
    %6270 = vmatprep.subr.mxu0 0.0
    %6271 = vmatpush1.msra.mxu0 0.0
    %6272 = vmatprep.mubr.f32.mxu0 %v5820
    %6273 = vmatmul.mubr.f32.gmra.mrb[0].mxu0 %v5420
    %v6274 = vpop.f32.mrb[0].mxu0
    %v6275 = vadd.f32 %v6198, %v6274
    %v6276 = vpop.f32.mrb[0].mxu0
    %v6277 = vadd.f32 %v6200, %v6276
    %6278 = vmatprep.mubr.f32.mxu0 %v5823
    %6279 = vmatmul.mubr.f32.gmra.mrb[0].mxu0 %v5424
    %v6280 = vpop.f32.mrb[0].mxu0
    %v6281 = vadd.f32 %v6204, %v6280
    %v6282 = vpop.f32.mrb[0].mxu0
    %v6283 = vadd.f32 %v6206, %v6282
    %6284 = vdwg.mxu0
    %6285 = vmatprep.subr.mxu0 0.0
    %6286 = vmatpush1.msra.mxu0 %v5432
    %6287 = vmatprep.subr.mxu0 0.0
    %6288 = vmatpush1.msra.mxu0 %v5439
    %6289 = vmatprep.subr.mxu0 0.0
    %6290 = vmatpush1.msra.mxu0 %v5446
    %6291 = vmatprep.subr.mxu0 0.0
    %6292 = vmatpush1.msra.mxu0 %v5453
    %6293 = vmatprep.subr.mxu0 0.0
    %6294 = vmatpush1.msra.mxu0 %v5460
    %6295 = vmatprep.subr.mxu0 0.0
    %6296 = vmatpush1.msra.mxu0 %v5467
    %6297 = vmatprep.subr.mxu0 0.0
    %6298 = vmatpush1.msra.mxu0 %v5474
    %6299 = vmatprep.subr.mxu0 0.0
    %6300 = vmatpush1.msra.mxu0 %v5481
    %6301 = vmatprep.subr.mxu0 0.0
    %6302 = vmatpush1.msra.mxu0 %v5488
    %6303 = vmatprep.subr.mxu0 0.0
    %6304 = vmatpush1.msra.mxu0 %v5495
    %6305 = vmatprep.subr.mxu0 0.0
    %6306 = vmatpush1.msra.mxu0 %v5502
    %6307 = vmatprep.subr.mxu0 0.0
    %6308 = vmatpush1.msra.mxu0 %v5509
    %6309 = vmatprep.subr.mxu0 0.0
    %6310 = vmatpush1.msra.mxu0 %v5516
    %6311 = vmatprep.subr.mxu0 0.0
    %6312 = vmatpush1.msra.mxu0 %v5523
    %6313 = vmatprep.subr.mxu0 0.0
    %6314 = vmatpush1.msra.mxu0 %v5530
    %6315 = vmatprep.subr.mxu0 0.0
    %6316 = vmatpush1.msra.mxu0 %v5537
    %6317 = vmatprep.subr.mxu0 0.0
    %6318 = vmatpush1.msra.mxu0 %v5544
    %6319 = vmatprep.subr.mxu0 0.0
    %6320 = vmatpush1.msra.mxu0 %v5551
    %6321 = vmatprep.subr.mxu0 0.0
    %6322 = vmatpush1.msra.mxu0 %v5558
    %6323 = vmatprep.subr.mxu0 0.0
    %6324 = vmatpush1.msra.mxu0 %v5565
    %6325 = vmatprep.subr.mxu0 0.0
    %6326 = vmatpush1.msra.mxu0 %v5572
    %6327 = vmatprep.subr.mxu0 0.0
    %6328 = vmatpush1.msra.mxu0 %v5579
    %6329 = vmatprep.subr.mxu0 0.0
    %6330 = vmatpush1.msra.mxu0 %v5586
    %6331 = vmatprep.subr.mxu0 0.0
    %6332 = vmatpush1.msra.mxu0 %v5593
    %6333 = vmatprep.subr.mxu0 0.0
    %6334 = vmatpush1.msra.mxu0 %v5600
    %6335 = vmatprep.subr.mxu0 0.0
    %6336 = vmatpush1.msra.mxu0 %v5607
    %6337 = vmatprep.subr.mxu0 0.0
    %6338 = vmatpush1.msra.mxu0 %v5614
    %6339 = vmatprep.subr.mxu0 0.0
    %6340 = vmatpush1.msra.mxu0 %v5621
    %6341 = vmatprep.subr.mxu0 0.0
    %6342 = vmatpush1.msra.mxu0 %v5628
    %6343 = vmatprep.subr.mxu0 0.0
    %6344 = vmatpush1.msra.mxu0 %v5635
    %6345 = vmatprep.subr.mxu0 0.0
    %6346 = vmatpush1.msra.mxu0 %v5642
    %6347 = vmatprep.subr.mxu0 0.0
    %6348 = vmatpush1.msra.mxu0 %v5649
    %6349 = vmatprep.mubr.f32.mxu0 %v5419
    %6350 = vmatmul.mubr.f32.gmra.mrb[0].mxu0 %v5418
    %v6351 = vpop.f32.mrb[0].mxu0
    %v6352 = vadd.f32 0.0, %v6351
    %v6353 = vpop.f32.mrb[0].mxu0
    %6354 = vmatprep.mubr.f32.mxu0 %v5423
    %6355 = vmatmul.mubr.f32.gmra.mrb[0].mxu0 %v5422
    %v6356 = vpop.f32.mrb[0].mxu0
    %v6357 = vadd.f32 0.0, %v6356
    %v6358 = vpop.f32.mrb[0].mxu0
    %6359 = vdwg.mxu0
    %6360 = vmatprep.subr.mxu0 0.0
    %6361 = vmatpush1.msra.mxu0 %v5656
    %6362 = vmatprep.subr.mxu0 0.0
    %6363 = vmatpush1.msra.mxu0 %v5663
    %6364 = vmatprep.subr.mxu0 0.0
    %6365 = vmatpush1.msra.mxu0 %v5670
    %6366 = vmatprep.subr.mxu0 0.0
    %6367 = vmatpush1.msra.mxu0 %v5677
    %6368 = vmatprep.subr.mxu0 0.0
    %6369 = vmatpush1.msra.mxu0 %v5684
    %6370 = vmatprep.subr.mxu0 0.0
    %6371 = vmatpush1.msra.mxu0 %v5691
    %6372 = vmatprep.subr.mxu0 0.0
    %6373 = vmatpush1.msra.mxu0 %v5698
    %6374 = vmatprep.subr.mxu0 0.0
    %6375 = vmatpush1.msra.mxu0 %v5705
    %6376 = vmatprep.subr.mxu0 0.0
    %6377 = vmatpush1.msra.mxu0 %v5712
    %6378 = vmatprep.subr.mxu0 0.0
    %6379 = vmatpush1.msra.mxu0 %v5719
    %6380 = vmatprep.subr.mxu0 0.0
    %6381 = vmatpush1.msra.mxu0 %v5726
    %6382 = vmatprep.subr.mxu0 0.0
    %6383 = vmatpush1.msra.mxu0 %v5733
    %6384 = vmatprep.subr.mxu0 0.0
    %6385 = vmatpush1.msra.mxu0 %v5740
    %6386 = vmatprep.subr.mxu0 0.0
    %6387 = vmatpush1.msra.mxu0 %v5747
    %6388 = vmatprep.subr.mxu0 0.0
    %6389 = vmatpush1.msra.mxu0 %v5754
    %6390 = vmatprep.subr.mxu0 0.0
    %6391 = vmatpush1.msra.mxu0 %v5761
    %6392 = vmatprep.subr.mxu0 0.0
    %6393 = vmatpush1.msra.mxu0 %v5768
    %6394 = vmatprep.subr.mxu0 0.0
    %6395 = vmatpush1.msra.mxu0 %v5775
    %6396 = vmatprep.subr.mxu0 0.0
    %6397 = vmatpush1.msra.mxu0 %v5782
    %6398 = vmatprep.subr.mxu0 0.0
    %6399 = vmatpush1.msra.mxu0 %v5789
    %6400 = vmatprep.subr.mxu0 0.0
    %6401 = vmatpush1.msra.mxu0 %v5796
    %6402 = vmatprep.subr.mxu0 0.0
    %6403 = vmatpush1.msra.mxu0 %v5803
    %6404 = vmatprep.subr.mxu0 0.0
    %6405 = vmatpush1.msra.mxu0 %v5810
    %6406 = vmatprep.subr.mxu0 0.0
    %6407 = vmatpush1.msra.mxu0 %v5817
    %6408 = vmatprep.subr.mxu0 0.0
    %6409 = vmatpush1.msra.mxu0 0.0
    %6410 = vmatprep.subr.mxu0 0.0
    %6411 = vmatpush1.msra.mxu0 0.0
    %6412 = vmatprep.subr.mxu0 0.0
    %6413 = vmatpush1.msra.mxu0 0.0
    %6414 = vmatprep.subr.mxu0 0.0
    %6415 = vmatpush1.msra.mxu0 0.0
    %6416 = vmatprep.subr.mxu0 0.0
    %6417 = vmatpush1.msra.mxu0 0.0
    %6418 = vmatprep.subr.mxu0 0.0
    %6419 = vmatpush1.msra.mxu0 0.0
    %6420 = vmatprep.subr.mxu0 0.0
    %6421 = vmatpush1.msra.mxu0 0.0
    %6422 = vmatprep.subr.mxu0 0.0
    %6423 = vmatpush1.msra.mxu0 0.0
    %6424 = vmatprep.mubr.f32.mxu0 %v5820
    %6425 = vmatmul.mubr.f32.gmra.mrb[0].mxu0 %v5420
    %v6426 = vpop.f32.mrb[0].mxu0
    %v6427 = vadd.f32 %v6352, %v6426
    %v6428 = vpop.f32.mrb[0].mxu0
    %6429 = vmatprep.mubr.f32.mxu0 %v5823
    %6430 = vmatmul.mubr.f32.gmra.mrb[0].mxu0 %v5424
    %v6431 = vpop.f32.mrb[0].mxu0
    %v6432 = vadd.f32 %v6357, %v6431
    %v6433 = vpop.f32.mrb[0].mxu0
    %6434 = vdwg.mxu0
    %v6435 = vld [vmem:[%s6] sm:$0x1]
    %v6436 = vadd.f32 %v6435, %v5968
    %v6439 = vunpack.c.l.s4 1966171168
    %v6440 = vunpack.c.0.s8 %v6439
    %v6441 = vlaneseq
    %v6442 = vshrl.u32 %v6441, 7
    %v6443 = vsub.s32 %v6440, %v6442
    %v6444 = vrot.slane %v5970, %v6443
    %v6445 = vcombine.high %v6444, %v6444
    %v6447 = vunpack.c.l.s4 1966171168
    %v6448 = vunpack.c.0.s8 %v6447
    %v6449 = vlaneseq
    %v6450 = vshrl.u32 %v6449, 7
    %v6451 = vsub.s32 %v6448, %v6450
    %v6452 = vrot.slane %v6445, %v6451
    %v6454 = vadd.f32 %v6436, %v6452
    %v6457 = vunpack.c.l.s4 1966171168
    %v6458 = vunpack.c.0.s8 %v6457
    %v6459 = vlaneseq
    %v6460 = vshrl.u32 %v6459, 7
    %v6461 = vsub.s32 %v6458, %v6460
    %v6462 = vrot.slane %v6121, %v6461
    %v6464 = vunpack.c.l.s4 1966171168
    %v6465 = vunpack.c.0.s8 %v6464
    %v6466 = vlaneseq
    %v6467 = vshrl.u32 %v6466, 7
    %v6468 = vsub.s32 %v6465, %v6467
    %v6469 = vrot.slane %v6462, %v6468
    %v6470 = vcombine.high %v6469, %v6469
    %v6472 = vadd.f32 %v6454, %v6470
    %v6475 = vunpack.c.l.s4 1966171168
    %v6476 = vunpack.c.0.s8 %v6475
    %v6477 = vlaneseq
    %v6478 = vshrl.u32 %v6477, 7
    %v6479 = vsub.s32 %v6476, %v6478
    %v6480 = vrot.slane %v6123, %v6479
    %v6481 = vcombine.high %v6480, %v6480
    %v6483 = vunpack.c.l.s4 1966171168
    %v6484 = vunpack.c.0.s8 %v6483
    %v6485 = vlaneseq
    %v6486 = vshrl.u32 %v6485, 7
    %v6487 = vsub.s32 %v6484, %v6486
    %v6488 = vrot.slane %v6481, %v6487
    %v6489 = vcombine.high %v6488, %v6488
    %v6491 = vadd.f32 %v6472, %v6489
    %v6493 = vcombine.high %v6275, %v6275
    %v6495 = vunpack.c.l.s4 1966171168
    %v6496 = vunpack.c.0.s8 %v6495
    %v6497 = vlaneseq
    %v6498 = vshrl.u32 %v6497, 7
    %v6499 = vsub.s32 %v6496, %v6498
    %v6500 = vrot.slane %v6493, %v6499
    %v6502 = vunpack.c.l.s4 1966171168
    %v6503 = vunpack.c.0.s8 %v6502
    %v6504 = vlaneseq
    %v6505 = vshrl.u32 %v6504, 7
    %v6506 = vsub.s32 %v6503, %v6505
    %v6507 = vrot.slane %v6500, %v6506
    %v6509 = vadd.f32 %v6491, %v6507
    %v6511 = vcombine.high %v6277, %v6277
    %v6513 = vunpack.c.l.s4 1966171168
    %v6514 = vunpack.c.0.s8 %v6513
    %v6515 = vlaneseq
    %v6516 = vshrl.u32 %v6515, 7
    %v6517 = vsub.s32 %v6514, %v6516
    %v6518 = vrot.slane %v6511, %v6517
    %v6519 = vcombine.high %v6518, %v6518
    %v6521 = vunpack.c.l.s4 1966171168
    %v6522 = vunpack.c.0.s8 %v6521
    %v6523 = vlaneseq
    %v6524 = vshrl.u32 %v6523, 7
    %v6525 = vsub.s32 %v6522, %v6524
    %v6526 = vrot.slane %v6519, %v6525
    %v6528 = vadd.f32 %v6509, %v6526
    %v6530 = vcombine.high %v6427, %v6427
    %v6532 = vunpack.c.l.s4 1966171168
    %v6533 = vunpack.c.0.s8 %v6532
    %v6534 = vlaneseq
    %v6535 = vshrl.u32 %v6534, 7
    %v6536 = vsub.s32 %v6533, %v6535
    %v6537 = vrot.slane %v6530, %v6536
    %v6539 = vunpack.c.l.s4 1966171168
    %v6540 = vunpack.c.0.s8 %v6539
    %v6541 = vlaneseq
    %v6542 = vshrl.u32 %v6541, 7
    %v6543 = vsub.s32 %v6540, %v6542
    %v6544 = vrot.slane %v6537, %v6543
    %v6545 = vcombine.high %v6544, %v6544
    %v6547 = vadd.f32 %v6528, %v6545
    %v6548 = vmax.f32 %v6547, 0.0
    %6549 = vst [vmem:[#allocation4] sm:$0x1] %v6548
    %v6551 = vcombine.high %v5968, %v5968
    %v6553 = vunpack.c.l.s4 1966171168
    %v6554 = vunpack.c.0.s8 %v6553
    %v6555 = vlaneseq
    %v6556 = vshrl.u32 %v6555, 7
    %v6557 = vsub.s32 %v6554, %v6556
    %v6558 = vrot.slane %v6551, %v6557
    %v6559 = vcombine.high %v6558, %v6558
    %v6561 = vunpack.c.l.s4 1966171168
    %v6562 = vunpack.c.0.s8 %v6561
    %v6563 = vlaneseq
    %v6564 = vshrl.u32 %v6563, 7
    %v6565 = vsub.s32 %v6562, %v6564
    %v6566 = vrot.slane %v6559, %v6565
    %v6567 = vcombine.high %v6566, %v6566
    %v6569 = vadd.f32 %v6435, %v6567
    %v6570 = vadd.f32 %v6569, %v5975
    %v6573 = vunpack.c.l.s4 1966171168
    %v6574 = vunpack.c.0.s8 %v6573
    %v6575 = vlaneseq
    %v6576 = vshrl.u32 %v6575, 7
    %v6577 = vsub.s32 %v6574, %v6576
    %v6578 = vrot.slane %v6127, %v6577
    %v6579 = vcombine.high %v6578, %v6578
    %v6581 = vunpack.c.l.s4 1966171168
    %v6582 = vunpack.c.0.s8 %v6581
    %v6583 = vlaneseq
    %v6584 = vshrl.u32 %v6583, 7
    %v6585 = vsub.s32 %v6582, %v6584
    %v6586 = vrot.slane %v6579, %v6585
    %v6588 = vadd.f32 %v6570, %v6586
    %v6591 = vunpack.c.l.s4 1966171168
    %v6592 = vunpack.c.0.s8 %v6591
    %v6593 = vlaneseq
    %v6594 = vshrl.u32 %v6593, 7
    %v6595 = vsub.s32 %v6592, %v6594
    %v6596 = vrot.slane %v6129, %v6595
    %v6598 = vunpack.c.l.s4 1966171168
    %v6599 = vunpack.c.0.s8 %v6598
    %v6600 = vlaneseq
    %v6601 = vshrl.u32 %v6600, 7
    %v6602 = vsub.s32 %v6599, %v6601
    %v6603 = vrot.slane %v6596, %v6602
    %v6604 = vcombine.high %v6603, %v6603
    %v6606 = vadd.f32 %v6588, %v6604
    %v6609 = vunpack.c.l.s4 1966171168
    %v6610 = vunpack.c.0.s8 %v6609
    %v6611 = vlaneseq
    %v6612 = vshrl.u32 %v6611, 7
    %v6613 = vsub.s32 %v6610, %v6612
    %v6614 = vrot.slane %v6281, %v6613
    %v6615 = vcombine.high %v6614, %v6614
    %v6617 = vunpack.c.l.s4 1966171168
    %v6618 = vunpack.c.0.s8 %v6617
    %v6619 = vlaneseq
    %v6620 = vshrl.u32 %v6619, 7
    %v6621 = vsub.s32 %v6618, %v6620
    %v6622 = vrot.slane %v6615, %v6621
    %v6623 = vcombine.high %v6622, %v6622
    %v6625 = vadd.f32 %v6606, %v6623
    %v6627 = vcombine.high %v6283, %v6283
    %v6629 = vunpack.c.l.s4 1966171168
    %v6630 = vunpack.c.0.s8 %v6629
    %v6631 = vlaneseq
    %v6632 = vshrl.u32 %v6631, 7
    %v6633 = vsub.s32 %v6630, %v6632
    %v6634 = vrot.slane %v6627, %v6633
    %v6636 = vunpack.c.l.s4 1966171168
    %v6637 = vunpack.c.0.s8 %v6636
    %v6638 = vlaneseq
    %v6639 = vshrl.u32 %v6638, 7
    %v6640 = vsub.s32 %v6637, %v6639
    %v6641 = vrot.slane %v6634, %v6640
    %v6643 = vadd.f32 %v6625, %v6641
    %v6645 = vcombine.high %v6432, %v6432
    %v6647 = vunpack.c.l.s4 1966171168
    %v6648 = vunpack.c.0.s8 %v6647
    %v6649 = vlaneseq
    %v6650 = vshrl.u32 %v6649, 7
    %v6651 = vsub.s32 %v6648, %v6650
    %v6652 = vrot.slane %v6645, %v6651
    %v6653 = vcombine.high %v6652, %v6652
    %v6655 = vunpack.c.l.s4 1966171168
    %v6656 = vunpack.c.0.s8 %v6655
    %v6657 = vlaneseq
    %v6658 = vshrl.u32 %v6657, 7
    %v6659 = vsub.s32 %v6656, %v6658
    %v6660 = vrot.slane %v6653, %v6659
    %v6662 = vadd.f32 %v6643, %v6660
    %v6663 = vmax.f32 %v6662, 0.0
    %6664 = vst [vmem:[#allocation4 + $0x1] sm:$0x1] %v6663
    %v6665 = vld [vmem:[#allocation4] sm:$0x3]
    %v6666 = vld [vmem:[%s7] sm:$0xff]
    %v6667 = vld [vmem:[%s7 + $0x8] sm:$0xff]
    %v6668 = vld [vmem:[%s7 + $0x10] sm:$0xff]
    %v6669 = vld [vmem:[%s7 + $0x18] sm:$0xff]
    %v6670 = vld [vmem:[%s7 + $0x20] sm:$0xff]
    %v6671 = vld [vmem:[%s7 + $0x28] sm:$0xff]
    %v6672 = vld [vmem:[%s7 + $0x30] sm:$0xff]
    %v6673 = vld [vmem:[%s7 + $0x38] sm:$0xff]
    %v6674 = vld [vmem:[%s7 + $0x40] sm:$0xff]
    %v6675 = vld [vmem:[%s7 + $0x48] sm:$0xff]
    %v6676 = vld [vmem:[%s7 + $0x50] sm:$0xff]
    %v6677 = vld [vmem:[%s7 + $0x58] sm:$0xff]
    %v6678 = vld [vmem:[%s7 + $0x60] sm:$0xff]
    %v6679 = vld [vmem:[%s7 + $0x68] sm:$0xff]
    %v6680 = vld [vmem:[%s7 + $0x70] sm:$0xff]
    %v6681 = vld [vmem:[%s7 + $0x78] sm:$0xff]
    %v6682 = vld [vmem:[%s8] sm:$0x1]
    %v6684 = vlaneseq
    %v6685 = vshrl.u32 %v6684, 7
    %v6686 = vsub.s32 0, %v6685
    %v6687 = vrot.slane %v6682, %v6686
    %6689 = vmatprep.subr.mxu0 0.0
    %6690 = vmatpush1.msra.mxu0 %v6666
    %6691 = vmatprep.subr.mxu0 0.0
    %6692 = vmatpush1.msra.mxu0 %v6667
    %6693 = vmatprep.subr.mxu0 0.0
    %6694 = vmatpush1.msra.mxu0 %v6668
    %6695 = vmatprep.subr.mxu0 0.0
    %6696 = vmatpush1.msra.mxu0 %v6669
    %6697 = vmatprep.subr.mxu0 0.0
    %6698 = vmatpush1.msra.mxu0 %v6670
    %6699 = vmatprep.subr.mxu0 0.0
    %6700 = vmatpush1.msra.mxu0 %v6671
    %6701 = vmatprep.subr.mxu0 0.0
    %6702 = vmatpush1.msra.mxu0 %v6672
    %6703 = vmatprep.subr.mxu0 0.0
    %6704 = vmatpush1.msra.mxu0 %v6673
    %6705 = vmatprep.subr.mxu0 0.0
    %6706 = vmatpush1.msra.mxu0 %v6674
    %6707 = vmatprep.subr.mxu0 0.0
    %6708 = vmatpush1.msra.mxu0 %v6675
    %6709 = vmatprep.subr.mxu0 0.0
    %6710 = vmatpush1.msra.mxu0 %v6676
    %6711 = vmatprep.subr.mxu0 0.0
    %6712 = vmatpush1.msra.mxu0 %v6677
    %6713 = vmatprep.subr.mxu0 0.0
    %6714 = vmatpush1.msra.mxu0 %v6678
    %6715 = vmatprep.subr.mxu0 0.0
    %6716 = vmatpush1.msra.mxu0 %v6679
    %6717 = vmatprep.subr.mxu0 0.0
    %6718 = vmatpush1.msra.mxu0 %v6680
    %6719 = vmatprep.subr.mxu0 0.0
    %6720 = vmatpush1.msra.mxu0 %v6681
    %6721 = vmatprep.subr.mxu0 0.0
    %6722 = vmatpush1.msra.mxu0 0.0
    %6723 = vmatprep.subr.mxu0 0.0
    %6724 = vmatpush1.msra.mxu0 0.0
    %6725 = vmatprep.subr.mxu0 0.0
    %6726 = vmatpush1.msra.mxu0 0.0
    %6727 = vmatprep.subr.mxu0 0.0
    %6728 = vmatpush1.msra.mxu0 0.0
    %6729 = vmatprep.subr.mxu0 0.0
    %6730 = vmatpush1.msra.mxu0 0.0
    %6731 = vmatprep.subr.mxu0 0.0
    %6732 = vmatpush1.msra.mxu0 0.0
    %6733 = vmatprep.subr.mxu0 0.0
    %6734 = vmatpush1.msra.mxu0 0.0
    %6735 = vmatprep.subr.mxu0 0.0
    %6736 = vmatpush1.msra.mxu0 0.0
    %6737 = vmatprep.subr.mxu0 0.0
    %6738 = vmatpush1.msra.mxu0 0.0
    %6739 = vmatprep.subr.mxu0 0.0
    %6740 = vmatpush1.msra.mxu0 0.0
    %6741 = vmatprep.subr.mxu0 0.0
    %6742 = vmatpush1.msra.mxu0 0.0
    %6743 = vmatprep.subr.mxu0 0.0
    %6744 = vmatpush1.msra.mxu0 0.0
    %6745 = vmatprep.subr.mxu0 0.0
    %6746 = vmatpush1.msra.mxu0 0.0
    %6747 = vmatprep.subr.mxu0 0.0
    %6748 = vmatpush1.msra.mxu0 0.0
    %6749 = vmatprep.subr.mxu0 0.0
    %6750 = vmatpush1.msra.mxu0 0.0
    %6751 = vmatprep.subr.mxu0 0.0
    %6752 = vmatpush1.msra.mxu0 0.0
    %6753 = vmatprep.mubr.f32.mxu0 0.0
    %6754 = vmatmul.mubr.f32.gmra.mrb[0].mxu0 %v6665
    %v6755 = vpop.f32.mrb[0].mxu0
    %v6756 = vadd.f32 %v6687, %v6755
    %v6757 = vpop.f32.mrb[0].mxu0
    %6758 = vdwg.mxu0
    %6759 = vst [vmem:[#allocation5] sm:$0x3] %v6756
    // Predicated region
    $region38: #{mnist_convnet_forward.1} parent=1 // pred_check
      _
    $region39: #{mnist_convnet_forward.1} parent=1 // pred_check_branch
      %6761 = sbr.rel (0) target = $region41
    $region40: #{mnist_convnet_forward.1} parent=1 // pred_region
      %s6763 = ssub.s32 32, 32
      %6764 = vsyncadd [#allocation6], %s6763
      %s6766 = sshll.u32 [#allocation5], 4
      %s6767 = int_to_ptr.vmem [resolvable:$true] %s6766
      %6769 = dma.vmem_to_hbm [thread:$0]  %s6767, 32, %s9, [#allocation6]
    $region41: #{mnist_convnet_forward.1} parent=1 // pred_fallthru
      _
    // Predicated region
    $region42: #{mnist_convnet_forward.1} parent=1 // pred_check
      _
    $region43: #{mnist_convnet_forward.1} parent=1 // pred_check_branch
      %6771 = sbr.rel (0) target = $region45
    $region44: #{mnist_convnet_forward.1} parent=1 // pred_region
      %6772 = dma.done [#allocation6], 32
    $region45: #{mnist_convnet_forward.1} parent=1 // pred_fallthru
      _
    %6773 = vsyncpa [#allocation6], 1

</llo_original>
